<compile_context>
chip_gen: v7x
topology: tpu7x:2x2x1
jax: 0.10.0
libtpu: 0.0.40
codegen_flags: <defaults>
</compile_context>

<pallas_src>
import jax
import jax.numpy as jnp
from jax.experimental import pallas as pl
from jax.experimental.pallas import tpu as pltpu

HID = 400        # layer1/3/4/5 output width (as in the module)
HID_PAD = 512    # padded to 4*128 lanes per branch
DEEP = 50        # deep MLP hidden width (module default)
DEEP_PAD = 64    # padded to 8-sublane / clean tiles
E_PAD = 64       # padded embed_dim

# Default batch tile: multiple of 128 (full MXU M on v5e), small enough that
# activations + resident weights fit comfortably in VMEM on every generation
# (v7x has only 64 MiB physical).  Raise to 512-1024 (v7x) / 2048+ (v6e) for
# large production batches.
DEFAULT_TILE_B = 256


def wide_deep_kernel(
    x_ref, ui_ref,
    w_feat_ref, b_feat_ref,
    wc1h_ref, wc1e_ref, bc1_ref,
    wd14_ref, wd1e_ref, bd1_ref,
    wc2_ref, bc2_ref, wd2_ref, bd2_ref,
    w_wide_ref, wc3_ref, wd3_ref, b_out_ref,
    out_ref,
):
    f32 = jnp.float32
    bf16 = jnp.bfloat16

    def dot(a, b):
        return jnp.dot(a, b, preferred_element_type=f32)

    def relu(v):
        return jnp.maximum(v, 0.0)

    x = x_ref[...]        # (TB, 112)       bf16
    ui = ui_ref[...]      # (TB, 2*E_PAD)   bf16

    # Fused layer1/3/4/5: one block-diagonal matmul, bias + ReLU on a lane-dense
    # (TB, 4*HID_PAD) slab.  Each 512-lane chunk holds one feature branch
    # (extra lanes are exact zeros).
    h_all = relu(dot(x, w_feat_ref[...]) + b_feat_ref[...])   # (TB, 2048) f32
    h_all_b = h_all.astype(bf16)

    # Wide head: N=1 matmul replaced by VPU multiply + cross-lane reduction.
    wide = jnp.sum(ui.astype(f32) * w_wide_ref[...], axis=-1, keepdims=True)

    # deep_corr: Linear(cat([h1, h3, h5, ue, ie])) -> ReLU -> Linear -> ReLU -> head.
    # The h4 chunk's rows of wc1h are zero, so a single K=2048 dot implements the cat.
    c = relu(dot(h_all_b, wc1h_ref[...]) + dot(ui, wc1e_ref[...]) + bc1_ref[...])
    c = relu(dot(c.astype(bf16), wc2_ref[...]) + bc2_ref[...])
    c_out = jnp.sum(c * wc3_ref[...], axis=-1, keepdims=True)

    # deep_causal: only the h4 branch feeds it; the slice is lane-tile aligned
    # (columns 1024:1536) thanks to the 512-lane branch padding.
    h4 = h_all_b[:, 2 * HID_PAD:3 * HID_PAD]
    d = relu(dot(h4, wd14_ref[...]) + dot(ui, wd1e_ref[...]) + bd1_ref[...])
    d = relu(dot(d.astype(bf16), wd2_ref[...]) + bd2_ref[...])
    d_out = jnp.sum(d * wd3_ref[...], axis=-1, keepdims=True)

    # TODO(synk): the (TILE_B, 1) output block is lane-width-1 (masked stores);
    # making it lane-dense would require an in-kernel transpose (batch lives on
    # sublanes) and the output is only 4*TILE_B bytes per tile, so keep it simple.
    out_ref[...] = wide + c_out + d_out + b_out_ref[...]


def wide_and_deep_forward(packed, users, items, x1, x3, x4, x5, *, tile_b=DEFAULT_TILE_B):
    f32, bf16 = jnp.float32, jnp.bfloat16

    # Glue: embedding gathers (nn.Embedding) stay in plain JAX, on padded tables.
    ue = jnp.take(packed["user_emb"], users, axis=0)   # (B, E_PAD) f32
    ie = jnp.take(packed["item_emb"], items, axis=0)   # (B, E_PAD) f32

    x_all = jnp.concatenate([x1, x3, x4, x5], axis=1).astype(bf16)   # (B, 112)
    ui = jnp.concatenate([ue, ie], axis=1).astype(bf16)              # (B, 2*E_PAD)

    B = x_all.shape[0]
    bp = pl.cdiv(B, tile_b) * tile_b
    if bp != B:
        x_all = jnp.pad(x_all, ((0, bp - B), (0, 0)))
        ui = jnp.pad(ui, ((0, bp - B), (0, 0)))

    weights = (
        packed["w_feat"], packed["b_feat"],
        packed["wc1h"], packed["wc1e"], packed["bc1"],
        packed["wd14"], packed["wd1e"], packed["bd1"],
        packed["wc2"], packed["bc2"], packed["wd2"], packed["bd2"],
        packed["w_wide"], packed["wc3"], packed["wd3"], packed["b_out"],
    )

    def const_spec(a):
        # Full-array block, constant block index -> stays VMEM-resident across the grid.
        return pl.BlockSpec(a.shape, lambda i: (0,) * a.ndim)

    grid = (bp // tile_b,)
    out = pl.pallas_call(
        wide_deep_kernel,
        out_shape=jax.ShapeDtypeStruct((bp, 1), f32),
        grid=grid,
        in_specs=[
            pl.BlockSpec((tile_b, x_all.shape[1]), lambda i: (i, 0)),
            pl.BlockSpec((tile_b, ui.shape[1]), lambda i: (i, 0)),
        ] + [const_spec(w) for w in weights],
        out_specs=pl.BlockSpec((tile_b, 1), lambda i: (i, 0)),
        compiler_params=pltpu.CompilerParams(
            dimension_semantics=("parallel",),
            vmem_limit_bytes=32 * 1024 * 1024,
        ),
    )(x_all, ui, *weights)
    return out[:B]


def pack_params(p, feat_dims, embed_dim):
    """Pad / fuse / cast the logical fp32 params into the kernel layout."""
    f32, bf16 = jnp.float32, jnp.bfloat16
    n_f1, n_f3, n_f4, n_f5 = feat_dims
    E = embed_dim
    K = n_f1 + n_f3 + n_f4 + n_f5

    q = {}
    # Embedding tables, zero-padded from E to E_PAD lanes (gathered in the wrapper).
    q["user_emb"] = jnp.pad(p["user_emb"], ((0, 0), (0, E_PAD - E)))
    q["item_emb"] = jnp.pad(p["item_emb"], ((0, 0), (0, E_PAD - E)))

    # Fused block-diagonal weight/bias for layer1/3/4/5: (K, 4*HID_PAD).
    w_feat = jnp.zeros((K, 4 * HID_PAD), f32)
    b_feat = jnp.zeros((1, 4 * HID_PAD), f32)
    row = 0
    for blk, (w, b) in enumerate([(p["w1"], p["b1"]), (p["w3"], p["b3"]),
                                  (p["w4"], p["b4"]), (p["w5"], p["b5"])]):
        col = blk * HID_PAD
        w_feat = w_feat.at[row:row + w.shape[0], col:col + HID].set(w)
        b_feat = b_feat.at[:, col:col + HID].set(b)
        row += w.shape[0]
    q["w_feat"] = w_feat.astype(bf16)
    q["b_feat"] = b_feat

    # deep_corr layer 1, split into the h_all chunk and the embedding chunk.
    wc1 = p["wc1"]
    wc1h = jnp.zeros((4 * HID_PAD, DEEP_PAD), f32)
    wc1h = wc1h.at[0:HID, :DEEP].set(wc1[0:HID])                                   # h1
    wc1h = wc1h.at[HID_PAD:HID_PAD + HID, :DEEP].set(wc1[HID:2 * HID])             # h3
    wc1h = wc1h.at[3 * HID_PAD:3 * HID_PAD + HID, :DEEP].set(wc1[2 * HID:3 * HID]) # h5
    wc1e = jnp.zeros((2 * E_PAD, DEEP_PAD), f32)
    wc1e = wc1e.at[0:E, :DEEP].set(wc1[3 * HID:3 * HID + E])
    wc1e = wc1e.at[E_PAD:E_PAD + E, :DEEP].set(wc1[3 * HID + E:])
    q["wc1h"] = wc1h.astype(bf16)
    q["wc1e"] = wc1e.astype(bf16)
    q["bc1"] = jnp.zeros((1, DEEP_PAD), f32).at[:, :DEEP].set(p["bc1"])

    # deep_causal layer 1.
    wd1 = p["wd1"]
    wd14 = jnp.zeros((HID_PAD, DEEP_PAD), f32).at[0:HID, :DEEP].set(wd1[0:HID])
    wd1e = jnp.zeros((2 * E_PAD, DEEP_PAD), f32)
    wd1e = wd1e.at[0:E, :DEEP].set(wd1[HID:HID + E])
    wd1e = wd1e.at[E_PAD:E_PAD + E, :DEEP].set(wd1[HID + E:])
    q["wd14"] = wd14.astype(bf16)
    q["wd1e"] = wd1e.astype(bf16)
    q["bd1"] = jnp.zeros((1, DEEP_PAD), f32).at[:, :DEEP].set(p["bd1"])

    # Hidden 50x50 layers padded to 64x64.
    pad_hh = ((0, DEEP_PAD - DEEP), (0, DEEP_PAD - DEEP))
    q["wc2"] = jnp.pad(p["wc2"], pad_hh).astype(bf16)
    q["bc2"] = jnp.pad(p["bc2"], ((0, 0), (0, DEEP_PAD - DEEP)))
    q["wd2"] = jnp.pad(p["wd2"], pad_hh).astype(bf16)
    q["bd2"] = jnp.pad(p["bd2"], ((0, 0), (0, DEEP_PAD - DEEP)))

    # N=1 heads kept as f32 row-vectors (VPU multiply + lane reduction in-kernel).
    w_wide = jnp.zeros((1, 2 * E_PAD), f32)
    w_wide = w_wide.at[0, :E].set(p["ww"][:E, 0])
    w_wide = w_wide.at[0, E_PAD:E_PAD + E].set(p["ww"][E:, 0])
    q["w_wide"] = w_wide
    q["wc3"] = jnp.zeros((1, DEEP_PAD), f32).at[0, :DEEP].set(p["wc3"][:, 0])
    q["wd3"] = jnp.zeros((1, DEEP_PAD), f32).at[0, :DEEP].set(p["wd3"][:, 0])
    # All three scalar head biases folded into a single (1,1) constant.
    q["b_out"] = (p["bw"] + p["bc3"] + p["bd3"]).reshape(1, 1)
    return q


def reference_forward(params, users, items, x1, x3, x4, x5):
    """Plain-JAX mirror of the PyTorch forward, using the same bf16-operand /
    f32-accumulation matmul numerics as the kernel."""
    relu = jax.nn.relu
    bf = lambda a: a.astype(jnp.bfloat16)

    def mm(a, w):
        return jnp.dot(bf(a), bf(w), preferred_element_type=jnp.float32)

    ue = jnp.take(params["user_emb"], users, axis=0)
    ie = jnp.take(params["item_emb"], items, axis=0)

    h1 = relu(mm(x1, params["w1"]) + params["b1"])
    h3 = relu(mm(x3, params["w3"]) + params["b3"])
    h4 = relu(mm(x4, params["w4"]) + params["b4"])
    h5 = relu(mm(x5, params["w5"]) + params["b5"])

    wide_in = jnp.concatenate([ue, ie], axis=1)
    wide = jnp.sum(bf(wide_in).astype(jnp.float32) * params["ww"][:, 0][None, :],
                   axis=-1, keepdims=True) + params["bw"]

    corr_in = jnp.concatenate([h1, h3, h5, ue, ie], axis=1)
    c = relu(mm(corr_in, params["wc1"]) + params["bc1"])
    c = relu(mm(c, params["wc2"]) + params["bc2"])
    c = jnp.sum(c * params["wc3"][:, 0][None, :], axis=-1, keepdims=True) + params["bc3"]

    causal_in = jnp.concatenate([h4, ue, ie], axis=1)
    d = relu(mm(causal_in, params["wd1"]) + params["bd1"])
    d = relu(mm(d, params["wd2"]) + params["bd2"])
    d = jnp.sum(d * params["wd3"][:, 0][None, :], axis=-1, keepdims=True) + params["bd3"]

    return wide + c + d


def _linear(key, fan_in, fan_out):
    kw, kb = jax.random.split(key)
    w = jax.random.normal(kw, (fan_in, fan_out), jnp.float32) * 0.05
    b = jax.random.normal(kb, (1, fan_out), jnp.float32) * 0.05
    return w, b


def init_params(key, n_users, n_items, n_f1, n_f3, n_f4, n_f5, embed_dim):
    keys = jax.random.split(key, 13)
    n_corr = 3 * HID      # n_corr_features implied by the forward's cat
    n_causal = HID        # n_causal_features implied by the forward's cat

    p = {}
    p["user_emb"] = jax.random.normal(keys[0], (n_users, embed_dim), jnp.float32) * 0.05
    p["item_emb"] = jax.random.normal(keys[1], (n_items, embed_dim), jnp.float32) * 0.05

    p["w1"], p["b1"] = _linear(keys[2], n_f1, HID)
    p["w3"], p["b3"] = _linear(keys[3], n_f3, HID)
    p["w4"], p["b4"] = _linear(keys[4], n_f4, HID)
    p["w5"], p["b5"] = _linear(keys[5], n_f5, HID)

    # wide head (2 * embed_dim inputs — see TODO(synk) at top of file)
    p["ww"], p["bw"] = _linear(keys[6], 2 * embed_dim, 1)

    # deep_corr: Linear(n_corr + 2E, 50) -> ReLU -> Linear(50, 50) -> ReLU -> Linear(50, 1)
    p["wc1"], p["bc1"] = _linear(keys[7], n_corr + 2 * embed_dim, DEEP)
    p["wc2"], p["bc2"] = _linear(keys[8], DEEP, DEEP)
    p["wc3"], p["bc3"] = _linear(keys[9], DEEP, 1)

    # deep_causal: Linear(n_causal + 2E, 50) -> ReLU -> Linear(50, 50) -> ReLU -> Linear(50, 1)
    p["wd1"], p["bd1"] = _linear(keys[10], n_causal + 2 * embed_dim, DEEP)
    p["wd2"], p["bd2"] = _linear(keys[11], DEEP, DEEP)
    p["wd3"], p["bd3"] = _linear(keys[12], DEEP, 1)
    return p


if __name__ == "__main__":
    # Small, deterministic example shapes consistent with the forward pass.
    B = 4
    n_users, n_items = 10, 12
    embed_dim = 50
    n_f1, n_f3, n_f4, n_f5 = 32, 24, 16, 40

    key = jax.random.PRNGKey(0)
    kp, ku, ki, k1, k3, k4, k5 = jax.random.split(key, 7)

    params = init_params(kp, n_users, n_items, n_f1, n_f3, n_f4, n_f5, embed_dim)
    packed = pack_params(params, (n_f1, n_f3, n_f4, n_f5), embed_dim)

    users = jax.random.randint(ku, (B,), 0, n_users, dtype=jnp.int32)
    items = jax.random.randint(ki, (B,), 0, n_items, dtype=jnp.int32)
    x1 = jax.random.normal(k1, (B, n_f1), jnp.float32)
    x3 = jax.random.normal(k3, (B, n_f3), jnp.float32)
    x4 = jax.random.normal(k4, (B, n_f4), jnp.float32)
    x5 = jax.random.normal(k5, (B, n_f5), jnp.float32)

    out = wide_and_deep_forward(packed, users, items, x1, x3, x4, x5)
    out = jax.block_until_ready(out)

    ref = reference_forward(params, users, items, x1, x3, x4, x5)
    assert out.shape == (B, 1), out.shape
    assert jnp.allclose(out, ref, atol=2e-3, rtol=2e-3), (out, ref)

    print("KERNEL_OK")
</pallas_src>

<mosaic_0001>
module attributes {stable_mosaic.version = 11 : i64} {
  func.func @wide_deep_kernel(%arg0: i32, %arg1: memref<256x112xbf16, #tpu.memory_space<vmem>>, %arg2: memref<256x128xbf16, #tpu.memory_space<vmem>>, %arg3: memref<112x2048xbf16, #tpu.memory_space<vmem>>, %arg4: memref<1x2048xf32, #tpu.memory_space<vmem>>, %arg5: memref<2048x64xbf16, #tpu.memory_space<vmem>>, %arg6: memref<128x64xbf16, #tpu.memory_space<vmem>>, %arg7: memref<1x64xf32, #tpu.memory_space<vmem>>, %arg8: memref<512x64xbf16, #tpu.memory_space<vmem>>, %arg9: memref<128x64xbf16, #tpu.memory_space<vmem>>, %arg10: memref<1x64xf32, #tpu.memory_space<vmem>>, %arg11: memref<64x64xbf16, #tpu.memory_space<vmem>>, %arg12: memref<1x64xf32, #tpu.memory_space<vmem>>, %arg13: memref<64x64xbf16, #tpu.memory_space<vmem>>, %arg14: memref<1x64xf32, #tpu.memory_space<vmem>>, %arg15: memref<1x128xf32, #tpu.memory_space<vmem>>, %arg16: memref<1x64xf32, #tpu.memory_space<vmem>>, %arg17: memref<1x64xf32, #tpu.memory_space<vmem>>, %arg18: memref<1x1xf32, #tpu.memory_space<vmem>>, %arg19: memref<256x1xf32, #tpu.memory_space<vmem>>) attributes {dimension_semantics = [#tpu.dimension_semantics<parallel>], iteration_bounds = array<i64: 1>, scalar_prefetch = 0 : i64, scratch_operands = 0 : i64, tpu.core_type = #tpu.core_type<tc>, window_params = [{transform_indices = @transform_0, window_bounds = array<i64: 256, 112>}, {transform_indices = @transform_1, window_bounds = array<i64: 256, 128>}, {pipeline_mode = #tpu.pipeline_mode<synchronous>, transform_indices = @transform_2, window_bounds = array<i64: 112, 2048>}, {pipeline_mode = #tpu.pipeline_mode<synchronous>, transform_indices = @transform_3, window_bounds = array<i64: 1, 2048>}, {pipeline_mode = #tpu.pipeline_mode<synchronous>, transform_indices = @transform_4, window_bounds = array<i64: 2048, 64>}, {pipeline_mode = #tpu.pipeline_mode<synchronous>, transform_indices = @transform_5, window_bounds = array<i64: 128, 64>}, {pipeline_mode = #tpu.pipeline_mode<synchronous>, transform_indices = @transform_6, window_bounds = array<i64: 1, 64>}, {pipeline_mode = #tpu.pipeline_mode<synchronous>, transform_indices = @transform_7, window_bounds = array<i64: 512, 64>}, {pipeline_mode = #tpu.pipeline_mode<synchronous>, transform_indices = @transform_8, window_bounds = array<i64: 128, 64>}, {pipeline_mode = #tpu.pipeline_mode<synchronous>, transform_indices = @transform_9, window_bounds = array<i64: 1, 64>}, {pipeline_mode = #tpu.pipeline_mode<synchronous>, transform_indices = @transform_10, window_bounds = array<i64: 64, 64>}, {pipeline_mode = #tpu.pipeline_mode<synchronous>, transform_indices = @transform_11, window_bounds = array<i64: 1, 64>}, {pipeline_mode = #tpu.pipeline_mode<synchronous>, transform_indices = @transform_12, window_bounds = array<i64: 64, 64>}, {pipeline_mode = #tpu.pipeline_mode<synchronous>, transform_indices = @transform_13, window_bounds = array<i64: 1, 64>}, {pipeline_mode = #tpu.pipeline_mode<synchronous>, transform_indices = @transform_14, window_bounds = array<i64: 1, 128>}, {pipeline_mode = #tpu.pipeline_mode<synchronous>, transform_indices = @transform_15, window_bounds = array<i64: 1, 64>}, {pipeline_mode = #tpu.pipeline_mode<synchronous>, transform_indices = @transform_16, window_bounds = array<i64: 1, 64>}, {pipeline_mode = #tpu.pipeline_mode<synchronous>, transform_indices = @transform_17, window_bounds = array<i64: 1, 1>}, {transform_indices = @transform_18, window_bounds = array<i64: 256, 1>}]} {
    %c0 = arith.constant 0 : index
    %c0_0 = arith.constant 0 : index
    %0 = vector.load %arg1[%c0, %c0_0] : memref<256x112xbf16, #tpu.memory_space<vmem>>, vector<256x112xbf16>
    %c0_1 = arith.constant 0 : index
    %c0_2 = arith.constant 0 : index
    %1 = vector.load %arg2[%c0_1, %c0_2] : memref<256x128xbf16, #tpu.memory_space<vmem>>, vector<256x128xbf16>
    %c0_3 = arith.constant 0 : index
    %c0_4 = arith.constant 0 : index
    %2 = vector.load %arg3[%c0_3, %c0_4] : memref<112x2048xbf16, #tpu.memory_space<vmem>>, vector<112x2048xbf16>
    %cst = arith.constant dense<0.000000e+00> : vector<256x2048xf32>
    %3 = tpu.matmul %0, %2, %cst {dimension_numbers = #tpu.dot_dimension_numbers<[1], [0], [0], [1], [0, 0, 1, 1], [], []>} : vector<256x112xbf16>, vector<112x2048xbf16>, vector<256x2048xf32> -> vector<256x2048xf32>
    %c0_5 = arith.constant 0 : index
    %c0_6 = arith.constant 0 : index
    %4 = vector.load %arg4[%c0_5, %c0_6] : memref<1x2048xf32, #tpu.memory_space<vmem>>, vector<1x2048xf32>
    %5 = vector.broadcast %4 : vector<1x2048xf32> to vector<256x2048xf32>
    %6 = arith.addf %3, %5 : vector<256x2048xf32>
    %cst_7 = arith.constant 0.000000e+00 : f32
    %7 = vector.broadcast %cst_7 : f32 to vector<256x2048xf32>
    %8 = arith.maximumf %6, %7 : vector<256x2048xf32>
    %9 = arith.truncf %8 : vector<256x2048xf32> to vector<256x2048xbf16>
    %10 = arith.extf %1 : vector<256x128xbf16> to vector<256x128xf32>
    %c0_8 = arith.constant 0 : index
    %c0_9 = arith.constant 0 : index
    %11 = vector.load %arg15[%c0_8, %c0_9] : memref<1x128xf32, #tpu.memory_space<vmem>>, vector<1x128xf32>
    %12 = vector.broadcast %11 : vector<1x128xf32> to vector<256x128xf32>
    %13 = arith.mulf %10, %12 : vector<256x128xf32>
    %cst_10 = arith.constant dense<0.000000e+00> : vector<256xf32>
    %14 = vector.multi_reduction <add>, %13, %cst_10 [1] : vector<256x128xf32> to vector<256xf32>
    %15 = vector.shape_cast %14 : vector<256xf32> to vector<256x1xf32>
    %c0_11 = arith.constant 0 : index
    %c0_12 = arith.constant 0 : index
    %16 = vector.load %arg5[%c0_11, %c0_12] : memref<2048x64xbf16, #tpu.memory_space<vmem>>, vector<2048x64xbf16>
    %cst_13 = arith.constant dense<0.000000e+00> : vector<256x64xf32>
    %17 = tpu.matmul %9, %16, %cst_13 {dimension_numbers = #tpu.dot_dimension_numbers<[1], [0], [0], [1], [0, 0, 1, 1], [], []>} : vector<256x2048xbf16>, vector<2048x64xbf16>, vector<256x64xf32> -> vector<256x64xf32>
    %c0_14 = arith.constant 0 : index
    %c0_15 = arith.constant 0 : index
    %18 = vector.load %arg6[%c0_14, %c0_15] : memref<128x64xbf16, #tpu.memory_space<vmem>>, vector<128x64xbf16>
    %cst_16 = arith.constant dense<0.000000e+00> : vector<256x64xf32>
    %19 = tpu.matmul %1, %18, %cst_16 {dimension_numbers = #tpu.dot_dimension_numbers<[1], [0], [0], [1], [0, 0, 1, 1], [], []>} : vector<256x128xbf16>, vector<128x64xbf16>, vector<256x64xf32> -> vector<256x64xf32>
    %20 = arith.addf %17, %19 : vector<256x64xf32>
    %c0_17 = arith.constant 0 : index
    %c0_18 = arith.constant 0 : index
    %21 = vector.load %arg7[%c0_17, %c0_18] : memref<1x64xf32, #tpu.memory_space<vmem>>, vector<1x64xf32>
    %22 = vector.broadcast %21 : vector<1x64xf32> to vector<256x64xf32>
    %23 = arith.addf %20, %22 : vector<256x64xf32>
    %cst_19 = arith.constant 0.000000e+00 : f32
    %24 = vector.broadcast %cst_19 : f32 to vector<256x64xf32>
    %25 = arith.maximumf %23, %24 : vector<256x64xf32>
    %26 = arith.truncf %25 : vector<256x64xf32> to vector<256x64xbf16>
    %c0_20 = arith.constant 0 : index
    %c0_21 = arith.constant 0 : index
    %27 = vector.load %arg11[%c0_20, %c0_21] : memref<64x64xbf16, #tpu.memory_space<vmem>>, vector<64x64xbf16>
    %cst_22 = arith.constant dense<0.000000e+00> : vector<256x64xf32>
    %28 = tpu.matmul %26, %27, %cst_22 {dimension_numbers = #tpu.dot_dimension_numbers<[1], [0], [0], [1], [0, 0, 1, 1], [], []>} : vector<256x64xbf16>, vector<64x64xbf16>, vector<256x64xf32> -> vector<256x64xf32>
    %c0_23 = arith.constant 0 : index
    %c0_24 = arith.constant 0 : index
    %29 = vector.load %arg12[%c0_23, %c0_24] : memref<1x64xf32, #tpu.memory_space<vmem>>, vector<1x64xf32>
    %30 = vector.broadcast %29 : vector<1x64xf32> to vector<256x64xf32>
    %31 = arith.addf %28, %30 : vector<256x64xf32>
    %cst_25 = arith.constant 0.000000e+00 : f32
    %32 = vector.broadcast %cst_25 : f32 to vector<256x64xf32>
    %33 = arith.maximumf %31, %32 : vector<256x64xf32>
    %c0_26 = arith.constant 0 : index
    %c0_27 = arith.constant 0 : index
    %34 = vector.load %arg16[%c0_26, %c0_27] : memref<1x64xf32, #tpu.memory_space<vmem>>, vector<1x64xf32>
    %35 = vector.broadcast %34 : vector<1x64xf32> to vector<256x64xf32>
    %36 = arith.mulf %33, %35 : vector<256x64xf32>
    %cst_28 = arith.constant dense<0.000000e+00> : vector<256xf32>
    %37 = vector.multi_reduction <add>, %36, %cst_28 [1] : vector<256x64xf32> to vector<256xf32>
    %38 = vector.shape_cast %37 : vector<256xf32> to vector<256x1xf32>
    %39 = vector.extract_strided_slice %9 {offsets = [0, 1024], sizes = [256, 512], strides = [1, 1]} : vector<256x2048xbf16> to vector<256x512xbf16>
    %c0_29 = arith.constant 0 : index
    %c0_30 = arith.constant 0 : index
    %40 = vector.load %arg8[%c0_29, %c0_30] : memref<512x64xbf16, #tpu.memory_space<vmem>>, vector<512x64xbf16>
    %cst_31 = arith.constant dense<0.000000e+00> : vector<256x64xf32>
    %41 = tpu.matmul %39, %40, %cst_31 {dimension_numbers = #tpu.dot_dimension_numbers<[1], [0], [0], [1], [0, 0, 1, 1], [], []>} : vector<256x512xbf16>, vector<512x64xbf16>, vector<256x64xf32> -> vector<256x64xf32>
    %c0_32 = arith.constant 0 : index
    %c0_33 = arith.constant 0 : index
    %42 = vector.load %arg9[%c0_32, %c0_33] : memref<128x64xbf16, #tpu.memory_space<vmem>>, vector<128x64xbf16>
    %cst_34 = arith.constant dense<0.000000e+00> : vector<256x64xf32>
    %43 = tpu.matmul %1, %42, %cst_34 {dimension_numbers = #tpu.dot_dimension_numbers<[1], [0], [0], [1], [0, 0, 1, 1], [], []>} : vector<256x128xbf16>, vector<128x64xbf16>, vector<256x64xf32> -> vector<256x64xf32>
    %44 = arith.addf %41, %43 : vector<256x64xf32>
    %c0_35 = arith.constant 0 : index
    %c0_36 = arith.constant 0 : index
    %45 = vector.load %arg10[%c0_35, %c0_36] : memref<1x64xf32, #tpu.memory_space<vmem>>, vector<1x64xf32>
    %46 = vector.broadcast %45 : vector<1x64xf32> to vector<256x64xf32>
    %47 = arith.addf %44, %46 : vector<256x64xf32>
    %cst_37 = arith.constant 0.000000e+00 : f32
    %48 = vector.broadcast %cst_37 : f32 to vector<256x64xf32>
    %49 = arith.maximumf %47, %48 : vector<256x64xf32>
    %50 = arith.truncf %49 : vector<256x64xf32> to vector<256x64xbf16>
    %c0_38 = arith.constant 0 : index
    %c0_39 = arith.constant 0 : index
    %51 = vector.load %arg13[%c0_38, %c0_39] : memref<64x64xbf16, #tpu.memory_space<vmem>>, vector<64x64xbf16>
    %cst_40 = arith.constant dense<0.000000e+00> : vector<256x64xf32>
    %52 = tpu.matmul %50, %51, %cst_40 {dimension_numbers = #tpu.dot_dimension_numbers<[1], [0], [0], [1], [0, 0, 1, 1], [], []>} : vector<256x64xbf16>, vector<64x64xbf16>, vector<256x64xf32> -> vector<256x64xf32>
    %c0_41 = arith.constant 0 : index
    %c0_42 = arith.constant 0 : index
    %53 = vector.load %arg14[%c0_41, %c0_42] : memref<1x64xf32, #tpu.memory_space<vmem>>, vector<1x64xf32>
    %54 = vector.broadcast %53 : vector<1x64xf32> to vector<256x64xf32>
    %55 = arith.addf %52, %54 : vector<256x64xf32>
    %cst_43 = arith.constant 0.000000e+00 : f32
    %56 = vector.broadcast %cst_43 : f32 to vector<256x64xf32>
    %57 = arith.maximumf %55, %56 : vector<256x64xf32>
    %c0_44 = arith.constant 0 : index
    %c0_45 = arith.constant 0 : index
    %58 = vector.load %arg17[%c0_44, %c0_45] : memref<1x64xf32, #tpu.memory_space<vmem>>, vector<1x64xf32>
    %59 = vector.broadcast %58 : vector<1x64xf32> to vector<256x64xf32>
    %60 = arith.mulf %57, %59 : vector<256x64xf32>
    %cst_46 = arith.constant dense<0.000000e+00> : vector<256xf32>
    %61 = vector.multi_reduction <add>, %60, %cst_46 [1] : vector<256x64xf32> to vector<256xf32>
    %62 = vector.shape_cast %61 : vector<256xf32> to vector<256x1xf32>
    %63 = arith.addf %15, %38 : vector<256x1xf32>
    %64 = arith.addf %63, %62 : vector<256x1xf32>
    %c0_47 = arith.constant 0 : index
    %c0_48 = arith.constant 0 : index
    %65 = vector.load %arg18[%c0_47, %c0_48] : memref<1x1xf32, #tpu.memory_space<vmem>>, vector<1x1xf32>
    %66 = vector.broadcast %65 : vector<1x1xf32> to vector<256x1xf32>
    %67 = arith.addf %64, %66 : vector<256x1xf32>
    %c0_49 = arith.constant 0 : index
    %c0_50 = arith.constant 0 : index
    %68 = vector.load %arg19[%c0_49, %c0_50] : memref<256x1xf32, #tpu.memory_space<vmem>>, vector<256x1xf32>
    tpu.vector_store %arg19[%c0_49, %c0_50], %67 {strides = array<i32>} : memref<256x1xf32, #tpu.memory_space<vmem>>, vector<256x1xf32>,
    return
  }
  func.func @transform_0(%arg0: i32) -> (i32, i32) {
    %c0_i32 = arith.constant 0 : i32
    %c0_i32_0 = arith.constant 0 : i32
    return %arg0, %c0_i32 : i32, i32
  }
  func.func @transform_1(%arg0: i32) -> (i32, i32) {
    %c0_i32 = arith.constant 0 : i32
    %c0_i32_0 = arith.constant 0 : i32
    return %arg0, %c0_i32 : i32, i32
  }
  func.func @transform_2(%arg0: i32) -> (i32, i32) {
    %c0_i32 = arith.constant 0 : i32
    %c0_i32_0 = arith.constant 0 : i32
    %c0_i32_1 = arith.constant 0 : i32
    return %c0_i32, %c0_i32_0 : i32, i32
  }
  func.func @transform_3(%arg0: i32) -> (i32, i32) {
    %c0_i32 = arith.constant 0 : i32
    %c0_i32_0 = arith.constant 0 : i32
    %c0_i32_1 = arith.constant 0 : i32
    return %c0_i32, %c0_i32_0 : i32, i32
  }
  func.func @transform_4(%arg0: i32) -> (i32, i32) {
    %c0_i32 = arith.constant 0 : i32
    %c0_i32_0 = arith.constant 0 : i32
    %c0_i32_1 = arith.constant 0 : i32
    return %c0_i32, %c0_i32_0 : i32, i32
  }
  func.func @transform_5(%arg0: i32) -> (i32, i32) {
    %c0_i32 = arith.constant 0 : i32
    %c0_i32_0 = arith.constant 0 : i32
    %c0_i32_1 = arith.constant 0 : i32
    return %c0_i32, %c0_i32_0 : i32, i32
  }
  func.func @transform_6(%arg0: i32) -> (i32, i32) {
    %c0_i32 = arith.constant 0 : i32
    %c0_i32_0 = arith.constant 0 : i32
    %c0_i32_1 = arith.constant 0 : i32
    return %c0_i32, %c0_i32_0 : i32, i32
  }
  func.func @transform_7(%arg0: i32) -> (i32, i32) {
    %c0_i32 = arith.constant 0 : i32
    %c0_i32_0 = arith.constant 0 : i32
    %c0_i32_1 = arith.constant 0 : i32
    return %c0_i32, %c0_i32_0 : i32, i32
  }
  func.func @transform_8(%arg0: i32) -> (i32, i32) {
    %c0_i32 = arith.constant 0 : i32
    %c0_i32_0 = arith.constant 0 : i32
    %c0_i32_1 = arith.constant 0 : i32
    return %c0_i32, %c0_i32_0 : i32, i32
  }
  func.func @transform_9(%arg0: i32) -> (i32, i32) {
    %c0_i32 = arith.constant 0 : i32
    %c0_i32_0 = arith.constant 0 : i32
    %c0_i32_1 = arith.constant 0 : i32
    return %c0_i32, %c0_i32_0 : i32, i32
  }
  func.func @transform_10(%arg0: i32) -> (i32, i32) {
    %c0_i32 = arith.constant 0 : i32
    %c0_i32_0 = arith.constant 0 : i32
    %c0_i32_1 = arith.constant 0 : i32
    return %c0_i32, %c0_i32_0 : i32, i32
  }
  func.func @transform_11(%arg0: i32) -> (i32, i32) {
    %c0_i32 = arith.constant 0 : i32
    %c0_i32_0 = arith.constant 0 : i32
    %c0_i32_1 = arith.constant 0 : i32
    return %c0_i32, %c0_i32_0 : i32, i32
  }
  func.func @transform_12(%arg0: i32) -> (i32, i32) {
    %c0_i32 = arith.constant 0 : i32
    %c0_i32_0 = arith.constant 0 : i32
    %c0_i32_1 = arith.constant 0 : i32
    return %c0_i32, %c0_i32_0 : i32, i32
  }
  func.func @transform_13(%arg0: i32) -> (i32, i32) {
    %c0_i32 = arith.constant 0 : i32
    %c0_i32_0 = arith.constant 0 : i32
    %c0_i32_1 = arith.constant 0 : i32
    return %c0_i32, %c0_i32_0 : i32, i32
  }
  func.func @transform_14(%arg0: i32) -> (i32, i32) {
    %c0_i32 = arith.constant 0 : i32
    %c0_i32_0 = arith.constant 0 : i32
    %c0_i32_1 = arith.constant 0 : i32
    return %c0_i32, %c0_i32_0 : i32, i32
  }
  func.func @transform_15(%arg0: i32) -> (i32, i32) {
    %c0_i32 = arith.constant 0 : i32
    %c0_i32_0 = arith.constant 0 : i32
    %c0_i32_1 = arith.constant 0 : i32
    return %c0_i32, %c0_i32_0 : i32, i32
  }
  func.func @transform_16(%arg0: i32) -> (i32, i32) {
    %c0_i32 = arith.constant 0 : i32
    %c0_i32_0 = arith.constant 0 : i32
    %c0_i32_1 = arith.constant 0 : i32
    return %c0_i32, %c0_i32_0 : i32, i32
  }
  func.func @transform_17(%arg0: i32) -> (i32, i32) {
    %c0_i32 = arith.constant 0 : i32
    %c0_i32_0 = arith.constant 0 : i32
    %c0_i32_1 = arith.constant 0 : i32
    return %c0_i32, %c0_i32_0 : i32, i32
  }
  func.func @transform_18(%arg0: i32) -> (i32, i32) {
    %c0_i32 = arith.constant 0 : i32
    %c0_i32_0 = arith.constant 0 : i32
    return %arg0, %c0_i32 : i32, i32
  }
}

</mosaic_0001>

<llo_original>
// kernel: tpu_custom_call.1
$region0: #{tpu_custom_call.1}
  #allocation0 [shape = 'u32[]', space=smem, size = 0x4, offset = 0x4, fixed_abs, tag = 'smem constant byte address 0x4 - core index']
  #allocation1 [shape = 'u32[144,128]{1,0:T(1,128)}', space=vmem, size = 0x12000, scoped, tag = 'internal scratch']
  #allocation2 [shape = 'f32[1,1]{1,0:T(1,128)S(1)}', space=vmem, size = 0x200, scoped, tag = 'scoped memory for tpu_custom_call.1']
  %s0 = inlined_call_operand.vmem [shape: bf16[256,112], index: 0, kind: input, shape index: {}]
  %s1 = inlined_call_operand.vmem [shape: bf16[256,128], index: 1, kind: input, shape index: {}]
  %s2 = inlined_call_operand.vmem [shape: bf16[112,2048], index: 2, kind: input, shape index: {}]
  %s3 = inlined_call_operand.vmem [shape: f32[1,2048], index: 3, kind: input, shape index: {}]
  %s4 = inlined_call_operand.vmem [shape: bf16[2048,64], index: 4, kind: input, shape index: {}]
  %s5 = inlined_call_operand.vmem [shape: bf16[128,64], index: 5, kind: input, shape index: {}]
  %s6 = inlined_call_operand.vmem [shape: f32[1,64], index: 6, kind: input, shape index: {}]
  %s7 = inlined_call_operand.vmem [shape: bf16[512,64], index: 7, kind: input, shape index: {}]
  %s8 = inlined_call_operand.vmem [shape: bf16[128,64], index: 8, kind: input, shape index: {}]
  %s9 = inlined_call_operand.vmem [shape: f32[1,64], index: 9, kind: input, shape index: {}]
  %s10 = inlined_call_operand.vmem [shape: bf16[64,64], index: 10, kind: input, shape index: {}]
  %s11 = inlined_call_operand.vmem [shape: f32[1,64], index: 11, kind: input, shape index: {}]
  %s12 = inlined_call_operand.vmem [shape: bf16[64,64], index: 12, kind: input, shape index: {}]
  %s13 = inlined_call_operand.vmem [shape: f32[1,64], index: 13, kind: input, shape index: {}]
  %s14 = inlined_call_operand.vmem [shape: f32[1,128], index: 14, kind: input, shape index: {}]
  %s15 = inlined_call_operand.vmem [shape: f32[1,64], index: 15, kind: input, shape index: {}]
  %s16 = inlined_call_operand.vmem [shape: f32[1,64], index: 16, kind: input, shape index: {}]
  %s17 = inlined_call_operand.<no memory space> [shape: f32[1,1], index: 17, kind: input, shape index: {}]
  %s18 = inlined_call_operand.vmem [shape: f32[256,1], index: 18, kind: output, shape index: {}]
  %s19 = sld [smem:[#allocation0]]
  $region82: #{tpu_custom_call.1} parent=0
    _
  %s21 = ssub.s32 1, %s19
  %s22 = scalar_select 0, %s21, %s19
  %v23 = vstv %s17
  %24 = vst [vmem:[#allocation2] sm:$0x1] %v23
  // Predicated region
  $region2: #{tpu_custom_call.1} parent=0 // pred_check
    _
  $region3: #{tpu_custom_call.1} parent=0 // pred_check_branch
    %26 = sbr.rel (0) target = $region5
  $region4: #{tpu_custom_call.1} parent=0 // pred_region
    _
  $region5: #{tpu_custom_call.1} parent=0 // pred_fallthru
    _
  // Predicated region
  $region6: #{tpu_custom_call.1} parent=0 // pred_check
    _
  $region7: #{tpu_custom_call.1} parent=0 // pred_check_branch
    %28 = sbr.rel (0) target = $region9
  $region8: #{tpu_custom_call.1} parent=0 // pred_region
    _
  $region9: #{tpu_custom_call.1} parent=0 // pred_fallthru
    _
  // Predicated region
  $region10: #{tpu_custom_call.1} parent=0 // pred_check
    _
  $region11: #{tpu_custom_call.1} parent=0 // pred_check_branch
    %30 = sbr.rel (0) target = $region13
  $region12: #{tpu_custom_call.1} parent=0 // pred_region
    _
  $region13: #{tpu_custom_call.1} parent=0 // pred_fallthru
    _
  // Predicated region
  $region14: #{tpu_custom_call.1} parent=0 // pred_check
    _
  $region15: #{tpu_custom_call.1} parent=0 // pred_check_branch
    %32 = sbr.rel (0) target = $region17
  $region16: #{tpu_custom_call.1} parent=0 // pred_region
    _
  $region17: #{tpu_custom_call.1} parent=0 // pred_fallthru
    _
  // Predicated region
  $region18: #{tpu_custom_call.1} parent=0 // pred_check
    _
  $region19: #{tpu_custom_call.1} parent=0 // pred_check_branch
    %34 = sbr.rel (0) target = $region21
  $region20: #{tpu_custom_call.1} parent=0 // pred_region
    _
  $region21: #{tpu_custom_call.1} parent=0 // pred_fallthru
    _
  // Predicated region
  $region22: #{tpu_custom_call.1} parent=0 // pred_check
    _
  $region23: #{tpu_custom_call.1} parent=0 // pred_check_branch
    %36 = sbr.rel (0) target = $region25
  $region24: #{tpu_custom_call.1} parent=0 // pred_region
    _
  $region25: #{tpu_custom_call.1} parent=0 // pred_fallthru
    _
  // Predicated region
  $region26: #{tpu_custom_call.1} parent=0 // pred_check
    _
  $region27: #{tpu_custom_call.1} parent=0 // pred_check_branch
    %38 = sbr.rel (0) target = $region29
  $region28: #{tpu_custom_call.1} parent=0 // pred_region
    _
  $region29: #{tpu_custom_call.1} parent=0 // pred_fallthru
    _
  // Predicated region
  $region30: #{tpu_custom_call.1} parent=0 // pred_check
    _
  $region31: #{tpu_custom_call.1} parent=0 // pred_check_branch
    %40 = sbr.rel (0) target = $region33
  $region32: #{tpu_custom_call.1} parent=0 // pred_region
    _
  $region33: #{tpu_custom_call.1} parent=0 // pred_fallthru
    _
  // Predicated region
  $region34: #{tpu_custom_call.1} parent=0 // pred_check
    _
  $region35: #{tpu_custom_call.1} parent=0 // pred_check_branch
    %42 = sbr.rel (0) target = $region37
  $region36: #{tpu_custom_call.1} parent=0 // pred_region
    _
  $region37: #{tpu_custom_call.1} parent=0 // pred_fallthru
    _
  // Predicated region
  $region38: #{tpu_custom_call.1} parent=0 // pred_check
    _
  $region39: #{tpu_custom_call.1} parent=0 // pred_check_branch
    %44 = sbr.rel (0) target = $region41
  $region40: #{tpu_custom_call.1} parent=0 // pred_region
    _
  $region41: #{tpu_custom_call.1} parent=0 // pred_fallthru
    _
  // Predicated region
  $region42: #{tpu_custom_call.1} parent=0 // pred_check
    _
  $region43: #{tpu_custom_call.1} parent=0 // pred_check_branch
    %46 = sbr.rel (0) target = $region45
  $region44: #{tpu_custom_call.1} parent=0 // pred_region
    _
  $region45: #{tpu_custom_call.1} parent=0 // pred_fallthru
    _
  // Predicated region
  $region46: #{tpu_custom_call.1} parent=0 // pred_check
    _
  $region47: #{tpu_custom_call.1} parent=0 // pred_check_branch
    %48 = sbr.rel (0) target = $region49
  $region48: #{tpu_custom_call.1} parent=0 // pred_region
    _
  $region49: #{tpu_custom_call.1} parent=0 // pred_fallthru
    _
  // Predicated region
  $region50: #{tpu_custom_call.1} parent=0 // pred_check
    _
  $region51: #{tpu_custom_call.1} parent=0 // pred_check_branch
    %50 = sbr.rel (0) target = $region53
  $region52: #{tpu_custom_call.1} parent=0 // pred_region
    _
  $region53: #{tpu_custom_call.1} parent=0 // pred_fallthru
    _
  // Predicated region
  $region54: #{tpu_custom_call.1} parent=0 // pred_check
    _
  $region55: #{tpu_custom_call.1} parent=0 // pred_check_branch
    %52 = sbr.rel (0) target = $region57
  $region56: #{tpu_custom_call.1} parent=0 // pred_region
    _
  $region57: #{tpu_custom_call.1} parent=0 // pred_fallthru
    _
  // Predicated region
  $region58: #{tpu_custom_call.1} parent=0 // pred_check
    _
  $region59: #{tpu_custom_call.1} parent=0 // pred_check_branch
    %54 = sbr.rel (0) target = $region61
  $region60: #{tpu_custom_call.1} parent=0 // pred_region
    _
  $region61: #{tpu_custom_call.1} parent=0 // pred_fallthru
    _
  // Predicated region
  $region62: #{tpu_custom_call.1} parent=0 // pred_check
    _
  $region63: #{tpu_custom_call.1} parent=0 // pred_check_branch
    %56 = sbr.rel (0) target = $region65
  $region64: #{tpu_custom_call.1} parent=0 // pred_region
    _
  $region65: #{tpu_custom_call.1} parent=0 // pred_fallthru
    _
  // Predicated region
  $region66: #{tpu_custom_call.1} parent=0 // pred_check
    _
  $region67: #{tpu_custom_call.1} parent=0 // pred_check_branch
    %58 = sbr.rel (0) target = $region69
  $region68: #{tpu_custom_call.1} parent=0 // pred_region
    _
  $region69: #{tpu_custom_call.1} parent=0 // pred_fallthru
    _
  // Predicated region
  $region70: #{tpu_custom_call.1} parent=0 // pred_check
    _
  $region71: #{tpu_custom_call.1} parent=0 // pred_check_branch
    %60 = sbr.rel (0) target = $region73
  $region72: #{tpu_custom_call.1} parent=0 // pred_region
    _
  $region73: #{tpu_custom_call.1} parent=0 // pred_fallthru
    _
  %v62 = vld [vmem:[%s0] sm:$0xf]
  %v63 = vld [vmem:[%s0 + $0x4] sm:$0xf]
  %v64 = vld [vmem:[%s0 + $0x8] sm:$0xf]
  %v65 = vld [vmem:[%s0 + $0xc] sm:$0xf]
  %v66 = vld [vmem:[%s0 + $0x10] sm:$0xf]
  %v67 = vld [vmem:[%s0 + $0x14] sm:$0xf]
  %v68 = vld [vmem:[%s0 + $0x18] sm:$0xf]
  %v69 = vld [vmem:[%s0 + $0x1c] sm:$0xf]
  %v70 = vld [vmem:[%s0 + $0x20] sm:$0xf]
  %v71 = vld [vmem:[%s0 + $0x24] sm:$0xf]
  %v72 = vld [vmem:[%s0 + $0x28] sm:$0xf]
  %v73 = vld [vmem:[%s0 + $0x2c] sm:$0xf]
  %v74 = vld [vmem:[%s0 + $0x30] sm:$0xf]
  %v75 = vld [vmem:[%s0 + $0x34] sm:$0xf]
  %v76 = vld [vmem:[%s0 + $0x38] sm:$0xf]
  %v77 = vld [vmem:[%s0 + $0x3c] sm:$0xf]
  %v78 = vld [vmem:[%s0 + $0x40] sm:$0xf]
  %v79 = vld [vmem:[%s0 + $0x44] sm:$0xf]
  %v80 = vld [vmem:[%s0 + $0x48] sm:$0xf]
  %v81 = vld [vmem:[%s0 + $0x4c] sm:$0xf]
  %v82 = vld [vmem:[%s0 + $0x50] sm:$0xf]
  %v83 = vld [vmem:[%s0 + $0x54] sm:$0xf]
  %v84 = vld [vmem:[%s0 + $0x58] sm:$0xf]
  %v85 = vld [vmem:[%s0 + $0x5c] sm:$0xf]
  %v86 = vld [vmem:[%s0 + $0x60] sm:$0xf]
  %v87 = vld [vmem:[%s0 + $0x64] sm:$0xf]
  %v88 = vld [vmem:[%s0 + $0x68] sm:$0xf]
  %v89 = vld [vmem:[%s0 + $0x6c] sm:$0xf]
  %v90 = vld [vmem:[%s0 + $0x70] sm:$0xf]
  %v91 = vld [vmem:[%s0 + $0x74] sm:$0xf]
  %v92 = vld [vmem:[%s0 + $0x78] sm:$0xf]
  %v93 = vld [vmem:[%s0 + $0x7c] sm:$0xf]
  %v94 = vld [vmem:[%s1] sm:$0xf]
  %v95 = vld [vmem:[%s1 + $0x4] sm:$0xf]
  %v96 = vld [vmem:[%s1 + $0x8] sm:$0xf]
  %v97 = vld [vmem:[%s1 + $0xc] sm:$0xf]
  %v98 = vld [vmem:[%s1 + $0x10] sm:$0xf]
  %v99 = vld [vmem:[%s1 + $0x14] sm:$0xf]
  %v100 = vld [vmem:[%s1 + $0x18] sm:$0xf]
  %v101 = vld [vmem:[%s1 + $0x1c] sm:$0xf]
  %v102 = vld [vmem:[%s1 + $0x20] sm:$0xf]
  %v103 = vld [vmem:[%s1 + $0x24] sm:$0xf]
  %v104 = vld [vmem:[%s1 + $0x28] sm:$0xf]
  %v105 = vld [vmem:[%s1 + $0x2c] sm:$0xf]
  %v106 = vld [vmem:[%s1 + $0x30] sm:$0xf]
  %v107 = vld [vmem:[%s1 + $0x34] sm:$0xf]
  %v108 = vld [vmem:[%s1 + $0x38] sm:$0xf]
  %v109 = vld [vmem:[%s1 + $0x3c] sm:$0xf]
  %v110 = vld [vmem:[%s1 + $0x40] sm:$0xf]
  %v111 = vld [vmem:[%s1 + $0x44] sm:$0xf]
  %v112 = vld [vmem:[%s1 + $0x48] sm:$0xf]
  %v113 = vld [vmem:[%s1 + $0x4c] sm:$0xf]
  %v114 = vld [vmem:[%s1 + $0x50] sm:$0xf]
  %v115 = vld [vmem:[%s1 + $0x54] sm:$0xf]
  %v116 = vld [vmem:[%s1 + $0x58] sm:$0xf]
  %v117 = vld [vmem:[%s1 + $0x5c] sm:$0xf]
  %v118 = vld [vmem:[%s1 + $0x60] sm:$0xf]
  %v119 = vld [vmem:[%s1 + $0x64] sm:$0xf]
  %v120 = vld [vmem:[%s1 + $0x68] sm:$0xf]
  %v121 = vld [vmem:[%s1 + $0x6c] sm:$0xf]
  %v122 = vld [vmem:[%s1 + $0x70] sm:$0xf]
  %v123 = vld [vmem:[%s1 + $0x74] sm:$0xf]
  %v124 = vld [vmem:[%s1 + $0x78] sm:$0xf]
  %v125 = vld [vmem:[%s1 + $0x7c] sm:$0xf]
  %v126 = vld [vmem:[%s2] sm:$0xff]
  %v127 = vld [vmem:[%s2 + $0x8] sm:$0xff]
  %v128 = vld [vmem:[%s2 + $0x10] sm:$0xff]
  %v129 = vld [vmem:[%s2 + $0x18] sm:$0xff]
  %v130 = vld [vmem:[%s2 + $0x20] sm:$0xff]
  %v131 = vld [vmem:[%s2 + $0x28] sm:$0xff]
  %v132 = vld [vmem:[%s2 + $0x30] sm:$0xff]
  %v133 = vld [vmem:[%s2 + $0x38] sm:$0xff]
  %v134 = vld [vmem:[%s2 + $0x40] sm:$0xff]
  %v135 = vld [vmem:[%s2 + $0x48] sm:$0xff]
  %v136 = vld [vmem:[%s2 + $0x50] sm:$0xff]
  %v137 = vld [vmem:[%s2 + $0x58] sm:$0xff]
  %v138 = vld [vmem:[%s2 + $0x60] sm:$0xff]
  %v139 = vld [vmem:[%s2 + $0x68] sm:$0xff]
  %v140 = vld [vmem:[%s2 + $0x70] sm:$0xff]
  %v141 = vld [vmem:[%s2 + $0x78] sm:$0xff]
  %v142 = vld [vmem:[%s2 + $0x80] sm:$0xff]
  %v143 = vld [vmem:[%s2 + $0x88] sm:$0xff]
  %v144 = vld [vmem:[%s2 + $0x90] sm:$0xff]
  %v145 = vld [vmem:[%s2 + $0x98] sm:$0xff]
  %v146 = vld [vmem:[%s2 + $0xa0] sm:$0xff]
  %v147 = vld [vmem:[%s2 + $0xa8] sm:$0xff]
  %v148 = vld [vmem:[%s2 + $0xb0] sm:$0xff]
  %v149 = vld [vmem:[%s2 + $0xb8] sm:$0xff]
  %v150 = vld [vmem:[%s2 + $0xc0] sm:$0xff]
  %v151 = vld [vmem:[%s2 + $0xc8] sm:$0xff]
  %v152 = vld [vmem:[%s2 + $0xd0] sm:$0xff]
  %v153 = vld [vmem:[%s2 + $0xd8] sm:$0xff]
  %v154 = vld [vmem:[%s2 + $0xe0] sm:$0xff]
  %v155 = vld [vmem:[%s2 + $0xe8] sm:$0xff]
  %v156 = vld [vmem:[%s2 + $0xf0] sm:$0xff]
  %v157 = vld [vmem:[%s2 + $0xf8] sm:$0xff]
  %v158 = vld [vmem:[%s2 + $0x100] sm:$0xff]
  %v159 = vld [vmem:[%s2 + $0x108] sm:$0xff]
  %v160 = vld [vmem:[%s2 + $0x110] sm:$0xff]
  %v161 = vld [vmem:[%s2 + $0x118] sm:$0xff]
  %v162 = vld [vmem:[%s2 + $0x120] sm:$0xff]
  %v163 = vld [vmem:[%s2 + $0x128] sm:$0xff]
  %v164 = vld [vmem:[%s2 + $0x130] sm:$0xff]
  %v165 = vld [vmem:[%s2 + $0x138] sm:$0xff]
  %v166 = vld [vmem:[%s2 + $0x140] sm:$0xff]
  %v167 = vld [vmem:[%s2 + $0x148] sm:$0xff]
  %v168 = vld [vmem:[%s2 + $0x150] sm:$0xff]
  %v169 = vld [vmem:[%s2 + $0x158] sm:$0xff]
  %v170 = vld [vmem:[%s2 + $0x160] sm:$0xff]
  %v171 = vld [vmem:[%s2 + $0x168] sm:$0xff]
  %v172 = vld [vmem:[%s2 + $0x170] sm:$0xff]
  %v173 = vld [vmem:[%s2 + $0x178] sm:$0xff]
  %v174 = vld [vmem:[%s2 + $0x180] sm:$0xff]
  %v175 = vld [vmem:[%s2 + $0x188] sm:$0xff]
  %v176 = vld [vmem:[%s2 + $0x190] sm:$0xff]
  %v177 = vld [vmem:[%s2 + $0x198] sm:$0xff]
  %v178 = vld [vmem:[%s2 + $0x1a0] sm:$0xff]
  %v179 = vld [vmem:[%s2 + $0x1a8] sm:$0xff]
  %v180 = vld [vmem:[%s2 + $0x1b0] sm:$0xff]
  %v181 = vld [vmem:[%s2 + $0x1b8] sm:$0xff]
  %v182 = vld [vmem:[%s2 + $0x1c0] sm:$0xff]
  %v183 = vld [vmem:[%s2 + $0x1c8] sm:$0xff]
  %v184 = vld [vmem:[%s2 + $0x1d0] sm:$0xff]
  %v185 = vld [vmem:[%s2 + $0x1d8] sm:$0xff]
  %v186 = vld [vmem:[%s2 + $0x1e0] sm:$0xff]
  %v187 = vld [vmem:[%s2 + $0x1e8] sm:$0xff]
  %v188 = vld [vmem:[%s2 + $0x1f0] sm:$0xff]
  %v189 = vld [vmem:[%s2 + $0x1f8] sm:$0xff]
  %v190 = vld [vmem:[%s2 + $0x200] sm:$0xff]
  %v191 = vld [vmem:[%s2 + $0x208] sm:$0xff]
  %v192 = vld [vmem:[%s2 + $0x210] sm:$0xff]
  %v193 = vld [vmem:[%s2 + $0x218] sm:$0xff]
  %v194 = vld [vmem:[%s2 + $0x220] sm:$0xff]
  %v195 = vld [vmem:[%s2 + $0x228] sm:$0xff]
  %v196 = vld [vmem:[%s2 + $0x230] sm:$0xff]
  %v197 = vld [vmem:[%s2 + $0x238] sm:$0xff]
  %v198 = vld [vmem:[%s2 + $0x240] sm:$0xff]
  %v199 = vld [vmem:[%s2 + $0x248] sm:$0xff]
  %v200 = vld [vmem:[%s2 + $0x250] sm:$0xff]
  %v201 = vld [vmem:[%s2 + $0x258] sm:$0xff]
  %v202 = vld [vmem:[%s2 + $0x260] sm:$0xff]
  %v203 = vld [vmem:[%s2 + $0x268] sm:$0xff]
  %v204 = vld [vmem:[%s2 + $0x270] sm:$0xff]
  %v205 = vld [vmem:[%s2 + $0x278] sm:$0xff]
  %v206 = vld [vmem:[%s2 + $0x280] sm:$0xff]
  %v207 = vld [vmem:[%s2 + $0x288] sm:$0xff]
  %v208 = vld [vmem:[%s2 + $0x290] sm:$0xff]
  %v209 = vld [vmem:[%s2 + $0x298] sm:$0xff]
  %v210 = vld [vmem:[%s2 + $0x2a0] sm:$0xff]
  %v211 = vld [vmem:[%s2 + $0x2a8] sm:$0xff]
  %v212 = vld [vmem:[%s2 + $0x2b0] sm:$0xff]
  %v213 = vld [vmem:[%s2 + $0x2b8] sm:$0xff]
  %v214 = vld [vmem:[%s2 + $0x2c0] sm:$0xff]
  %v215 = vld [vmem:[%s2 + $0x2c8] sm:$0xff]
  %v216 = vld [vmem:[%s2 + $0x2d0] sm:$0xff]
  %v217 = vld [vmem:[%s2 + $0x2d8] sm:$0xff]
  %v218 = vld [vmem:[%s2 + $0x2e0] sm:$0xff]
  %v219 = vld [vmem:[%s2 + $0x2e8] sm:$0xff]
  %v220 = vld [vmem:[%s2 + $0x2f0] sm:$0xff]
  %v221 = vld [vmem:[%s2 + $0x2f8] sm:$0xff]
  %v222 = vld [vmem:[%s2 + $0x300] sm:$0xff]
  %v223 = vld [vmem:[%s2 + $0x308] sm:$0xff]
  %v224 = vld [vmem:[%s2 + $0x310] sm:$0xff]
  %v225 = vld [vmem:[%s2 + $0x318] sm:$0xff]
  %v226 = vld [vmem:[%s2 + $0x320] sm:$0xff]
  %v227 = vld [vmem:[%s2 + $0x328] sm:$0xff]
  %v228 = vld [vmem:[%s2 + $0x330] sm:$0xff]
  %v229 = vld [vmem:[%s2 + $0x338] sm:$0xff]
  %v230 = vld [vmem:[%s2 + $0x340] sm:$0xff]
  %v231 = vld [vmem:[%s2 + $0x348] sm:$0xff]
  %v232 = vld [vmem:[%s2 + $0x350] sm:$0xff]
  %v233 = vld [vmem:[%s2 + $0x358] sm:$0xff]
  %v234 = vld [vmem:[%s2 + $0x360] sm:$0xff]
  %v235 = vld [vmem:[%s2 + $0x368] sm:$0xff]
  %v236 = vld [vmem:[%s2 + $0x370] sm:$0xff]
  %v237 = vld [vmem:[%s2 + $0x378] sm:$0xff]
  %v238 = vld [vmem:[%s3] sm:$0xff]
  %v239 = vld [vmem:[%s3 + $0x8] sm:$0xff]
  %v242 = vlaneseq
  %v243 = vshrl.u32 %v242, 7
  %v244 = vsub.s32 0, %v243
  %v245 = vrot.slane %v238, %v244
  %v246 = vlaneseq
  %v247 = vshrl.u32 %v246, 7
  %v248 = vsub.s32 1, %v247
  %v249 = vrot.slane %v238, %v248
  %v250 = vlaneseq
  %v251 = vshrl.u32 %v250, 7
  %v252 = vsub.s32 2, %v251
  %v253 = vrot.slane %v238, %v252
  %v254 = vlaneseq
  %v255 = vshrl.u32 %v254, 7
  %v256 = vsub.s32 3, %v255
  %v257 = vrot.slane %v238, %v256
  %v258 = vlaneseq
  %v259 = vshrl.u32 %v258, 7
  %v260 = vsub.s32 4, %v259
  %v261 = vrot.slane %v238, %v260
  %v262 = vlaneseq
  %v263 = vshrl.u32 %v262, 7
  %v264 = vsub.s32 5, %v263
  %v265 = vrot.slane %v238, %v264
  %v266 = vlaneseq
  %v267 = vshrl.u32 %v266, 7
  %v268 = vsub.s32 6, %v267
  %v269 = vrot.slane %v238, %v268
  %v270 = vlaneseq
  %v271 = vshrl.u32 %v270, 7
  %v272 = vsub.s32 7, %v271
  %v273 = vrot.slane %v238, %v272
  %v274 = vlaneseq
  %v275 = vshrl.u32 %v274, 7
  %v276 = vsub.s32 0, %v275
  %v277 = vrot.slane %v239, %v276
  %v278 = vlaneseq
  %v279 = vshrl.u32 %v278, 7
  %v280 = vsub.s32 1, %v279
  %v281 = vrot.slane %v239, %v280
  %v282 = vlaneseq
  %v283 = vshrl.u32 %v282, 7
  %v284 = vsub.s32 2, %v283
  %v285 = vrot.slane %v239, %v284
  %v286 = vlaneseq
  %v287 = vshrl.u32 %v286, 7
  %v288 = vsub.s32 3, %v287
  %v289 = vrot.slane %v239, %v288
  %v290 = vlaneseq
  %v291 = vshrl.u32 %v290, 7
  %v292 = vsub.s32 4, %v291
  %v293 = vrot.slane %v239, %v292
  %v294 = vlaneseq
  %v295 = vshrl.u32 %v294, 7
  %v296 = vsub.s32 5, %v295
  %v297 = vrot.slane %v239, %v296
  %v298 = vlaneseq
  %v299 = vshrl.u32 %v298, 7
  %v300 = vsub.s32 6, %v299
  %v301 = vrot.slane %v239, %v300
  %v302 = vlaneseq
  %v303 = vshrl.u32 %v302, 7
  %v304 = vsub.s32 7, %v303
  %v305 = vrot.slane %v239, %v304
  %v354 = vunpack.c.l.b16 %v62
  %v355 = vunpack.c.l.b16 %v63
  %v356 = vunpack.c.l.b16 %v64
  %v357 = vunpack.c.l.b16 %v65
  %v358 = vunpack.c.l.b16 %v66
  %v359 = vunpack.c.l.b16 %v67
  %v360 = vunpack.c.l.b16 %v68
  %v361 = vunpack.c.l.b16 %v69
  %v362 = vunpack.c.l.b16 %v70
  %v363 = vunpack.c.l.b16 %v71
  %v364 = vunpack.c.l.b16 %v72
  %v365 = vunpack.c.l.b16 %v73
  %v366 = vunpack.c.l.b16 %v74
  %v367 = vunpack.c.l.b16 %v75
  %v368 = vunpack.c.l.b16 %v76
  %v369 = vunpack.c.l.b16 %v77
  %v370 = vunpack.c.l.b16 %v78
  %v371 = vunpack.c.l.b16 %v79
  %v372 = vunpack.c.l.b16 %v80
  %v373 = vunpack.c.l.b16 %v81
  %v374 = vunpack.c.l.b16 %v82
  %v375 = vunpack.c.l.b16 %v83
  %v376 = vunpack.c.l.b16 %v84
  %v377 = vunpack.c.l.b16 %v85
  %v378 = vunpack.c.l.b16 %v86
  %v379 = vunpack.c.l.b16 %v87
  %v380 = vunpack.c.l.b16 %v88
  %v381 = vunpack.c.l.b16 %v89
  %v382 = vunpack.c.l.b16 %v90
  %v383 = vunpack.c.l.b16 %v91
  %v384 = vunpack.c.l.b16 %v92
  %v385 = vunpack.c.l.b16 %v93
  %v386 = vpack.c.b16 %v355, %v354
  %v387 = vpack.c.b16 %v357, %v356
  %v388 = vpack.c.b16 %v359, %v358
  %v389 = vpack.c.b16 %v361, %v360
  %v390 = vpack.c.b16 %v363, %v362
  %v391 = vpack.c.b16 %v365, %v364
  %v392 = vpack.c.b16 %v367, %v366
  %v393 = vpack.c.b16 %v369, %v368
  %v394 = vpack.c.b16 %v371, %v370
  %v395 = vpack.c.b16 %v373, %v372
  %v396 = vpack.c.b16 %v375, %v374
  %v397 = vpack.c.b16 %v377, %v376
  %v398 = vpack.c.b16 %v379, %v378
  %v399 = vpack.c.b16 %v381, %v380
  %v400 = vpack.c.b16 %v383, %v382
  %v401 = vpack.c.b16 %v385, %v384
  %v514 = vunpack.c.l.b16 %v126
  %v515 = vunpack.c.h.b16 %v126
  %v516 = vunpack.c.l.b16 %v127
  %v517 = vunpack.c.h.b16 %v127
  %v518 = vunpack.c.l.b16 %v128
  %v519 = vunpack.c.h.b16 %v128
  %v520 = vunpack.c.l.b16 %v129
  %v521 = vunpack.c.h.b16 %v129
  %v522 = vunpack.c.l.b16 %v130
  %v523 = vunpack.c.h.b16 %v130
  %v524 = vunpack.c.l.b16 %v131
  %v525 = vunpack.c.h.b16 %v131
  %v526 = vunpack.c.l.b16 %v132
  %v527 = vunpack.c.h.b16 %v132
  %v528 = vunpack.c.l.b16 %v133
  %v529 = vunpack.c.h.b16 %v133
  %v530 = vunpack.c.l.b16 %v134
  %v531 = vunpack.c.h.b16 %v134
  %v532 = vunpack.c.l.b16 %v135
  %v533 = vunpack.c.h.b16 %v135
  %v534 = vunpack.c.l.b16 %v136
  %v535 = vunpack.c.h.b16 %v136
  %v536 = vunpack.c.l.b16 %v137
  %v537 = vunpack.c.h.b16 %v137
  %v538 = vunpack.c.l.b16 %v138
  %v539 = vunpack.c.h.b16 %v138
  %v540 = vunpack.c.l.b16 %v139
  %v541 = vunpack.c.h.b16 %v139
  %v542 = vunpack.c.l.b16 %v140
  %v543 = vunpack.c.h.b16 %v140
  %v544 = vunpack.c.l.b16 %v141
  %v545 = vunpack.c.h.b16 %v141
  %v546 = vunpack.c.l.b16 %v142
  %v547 = vunpack.c.h.b16 %v142
  %v548 = vunpack.c.l.b16 %v143
  %v549 = vunpack.c.h.b16 %v143
  %v550 = vunpack.c.l.b16 %v144
  %v551 = vunpack.c.h.b16 %v144
  %v552 = vunpack.c.l.b16 %v145
  %v553 = vunpack.c.h.b16 %v145
  %v554 = vunpack.c.l.b16 %v146
  %v555 = vunpack.c.h.b16 %v146
  %v556 = vunpack.c.l.b16 %v147
  %v557 = vunpack.c.h.b16 %v147
  %v558 = vunpack.c.l.b16 %v148
  %v559 = vunpack.c.h.b16 %v148
  %v560 = vunpack.c.l.b16 %v149
  %v561 = vunpack.c.h.b16 %v149
  %v562 = vunpack.c.l.b16 %v150
  %v563 = vunpack.c.h.b16 %v150
  %v564 = vunpack.c.l.b16 %v151
  %v565 = vunpack.c.h.b16 %v151
  %v566 = vunpack.c.l.b16 %v152
  %v567 = vunpack.c.h.b16 %v152
  %v568 = vunpack.c.l.b16 %v153
  %v569 = vunpack.c.h.b16 %v153
  %v570 = vunpack.c.l.b16 %v154
  %v571 = vunpack.c.h.b16 %v154
  %v572 = vunpack.c.l.b16 %v155
  %v573 = vunpack.c.h.b16 %v155
  %v574 = vunpack.c.l.b16 %v156
  %v575 = vunpack.c.h.b16 %v156
  %v576 = vunpack.c.l.b16 %v157
  %v577 = vunpack.c.h.b16 %v157
  %v578 = vunpack.c.l.b16 %v158
  %v579 = vunpack.c.h.b16 %v158
  %v580 = vunpack.c.l.b16 %v159
  %v581 = vunpack.c.h.b16 %v159
  %v582 = vunpack.c.l.b16 %v160
  %v583 = vunpack.c.h.b16 %v160
  %v584 = vunpack.c.l.b16 %v161
  %v585 = vunpack.c.h.b16 %v161
  %v586 = vunpack.c.l.b16 %v162
  %v587 = vunpack.c.h.b16 %v162
  %v588 = vunpack.c.l.b16 %v163
  %v589 = vunpack.c.h.b16 %v163
  %v590 = vunpack.c.l.b16 %v164
  %v591 = vunpack.c.h.b16 %v164
  %v592 = vunpack.c.l.b16 %v165
  %v593 = vunpack.c.h.b16 %v165
  %v594 = vunpack.c.l.b16 %v166
  %v595 = vunpack.c.h.b16 %v166
  %v596 = vunpack.c.l.b16 %v167
  %v597 = vunpack.c.h.b16 %v167
  %v598 = vunpack.c.l.b16 %v168
  %v599 = vunpack.c.h.b16 %v168
  %v600 = vunpack.c.l.b16 %v169
  %v601 = vunpack.c.h.b16 %v169
  %v602 = vunpack.c.l.b16 %v170
  %v603 = vunpack.c.h.b16 %v170
  %v604 = vunpack.c.l.b16 %v171
  %v605 = vunpack.c.h.b16 %v171
  %v606 = vunpack.c.l.b16 %v172
  %v607 = vunpack.c.h.b16 %v172
  %v608 = vunpack.c.l.b16 %v173
  %v609 = vunpack.c.h.b16 %v173
  %v610 = vunpack.c.l.b16 %v174
  %v611 = vunpack.c.h.b16 %v174
  %v612 = vunpack.c.l.b16 %v175
  %v613 = vunpack.c.h.b16 %v175
  %v614 = vunpack.c.l.b16 %v176
  %v615 = vunpack.c.h.b16 %v176
  %v616 = vunpack.c.l.b16 %v177
  %v617 = vunpack.c.h.b16 %v177
  %v618 = vunpack.c.l.b16 %v178
  %v619 = vunpack.c.h.b16 %v178
  %v620 = vunpack.c.l.b16 %v179
  %v621 = vunpack.c.h.b16 %v179
  %v622 = vunpack.c.l.b16 %v180
  %v623 = vunpack.c.h.b16 %v180
  %v624 = vunpack.c.l.b16 %v181
  %v625 = vunpack.c.h.b16 %v181
  %v626 = vunpack.c.l.b16 %v182
  %v627 = vunpack.c.h.b16 %v182
  %v628 = vunpack.c.l.b16 %v183
  %v629 = vunpack.c.h.b16 %v183
  %v630 = vunpack.c.l.b16 %v184
  %v631 = vunpack.c.h.b16 %v184
  %v632 = vunpack.c.l.b16 %v185
  %v633 = vunpack.c.h.b16 %v185
  %v634 = vunpack.c.l.b16 %v186
  %v635 = vunpack.c.h.b16 %v186
  %v636 = vunpack.c.l.b16 %v187
  %v637 = vunpack.c.h.b16 %v187
  %v638 = vunpack.c.l.b16 %v188
  %v639 = vunpack.c.h.b16 %v188
  %v640 = vunpack.c.l.b16 %v189
  %v641 = vunpack.c.h.b16 %v189
  %v642 = vunpack.c.l.b16 %v190
  %v643 = vunpack.c.h.b16 %v190
  %v644 = vunpack.c.l.b16 %v191
  %v645 = vunpack.c.h.b16 %v191
  %v646 = vunpack.c.l.b16 %v192
  %v647 = vunpack.c.h.b16 %v192
  %v648 = vunpack.c.l.b16 %v193
  %v649 = vunpack.c.h.b16 %v193
  %v650 = vunpack.c.l.b16 %v194
  %v651 = vunpack.c.h.b16 %v194
  %v652 = vunpack.c.l.b16 %v195
  %v653 = vunpack.c.h.b16 %v195
  %v654 = vunpack.c.l.b16 %v196
  %v655 = vunpack.c.h.b16 %v196
  %v656 = vunpack.c.l.b16 %v197
  %v657 = vunpack.c.h.b16 %v197
  %v658 = vunpack.c.l.b16 %v198
  %v659 = vunpack.c.h.b16 %v198
  %v660 = vunpack.c.l.b16 %v199
  %v661 = vunpack.c.h.b16 %v199
  %v662 = vunpack.c.l.b16 %v200
  %v663 = vunpack.c.h.b16 %v200
  %v664 = vunpack.c.l.b16 %v201
  %v665 = vunpack.c.h.b16 %v201
  %v666 = vunpack.c.l.b16 %v202
  %v667 = vunpack.c.h.b16 %v202
  %v668 = vunpack.c.l.b16 %v203
  %v669 = vunpack.c.h.b16 %v203
  %v670 = vunpack.c.l.b16 %v204
  %v671 = vunpack.c.h.b16 %v204
  %v672 = vunpack.c.l.b16 %v205
  %v673 = vunpack.c.h.b16 %v205
  %v674 = vunpack.c.l.b16 %v206
  %v675 = vunpack.c.h.b16 %v206
  %v676 = vunpack.c.l.b16 %v207
  %v677 = vunpack.c.h.b16 %v207
  %v678 = vunpack.c.l.b16 %v208
  %v679 = vunpack.c.h.b16 %v208
  %v680 = vunpack.c.l.b16 %v209
  %v681 = vunpack.c.h.b16 %v209
  %v682 = vunpack.c.l.b16 %v210
  %v683 = vunpack.c.h.b16 %v210
  %v684 = vunpack.c.l.b16 %v211
  %v685 = vunpack.c.h.b16 %v211
  %v686 = vunpack.c.l.b16 %v212
  %v687 = vunpack.c.h.b16 %v212
  %v688 = vunpack.c.l.b16 %v213
  %v689 = vunpack.c.h.b16 %v213
  %v690 = vunpack.c.l.b16 %v214
  %v691 = vunpack.c.h.b16 %v214
  %v692 = vunpack.c.l.b16 %v215
  %v693 = vunpack.c.h.b16 %v215
  %v694 = vunpack.c.l.b16 %v216
  %v695 = vunpack.c.h.b16 %v216
  %v696 = vunpack.c.l.b16 %v217
  %v697 = vunpack.c.h.b16 %v217
  %v698 = vunpack.c.l.b16 %v218
  %v699 = vunpack.c.h.b16 %v218
  %v700 = vunpack.c.l.b16 %v219
  %v701 = vunpack.c.h.b16 %v219
  %v702 = vunpack.c.l.b16 %v220
  %v703 = vunpack.c.h.b16 %v220
  %v704 = vunpack.c.l.b16 %v221
  %v705 = vunpack.c.h.b16 %v221
  %v706 = vunpack.c.l.b16 %v222
  %v707 = vunpack.c.h.b16 %v222
  %v708 = vunpack.c.l.b16 %v223
  %v709 = vunpack.c.h.b16 %v223
  %v710 = vunpack.c.l.b16 %v224
  %v711 = vunpack.c.h.b16 %v224
  %v712 = vunpack.c.l.b16 %v225
  %v713 = vunpack.c.h.b16 %v225
  %v714 = vunpack.c.l.b16 %v226
  %v715 = vunpack.c.h.b16 %v226
  %v716 = vunpack.c.l.b16 %v227
  %v717 = vunpack.c.h.b16 %v227
  %v718 = vunpack.c.l.b16 %v228
  %v719 = vunpack.c.h.b16 %v228
  %v720 = vunpack.c.l.b16 %v229
  %v721 = vunpack.c.h.b16 %v229
  %v722 = vunpack.c.l.b16 %v230
  %v723 = vunpack.c.h.b16 %v230
  %v724 = vunpack.c.l.b16 %v231
  %v725 = vunpack.c.h.b16 %v231
  %v726 = vunpack.c.l.b16 %v232
  %v727 = vunpack.c.h.b16 %v232
  %v728 = vunpack.c.l.b16 %v233
  %v729 = vunpack.c.h.b16 %v233
  %v730 = vunpack.c.l.b16 %v234
  %v731 = vunpack.c.h.b16 %v234
  %v732 = vunpack.c.l.b16 %v235
  %v733 = vunpack.c.h.b16 %v235
  %v734 = vunpack.c.l.b16 %v236
  %v735 = vunpack.c.h.b16 %v236
  %v736 = vunpack.c.l.b16 %v237
  %v737 = vunpack.c.h.b16 %v237
  %v738 = vpack.c.b16 %v530, %v514
  %v739 = vpack.c.b16 %v531, %v515
  %v740 = vpack.c.b16 %v532, %v516
  %v741 = vpack.c.b16 %v533, %v517
  %v742 = vpack.c.b16 %v534, %v518
  %v743 = vpack.c.b16 %v535, %v519
  %v744 = vpack.c.b16 %v536, %v520
  %v745 = vpack.c.b16 %v537, %v521
  %v746 = vpack.c.b16 %v538, %v522
  %v747 = vpack.c.b16 %v539, %v523
  %v748 = vpack.c.b16 %v540, %v524
  %v749 = vpack.c.b16 %v541, %v525
  %v750 = vpack.c.b16 %v542, %v526
  %v751 = vpack.c.b16 %v543, %v527
  %v752 = vpack.c.b16 %v544, %v528
  %v753 = vpack.c.b16 %v545, %v529
  %v754 = vpack.c.b16 %v562, %v546
  %v755 = vpack.c.b16 %v563, %v547
  %v756 = vpack.c.b16 %v564, %v548
  %v757 = vpack.c.b16 %v565, %v549
  %v758 = vpack.c.b16 %v566, %v550
  %v759 = vpack.c.b16 %v567, %v551
  %v760 = vpack.c.b16 %v568, %v552
  %v761 = vpack.c.b16 %v569, %v553
  %v762 = vpack.c.b16 %v570, %v554
  %v763 = vpack.c.b16 %v571, %v555
  %v764 = vpack.c.b16 %v572, %v556
  %v765 = vpack.c.b16 %v573, %v557
  %v766 = vpack.c.b16 %v574, %v558
  %v767 = vpack.c.b16 %v575, %v559
  %v768 = vpack.c.b16 %v576, %v560
  %v769 = vpack.c.b16 %v577, %v561
  %v770 = vpack.c.b16 %v594, %v578
  %v771 = vpack.c.b16 %v595, %v579
  %v772 = vpack.c.b16 %v596, %v580
  %v773 = vpack.c.b16 %v597, %v581
  %v774 = vpack.c.b16 %v598, %v582
  %v775 = vpack.c.b16 %v599, %v583
  %v776 = vpack.c.b16 %v600, %v584
  %v777 = vpack.c.b16 %v601, %v585
  %v778 = vpack.c.b16 %v602, %v586
  %v779 = vpack.c.b16 %v603, %v587
  %v780 = vpack.c.b16 %v604, %v588
  %v781 = vpack.c.b16 %v605, %v589
  %v782 = vpack.c.b16 %v606, %v590
  %v783 = vpack.c.b16 %v607, %v591
  %v784 = vpack.c.b16 %v608, %v592
  %v785 = vpack.c.b16 %v609, %v593
  %v786 = vpack.c.b16 %v626, %v610
  %v787 = vpack.c.b16 %v627, %v611
  %v788 = vpack.c.b16 %v628, %v612
  %v789 = vpack.c.b16 %v629, %v613
  %v790 = vpack.c.b16 %v630, %v614
  %v791 = vpack.c.b16 %v631, %v615
  %v792 = vpack.c.b16 %v632, %v616
  %v793 = vpack.c.b16 %v633, %v617
  %v794 = vpack.c.b16 %v634, %v618
  %v795 = vpack.c.b16 %v635, %v619
  %v796 = vpack.c.b16 %v636, %v620
  %v797 = vpack.c.b16 %v637, %v621
  %v798 = vpack.c.b16 %v638, %v622
  %v799 = vpack.c.b16 %v639, %v623
  %v800 = vpack.c.b16 %v640, %v624
  %v801 = vpack.c.b16 %v641, %v625
  %v802 = vpack.c.b16 %v658, %v642
  %v803 = vpack.c.b16 %v659, %v643
  %v804 = vpack.c.b16 %v660, %v644
  %v805 = vpack.c.b16 %v661, %v645
  %v806 = vpack.c.b16 %v662, %v646
  %v807 = vpack.c.b16 %v663, %v647
  %v808 = vpack.c.b16 %v664, %v648
  %v809 = vpack.c.b16 %v665, %v649
  %v810 = vpack.c.b16 %v666, %v650
  %v811 = vpack.c.b16 %v667, %v651
  %v812 = vpack.c.b16 %v668, %v652
  %v813 = vpack.c.b16 %v669, %v653
  %v814 = vpack.c.b16 %v670, %v654
  %v815 = vpack.c.b16 %v671, %v655
  %v816 = vpack.c.b16 %v672, %v656
  %v817 = vpack.c.b16 %v673, %v657
  %v818 = vpack.c.b16 %v690, %v674
  %v819 = vpack.c.b16 %v691, %v675
  %v820 = vpack.c.b16 %v692, %v676
  %v821 = vpack.c.b16 %v693, %v677
  %v822 = vpack.c.b16 %v694, %v678
  %v823 = vpack.c.b16 %v695, %v679
  %v824 = vpack.c.b16 %v696, %v680
  %v825 = vpack.c.b16 %v697, %v681
  %v826 = vpack.c.b16 %v698, %v682
  %v827 = vpack.c.b16 %v699, %v683
  %v828 = vpack.c.b16 %v700, %v684
  %v829 = vpack.c.b16 %v701, %v685
  %v830 = vpack.c.b16 %v702, %v686
  %v831 = vpack.c.b16 %v703, %v687
  %v832 = vpack.c.b16 %v704, %v688
  %v833 = vpack.c.b16 %v705, %v689
  %v834 = vpack.c.b16 %v722, %v706
  %v835 = vpack.c.b16 %v723, %v707
  %v836 = vpack.c.b16 %v724, %v708
  %v837 = vpack.c.b16 %v725, %v709
  %v838 = vpack.c.b16 %v726, %v710
  %v839 = vpack.c.b16 %v727, %v711
  %v840 = vpack.c.b16 %v728, %v712
  %v841 = vpack.c.b16 %v729, %v713
  %v842 = vpack.c.b16 %v730, %v714
  %v843 = vpack.c.b16 %v731, %v715
  %v844 = vpack.c.b16 %v732, %v716
  %v845 = vpack.c.b16 %v733, %v717
  %v846 = vpack.c.b16 %v734, %v718
  %v847 = vpack.c.b16 %v735, %v719
  %v848 = vpack.c.b16 %v736, %v720
  %v849 = vpack.c.b16 %v737, %v721
  %vm962 = vcmask 916480
  %v964 = vsel %vm962, %v386, 0
  %v967 = vsel %vm962, %v387, 0
  %v970 = vsel %vm962, %v388, 0
  %v973 = vsel %vm962, %v389, 0
  %v976 = vsel %vm962, %v390, 0
  %v979 = vsel %vm962, %v391, 0
  %v982 = vsel %vm962, %v392, 0
  %v985 = vsel %vm962, %v393, 0
  %v988 = vsel %vm962, %v394, 0
  %v991 = vsel %vm962, %v395, 0
  %v994 = vsel %vm962, %v396, 0
  %v997 = vsel %vm962, %v397, 0
  %v1000 = vsel %vm962, %v398, 0
  %v1003 = vsel %vm962, %v399, 0
  %v1006 = vsel %vm962, %v400, 0
  %v1009 = vsel %vm962, %v401, 0
  %1011 = vmatprep.subr.bf16.mxu0 %v739
  %1012 = vmatpush1.bf16.msra.mxu0 %v738
  %1013 = vmatprep.subr.bf16.mxu0 %v755
  %1014 = vmatpush1.bf16.msra.mxu0 %v754
  %1015 = vmatprep.subr.bf16.mxu0 %v771
  %1016 = vmatpush1.bf16.msra.mxu0 %v770
  %1017 = vmatprep.subr.bf16.mxu0 %v787
  %1018 = vmatpush1.bf16.msra.mxu0 %v786
  %1019 = vmatprep.subr.bf16.mxu0 %v803
  %1020 = vmatpush1.bf16.msra.mxu0 %v802
  %1021 = vmatprep.subr.bf16.mxu0 %v819
  %1022 = vmatpush1.bf16.msra.mxu0 %v818
  %1023 = vmatprep.subr.bf16.mxu0 %v835
  %1024 = vmatpush1.bf16.msra.mxu0 %v834
  %1025 = vmatprep.subr.bf16.mxu0 0
  %1026 = vmatpush1.bf16.msra.mxu0 0
  %1027 = vmatprep.subr.bf16.mxu0 0
  %1028 = vmatpush1.bf16.msra.mxu0 0
  %1029 = vmatprep.subr.bf16.mxu0 0
  %1030 = vmatpush1.bf16.msra.mxu0 0
  %1031 = vmatprep.subr.bf16.mxu0 0
  %1032 = vmatpush1.bf16.msra.mxu0 0
  %1033 = vmatprep.subr.bf16.mxu0 0
  %1034 = vmatpush1.bf16.msra.mxu0 0
  %1035 = vmatprep.subr.bf16.mxu0 0
  %1036 = vmatpush1.bf16.msra.mxu0 0
  %1037 = vmatprep.subr.bf16.mxu0 0
  %1038 = vmatpush1.bf16.msra.mxu0 0
  %1039 = vmatprep.subr.bf16.mxu0 0
  %1040 = vmatpush1.bf16.msra.mxu0 0
  %1041 = vmatprep.subr.bf16.mxu0 0
  %1042 = vmatpush1.bf16.msra.mxu0 0
  %1043 = vmatprep.mubr.bf16.mxu0 0
  %1044 = vmatmul.mubr.bf16.gmra.mrb[0].mxu0 %v964
  %v1045 = vpop.f32.mrb[0].mxu0
  %v1046 = vadd.f32 %v245, %v1045
  %v1047 = vpop.f32.mrb[0].mxu0
  %v1048 = vadd.f32 %v249, %v1047
  %v1049 = vpop.f32.mrb[0].mxu0
  %v1050 = vadd.f32 %v245, %v1049
  %v1051 = vpop.f32.mrb[0].mxu0
  %v1052 = vadd.f32 %v249, %v1051
  %1053 = vmatprep.mubr.bf16.mxu0 0
  %1054 = vmatmul.mubr.bf16.gmra.mrb[0].mxu0 %v967
  %v1055 = vpop.f32.mrb[0].mxu0
  %v1056 = vadd.f32 %v245, %v1055
  %v1057 = vpop.f32.mrb[0].mxu0
  %v1058 = vadd.f32 %v249, %v1057
  %v1059 = vpop.f32.mrb[0].mxu0
  %v1060 = vadd.f32 %v245, %v1059
  %v1061 = vpop.f32.mrb[0].mxu0
  %v1062 = vadd.f32 %v249, %v1061
  %1063 = vmatprep.mubr.bf16.mxu0 0
  %1064 = vmatmul.mubr.bf16.gmra.mrb[0].mxu0 %v970
  %v1065 = vpop.f32.mrb[0].mxu0
  %v1066 = vadd.f32 %v245, %v1065
  %v1067 = vpop.f32.mrb[0].mxu0
  %v1068 = vadd.f32 %v249, %v1067
  %v1069 = vpop.f32.mrb[0].mxu0
  %v1070 = vadd.f32 %v245, %v1069
  %v1071 = vpop.f32.mrb[0].mxu0
  %v1072 = vadd.f32 %v249, %v1071
  %1073 = vmatprep.mubr.bf16.mxu0 0
  %1074 = vmatmul.mubr.bf16.gmra.mrb[0].mxu0 %v973
  %v1075 = vpop.f32.mrb[0].mxu0
  %v1076 = vadd.f32 %v245, %v1075
  %v1077 = vpop.f32.mrb[0].mxu0
  %v1078 = vadd.f32 %v249, %v1077
  %v1079 = vpop.f32.mrb[0].mxu0
  %v1080 = vadd.f32 %v245, %v1079
  %v1081 = vpop.f32.mrb[0].mxu0
  %v1082 = vadd.f32 %v249, %v1081
  %1083 = vmatprep.mubr.bf16.mxu0 0
  %1084 = vmatmul.mubr.bf16.gmra.mrb[0].mxu0 %v976
  %v1085 = vpop.f32.mrb[0].mxu0
  %v1086 = vadd.f32 %v245, %v1085
  %v1087 = vpop.f32.mrb[0].mxu0
  %v1088 = vadd.f32 %v249, %v1087
  %v1089 = vpop.f32.mrb[0].mxu0
  %v1090 = vadd.f32 %v245, %v1089
  %v1091 = vpop.f32.mrb[0].mxu0
  %v1092 = vadd.f32 %v249, %v1091
  %1093 = vmatprep.mubr.bf16.mxu0 0
  %1094 = vmatmul.mubr.bf16.gmra.mrb[0].mxu0 %v979
  %v1095 = vpop.f32.mrb[0].mxu0
  %v1096 = vadd.f32 %v245, %v1095
  %v1097 = vpop.f32.mrb[0].mxu0
  %v1098 = vadd.f32 %v249, %v1097
  %v1099 = vpop.f32.mrb[0].mxu0
  %v1100 = vadd.f32 %v245, %v1099
  %v1101 = vpop.f32.mrb[0].mxu0
  %v1102 = vadd.f32 %v249, %v1101
  %1103 = vmatprep.mubr.bf16.mxu0 0
  %1104 = vmatmul.mubr.bf16.gmra.mrb[0].mxu0 %v982
  %v1105 = vpop.f32.mrb[0].mxu0
  %v1106 = vadd.f32 %v245, %v1105
  %v1107 = vpop.f32.mrb[0].mxu0
  %v1108 = vadd.f32 %v249, %v1107
  %v1109 = vpop.f32.mrb[0].mxu0
  %v1110 = vadd.f32 %v245, %v1109
  %v1111 = vpop.f32.mrb[0].mxu0
  %v1112 = vadd.f32 %v249, %v1111
  %1113 = vmatprep.mubr.bf16.mxu0 0
  %1114 = vmatmul.mubr.bf16.gmra.mrb[0].mxu0 %v985
  %v1115 = vpop.f32.mrb[0].mxu0
  %v1116 = vadd.f32 %v245, %v1115
  %v1117 = vpop.f32.mrb[0].mxu0
  %v1118 = vadd.f32 %v249, %v1117
  %v1119 = vpop.f32.mrb[0].mxu0
  %v1120 = vadd.f32 %v245, %v1119
  %v1121 = vpop.f32.mrb[0].mxu0
  %v1122 = vadd.f32 %v249, %v1121
  %1123 = vmatprep.mubr.bf16.mxu0 0
  %1124 = vmatmul.mubr.bf16.gmra.mrb[0].mxu0 %v988
  %v1125 = vpop.f32.mrb[0].mxu0
  %v1126 = vadd.f32 %v245, %v1125
  %v1127 = vpop.f32.mrb[0].mxu0
  %v1128 = vadd.f32 %v249, %v1127
  %v1129 = vpop.f32.mrb[0].mxu0
  %v1130 = vadd.f32 %v245, %v1129
  %v1131 = vpop.f32.mrb[0].mxu0
  %v1132 = vadd.f32 %v249, %v1131
  %1133 = vmatprep.mubr.bf16.mxu0 0
  %1134 = vmatmul.mubr.bf16.gmra.mrb[0].mxu0 %v991
  %v1135 = vpop.f32.mrb[0].mxu0
  %v1136 = vadd.f32 %v245, %v1135
  %v1137 = vpop.f32.mrb[0].mxu0
  %v1138 = vadd.f32 %v249, %v1137
  %v1139 = vpop.f32.mrb[0].mxu0
  %v1140 = vadd.f32 %v245, %v1139
  %v1141 = vpop.f32.mrb[0].mxu0
  %v1142 = vadd.f32 %v249, %v1141
  %1143 = vmatprep.mubr.bf16.mxu0 0
  %1144 = vmatmul.mubr.bf16.gmra.mrb[0].mxu0 %v994
  %v1145 = vpop.f32.mrb[0].mxu0
  %v1146 = vadd.f32 %v245, %v1145
  %v1147 = vpop.f32.mrb[0].mxu0
  %v1148 = vadd.f32 %v249, %v1147
  %v1149 = vpop.f32.mrb[0].mxu0
  %v1150 = vadd.f32 %v245, %v1149
  %v1151 = vpop.f32.mrb[0].mxu0
  %v1152 = vadd.f32 %v249, %v1151
  %1153 = vmatprep.mubr.bf16.mxu0 0
  %1154 = vmatmul.mubr.bf16.gmra.mrb[0].mxu0 %v997
  %v1155 = vpop.f32.mrb[0].mxu0
  %v1156 = vadd.f32 %v245, %v1155
  %v1157 = vpop.f32.mrb[0].mxu0
  %v1158 = vadd.f32 %v249, %v1157
  %v1159 = vpop.f32.mrb[0].mxu0
  %v1160 = vadd.f32 %v245, %v1159
  %v1161 = vpop.f32.mrb[0].mxu0
  %v1162 = vadd.f32 %v249, %v1161
  %1163 = vmatprep.mubr.bf16.mxu0 0
  %1164 = vmatmul.mubr.bf16.gmra.mrb[0].mxu0 %v1000
  %v1165 = vpop.f32.mrb[0].mxu0
  %v1166 = vadd.f32 %v245, %v1165
  %v1167 = vpop.f32.mrb[0].mxu0
  %v1168 = vadd.f32 %v249, %v1167
  %v1169 = vpop.f32.mrb[0].mxu0
  %v1170 = vadd.f32 %v245, %v1169
  %v1171 = vpop.f32.mrb[0].mxu0
  %v1172 = vadd.f32 %v249, %v1171
  %1173 = vmatprep.mubr.bf16.mxu0 0
  %1174 = vmatmul.mubr.bf16.gmra.mrb[0].mxu0 %v1003
  %v1175 = vpop.f32.mrb[0].mxu0
  %v1176 = vadd.f32 %v245, %v1175
  %v1177 = vpop.f32.mrb[0].mxu0
  %v1178 = vadd.f32 %v249, %v1177
  %v1179 = vpop.f32.mrb[0].mxu0
  %v1180 = vadd.f32 %v245, %v1179
  %v1181 = vpop.f32.mrb[0].mxu0
  %v1182 = vadd.f32 %v249, %v1181
  %1183 = vmatprep.mubr.bf16.mxu0 0
  %1184 = vmatmul.mubr.bf16.gmra.mrb[0].mxu0 %v1006
  %v1185 = vpop.f32.mrb[0].mxu0
  %v1186 = vadd.f32 %v245, %v1185
  %v1187 = vpop.f32.mrb[0].mxu0
  %v1188 = vadd.f32 %v249, %v1187
  %v1189 = vpop.f32.mrb[0].mxu0
  %v1190 = vadd.f32 %v245, %v1189
  %v1191 = vpop.f32.mrb[0].mxu0
  %v1192 = vadd.f32 %v249, %v1191
  %1193 = vmatprep.mubr.bf16.mxu0 0
  %1194 = vmatmul.mubr.bf16.gmra.mrb[0].mxu0 %v1009
  %v1195 = vpop.f32.mrb[0].mxu0
  %v1196 = vadd.f32 %v245, %v1195
  %v1197 = vpop.f32.mrb[0].mxu0
  %v1198 = vadd.f32 %v249, %v1197
  %v1199 = vpop.f32.mrb[0].mxu0
  %v1200 = vadd.f32 %v245, %v1199
  %v1201 = vpop.f32.mrb[0].mxu0
  %v1202 = vadd.f32 %v249, %v1201
  %1203 = vdwg.mxu0
  %1204 = vmatprep.subr.bf16.mxu0 %v741
  %1205 = vmatpush1.bf16.msra.mxu0 %v740
  %1206 = vmatprep.subr.bf16.mxu0 %v757
  %1207 = vmatpush1.bf16.msra.mxu0 %v756
  %1208 = vmatprep.subr.bf16.mxu0 %v773
  %1209 = vmatpush1.bf16.msra.mxu0 %v772
  %1210 = vmatprep.subr.bf16.mxu0 %v789
  %1211 = vmatpush1.bf16.msra.mxu0 %v788
  %1212 = vmatprep.subr.bf16.mxu0 %v805
  %1213 = vmatpush1.bf16.msra.mxu0 %v804
  %1214 = vmatprep.subr.bf16.mxu0 %v821
  %1215 = vmatpush1.bf16.msra.mxu0 %v820
  %1216 = vmatprep.subr.bf16.mxu0 %v837
  %1217 = vmatpush1.bf16.msra.mxu0 %v836
  %1218 = vmatprep.subr.bf16.mxu0 0
  %1219 = vmatpush1.bf16.msra.mxu0 0
  %1220 = vmatprep.subr.bf16.mxu0 0
  %1221 = vmatpush1.bf16.msra.mxu0 0
  %1222 = vmatprep.subr.bf16.mxu0 0
  %1223 = vmatpush1.bf16.msra.mxu0 0
  %1224 = vmatprep.subr.bf16.mxu0 0
  %1225 = vmatpush1.bf16.msra.mxu0 0
  %1226 = vmatprep.subr.bf16.mxu0 0
  %1227 = vmatpush1.bf16.msra.mxu0 0
  %1228 = vmatprep.subr.bf16.mxu0 0
  %1229 = vmatpush1.bf16.msra.mxu0 0
  %1230 = vmatprep.subr.bf16.mxu0 0
  %1231 = vmatpush1.bf16.msra.mxu0 0
  %1232 = vmatprep.subr.bf16.mxu0 0
  %1233 = vmatpush1.bf16.msra.mxu0 0
  %1234 = vmatprep.subr.bf16.mxu0 0
  %1235 = vmatpush1.bf16.msra.mxu0 0
  %1236 = vmatprep.mubr.bf16.mxu0 0
  %1237 = vmatmul.mubr.bf16.gmra.mrb[0].mxu0 %v964
  %v1238 = vpop.f32.mrb[0].mxu0
  %v1239 = vadd.f32 %v253, %v1238
  %v1240 = vpop.f32.mrb[0].mxu0
  %v1241 = vadd.f32 %v257, %v1240
  %v1242 = vpop.f32.mrb[0].mxu0
  %v1243 = vadd.f32 %v253, %v1242
  %v1244 = vpop.f32.mrb[0].mxu0
  %v1245 = vadd.f32 %v257, %v1244
  %1246 = vmatprep.mubr.bf16.mxu0 0
  %1247 = vmatmul.mubr.bf16.gmra.mrb[0].mxu0 %v967
  %v1248 = vpop.f32.mrb[0].mxu0
  %v1249 = vadd.f32 %v253, %v1248
  %v1250 = vpop.f32.mrb[0].mxu0
  %v1251 = vadd.f32 %v257, %v1250
  %v1252 = vpop.f32.mrb[0].mxu0
  %v1253 = vadd.f32 %v253, %v1252
  %v1254 = vpop.f32.mrb[0].mxu0
  %v1255 = vadd.f32 %v257, %v1254
  %1256 = vmatprep.mubr.bf16.mxu0 0
  %1257 = vmatmul.mubr.bf16.gmra.mrb[0].mxu0 %v970
  %v1258 = vpop.f32.mrb[0].mxu0
  %v1259 = vadd.f32 %v253, %v1258
  %v1260 = vpop.f32.mrb[0].mxu0
  %v1261 = vadd.f32 %v257, %v1260
  %v1262 = vpop.f32.mrb[0].mxu0
  %v1263 = vadd.f32 %v253, %v1262
  %v1264 = vpop.f32.mrb[0].mxu0
  %v1265 = vadd.f32 %v257, %v1264
  %1266 = vmatprep.mubr.bf16.mxu0 0
  %1267 = vmatmul.mubr.bf16.gmra.mrb[0].mxu0 %v973
  %v1268 = vpop.f32.mrb[0].mxu0
  %v1269 = vadd.f32 %v253, %v1268
  %v1270 = vpop.f32.mrb[0].mxu0
  %v1271 = vadd.f32 %v257, %v1270
  %v1272 = vpop.f32.mrb[0].mxu0
  %v1273 = vadd.f32 %v253, %v1272
  %v1274 = vpop.f32.mrb[0].mxu0
  %v1275 = vadd.f32 %v257, %v1274
  %1276 = vmatprep.mubr.bf16.mxu0 0
  %1277 = vmatmul.mubr.bf16.gmra.mrb[0].mxu0 %v976
  %v1278 = vpop.f32.mrb[0].mxu0
  %v1279 = vadd.f32 %v253, %v1278
  %v1280 = vpop.f32.mrb[0].mxu0
  %v1281 = vadd.f32 %v257, %v1280
  %v1282 = vpop.f32.mrb[0].mxu0
  %v1283 = vadd.f32 %v253, %v1282
  %v1284 = vpop.f32.mrb[0].mxu0
  %v1285 = vadd.f32 %v257, %v1284
  %1286 = vmatprep.mubr.bf16.mxu0 0
  %1287 = vmatmul.mubr.bf16.gmra.mrb[0].mxu0 %v979
  %v1288 = vpop.f32.mrb[0].mxu0
  %v1289 = vadd.f32 %v253, %v1288
  %v1290 = vpop.f32.mrb[0].mxu0
  %v1291 = vadd.f32 %v257, %v1290
  %v1292 = vpop.f32.mrb[0].mxu0
  %v1293 = vadd.f32 %v253, %v1292
  %v1294 = vpop.f32.mrb[0].mxu0
  %v1295 = vadd.f32 %v257, %v1294
  %1296 = vmatprep.mubr.bf16.mxu0 0
  %1297 = vmatmul.mubr.bf16.gmra.mrb[0].mxu0 %v982
  %v1298 = vpop.f32.mrb[0].mxu0
  %v1299 = vadd.f32 %v253, %v1298
  %v1300 = vpop.f32.mrb[0].mxu0
  %v1301 = vadd.f32 %v257, %v1300
  %v1302 = vpop.f32.mrb[0].mxu0
  %v1303 = vadd.f32 %v253, %v1302
  %v1304 = vpop.f32.mrb[0].mxu0
  %v1305 = vadd.f32 %v257, %v1304
  %1306 = vmatprep.mubr.bf16.mxu0 0
  %1307 = vmatmul.mubr.bf16.gmra.mrb[0].mxu0 %v985
  %v1308 = vpop.f32.mrb[0].mxu0
  %v1309 = vadd.f32 %v253, %v1308
  %v1310 = vpop.f32.mrb[0].mxu0
  %v1311 = vadd.f32 %v257, %v1310
  %v1312 = vpop.f32.mrb[0].mxu0
  %v1313 = vadd.f32 %v253, %v1312
  %v1314 = vpop.f32.mrb[0].mxu0
  %v1315 = vadd.f32 %v257, %v1314
  %1316 = vmatprep.mubr.bf16.mxu0 0
  %1317 = vmatmul.mubr.bf16.gmra.mrb[0].mxu0 %v988
  %v1318 = vpop.f32.mrb[0].mxu0
  %v1319 = vadd.f32 %v253, %v1318
  %v1320 = vpop.f32.mrb[0].mxu0
  %v1321 = vadd.f32 %v257, %v1320
  %v1322 = vpop.f32.mrb[0].mxu0
  %v1323 = vadd.f32 %v253, %v1322
  %v1324 = vpop.f32.mrb[0].mxu0
  %v1325 = vadd.f32 %v257, %v1324
  %1326 = vmatprep.mubr.bf16.mxu0 0
  %1327 = vmatmul.mubr.bf16.gmra.mrb[0].mxu0 %v991
  %v1328 = vpop.f32.mrb[0].mxu0
  %v1329 = vadd.f32 %v253, %v1328
  %v1330 = vpop.f32.mrb[0].mxu0
  %v1331 = vadd.f32 %v257, %v1330
  %v1332 = vpop.f32.mrb[0].mxu0
  %v1333 = vadd.f32 %v253, %v1332
  %v1334 = vpop.f32.mrb[0].mxu0
  %v1335 = vadd.f32 %v257, %v1334
  %1336 = vmatprep.mubr.bf16.mxu0 0
  %1337 = vmatmul.mubr.bf16.gmra.mrb[0].mxu0 %v994
  %v1338 = vpop.f32.mrb[0].mxu0
  %v1339 = vadd.f32 %v253, %v1338
  %v1340 = vpop.f32.mrb[0].mxu0
  %v1341 = vadd.f32 %v257, %v1340
  %v1342 = vpop.f32.mrb[0].mxu0
  %v1343 = vadd.f32 %v253, %v1342
  %v1344 = vpop.f32.mrb[0].mxu0
  %v1345 = vadd.f32 %v257, %v1344
  %1346 = vmatprep.mubr.bf16.mxu0 0
  %1347 = vmatmul.mubr.bf16.gmra.mrb[0].mxu0 %v997
  %v1348 = vpop.f32.mrb[0].mxu0
  %v1349 = vadd.f32 %v253, %v1348
  %v1350 = vpop.f32.mrb[0].mxu0
  %v1351 = vadd.f32 %v257, %v1350
  %v1352 = vpop.f32.mrb[0].mxu0
  %v1353 = vadd.f32 %v253, %v1352
  %v1354 = vpop.f32.mrb[0].mxu0
  %v1355 = vadd.f32 %v257, %v1354
  %1356 = vmatprep.mubr.bf16.mxu0 0
  %1357 = vmatmul.mubr.bf16.gmra.mrb[0].mxu0 %v1000
  %v1358 = vpop.f32.mrb[0].mxu0
  %v1359 = vadd.f32 %v253, %v1358
  %v1360 = vpop.f32.mrb[0].mxu0
  %v1361 = vadd.f32 %v257, %v1360
  %v1362 = vpop.f32.mrb[0].mxu0
  %v1363 = vadd.f32 %v253, %v1362
  %v1364 = vpop.f32.mrb[0].mxu0
  %v1365 = vadd.f32 %v257, %v1364
  %1366 = vmatprep.mubr.bf16.mxu0 0
  %1367 = vmatmul.mubr.bf16.gmra.mrb[0].mxu0 %v1003
  %v1368 = vpop.f32.mrb[0].mxu0
  %v1369 = vadd.f32 %v253, %v1368
  %v1370 = vpop.f32.mrb[0].mxu0
  %v1371 = vadd.f32 %v257, %v1370
  %v1372 = vpop.f32.mrb[0].mxu0
  %v1373 = vadd.f32 %v253, %v1372
  %v1374 = vpop.f32.mrb[0].mxu0
  %v1375 = vadd.f32 %v257, %v1374
  %1376 = vmatprep.mubr.bf16.mxu0 0
  %1377 = vmatmul.mubr.bf16.gmra.mrb[0].mxu0 %v1006
  %v1378 = vpop.f32.mrb[0].mxu0
  %v1379 = vadd.f32 %v253, %v1378
  %v1380 = vpop.f32.mrb[0].mxu0
  %v1381 = vadd.f32 %v257, %v1380
  %v1382 = vpop.f32.mrb[0].mxu0
  %v1383 = vadd.f32 %v253, %v1382
  %v1384 = vpop.f32.mrb[0].mxu0
  %v1385 = vadd.f32 %v257, %v1384
  %1386 = vmatprep.mubr.bf16.mxu0 0
  %1387 = vmatmul.mubr.bf16.gmra.mrb[0].mxu0 %v1009
  %v1388 = vpop.f32.mrb[0].mxu0
  %v1389 = vadd.f32 %v253, %v1388
  %v1390 = vpop.f32.mrb[0].mxu0
  %v1391 = vadd.f32 %v257, %v1390
  %v1392 = vpop.f32.mrb[0].mxu0
  %v1393 = vadd.f32 %v253, %v1392
  %v1394 = vpop.f32.mrb[0].mxu0
  %v1395 = vadd.f32 %v257, %v1394
  %1396 = vdwg.mxu0
  %1397 = vmatprep.subr.bf16.mxu0 %v743
  %1398 = vmatpush1.bf16.msra.mxu0 %v742
  %1399 = vmatprep.subr.bf16.mxu0 %v759
  %1400 = vmatpush1.bf16.msra.mxu0 %v758
  %1401 = vmatprep.subr.bf16.mxu0 %v775
  %1402 = vmatpush1.bf16.msra.mxu0 %v774
  %1403 = vmatprep.subr.bf16.mxu0 %v791
  %1404 = vmatpush1.bf16.msra.mxu0 %v790
  %1405 = vmatprep.subr.bf16.mxu0 %v807
  %1406 = vmatpush1.bf16.msra.mxu0 %v806
  %1407 = vmatprep.subr.bf16.mxu0 %v823
  %1408 = vmatpush1.bf16.msra.mxu0 %v822
  %1409 = vmatprep.subr.bf16.mxu0 %v839
  %1410 = vmatpush1.bf16.msra.mxu0 %v838
  %1411 = vmatprep.subr.bf16.mxu0 0
  %1412 = vmatpush1.bf16.msra.mxu0 0
  %1413 = vmatprep.subr.bf16.mxu0 0
  %1414 = vmatpush1.bf16.msra.mxu0 0
  %1415 = vmatprep.subr.bf16.mxu0 0
  %1416 = vmatpush1.bf16.msra.mxu0 0
  %1417 = vmatprep.subr.bf16.mxu0 0
  %1418 = vmatpush1.bf16.msra.mxu0 0
  %1419 = vmatprep.subr.bf16.mxu0 0
  %1420 = vmatpush1.bf16.msra.mxu0 0
  %1421 = vmatprep.subr.bf16.mxu0 0
  %1422 = vmatpush1.bf16.msra.mxu0 0
  %1423 = vmatprep.subr.bf16.mxu0 0
  %1424 = vmatpush1.bf16.msra.mxu0 0
  %1425 = vmatprep.subr.bf16.mxu0 0
  %1426 = vmatpush1.bf16.msra.mxu0 0
  %1427 = vmatprep.subr.bf16.mxu0 0
  %1428 = vmatpush1.bf16.msra.mxu0 0
  %1429 = vmatprep.mubr.bf16.mxu0 0
  %1430 = vmatmul.mubr.bf16.gmra.mrb[0].mxu0 %v964
  %v1431 = vpop.f32.mrb[0].mxu0
  %v1432 = vadd.f32 %v261, %v1431
  %v1433 = vpop.f32.mrb[0].mxu0
  %v1434 = vadd.f32 %v265, %v1433
  %v1435 = vpop.f32.mrb[0].mxu0
  %v1436 = vadd.f32 %v261, %v1435
  %v1437 = vpop.f32.mrb[0].mxu0
  %v1438 = vadd.f32 %v265, %v1437
  %1439 = vmatprep.mubr.bf16.mxu0 0
  %1440 = vmatmul.mubr.bf16.gmra.mrb[0].mxu0 %v967
  %v1441 = vpop.f32.mrb[0].mxu0
  %v1442 = vadd.f32 %v261, %v1441
  %v1443 = vpop.f32.mrb[0].mxu0
  %v1444 = vadd.f32 %v265, %v1443
  %v1445 = vpop.f32.mrb[0].mxu0
  %v1446 = vadd.f32 %v261, %v1445
  %v1447 = vpop.f32.mrb[0].mxu0
  %v1448 = vadd.f32 %v265, %v1447
  %1449 = vmatprep.mubr.bf16.mxu0 0
  %1450 = vmatmul.mubr.bf16.gmra.mrb[0].mxu0 %v970
  %v1451 = vpop.f32.mrb[0].mxu0
  %v1452 = vadd.f32 %v261, %v1451
  %v1453 = vpop.f32.mrb[0].mxu0
  %v1454 = vadd.f32 %v265, %v1453
  %v1455 = vpop.f32.mrb[0].mxu0
  %v1456 = vadd.f32 %v261, %v1455
  %v1457 = vpop.f32.mrb[0].mxu0
  %v1458 = vadd.f32 %v265, %v1457
  %1459 = vmatprep.mubr.bf16.mxu0 0
  %1460 = vmatmul.mubr.bf16.gmra.mrb[0].mxu0 %v973
  %v1461 = vpop.f32.mrb[0].mxu0
  %v1462 = vadd.f32 %v261, %v1461
  %v1463 = vpop.f32.mrb[0].mxu0
  %v1464 = vadd.f32 %v265, %v1463
  %v1465 = vpop.f32.mrb[0].mxu0
  %v1466 = vadd.f32 %v261, %v1465
  %v1467 = vpop.f32.mrb[0].mxu0
  %v1468 = vadd.f32 %v265, %v1467
  %1469 = vmatprep.mubr.bf16.mxu0 0
  %1470 = vmatmul.mubr.bf16.gmra.mrb[0].mxu0 %v976
  %v1471 = vpop.f32.mrb[0].mxu0
  %v1472 = vadd.f32 %v261, %v1471
  %v1473 = vpop.f32.mrb[0].mxu0
  %v1474 = vadd.f32 %v265, %v1473
  %v1475 = vpop.f32.mrb[0].mxu0
  %v1476 = vadd.f32 %v261, %v1475
  %v1477 = vpop.f32.mrb[0].mxu0
  %v1478 = vadd.f32 %v265, %v1477
  %1479 = vmatprep.mubr.bf16.mxu0 0
  %1480 = vmatmul.mubr.bf16.gmra.mrb[0].mxu0 %v979
  %v1481 = vpop.f32.mrb[0].mxu0
  %v1482 = vadd.f32 %v261, %v1481
  %v1483 = vpop.f32.mrb[0].mxu0
  %v1484 = vadd.f32 %v265, %v1483
  %v1485 = vpop.f32.mrb[0].mxu0
  %v1486 = vadd.f32 %v261, %v1485
  %v1487 = vpop.f32.mrb[0].mxu0
  %v1488 = vadd.f32 %v265, %v1487
  %1489 = vmatprep.mubr.bf16.mxu0 0
  %1490 = vmatmul.mubr.bf16.gmra.mrb[0].mxu0 %v982
  %v1491 = vpop.f32.mrb[0].mxu0
  %v1492 = vadd.f32 %v261, %v1491
  %v1493 = vpop.f32.mrb[0].mxu0
  %v1494 = vadd.f32 %v265, %v1493
  %v1495 = vpop.f32.mrb[0].mxu0
  %v1496 = vadd.f32 %v261, %v1495
  %v1497 = vpop.f32.mrb[0].mxu0
  %v1498 = vadd.f32 %v265, %v1497
  %1499 = vmatprep.mubr.bf16.mxu0 0
  %1500 = vmatmul.mubr.bf16.gmra.mrb[0].mxu0 %v985
  %v1501 = vpop.f32.mrb[0].mxu0
  %v1502 = vadd.f32 %v261, %v1501
  %v1503 = vpop.f32.mrb[0].mxu0
  %v1504 = vadd.f32 %v265, %v1503
  %v1505 = vpop.f32.mrb[0].mxu0
  %v1506 = vadd.f32 %v261, %v1505
  %v1507 = vpop.f32.mrb[0].mxu0
  %v1508 = vadd.f32 %v265, %v1507
  %1509 = vmatprep.mubr.bf16.mxu0 0
  %1510 = vmatmul.mubr.bf16.gmra.mrb[0].mxu0 %v988
  %v1511 = vpop.f32.mrb[0].mxu0
  %v1512 = vadd.f32 %v261, %v1511
  %v1513 = vpop.f32.mrb[0].mxu0
  %v1514 = vadd.f32 %v265, %v1513
  %v1515 = vpop.f32.mrb[0].mxu0
  %v1516 = vadd.f32 %v261, %v1515
  %v1517 = vpop.f32.mrb[0].mxu0
  %v1518 = vadd.f32 %v265, %v1517
  %1519 = vmatprep.mubr.bf16.mxu0 0
  %1520 = vmatmul.mubr.bf16.gmra.mrb[0].mxu0 %v991
  %v1521 = vpop.f32.mrb[0].mxu0
  %v1522 = vadd.f32 %v261, %v1521
  %v1523 = vpop.f32.mrb[0].mxu0
  %v1524 = vadd.f32 %v265, %v1523
  %v1525 = vpop.f32.mrb[0].mxu0
  %v1526 = vadd.f32 %v261, %v1525
  %v1527 = vpop.f32.mrb[0].mxu0
  %v1528 = vadd.f32 %v265, %v1527
  %1529 = vmatprep.mubr.bf16.mxu0 0
  %1530 = vmatmul.mubr.bf16.gmra.mrb[0].mxu0 %v994
  %v1531 = vpop.f32.mrb[0].mxu0
  %v1532 = vadd.f32 %v261, %v1531
  %v1533 = vpop.f32.mrb[0].mxu0
  %v1534 = vadd.f32 %v265, %v1533
  %v1535 = vpop.f32.mrb[0].mxu0
  %v1536 = vadd.f32 %v261, %v1535
  %v1537 = vpop.f32.mrb[0].mxu0
  %v1538 = vadd.f32 %v265, %v1537
  %1539 = vmatprep.mubr.bf16.mxu0 0
  %1540 = vmatmul.mubr.bf16.gmra.mrb[0].mxu0 %v997
  %v1541 = vpop.f32.mrb[0].mxu0
  %v1542 = vadd.f32 %v261, %v1541
  %v1543 = vpop.f32.mrb[0].mxu0
  %v1544 = vadd.f32 %v265, %v1543
  %v1545 = vpop.f32.mrb[0].mxu0
  %v1546 = vadd.f32 %v261, %v1545
  %v1547 = vpop.f32.mrb[0].mxu0
  %v1548 = vadd.f32 %v265, %v1547
  %1549 = vmatprep.mubr.bf16.mxu0 0
  %1550 = vmatmul.mubr.bf16.gmra.mrb[0].mxu0 %v1000
  %v1551 = vpop.f32.mrb[0].mxu0
  %v1552 = vadd.f32 %v261, %v1551
  %v1553 = vpop.f32.mrb[0].mxu0
  %v1554 = vadd.f32 %v265, %v1553
  %v1555 = vpop.f32.mrb[0].mxu0
  %v1556 = vadd.f32 %v261, %v1555
  %v1557 = vpop.f32.mrb[0].mxu0
  %v1558 = vadd.f32 %v265, %v1557
  %1559 = vmatprep.mubr.bf16.mxu0 0
  %1560 = vmatmul.mubr.bf16.gmra.mrb[0].mxu0 %v1003
  %v1561 = vpop.f32.mrb[0].mxu0
  %v1562 = vadd.f32 %v261, %v1561
  %v1563 = vpop.f32.mrb[0].mxu0
  %v1564 = vadd.f32 %v265, %v1563
  %v1565 = vpop.f32.mrb[0].mxu0
  %v1566 = vadd.f32 %v261, %v1565
  %v1567 = vpop.f32.mrb[0].mxu0
  %v1568 = vadd.f32 %v265, %v1567
  %1569 = vmatprep.mubr.bf16.mxu0 0
  %1570 = vmatmul.mubr.bf16.gmra.mrb[0].mxu0 %v1006
  %v1571 = vpop.f32.mrb[0].mxu0
  %v1572 = vadd.f32 %v261, %v1571
  %v1573 = vpop.f32.mrb[0].mxu0
  %v1574 = vadd.f32 %v265, %v1573
  %v1575 = vpop.f32.mrb[0].mxu0
  %v1576 = vadd.f32 %v261, %v1575
  %v1577 = vpop.f32.mrb[0].mxu0
  %v1578 = vadd.f32 %v265, %v1577
  %1579 = vmatprep.mubr.bf16.mxu0 0
  %1580 = vmatmul.mubr.bf16.gmra.mrb[0].mxu0 %v1009
  %v1581 = vpop.f32.mrb[0].mxu0
  %v1582 = vadd.f32 %v261, %v1581
  %v1583 = vpop.f32.mrb[0].mxu0
  %v1584 = vadd.f32 %v265, %v1583
  %v1585 = vpop.f32.mrb[0].mxu0
  %v1586 = vadd.f32 %v261, %v1585
  %v1587 = vpop.f32.mrb[0].mxu0
  %v1588 = vadd.f32 %v265, %v1587
  %1589 = vdwg.mxu0
  %1590 = vmatprep.subr.bf16.mxu0 %v745
  %1591 = vmatpush1.bf16.msra.mxu0 %v744
  %1592 = vmatprep.subr.bf16.mxu0 %v761
  %1593 = vmatpush1.bf16.msra.mxu0 %v760
  %1594 = vmatprep.subr.bf16.mxu0 %v777
  %1595 = vmatpush1.bf16.msra.mxu0 %v776
  %1596 = vmatprep.subr.bf16.mxu0 %v793
  %1597 = vmatpush1.bf16.msra.mxu0 %v792
  %1598 = vmatprep.subr.bf16.mxu0 %v809
  %1599 = vmatpush1.bf16.msra.mxu0 %v808
  %1600 = vmatprep.subr.bf16.mxu0 %v825
  %1601 = vmatpush1.bf16.msra.mxu0 %v824
  %1602 = vmatprep.subr.bf16.mxu0 %v841
  %1603 = vmatpush1.bf16.msra.mxu0 %v840
  %1604 = vmatprep.subr.bf16.mxu0 0
  %1605 = vmatpush1.bf16.msra.mxu0 0
  %1606 = vmatprep.subr.bf16.mxu0 0
  %1607 = vmatpush1.bf16.msra.mxu0 0
  %1608 = vmatprep.subr.bf16.mxu0 0
  %1609 = vmatpush1.bf16.msra.mxu0 0
  %1610 = vmatprep.subr.bf16.mxu0 0
  %1611 = vmatpush1.bf16.msra.mxu0 0
  %1612 = vmatprep.subr.bf16.mxu0 0
  %1613 = vmatpush1.bf16.msra.mxu0 0
  %1614 = vmatprep.subr.bf16.mxu0 0
  %1615 = vmatpush1.bf16.msra.mxu0 0
  %1616 = vmatprep.subr.bf16.mxu0 0
  %1617 = vmatpush1.bf16.msra.mxu0 0
  %1618 = vmatprep.subr.bf16.mxu0 0
  %1619 = vmatpush1.bf16.msra.mxu0 0
  %1620 = vmatprep.subr.bf16.mxu0 0
  %1621 = vmatpush1.bf16.msra.mxu0 0
  %1622 = vmatprep.mubr.bf16.mxu0 0
  %1623 = vmatmul.mubr.bf16.gmra.mrb[0].mxu0 %v964
  %v1624 = vpop.f32.mrb[0].mxu0
  %v1625 = vadd.f32 %v269, %v1624
  %v1626 = vpop.f32.mrb[0].mxu0
  %v1627 = vadd.f32 %v273, %v1626
  %v1628 = vpop.f32.mrb[0].mxu0
  %v1629 = vadd.f32 %v269, %v1628
  %v1630 = vpop.f32.mrb[0].mxu0
  %v1631 = vadd.f32 %v273, %v1630
  %1632 = vmatprep.mubr.bf16.mxu0 0
  %1633 = vmatmul.mubr.bf16.gmra.mrb[0].mxu0 %v967
  %v1634 = vpop.f32.mrb[0].mxu0
  %v1635 = vadd.f32 %v269, %v1634
  %v1636 = vpop.f32.mrb[0].mxu0
  %v1637 = vadd.f32 %v273, %v1636
  %v1638 = vpop.f32.mrb[0].mxu0
  %v1639 = vadd.f32 %v269, %v1638
  %v1640 = vpop.f32.mrb[0].mxu0
  %v1641 = vadd.f32 %v273, %v1640
  %1642 = vmatprep.mubr.bf16.mxu0 0
  %1643 = vmatmul.mubr.bf16.gmra.mrb[0].mxu0 %v970
  %v1644 = vpop.f32.mrb[0].mxu0
  %v1645 = vadd.f32 %v269, %v1644
  %v1646 = vpop.f32.mrb[0].mxu0
  %v1647 = vadd.f32 %v273, %v1646
  %v1648 = vpop.f32.mrb[0].mxu0
  %v1649 = vadd.f32 %v269, %v1648
  %v1650 = vpop.f32.mrb[0].mxu0
  %v1651 = vadd.f32 %v273, %v1650
  %1652 = vmatprep.mubr.bf16.mxu0 0
  %1653 = vmatmul.mubr.bf16.gmra.mrb[0].mxu0 %v973
  %v1654 = vpop.f32.mrb[0].mxu0
  %v1655 = vadd.f32 %v269, %v1654
  %v1656 = vpop.f32.mrb[0].mxu0
  %v1657 = vadd.f32 %v273, %v1656
  %v1658 = vpop.f32.mrb[0].mxu0
  %v1659 = vadd.f32 %v269, %v1658
  %v1660 = vpop.f32.mrb[0].mxu0
  %v1661 = vadd.f32 %v273, %v1660
  %1662 = vmatprep.mubr.bf16.mxu0 0
  %1663 = vmatmul.mubr.bf16.gmra.mrb[0].mxu0 %v976
  %v1664 = vpop.f32.mrb[0].mxu0
  %v1665 = vadd.f32 %v269, %v1664
  %v1666 = vpop.f32.mrb[0].mxu0
  %v1667 = vadd.f32 %v273, %v1666
  %v1668 = vpop.f32.mrb[0].mxu0
  %v1669 = vadd.f32 %v269, %v1668
  %v1670 = vpop.f32.mrb[0].mxu0
  %v1671 = vadd.f32 %v273, %v1670
  %1672 = vmatprep.mubr.bf16.mxu0 0
  %1673 = vmatmul.mubr.bf16.gmra.mrb[0].mxu0 %v979
  %v1674 = vpop.f32.mrb[0].mxu0
  %v1675 = vadd.f32 %v269, %v1674
  %v1676 = vpop.f32.mrb[0].mxu0
  %v1677 = vadd.f32 %v273, %v1676
  %v1678 = vpop.f32.mrb[0].mxu0
  %v1679 = vadd.f32 %v269, %v1678
  %v1680 = vpop.f32.mrb[0].mxu0
  %v1681 = vadd.f32 %v273, %v1680
  %1682 = vmatprep.mubr.bf16.mxu0 0
  %1683 = vmatmul.mubr.bf16.gmra.mrb[0].mxu0 %v982
  %v1684 = vpop.f32.mrb[0].mxu0
  %v1685 = vadd.f32 %v269, %v1684
  %v1686 = vpop.f32.mrb[0].mxu0
  %v1687 = vadd.f32 %v273, %v1686
  %v1688 = vpop.f32.mrb[0].mxu0
  %v1689 = vadd.f32 %v269, %v1688
  %v1690 = vpop.f32.mrb[0].mxu0
  %v1691 = vadd.f32 %v273, %v1690
  %1692 = vmatprep.mubr.bf16.mxu0 0
  %1693 = vmatmul.mubr.bf16.gmra.mrb[0].mxu0 %v985
  %v1694 = vpop.f32.mrb[0].mxu0
  %v1695 = vadd.f32 %v269, %v1694
  %v1696 = vpop.f32.mrb[0].mxu0
  %v1697 = vadd.f32 %v273, %v1696
  %v1698 = vpop.f32.mrb[0].mxu0
  %v1699 = vadd.f32 %v269, %v1698
  %v1700 = vpop.f32.mrb[0].mxu0
  %v1701 = vadd.f32 %v273, %v1700
  %1702 = vmatprep.mubr.bf16.mxu0 0
  %1703 = vmatmul.mubr.bf16.gmra.mrb[0].mxu0 %v988
  %v1704 = vpop.f32.mrb[0].mxu0
  %v1705 = vadd.f32 %v269, %v1704
  %v1706 = vpop.f32.mrb[0].mxu0
  %v1707 = vadd.f32 %v273, %v1706
  %v1708 = vpop.f32.mrb[0].mxu0
  %v1709 = vadd.f32 %v269, %v1708
  %v1710 = vpop.f32.mrb[0].mxu0
  %v1711 = vadd.f32 %v273, %v1710
  %1712 = vmatprep.mubr.bf16.mxu0 0
  %1713 = vmatmul.mubr.bf16.gmra.mrb[0].mxu0 %v991
  %v1714 = vpop.f32.mrb[0].mxu0
  %v1715 = vadd.f32 %v269, %v1714
  %v1716 = vpop.f32.mrb[0].mxu0
  %v1717 = vadd.f32 %v273, %v1716
  %v1718 = vpop.f32.mrb[0].mxu0
  %v1719 = vadd.f32 %v269, %v1718
  %v1720 = vpop.f32.mrb[0].mxu0
  %v1721 = vadd.f32 %v273, %v1720
  %1722 = vmatprep.mubr.bf16.mxu0 0
  %1723 = vmatmul.mubr.bf16.gmra.mrb[0].mxu0 %v994
  %v1724 = vpop.f32.mrb[0].mxu0
  %v1725 = vadd.f32 %v269, %v1724
  %v1726 = vpop.f32.mrb[0].mxu0
  %v1727 = vadd.f32 %v273, %v1726
  %v1728 = vpop.f32.mrb[0].mxu0
  %v1729 = vadd.f32 %v269, %v1728
  %v1730 = vpop.f32.mrb[0].mxu0
  %v1731 = vadd.f32 %v273, %v1730
  %1732 = vmatprep.mubr.bf16.mxu0 0
  %1733 = vmatmul.mubr.bf16.gmra.mrb[0].mxu0 %v997
  %v1734 = vpop.f32.mrb[0].mxu0
  %v1735 = vadd.f32 %v269, %v1734
  %v1736 = vpop.f32.mrb[0].mxu0
  %v1737 = vadd.f32 %v273, %v1736
  %v1738 = vpop.f32.mrb[0].mxu0
  %v1739 = vadd.f32 %v269, %v1738
  %v1740 = vpop.f32.mrb[0].mxu0
  %v1741 = vadd.f32 %v273, %v1740
  %1742 = vmatprep.mubr.bf16.mxu0 0
  %1743 = vmatmul.mubr.bf16.gmra.mrb[0].mxu0 %v1000
  %v1744 = vpop.f32.mrb[0].mxu0
  %v1745 = vadd.f32 %v269, %v1744
  %v1746 = vpop.f32.mrb[0].mxu0
  %v1747 = vadd.f32 %v273, %v1746
  %v1748 = vpop.f32.mrb[0].mxu0
  %v1749 = vadd.f32 %v269, %v1748
  %v1750 = vpop.f32.mrb[0].mxu0
  %v1751 = vadd.f32 %v273, %v1750
  %1752 = vmatprep.mubr.bf16.mxu0 0
  %1753 = vmatmul.mubr.bf16.gmra.mrb[0].mxu0 %v1003
  %v1754 = vpop.f32.mrb[0].mxu0
  %v1755 = vadd.f32 %v269, %v1754
  %v1756 = vpop.f32.mrb[0].mxu0
  %v1757 = vadd.f32 %v273, %v1756
  %v1758 = vpop.f32.mrb[0].mxu0
  %v1759 = vadd.f32 %v269, %v1758
  %v1760 = vpop.f32.mrb[0].mxu0
  %v1761 = vadd.f32 %v273, %v1760
  %1762 = vmatprep.mubr.bf16.mxu0 0
  %1763 = vmatmul.mubr.bf16.gmra.mrb[0].mxu0 %v1006
  %v1764 = vpop.f32.mrb[0].mxu0
  %v1765 = vadd.f32 %v269, %v1764
  %v1766 = vpop.f32.mrb[0].mxu0
  %v1767 = vadd.f32 %v273, %v1766
  %v1768 = vpop.f32.mrb[0].mxu0
  %v1769 = vadd.f32 %v269, %v1768
  %v1770 = vpop.f32.mrb[0].mxu0
  %v1771 = vadd.f32 %v273, %v1770
  %1772 = vmatprep.mubr.bf16.mxu0 0
  %1773 = vmatmul.mubr.bf16.gmra.mrb[0].mxu0 %v1009
  %v1774 = vpop.f32.mrb[0].mxu0
  %v1775 = vadd.f32 %v269, %v1774
  %v1776 = vpop.f32.mrb[0].mxu0
  %v1777 = vadd.f32 %v273, %v1776
  %v1778 = vpop.f32.mrb[0].mxu0
  %v1779 = vadd.f32 %v269, %v1778
  %v1780 = vpop.f32.mrb[0].mxu0
  %v1781 = vadd.f32 %v273, %v1780
  %1782 = vdwg.mxu0
  %1783 = vmatprep.subr.bf16.mxu0 %v747
  %1784 = vmatpush1.bf16.msra.mxu0 %v746
  %1785 = vmatprep.subr.bf16.mxu0 %v763
  %1786 = vmatpush1.bf16.msra.mxu0 %v762
  %1787 = vmatprep.subr.bf16.mxu0 %v779
  %1788 = vmatpush1.bf16.msra.mxu0 %v778
  %1789 = vmatprep.subr.bf16.mxu0 %v795
  %1790 = vmatpush1.bf16.msra.mxu0 %v794
  %1791 = vmatprep.subr.bf16.mxu0 %v811
  %1792 = vmatpush1.bf16.msra.mxu0 %v810
  %1793 = vmatprep.subr.bf16.mxu0 %v827
  %1794 = vmatpush1.bf16.msra.mxu0 %v826
  %1795 = vmatprep.subr.bf16.mxu0 %v843
  %1796 = vmatpush1.bf16.msra.mxu0 %v842
  %1797 = vmatprep.subr.bf16.mxu0 0
  %1798 = vmatpush1.bf16.msra.mxu0 0
  %1799 = vmatprep.subr.bf16.mxu0 0
  %1800 = vmatpush1.bf16.msra.mxu0 0
  %1801 = vmatprep.subr.bf16.mxu0 0
  %1802 = vmatpush1.bf16.msra.mxu0 0
  %1803 = vmatprep.subr.bf16.mxu0 0
  %1804 = vmatpush1.bf16.msra.mxu0 0
  %1805 = vmatprep.subr.bf16.mxu0 0
  %1806 = vmatpush1.bf16.msra.mxu0 0
  %1807 = vmatprep.subr.bf16.mxu0 0
  %1808 = vmatpush1.bf16.msra.mxu0 0
  %1809 = vmatprep.subr.bf16.mxu0 0
  %1810 = vmatpush1.bf16.msra.mxu0 0
  %1811 = vmatprep.subr.bf16.mxu0 0
  %1812 = vmatpush1.bf16.msra.mxu0 0
  %1813 = vmatprep.subr.bf16.mxu0 0
  %1814 = vmatpush1.bf16.msra.mxu0 0
  %1815 = vmatprep.mubr.bf16.mxu0 0
  %1816 = vmatmul.mubr.bf16.gmra.mrb[0].mxu0 %v964
  %v1817 = vpop.f32.mrb[0].mxu0
  %v1818 = vadd.f32 %v277, %v1817
  %v1819 = vpop.f32.mrb[0].mxu0
  %v1820 = vadd.f32 %v281, %v1819
  %v1821 = vpop.f32.mrb[0].mxu0
  %v1822 = vadd.f32 %v277, %v1821
  %v1823 = vpop.f32.mrb[0].mxu0
  %v1824 = vadd.f32 %v281, %v1823
  %1825 = vmatprep.mubr.bf16.mxu0 0
  %1826 = vmatmul.mubr.bf16.gmra.mrb[0].mxu0 %v967
  %v1827 = vpop.f32.mrb[0].mxu0
  %v1828 = vadd.f32 %v277, %v1827
  %v1829 = vpop.f32.mrb[0].mxu0
  %v1830 = vadd.f32 %v281, %v1829
  %v1831 = vpop.f32.mrb[0].mxu0
  %v1832 = vadd.f32 %v277, %v1831
  %v1833 = vpop.f32.mrb[0].mxu0
  %v1834 = vadd.f32 %v281, %v1833
  %1835 = vmatprep.mubr.bf16.mxu0 0
  %1836 = vmatmul.mubr.bf16.gmra.mrb[0].mxu0 %v970
  %v1837 = vpop.f32.mrb[0].mxu0
  %v1838 = vadd.f32 %v277, %v1837
  %v1839 = vpop.f32.mrb[0].mxu0
  %v1840 = vadd.f32 %v281, %v1839
  %v1841 = vpop.f32.mrb[0].mxu0
  %v1842 = vadd.f32 %v277, %v1841
  %v1843 = vpop.f32.mrb[0].mxu0
  %v1844 = vadd.f32 %v281, %v1843
  %1845 = vmatprep.mubr.bf16.mxu0 0
  %1846 = vmatmul.mubr.bf16.gmra.mrb[0].mxu0 %v973
  %v1847 = vpop.f32.mrb[0].mxu0
  %v1848 = vadd.f32 %v277, %v1847
  %v1849 = vpop.f32.mrb[0].mxu0
  %v1850 = vadd.f32 %v281, %v1849
  %v1851 = vpop.f32.mrb[0].mxu0
  %v1852 = vadd.f32 %v277, %v1851
  %v1853 = vpop.f32.mrb[0].mxu0
  %v1854 = vadd.f32 %v281, %v1853
  %1855 = vmatprep.mubr.bf16.mxu0 0
  %1856 = vmatmul.mubr.bf16.gmra.mrb[0].mxu0 %v976
  %v1857 = vpop.f32.mrb[0].mxu0
  %v1858 = vadd.f32 %v277, %v1857
  %v1859 = vpop.f32.mrb[0].mxu0
  %v1860 = vadd.f32 %v281, %v1859
  %v1861 = vpop.f32.mrb[0].mxu0
  %v1862 = vadd.f32 %v277, %v1861
  %v1863 = vpop.f32.mrb[0].mxu0
  %v1864 = vadd.f32 %v281, %v1863
  %1865 = vmatprep.mubr.bf16.mxu0 0
  %1866 = vmatmul.mubr.bf16.gmra.mrb[0].mxu0 %v979
  %v1867 = vpop.f32.mrb[0].mxu0
  %v1868 = vadd.f32 %v277, %v1867
  %v1869 = vpop.f32.mrb[0].mxu0
  %v1870 = vadd.f32 %v281, %v1869
  %v1871 = vpop.f32.mrb[0].mxu0
  %v1872 = vadd.f32 %v277, %v1871
  %v1873 = vpop.f32.mrb[0].mxu0
  %v1874 = vadd.f32 %v281, %v1873
  %1875 = vmatprep.mubr.bf16.mxu0 0
  %1876 = vmatmul.mubr.bf16.gmra.mrb[0].mxu0 %v982
  %v1877 = vpop.f32.mrb[0].mxu0
  %v1878 = vadd.f32 %v277, %v1877
  %v1879 = vpop.f32.mrb[0].mxu0
  %v1880 = vadd.f32 %v281, %v1879
  %v1881 = vpop.f32.mrb[0].mxu0
  %v1882 = vadd.f32 %v277, %v1881
  %v1883 = vpop.f32.mrb[0].mxu0
  %v1884 = vadd.f32 %v281, %v1883
  %1885 = vmatprep.mubr.bf16.mxu0 0
  %1886 = vmatmul.mubr.bf16.gmra.mrb[0].mxu0 %v985
  %v1887 = vpop.f32.mrb[0].mxu0
  %v1888 = vadd.f32 %v277, %v1887
  %v1889 = vpop.f32.mrb[0].mxu0
  %v1890 = vadd.f32 %v281, %v1889
  %v1891 = vpop.f32.mrb[0].mxu0
  %v1892 = vadd.f32 %v277, %v1891
  %v1893 = vpop.f32.mrb[0].mxu0
  %v1894 = vadd.f32 %v281, %v1893
  %1895 = vmatprep.mubr.bf16.mxu0 0
  %1896 = vmatmul.mubr.bf16.gmra.mrb[0].mxu0 %v988
  %v1897 = vpop.f32.mrb[0].mxu0
  %v1898 = vadd.f32 %v277, %v1897
  %v1899 = vpop.f32.mrb[0].mxu0
  %v1900 = vadd.f32 %v281, %v1899
  %v1901 = vpop.f32.mrb[0].mxu0
  %v1902 = vadd.f32 %v277, %v1901
  %v1903 = vpop.f32.mrb[0].mxu0
  %v1904 = vadd.f32 %v281, %v1903
  %1905 = vmatprep.mubr.bf16.mxu0 0
  %1906 = vmatmul.mubr.bf16.gmra.mrb[0].mxu0 %v991
  %v1907 = vpop.f32.mrb[0].mxu0
  %v1908 = vadd.f32 %v277, %v1907
  %v1909 = vpop.f32.mrb[0].mxu0
  %v1910 = vadd.f32 %v281, %v1909
  %v1911 = vpop.f32.mrb[0].mxu0
  %v1912 = vadd.f32 %v277, %v1911
  %v1913 = vpop.f32.mrb[0].mxu0
  %v1914 = vadd.f32 %v281, %v1913
  %1915 = vmatprep.mubr.bf16.mxu0 0
  %1916 = vmatmul.mubr.bf16.gmra.mrb[0].mxu0 %v994
  %v1917 = vpop.f32.mrb[0].mxu0
  %v1918 = vadd.f32 %v277, %v1917
  %v1919 = vpop.f32.mrb[0].mxu0
  %v1920 = vadd.f32 %v281, %v1919
  %v1921 = vpop.f32.mrb[0].mxu0
  %v1922 = vadd.f32 %v277, %v1921
  %v1923 = vpop.f32.mrb[0].mxu0
  %v1924 = vadd.f32 %v281, %v1923
  %1925 = vmatprep.mubr.bf16.mxu0 0
  %1926 = vmatmul.mubr.bf16.gmra.mrb[0].mxu0 %v997
  %v1927 = vpop.f32.mrb[0].mxu0
  %v1928 = vadd.f32 %v277, %v1927
  %v1929 = vpop.f32.mrb[0].mxu0
  %v1930 = vadd.f32 %v281, %v1929
  %v1931 = vpop.f32.mrb[0].mxu0
  %v1932 = vadd.f32 %v277, %v1931
  %v1933 = vpop.f32.mrb[0].mxu0
  %v1934 = vadd.f32 %v281, %v1933
  %1935 = vmatprep.mubr.bf16.mxu0 0
  %1936 = vmatmul.mubr.bf16.gmra.mrb[0].mxu0 %v1000
  %v1937 = vpop.f32.mrb[0].mxu0
  %v1938 = vadd.f32 %v277, %v1937
  %v1939 = vpop.f32.mrb[0].mxu0
  %v1940 = vadd.f32 %v281, %v1939
  %v1941 = vpop.f32.mrb[0].mxu0
  %v1942 = vadd.f32 %v277, %v1941
  %v1943 = vpop.f32.mrb[0].mxu0
  %v1944 = vadd.f32 %v281, %v1943
  %1945 = vmatprep.mubr.bf16.mxu0 0
  %1946 = vmatmul.mubr.bf16.gmra.mrb[0].mxu0 %v1003
  %v1947 = vpop.f32.mrb[0].mxu0
  %v1948 = vadd.f32 %v277, %v1947
  %v1949 = vpop.f32.mrb[0].mxu0
  %v1950 = vadd.f32 %v281, %v1949
  %v1951 = vpop.f32.mrb[0].mxu0
  %v1952 = vadd.f32 %v277, %v1951
  %v1953 = vpop.f32.mrb[0].mxu0
  %v1954 = vadd.f32 %v281, %v1953
  %1955 = vmatprep.mubr.bf16.mxu0 0
  %1956 = vmatmul.mubr.bf16.gmra.mrb[0].mxu0 %v1006
  %v1957 = vpop.f32.mrb[0].mxu0
  %v1958 = vadd.f32 %v277, %v1957
  %v1959 = vpop.f32.mrb[0].mxu0
  %v1960 = vadd.f32 %v281, %v1959
  %v1961 = vpop.f32.mrb[0].mxu0
  %v1962 = vadd.f32 %v277, %v1961
  %v1963 = vpop.f32.mrb[0].mxu0
  %v1964 = vadd.f32 %v281, %v1963
  %1965 = vmatprep.mubr.bf16.mxu0 0
  %1966 = vmatmul.mubr.bf16.gmra.mrb[0].mxu0 %v1009
  %v1967 = vpop.f32.mrb[0].mxu0
  %v1968 = vadd.f32 %v277, %v1967
  %v1969 = vpop.f32.mrb[0].mxu0
  %v1970 = vadd.f32 %v281, %v1969
  %v1971 = vpop.f32.mrb[0].mxu0
  %v1972 = vadd.f32 %v277, %v1971
  %v1973 = vpop.f32.mrb[0].mxu0
  %v1974 = vadd.f32 %v281, %v1973
  %1975 = vdwg.mxu0
  %1976 = vmatprep.subr.bf16.mxu0 %v749
  %1977 = vmatpush1.bf16.msra.mxu0 %v748
  %1978 = vmatprep.subr.bf16.mxu0 %v765
  %1979 = vmatpush1.bf16.msra.mxu0 %v764
  %1980 = vmatprep.subr.bf16.mxu0 %v781
  %1981 = vmatpush1.bf16.msra.mxu0 %v780
  %1982 = vmatprep.subr.bf16.mxu0 %v797
  %1983 = vmatpush1.bf16.msra.mxu0 %v796
  %1984 = vmatprep.subr.bf16.mxu0 %v813
  %1985 = vmatpush1.bf16.msra.mxu0 %v812
  %1986 = vmatprep.subr.bf16.mxu0 %v829
  %1987 = vmatpush1.bf16.msra.mxu0 %v828
  %1988 = vmatprep.subr.bf16.mxu0 %v845
  %1989 = vmatpush1.bf16.msra.mxu0 %v844
  %1990 = vmatprep.subr.bf16.mxu0 0
  %1991 = vmatpush1.bf16.msra.mxu0 0
  %1992 = vmatprep.subr.bf16.mxu0 0
  %1993 = vmatpush1.bf16.msra.mxu0 0
  %1994 = vmatprep.subr.bf16.mxu0 0
  %1995 = vmatpush1.bf16.msra.mxu0 0
  %1996 = vmatprep.subr.bf16.mxu0 0
  %1997 = vmatpush1.bf16.msra.mxu0 0
  %1998 = vmatprep.subr.bf16.mxu0 0
  %1999 = vmatpush1.bf16.msra.mxu0 0
  %2000 = vmatprep.subr.bf16.mxu0 0
  %2001 = vmatpush1.bf16.msra.mxu0 0
  %2002 = vmatprep.subr.bf16.mxu0 0
  %2003 = vmatpush1.bf16.msra.mxu0 0
  %2004 = vmatprep.subr.bf16.mxu0 0
  %2005 = vmatpush1.bf16.msra.mxu0 0
  %2006 = vmatprep.subr.bf16.mxu0 0
  %2007 = vmatpush1.bf16.msra.mxu0 0
  %2008 = vmatprep.mubr.bf16.mxu0 0
  %2009 = vmatmul.mubr.bf16.gmra.mrb[0].mxu0 %v964
  %v2010 = vpop.f32.mrb[0].mxu0
  %v2011 = vadd.f32 %v285, %v2010
  %v2012 = vpop.f32.mrb[0].mxu0
  %v2013 = vadd.f32 %v289, %v2012
  %v2014 = vpop.f32.mrb[0].mxu0
  %v2015 = vadd.f32 %v285, %v2014
  %v2016 = vpop.f32.mrb[0].mxu0
  %v2017 = vadd.f32 %v289, %v2016
  %2018 = vmatprep.mubr.bf16.mxu0 0
  %2019 = vmatmul.mubr.bf16.gmra.mrb[0].mxu0 %v967
  %v2020 = vpop.f32.mrb[0].mxu0
  %v2021 = vadd.f32 %v285, %v2020
  %v2022 = vpop.f32.mrb[0].mxu0
  %v2023 = vadd.f32 %v289, %v2022
  %v2024 = vpop.f32.mrb[0].mxu0
  %v2025 = vadd.f32 %v285, %v2024
  %v2026 = vpop.f32.mrb[0].mxu0
  %v2027 = vadd.f32 %v289, %v2026
  %2028 = vmatprep.mubr.bf16.mxu0 0
  %2029 = vmatmul.mubr.bf16.gmra.mrb[0].mxu0 %v970
  %v2030 = vpop.f32.mrb[0].mxu0
  %v2031 = vadd.f32 %v285, %v2030
  %v2032 = vpop.f32.mrb[0].mxu0
  %v2033 = vadd.f32 %v289, %v2032
  %v2034 = vpop.f32.mrb[0].mxu0
  %v2035 = vadd.f32 %v285, %v2034
  %v2036 = vpop.f32.mrb[0].mxu0
  %v2037 = vadd.f32 %v289, %v2036
  %2038 = vmatprep.mubr.bf16.mxu0 0
  %2039 = vmatmul.mubr.bf16.gmra.mrb[0].mxu0 %v973
  %v2040 = vpop.f32.mrb[0].mxu0
  %v2041 = vadd.f32 %v285, %v2040
  %v2042 = vpop.f32.mrb[0].mxu0
  %v2043 = vadd.f32 %v289, %v2042
  %v2044 = vpop.f32.mrb[0].mxu0
  %v2045 = vadd.f32 %v285, %v2044
  %v2046 = vpop.f32.mrb[0].mxu0
  %v2047 = vadd.f32 %v289, %v2046
  %2048 = vmatprep.mubr.bf16.mxu0 0
  %2049 = vmatmul.mubr.bf16.gmra.mrb[0].mxu0 %v976
  %v2050 = vpop.f32.mrb[0].mxu0
  %v2051 = vadd.f32 %v285, %v2050
  %v2052 = vpop.f32.mrb[0].mxu0
  %v2053 = vadd.f32 %v289, %v2052
  %v2054 = vpop.f32.mrb[0].mxu0
  %v2055 = vadd.f32 %v285, %v2054
  %v2056 = vpop.f32.mrb[0].mxu0
  %v2057 = vadd.f32 %v289, %v2056
  %2058 = vmatprep.mubr.bf16.mxu0 0
  %2059 = vmatmul.mubr.bf16.gmra.mrb[0].mxu0 %v979
  %v2060 = vpop.f32.mrb[0].mxu0
  %v2061 = vadd.f32 %v285, %v2060
  %v2062 = vpop.f32.mrb[0].mxu0
  %v2063 = vadd.f32 %v289, %v2062
  %v2064 = vpop.f32.mrb[0].mxu0
  %v2065 = vadd.f32 %v285, %v2064
  %v2066 = vpop.f32.mrb[0].mxu0
  %v2067 = vadd.f32 %v289, %v2066
  %2068 = vmatprep.mubr.bf16.mxu0 0
  %2069 = vmatmul.mubr.bf16.gmra.mrb[0].mxu0 %v982
  %v2070 = vpop.f32.mrb[0].mxu0
  %v2071 = vadd.f32 %v285, %v2070
  %v2072 = vpop.f32.mrb[0].mxu0
  %v2073 = vadd.f32 %v289, %v2072
  %v2074 = vpop.f32.mrb[0].mxu0
  %v2075 = vadd.f32 %v285, %v2074
  %v2076 = vpop.f32.mrb[0].mxu0
  %v2077 = vadd.f32 %v289, %v2076
  %2078 = vmatprep.mubr.bf16.mxu0 0
  %2079 = vmatmul.mubr.bf16.gmra.mrb[0].mxu0 %v985
  %v2080 = vpop.f32.mrb[0].mxu0
  %v2081 = vadd.f32 %v285, %v2080
  %v2082 = vpop.f32.mrb[0].mxu0
  %v2083 = vadd.f32 %v289, %v2082
  %v2084 = vpop.f32.mrb[0].mxu0
  %v2085 = vadd.f32 %v285, %v2084
  %v2086 = vpop.f32.mrb[0].mxu0
  %v2087 = vadd.f32 %v289, %v2086
  %2088 = vmatprep.mubr.bf16.mxu0 0
  %2089 = vmatmul.mubr.bf16.gmra.mrb[0].mxu0 %v988
  %v2090 = vpop.f32.mrb[0].mxu0
  %v2091 = vadd.f32 %v285, %v2090
  %v2092 = vpop.f32.mrb[0].mxu0
  %v2093 = vadd.f32 %v289, %v2092
  %v2094 = vpop.f32.mrb[0].mxu0
  %v2095 = vadd.f32 %v285, %v2094
  %v2096 = vpop.f32.mrb[0].mxu0
  %v2097 = vadd.f32 %v289, %v2096
  %2098 = vmatprep.mubr.bf16.mxu0 0
  %2099 = vmatmul.mubr.bf16.gmra.mrb[0].mxu0 %v991
  %v2100 = vpop.f32.mrb[0].mxu0
  %v2101 = vadd.f32 %v285, %v2100
  %v2102 = vpop.f32.mrb[0].mxu0
  %v2103 = vadd.f32 %v289, %v2102
  %v2104 = vpop.f32.mrb[0].mxu0
  %v2105 = vadd.f32 %v285, %v2104
  %v2106 = vpop.f32.mrb[0].mxu0
  %v2107 = vadd.f32 %v289, %v2106
  %2108 = vmatprep.mubr.bf16.mxu0 0
  %2109 = vmatmul.mubr.bf16.gmra.mrb[0].mxu0 %v994
  %v2110 = vpop.f32.mrb[0].mxu0
  %v2111 = vadd.f32 %v285, %v2110
  %v2112 = vpop.f32.mrb[0].mxu0
  %v2113 = vadd.f32 %v289, %v2112
  %v2114 = vpop.f32.mrb[0].mxu0
  %v2115 = vadd.f32 %v285, %v2114
  %v2116 = vpop.f32.mrb[0].mxu0
  %v2117 = vadd.f32 %v289, %v2116
  %2118 = vmatprep.mubr.bf16.mxu0 0
  %2119 = vmatmul.mubr.bf16.gmra.mrb[0].mxu0 %v997
  %v2120 = vpop.f32.mrb[0].mxu0
  %v2121 = vadd.f32 %v285, %v2120
  %v2122 = vpop.f32.mrb[0].mxu0
  %v2123 = vadd.f32 %v289, %v2122
  %v2124 = vpop.f32.mrb[0].mxu0
  %v2125 = vadd.f32 %v285, %v2124
  %v2126 = vpop.f32.mrb[0].mxu0
  %v2127 = vadd.f32 %v289, %v2126
  %2128 = vmatprep.mubr.bf16.mxu0 0
  %2129 = vmatmul.mubr.bf16.gmra.mrb[0].mxu0 %v1000
  %v2130 = vpop.f32.mrb[0].mxu0
  %v2131 = vadd.f32 %v285, %v2130
  %v2132 = vpop.f32.mrb[0].mxu0
  %v2133 = vadd.f32 %v289, %v2132
  %v2134 = vpop.f32.mrb[0].mxu0
  %v2135 = vadd.f32 %v285, %v2134
  %v2136 = vpop.f32.mrb[0].mxu0
  %v2137 = vadd.f32 %v289, %v2136
  %2138 = vmatprep.mubr.bf16.mxu0 0
  %2139 = vmatmul.mubr.bf16.gmra.mrb[0].mxu0 %v1003
  %v2140 = vpop.f32.mrb[0].mxu0
  %v2141 = vadd.f32 %v285, %v2140
  %v2142 = vpop.f32.mrb[0].mxu0
  %v2143 = vadd.f32 %v289, %v2142
  %v2144 = vpop.f32.mrb[0].mxu0
  %v2145 = vadd.f32 %v285, %v2144
  %v2146 = vpop.f32.mrb[0].mxu0
  %v2147 = vadd.f32 %v289, %v2146
  %2148 = vmatprep.mubr.bf16.mxu0 0
  %2149 = vmatmul.mubr.bf16.gmra.mrb[0].mxu0 %v1006
  %v2150 = vpop.f32.mrb[0].mxu0
  %v2151 = vadd.f32 %v285, %v2150
  %v2152 = vpop.f32.mrb[0].mxu0
  %v2153 = vadd.f32 %v289, %v2152
  %v2154 = vpop.f32.mrb[0].mxu0
  %v2155 = vadd.f32 %v285, %v2154
  %v2156 = vpop.f32.mrb[0].mxu0
  %v2157 = vadd.f32 %v289, %v2156
  %2158 = vmatprep.mubr.bf16.mxu0 0
  %2159 = vmatmul.mubr.bf16.gmra.mrb[0].mxu0 %v1009
  %v2160 = vpop.f32.mrb[0].mxu0
  %v2161 = vadd.f32 %v285, %v2160
  %v2162 = vpop.f32.mrb[0].mxu0
  %v2163 = vadd.f32 %v289, %v2162
  %v2164 = vpop.f32.mrb[0].mxu0
  %v2165 = vadd.f32 %v285, %v2164
  %v2166 = vpop.f32.mrb[0].mxu0
  %v2167 = vadd.f32 %v289, %v2166
  %2168 = vdwg.mxu0
  %2169 = vmatprep.subr.bf16.mxu0 %v751
  %2170 = vmatpush1.bf16.msra.mxu0 %v750
  %2171 = vmatprep.subr.bf16.mxu0 %v767
  %2172 = vmatpush1.bf16.msra.mxu0 %v766
  %2173 = vmatprep.subr.bf16.mxu0 %v783
  %2174 = vmatpush1.bf16.msra.mxu0 %v782
  %2175 = vmatprep.subr.bf16.mxu0 %v799
  %2176 = vmatpush1.bf16.msra.mxu0 %v798
  %2177 = vmatprep.subr.bf16.mxu0 %v815
  %2178 = vmatpush1.bf16.msra.mxu0 %v814
  %2179 = vmatprep.subr.bf16.mxu0 %v831
  %2180 = vmatpush1.bf16.msra.mxu0 %v830
  %2181 = vmatprep.subr.bf16.mxu0 %v847
  %2182 = vmatpush1.bf16.msra.mxu0 %v846
  %2183 = vmatprep.subr.bf16.mxu0 0
  %2184 = vmatpush1.bf16.msra.mxu0 0
  %2185 = vmatprep.subr.bf16.mxu0 0
  %2186 = vmatpush1.bf16.msra.mxu0 0
  %2187 = vmatprep.subr.bf16.mxu0 0
  %2188 = vmatpush1.bf16.msra.mxu0 0
  %2189 = vmatprep.subr.bf16.mxu0 0
  %2190 = vmatpush1.bf16.msra.mxu0 0
  %2191 = vmatprep.subr.bf16.mxu0 0
  %2192 = vmatpush1.bf16.msra.mxu0 0
  %2193 = vmatprep.subr.bf16.mxu0 0
  %2194 = vmatpush1.bf16.msra.mxu0 0
  %2195 = vmatprep.subr.bf16.mxu0 0
  %2196 = vmatpush1.bf16.msra.mxu0 0
  %2197 = vmatprep.subr.bf16.mxu0 0
  %2198 = vmatpush1.bf16.msra.mxu0 0
  %2199 = vmatprep.subr.bf16.mxu0 0
  %2200 = vmatpush1.bf16.msra.mxu0 0
  %2201 = vmatprep.mubr.bf16.mxu0 0
  %2202 = vmatmul.mubr.bf16.gmra.mrb[0].mxu0 %v964
  %v2203 = vpop.f32.mrb[0].mxu0
  %v2204 = vadd.f32 %v293, %v2203
  %v2205 = vpop.f32.mrb[0].mxu0
  %v2206 = vadd.f32 %v297, %v2205
  %v2207 = vpop.f32.mrb[0].mxu0
  %v2208 = vadd.f32 %v293, %v2207
  %v2209 = vpop.f32.mrb[0].mxu0
  %v2210 = vadd.f32 %v297, %v2209
  %2211 = vmatprep.mubr.bf16.mxu0 0
  %2212 = vmatmul.mubr.bf16.gmra.mrb[0].mxu0 %v967
  %v2213 = vpop.f32.mrb[0].mxu0
  %v2214 = vadd.f32 %v293, %v2213
  %v2215 = vpop.f32.mrb[0].mxu0
  %v2216 = vadd.f32 %v297, %v2215
  %v2217 = vpop.f32.mrb[0].mxu0
  %v2218 = vadd.f32 %v293, %v2217
  %v2219 = vpop.f32.mrb[0].mxu0
  %v2220 = vadd.f32 %v297, %v2219
  %2221 = vmatprep.mubr.bf16.mxu0 0
  %2222 = vmatmul.mubr.bf16.gmra.mrb[0].mxu0 %v970
  %v2223 = vpop.f32.mrb[0].mxu0
  %v2224 = vadd.f32 %v293, %v2223
  %v2225 = vpop.f32.mrb[0].mxu0
  %v2226 = vadd.f32 %v297, %v2225
  %v2227 = vpop.f32.mrb[0].mxu0
  %v2228 = vadd.f32 %v293, %v2227
  %v2229 = vpop.f32.mrb[0].mxu0
  %v2230 = vadd.f32 %v297, %v2229
  %2231 = vmatprep.mubr.bf16.mxu0 0
  %2232 = vmatmul.mubr.bf16.gmra.mrb[0].mxu0 %v973
  %v2233 = vpop.f32.mrb[0].mxu0
  %v2234 = vadd.f32 %v293, %v2233
  %v2235 = vpop.f32.mrb[0].mxu0
  %v2236 = vadd.f32 %v297, %v2235
  %v2237 = vpop.f32.mrb[0].mxu0
  %v2238 = vadd.f32 %v293, %v2237
  %v2239 = vpop.f32.mrb[0].mxu0
  %v2240 = vadd.f32 %v297, %v2239
  %2241 = vmatprep.mubr.bf16.mxu0 0
  %2242 = vmatmul.mubr.bf16.gmra.mrb[0].mxu0 %v976
  %v2243 = vpop.f32.mrb[0].mxu0
  %v2244 = vadd.f32 %v293, %v2243
  %v2245 = vpop.f32.mrb[0].mxu0
  %v2246 = vadd.f32 %v297, %v2245
  %v2247 = vpop.f32.mrb[0].mxu0
  %v2248 = vadd.f32 %v293, %v2247
  %v2249 = vpop.f32.mrb[0].mxu0
  %v2250 = vadd.f32 %v297, %v2249
  %2251 = vmatprep.mubr.bf16.mxu0 0
  %2252 = vmatmul.mubr.bf16.gmra.mrb[0].mxu0 %v979
  %v2253 = vpop.f32.mrb[0].mxu0
  %v2254 = vadd.f32 %v293, %v2253
  %v2255 = vpop.f32.mrb[0].mxu0
  %v2256 = vadd.f32 %v297, %v2255
  %v2257 = vpop.f32.mrb[0].mxu0
  %v2258 = vadd.f32 %v293, %v2257
  %v2259 = vpop.f32.mrb[0].mxu0
  %v2260 = vadd.f32 %v297, %v2259
  %2261 = vmatprep.mubr.bf16.mxu0 0
  %2262 = vmatmul.mubr.bf16.gmra.mrb[0].mxu0 %v982
  %v2263 = vpop.f32.mrb[0].mxu0
  %v2264 = vadd.f32 %v293, %v2263
  %v2265 = vpop.f32.mrb[0].mxu0
  %v2266 = vadd.f32 %v297, %v2265
  %v2267 = vpop.f32.mrb[0].mxu0
  %v2268 = vadd.f32 %v293, %v2267
  %v2269 = vpop.f32.mrb[0].mxu0
  %v2270 = vadd.f32 %v297, %v2269
  %2271 = vmatprep.mubr.bf16.mxu0 0
  %2272 = vmatmul.mubr.bf16.gmra.mrb[0].mxu0 %v985
  %v2273 = vpop.f32.mrb[0].mxu0
  %v2274 = vadd.f32 %v293, %v2273
  %v2275 = vpop.f32.mrb[0].mxu0
  %v2276 = vadd.f32 %v297, %v2275
  %v2277 = vpop.f32.mrb[0].mxu0
  %v2278 = vadd.f32 %v293, %v2277
  %v2279 = vpop.f32.mrb[0].mxu0
  %v2280 = vadd.f32 %v297, %v2279
  %2281 = vmatprep.mubr.bf16.mxu0 0
  %2282 = vmatmul.mubr.bf16.gmra.mrb[0].mxu0 %v988
  %v2283 = vpop.f32.mrb[0].mxu0
  %v2284 = vadd.f32 %v293, %v2283
  %v2285 = vpop.f32.mrb[0].mxu0
  %v2286 = vadd.f32 %v297, %v2285
  %v2287 = vpop.f32.mrb[0].mxu0
  %v2288 = vadd.f32 %v293, %v2287
  %v2289 = vpop.f32.mrb[0].mxu0
  %v2290 = vadd.f32 %v297, %v2289
  %2291 = vmatprep.mubr.bf16.mxu0 0
  %2292 = vmatmul.mubr.bf16.gmra.mrb[0].mxu0 %v991
  %v2293 = vpop.f32.mrb[0].mxu0
  %v2294 = vadd.f32 %v293, %v2293
  %v2295 = vpop.f32.mrb[0].mxu0
  %v2296 = vadd.f32 %v297, %v2295
  %v2297 = vpop.f32.mrb[0].mxu0
  %v2298 = vadd.f32 %v293, %v2297
  %v2299 = vpop.f32.mrb[0].mxu0
  %v2300 = vadd.f32 %v297, %v2299
  %2301 = vmatprep.mubr.bf16.mxu0 0
  %2302 = vmatmul.mubr.bf16.gmra.mrb[0].mxu0 %v994
  %v2303 = vpop.f32.mrb[0].mxu0
  %v2304 = vadd.f32 %v293, %v2303
  %v2305 = vpop.f32.mrb[0].mxu0
  %v2306 = vadd.f32 %v297, %v2305
  %v2307 = vpop.f32.mrb[0].mxu0
  %v2308 = vadd.f32 %v293, %v2307
  %v2309 = vpop.f32.mrb[0].mxu0
  %v2310 = vadd.f32 %v297, %v2309
  %2311 = vmatprep.mubr.bf16.mxu0 0
  %2312 = vmatmul.mubr.bf16.gmra.mrb[0].mxu0 %v997
  %v2313 = vpop.f32.mrb[0].mxu0
  %v2314 = vadd.f32 %v293, %v2313
  %v2315 = vpop.f32.mrb[0].mxu0
  %v2316 = vadd.f32 %v297, %v2315
  %v2317 = vpop.f32.mrb[0].mxu0
  %v2318 = vadd.f32 %v293, %v2317
  %v2319 = vpop.f32.mrb[0].mxu0
  %v2320 = vadd.f32 %v297, %v2319
  %2321 = vmatprep.mubr.bf16.mxu0 0
  %2322 = vmatmul.mubr.bf16.gmra.mrb[0].mxu0 %v1000
  %v2323 = vpop.f32.mrb[0].mxu0
  %v2324 = vadd.f32 %v293, %v2323
  %v2325 = vpop.f32.mrb[0].mxu0
  %v2326 = vadd.f32 %v297, %v2325
  %v2327 = vpop.f32.mrb[0].mxu0
  %v2328 = vadd.f32 %v293, %v2327
  %v2329 = vpop.f32.mrb[0].mxu0
  %v2330 = vadd.f32 %v297, %v2329
  %2331 = vmatprep.mubr.bf16.mxu0 0
  %2332 = vmatmul.mubr.bf16.gmra.mrb[0].mxu0 %v1003
  %v2333 = vpop.f32.mrb[0].mxu0
  %v2334 = vadd.f32 %v293, %v2333
  %v2335 = vpop.f32.mrb[0].mxu0
  %v2336 = vadd.f32 %v297, %v2335
  %v2337 = vpop.f32.mrb[0].mxu0
  %v2338 = vadd.f32 %v293, %v2337
  %v2339 = vpop.f32.mrb[0].mxu0
  %v2340 = vadd.f32 %v297, %v2339
  %2341 = vmatprep.mubr.bf16.mxu0 0
  %2342 = vmatmul.mubr.bf16.gmra.mrb[0].mxu0 %v1006
  %v2343 = vpop.f32.mrb[0].mxu0
  %v2344 = vadd.f32 %v293, %v2343
  %v2345 = vpop.f32.mrb[0].mxu0
  %v2346 = vadd.f32 %v297, %v2345
  %v2347 = vpop.f32.mrb[0].mxu0
  %v2348 = vadd.f32 %v293, %v2347
  %v2349 = vpop.f32.mrb[0].mxu0
  %v2350 = vadd.f32 %v297, %v2349
  %2351 = vmatprep.mubr.bf16.mxu0 0
  %2352 = vmatmul.mubr.bf16.gmra.mrb[0].mxu0 %v1009
  %v2353 = vpop.f32.mrb[0].mxu0
  %v2354 = vadd.f32 %v293, %v2353
  %v2355 = vpop.f32.mrb[0].mxu0
  %v2356 = vadd.f32 %v297, %v2355
  %v2357 = vpop.f32.mrb[0].mxu0
  %v2358 = vadd.f32 %v293, %v2357
  %v2359 = vpop.f32.mrb[0].mxu0
  %v2360 = vadd.f32 %v297, %v2359
  %2361 = vdwg.mxu0
  %2362 = vmatprep.subr.bf16.mxu0 %v753
  %2363 = vmatpush1.bf16.msra.mxu0 %v752
  %2364 = vmatprep.subr.bf16.mxu0 %v769
  %2365 = vmatpush1.bf16.msra.mxu0 %v768
  %2366 = vmatprep.subr.bf16.mxu0 %v785
  %2367 = vmatpush1.bf16.msra.mxu0 %v784
  %2368 = vmatprep.subr.bf16.mxu0 %v801
  %2369 = vmatpush1.bf16.msra.mxu0 %v800
  %2370 = vmatprep.subr.bf16.mxu0 %v817
  %2371 = vmatpush1.bf16.msra.mxu0 %v816
  %2372 = vmatprep.subr.bf16.mxu0 %v833
  %2373 = vmatpush1.bf16.msra.mxu0 %v832
  %2374 = vmatprep.subr.bf16.mxu0 %v849
  %2375 = vmatpush1.bf16.msra.mxu0 %v848
  %2376 = vmatprep.subr.bf16.mxu0 0
  %2377 = vmatpush1.bf16.msra.mxu0 0
  %2378 = vmatprep.subr.bf16.mxu0 0
  %2379 = vmatpush1.bf16.msra.mxu0 0
  %2380 = vmatprep.subr.bf16.mxu0 0
  %2381 = vmatpush1.bf16.msra.mxu0 0
  %2382 = vmatprep.subr.bf16.mxu0 0
  %2383 = vmatpush1.bf16.msra.mxu0 0
  %2384 = vmatprep.subr.bf16.mxu0 0
  %2385 = vmatpush1.bf16.msra.mxu0 0
  %2386 = vmatprep.subr.bf16.mxu0 0
  %2387 = vmatpush1.bf16.msra.mxu0 0
  %2388 = vmatprep.subr.bf16.mxu0 0
  %2389 = vmatpush1.bf16.msra.mxu0 0
  %2390 = vmatprep.subr.bf16.mxu0 0
  %2391 = vmatpush1.bf16.msra.mxu0 0
  %2392 = vmatprep.subr.bf16.mxu0 0
  %2393 = vmatpush1.bf16.msra.mxu0 0
  %2394 = vmatprep.mubr.bf16.mxu0 0
  %2395 = vmatmul.mubr.bf16.gmra.mrb[0].mxu0 %v964
  %v2396 = vpop.f32.mrb[0].mxu0
  %v2397 = vadd.f32 %v301, %v2396
  %v2398 = vpop.f32.mrb[0].mxu0
  %v2399 = vadd.f32 %v305, %v2398
  %v2400 = vpop.f32.mrb[0].mxu0
  %v2401 = vadd.f32 %v301, %v2400
  %v2402 = vpop.f32.mrb[0].mxu0
  %v2403 = vadd.f32 %v305, %v2402
  %2404 = vmatprep.mubr.bf16.mxu0 0
  %2405 = vmatmul.mubr.bf16.gmra.mrb[0].mxu0 %v967
  %v2406 = vpop.f32.mrb[0].mxu0
  %v2407 = vadd.f32 %v301, %v2406
  %v2408 = vpop.f32.mrb[0].mxu0
  %v2409 = vadd.f32 %v305, %v2408
  %v2410 = vpop.f32.mrb[0].mxu0
  %v2411 = vadd.f32 %v301, %v2410
  %v2412 = vpop.f32.mrb[0].mxu0
  %v2413 = vadd.f32 %v305, %v2412
  %2414 = vmatprep.mubr.bf16.mxu0 0
  %2415 = vmatmul.mubr.bf16.gmra.mrb[0].mxu0 %v970
  %v2416 = vpop.f32.mrb[0].mxu0
  %v2417 = vadd.f32 %v301, %v2416
  %v2418 = vpop.f32.mrb[0].mxu0
  %v2419 = vadd.f32 %v305, %v2418
  %v2420 = vpop.f32.mrb[0].mxu0
  %v2421 = vadd.f32 %v301, %v2420
  %v2422 = vpop.f32.mrb[0].mxu0
  %v2423 = vadd.f32 %v305, %v2422
  %2424 = vmatprep.mubr.bf16.mxu0 0
  %2425 = vmatmul.mubr.bf16.gmra.mrb[0].mxu0 %v973
  %v2426 = vpop.f32.mrb[0].mxu0
  %v2427 = vadd.f32 %v301, %v2426
  %v2428 = vpop.f32.mrb[0].mxu0
  %v2429 = vadd.f32 %v305, %v2428
  %v2430 = vpop.f32.mrb[0].mxu0
  %v2431 = vadd.f32 %v301, %v2430
  %v2432 = vpop.f32.mrb[0].mxu0
  %v2433 = vadd.f32 %v305, %v2432
  %2434 = vmatprep.mubr.bf16.mxu0 0
  %2435 = vmatmul.mubr.bf16.gmra.mrb[0].mxu0 %v976
  %v2436 = vpop.f32.mrb[0].mxu0
  %v2437 = vadd.f32 %v301, %v2436
  %v2438 = vpop.f32.mrb[0].mxu0
  %v2439 = vadd.f32 %v305, %v2438
  %v2440 = vpop.f32.mrb[0].mxu0
  %v2441 = vadd.f32 %v301, %v2440
  %v2442 = vpop.f32.mrb[0].mxu0
  %v2443 = vadd.f32 %v305, %v2442
  %2444 = vmatprep.mubr.bf16.mxu0 0
  %2445 = vmatmul.mubr.bf16.gmra.mrb[0].mxu0 %v979
  %v2446 = vpop.f32.mrb[0].mxu0
  %v2447 = vadd.f32 %v301, %v2446
  %v2448 = vpop.f32.mrb[0].mxu0
  %v2449 = vadd.f32 %v305, %v2448
  %v2450 = vpop.f32.mrb[0].mxu0
  %v2451 = vadd.f32 %v301, %v2450
  %v2452 = vpop.f32.mrb[0].mxu0
  %v2453 = vadd.f32 %v305, %v2452
  %2454 = vmatprep.mubr.bf16.mxu0 0
  %2455 = vmatmul.mubr.bf16.gmra.mrb[0].mxu0 %v982
  %v2456 = vpop.f32.mrb[0].mxu0
  %v2457 = vadd.f32 %v301, %v2456
  %v2458 = vpop.f32.mrb[0].mxu0
  %v2459 = vadd.f32 %v305, %v2458
  %v2460 = vpop.f32.mrb[0].mxu0
  %v2461 = vadd.f32 %v301, %v2460
  %v2462 = vpop.f32.mrb[0].mxu0
  %v2463 = vadd.f32 %v305, %v2462
  %2464 = vmatprep.mubr.bf16.mxu0 0
  %2465 = vmatmul.mubr.bf16.gmra.mrb[0].mxu0 %v985
  %v2466 = vpop.f32.mrb[0].mxu0
  %v2467 = vadd.f32 %v301, %v2466
  %v2468 = vpop.f32.mrb[0].mxu0
  %v2469 = vadd.f32 %v305, %v2468
  %v2470 = vpop.f32.mrb[0].mxu0
  %v2471 = vadd.f32 %v301, %v2470
  %v2472 = vpop.f32.mrb[0].mxu0
  %v2473 = vadd.f32 %v305, %v2472
  %2474 = vmatprep.mubr.bf16.mxu0 0
  %2475 = vmatmul.mubr.bf16.gmra.mrb[0].mxu0 %v988
  %v2476 = vpop.f32.mrb[0].mxu0
  %v2477 = vadd.f32 %v301, %v2476
  %v2478 = vpop.f32.mrb[0].mxu0
  %v2479 = vadd.f32 %v305, %v2478
  %v2480 = vpop.f32.mrb[0].mxu0
  %v2481 = vadd.f32 %v301, %v2480
  %v2482 = vpop.f32.mrb[0].mxu0
  %v2483 = vadd.f32 %v305, %v2482
  %2484 = vmatprep.mubr.bf16.mxu0 0
  %2485 = vmatmul.mubr.bf16.gmra.mrb[0].mxu0 %v991
  %v2486 = vpop.f32.mrb[0].mxu0
  %v2487 = vadd.f32 %v301, %v2486
  %v2488 = vpop.f32.mrb[0].mxu0
  %v2489 = vadd.f32 %v305, %v2488
  %v2490 = vpop.f32.mrb[0].mxu0
  %v2491 = vadd.f32 %v301, %v2490
  %v2492 = vpop.f32.mrb[0].mxu0
  %v2493 = vadd.f32 %v305, %v2492
  %2494 = vmatprep.mubr.bf16.mxu0 0
  %2495 = vmatmul.mubr.bf16.gmra.mrb[0].mxu0 %v994
  %v2496 = vpop.f32.mrb[0].mxu0
  %v2497 = vadd.f32 %v301, %v2496
  %v2498 = vpop.f32.mrb[0].mxu0
  %v2499 = vadd.f32 %v305, %v2498
  %v2500 = vpop.f32.mrb[0].mxu0
  %v2501 = vadd.f32 %v301, %v2500
  %v2502 = vpop.f32.mrb[0].mxu0
  %v2503 = vadd.f32 %v305, %v2502
  %2504 = vmatprep.mubr.bf16.mxu0 0
  %2505 = vmatmul.mubr.bf16.gmra.mrb[0].mxu0 %v997
  %v2506 = vpop.f32.mrb[0].mxu0
  %v2507 = vadd.f32 %v301, %v2506
  %v2508 = vpop.f32.mrb[0].mxu0
  %v2509 = vadd.f32 %v305, %v2508
  %v2510 = vpop.f32.mrb[0].mxu0
  %v2511 = vadd.f32 %v301, %v2510
  %v2512 = vpop.f32.mrb[0].mxu0
  %v2513 = vadd.f32 %v305, %v2512
  %2514 = vmatprep.mubr.bf16.mxu0 0
  %2515 = vmatmul.mubr.bf16.gmra.mrb[0].mxu0 %v1000
  %v2516 = vpop.f32.mrb[0].mxu0
  %v2517 = vadd.f32 %v301, %v2516
  %v2518 = vpop.f32.mrb[0].mxu0
  %v2519 = vadd.f32 %v305, %v2518
  %v2520 = vpop.f32.mrb[0].mxu0
  %v2521 = vadd.f32 %v301, %v2520
  %v2522 = vpop.f32.mrb[0].mxu0
  %v2523 = vadd.f32 %v305, %v2522
  %2524 = vmatprep.mubr.bf16.mxu0 0
  %2525 = vmatmul.mubr.bf16.gmra.mrb[0].mxu0 %v1003
  %v2526 = vpop.f32.mrb[0].mxu0
  %v2527 = vadd.f32 %v301, %v2526
  %v2528 = vpop.f32.mrb[0].mxu0
  %v2529 = vadd.f32 %v305, %v2528
  %v2530 = vpop.f32.mrb[0].mxu0
  %v2531 = vadd.f32 %v301, %v2530
  %v2532 = vpop.f32.mrb[0].mxu0
  %v2533 = vadd.f32 %v305, %v2532
  %2534 = vmatprep.mubr.bf16.mxu0 0
  %2535 = vmatmul.mubr.bf16.gmra.mrb[0].mxu0 %v1006
  %v2536 = vpop.f32.mrb[0].mxu0
  %v2537 = vadd.f32 %v301, %v2536
  %v2538 = vpop.f32.mrb[0].mxu0
  %v2539 = vadd.f32 %v305, %v2538
  %v2540 = vpop.f32.mrb[0].mxu0
  %v2541 = vadd.f32 %v301, %v2540
  %v2542 = vpop.f32.mrb[0].mxu0
  %v2543 = vadd.f32 %v305, %v2542
  %2544 = vmatprep.mubr.bf16.mxu0 0
  %2545 = vmatmul.mubr.bf16.gmra.mrb[0].mxu0 %v1009
  %v2546 = vpop.f32.mrb[0].mxu0
  %v2547 = vadd.f32 %v301, %v2546
  %v2548 = vpop.f32.mrb[0].mxu0
  %v2549 = vadd.f32 %v305, %v2548
  %v2550 = vpop.f32.mrb[0].mxu0
  %v2551 = vadd.f32 %v301, %v2550
  %v2552 = vpop.f32.mrb[0].mxu0
  %v2553 = vadd.f32 %v305, %v2552
  %2554 = vdwg.mxu0
  %v2555 = vmax.f32 %v1046, 0.0
  %v2556 = vmax.f32 %v1048, 0.0
  %v2557 = vmax.f32 %v1239, 0.0
  %v2558 = vmax.f32 %v1241, 0.0
  %v2559 = vmax.f32 %v1432, 0.0
  %v2560 = vmax.f32 %v1434, 0.0
  %v2561 = vmax.f32 %v1625, 0.0
  %v2562 = vmax.f32 %v1627, 0.0
  %v2563 = vmax.f32 %v1818, 0.0
  %v2564 = vmax.f32 %v1820, 0.0
  %v2565 = vmax.f32 %v2011, 0.0
  %v2566 = vmax.f32 %v2013, 0.0
  %v2567 = vmax.f32 %v2204, 0.0
  %v2568 = vmax.f32 %v2206, 0.0
  %v2569 = vmax.f32 %v2397, 0.0
  %v2570 = vmax.f32 %v2399, 0.0
  %v2571 = vmax.f32 %v1050, 0.0
  %v2572 = vmax.f32 %v1052, 0.0
  %v2573 = vmax.f32 %v1243, 0.0
  %v2574 = vmax.f32 %v1245, 0.0
  %v2575 = vmax.f32 %v1436, 0.0
  %v2576 = vmax.f32 %v1438, 0.0
  %v2577 = vmax.f32 %v1629, 0.0
  %v2578 = vmax.f32 %v1631, 0.0
  %v2579 = vmax.f32 %v1822, 0.0
  %v2580 = vmax.f32 %v1824, 0.0
  %v2581 = vmax.f32 %v2015, 0.0
  %v2582 = vmax.f32 %v2017, 0.0
  %v2583 = vmax.f32 %v2208, 0.0
  %v2584 = vmax.f32 %v2210, 0.0
  %v2585 = vmax.f32 %v2401, 0.0
  %v2586 = vmax.f32 %v2403, 0.0
  %v2587 = vmax.f32 %v1056, 0.0
  %v2588 = vmax.f32 %v1058, 0.0
  %v2589 = vmax.f32 %v1249, 0.0
  %v2590 = vmax.f32 %v1251, 0.0
  %v2591 = vmax.f32 %v1442, 0.0
  %v2592 = vmax.f32 %v1444, 0.0
  %v2593 = vmax.f32 %v1635, 0.0
  %v2594 = vmax.f32 %v1637, 0.0
  %v2595 = vmax.f32 %v1828, 0.0
  %v2596 = vmax.f32 %v1830, 0.0
  %v2597 = vmax.f32 %v2021, 0.0
  %v2598 = vmax.f32 %v2023, 0.0
  %v2599 = vmax.f32 %v2214, 0.0
  %v2600 = vmax.f32 %v2216, 0.0
  %v2601 = vmax.f32 %v2407, 0.0
  %v2602 = vmax.f32 %v2409, 0.0
  %v2603 = vmax.f32 %v1060, 0.0
  %v2604 = vmax.f32 %v1062, 0.0
  %v2605 = vmax.f32 %v1253, 0.0
  %v2606 = vmax.f32 %v1255, 0.0
  %v2607 = vmax.f32 %v1446, 0.0
  %v2608 = vmax.f32 %v1448, 0.0
  %v2609 = vmax.f32 %v1639, 0.0
  %v2610 = vmax.f32 %v1641, 0.0
  %v2611 = vmax.f32 %v1832, 0.0
  %v2612 = vmax.f32 %v1834, 0.0
  %v2613 = vmax.f32 %v2025, 0.0
  %v2614 = vmax.f32 %v2027, 0.0
  %v2615 = vmax.f32 %v2218, 0.0
  %v2616 = vmax.f32 %v2220, 0.0
  %v2617 = vmax.f32 %v2411, 0.0
  %v2618 = vmax.f32 %v2413, 0.0
  %v2619 = vmax.f32 %v1066, 0.0
  %v2620 = vmax.f32 %v1068, 0.0
  %v2621 = vmax.f32 %v1259, 0.0
  %v2622 = vmax.f32 %v1261, 0.0
  %v2623 = vmax.f32 %v1452, 0.0
  %v2624 = vmax.f32 %v1454, 0.0
  %v2625 = vmax.f32 %v1645, 0.0
  %v2626 = vmax.f32 %v1647, 0.0
  %v2627 = vmax.f32 %v1838, 0.0
  %v2628 = vmax.f32 %v1840, 0.0
  %v2629 = vmax.f32 %v2031, 0.0
  %v2630 = vmax.f32 %v2033, 0.0
  %v2631 = vmax.f32 %v2224, 0.0
  %v2632 = vmax.f32 %v2226, 0.0
  %v2633 = vmax.f32 %v2417, 0.0
  %v2634 = vmax.f32 %v2419, 0.0
  %v2635 = vmax.f32 %v1070, 0.0
  %v2636 = vmax.f32 %v1072, 0.0
  %v2637 = vmax.f32 %v1263, 0.0
  %v2638 = vmax.f32 %v1265, 0.0
  %v2639 = vmax.f32 %v1456, 0.0
  %v2640 = vmax.f32 %v1458, 0.0
  %v2641 = vmax.f32 %v1649, 0.0
  %v2642 = vmax.f32 %v1651, 0.0
  %v2643 = vmax.f32 %v1842, 0.0
  %v2644 = vmax.f32 %v1844, 0.0
  %v2645 = vmax.f32 %v2035, 0.0
  %v2646 = vmax.f32 %v2037, 0.0
  %v2647 = vmax.f32 %v2228, 0.0
  %v2648 = vmax.f32 %v2230, 0.0
  %v2649 = vmax.f32 %v2421, 0.0
  %v2650 = vmax.f32 %v2423, 0.0
  %v2651 = vmax.f32 %v1076, 0.0
  %v2652 = vmax.f32 %v1078, 0.0
  %v2653 = vmax.f32 %v1269, 0.0
  %v2654 = vmax.f32 %v1271, 0.0
  %v2655 = vmax.f32 %v1462, 0.0
  %v2656 = vmax.f32 %v1464, 0.0
  %v2657 = vmax.f32 %v1655, 0.0
  %v2658 = vmax.f32 %v1657, 0.0
  %v2659 = vmax.f32 %v1848, 0.0
  %v2660 = vmax.f32 %v1850, 0.0
  %v2661 = vmax.f32 %v2041, 0.0
  %v2662 = vmax.f32 %v2043, 0.0
  %v2663 = vmax.f32 %v2234, 0.0
  %v2664 = vmax.f32 %v2236, 0.0
  %v2665 = vmax.f32 %v2427, 0.0
  %v2666 = vmax.f32 %v2429, 0.0
  %v2667 = vmax.f32 %v1080, 0.0
  %v2668 = vmax.f32 %v1082, 0.0
  %v2669 = vmax.f32 %v1273, 0.0
  %v2670 = vmax.f32 %v1275, 0.0
  %v2671 = vmax.f32 %v1466, 0.0
  %v2672 = vmax.f32 %v1468, 0.0
  %v2673 = vmax.f32 %v1659, 0.0
  %v2674 = vmax.f32 %v1661, 0.0
  %v2675 = vmax.f32 %v1852, 0.0
  %v2676 = vmax.f32 %v1854, 0.0
  %v2677 = vmax.f32 %v2045, 0.0
  %v2678 = vmax.f32 %v2047, 0.0
  %v2679 = vmax.f32 %v2238, 0.0
  %v2680 = vmax.f32 %v2240, 0.0
  %v2681 = vmax.f32 %v2431, 0.0
  %v2682 = vmax.f32 %v2433, 0.0
  %v2683 = vmax.f32 %v1086, 0.0
  %v2684 = vmax.f32 %v1088, 0.0
  %v2685 = vmax.f32 %v1279, 0.0
  %v2686 = vmax.f32 %v1281, 0.0
  %v2687 = vmax.f32 %v1472, 0.0
  %v2688 = vmax.f32 %v1474, 0.0
  %v2689 = vmax.f32 %v1665, 0.0
  %v2690 = vmax.f32 %v1667, 0.0
  %v2691 = vmax.f32 %v1858, 0.0
  %v2692 = vmax.f32 %v1860, 0.0
  %v2693 = vmax.f32 %v2051, 0.0
  %v2694 = vmax.f32 %v2053, 0.0
  %v2695 = vmax.f32 %v2244, 0.0
  %v2696 = vmax.f32 %v2246, 0.0
  %v2697 = vmax.f32 %v2437, 0.0
  %v2698 = vmax.f32 %v2439, 0.0
  %v2699 = vmax.f32 %v1090, 0.0
  %v2700 = vmax.f32 %v1092, 0.0
  %v2701 = vmax.f32 %v1283, 0.0
  %v2702 = vmax.f32 %v1285, 0.0
  %v2703 = vmax.f32 %v1476, 0.0
  %v2704 = vmax.f32 %v1478, 0.0
  %v2705 = vmax.f32 %v1669, 0.0
  %v2706 = vmax.f32 %v1671, 0.0
  %v2707 = vmax.f32 %v1862, 0.0
  %v2708 = vmax.f32 %v1864, 0.0
  %v2709 = vmax.f32 %v2055, 0.0
  %v2710 = vmax.f32 %v2057, 0.0
  %v2711 = vmax.f32 %v2248, 0.0
  %v2712 = vmax.f32 %v2250, 0.0
  %v2713 = vmax.f32 %v2441, 0.0
  %v2714 = vmax.f32 %v2443, 0.0
  %v2715 = vmax.f32 %v1096, 0.0
  %v2716 = vmax.f32 %v1098, 0.0
  %v2717 = vmax.f32 %v1289, 0.0
  %v2718 = vmax.f32 %v1291, 0.0
  %v2719 = vmax.f32 %v1482, 0.0
  %v2720 = vmax.f32 %v1484, 0.0
  %v2721 = vmax.f32 %v1675, 0.0
  %v2722 = vmax.f32 %v1677, 0.0
  %v2723 = vmax.f32 %v1868, 0.0
  %v2724 = vmax.f32 %v1870, 0.0
  %v2725 = vmax.f32 %v2061, 0.0
  %v2726 = vmax.f32 %v2063, 0.0
  %v2727 = vmax.f32 %v2254, 0.0
  %v2728 = vmax.f32 %v2256, 0.0
  %v2729 = vmax.f32 %v2447, 0.0
  %v2730 = vmax.f32 %v2449, 0.0
  %v2731 = vmax.f32 %v1100, 0.0
  %v2732 = vmax.f32 %v1102, 0.0
  %v2733 = vmax.f32 %v1293, 0.0
  %v2734 = vmax.f32 %v1295, 0.0
  %v2735 = vmax.f32 %v1486, 0.0
  %v2736 = vmax.f32 %v1488, 0.0
  %v2737 = vmax.f32 %v1679, 0.0
  %v2738 = vmax.f32 %v1681, 0.0
  %v2739 = vmax.f32 %v1872, 0.0
  %v2740 = vmax.f32 %v1874, 0.0
  %v2741 = vmax.f32 %v2065, 0.0
  %v2742 = vmax.f32 %v2067, 0.0
  %v2743 = vmax.f32 %v2258, 0.0
  %v2744 = vmax.f32 %v2260, 0.0
  %v2745 = vmax.f32 %v2451, 0.0
  %v2746 = vmax.f32 %v2453, 0.0
  %v2747 = vmax.f32 %v1106, 0.0
  %v2748 = vmax.f32 %v1108, 0.0
  %v2749 = vmax.f32 %v1299, 0.0
  %v2750 = vmax.f32 %v1301, 0.0
  %v2751 = vmax.f32 %v1492, 0.0
  %v2752 = vmax.f32 %v1494, 0.0
  %v2753 = vmax.f32 %v1685, 0.0
  %v2754 = vmax.f32 %v1687, 0.0
  %v2755 = vmax.f32 %v1878, 0.0
  %v2756 = vmax.f32 %v1880, 0.0
  %v2757 = vmax.f32 %v2071, 0.0
  %v2758 = vmax.f32 %v2073, 0.0
  %v2759 = vmax.f32 %v2264, 0.0
  %v2760 = vmax.f32 %v2266, 0.0
  %v2761 = vmax.f32 %v2457, 0.0
  %v2762 = vmax.f32 %v2459, 0.0
  %v2763 = vmax.f32 %v1110, 0.0
  %v2764 = vmax.f32 %v1112, 0.0
  %v2765 = vmax.f32 %v1303, 0.0
  %v2766 = vmax.f32 %v1305, 0.0
  %v2767 = vmax.f32 %v1496, 0.0
  %v2768 = vmax.f32 %v1498, 0.0
  %v2769 = vmax.f32 %v1689, 0.0
  %v2770 = vmax.f32 %v1691, 0.0
  %v2771 = vmax.f32 %v1882, 0.0
  %v2772 = vmax.f32 %v1884, 0.0
  %v2773 = vmax.f32 %v2075, 0.0
  %v2774 = vmax.f32 %v2077, 0.0
  %v2775 = vmax.f32 %v2268, 0.0
  %v2776 = vmax.f32 %v2270, 0.0
  %v2777 = vmax.f32 %v2461, 0.0
  %v2778 = vmax.f32 %v2463, 0.0
  %v2779 = vmax.f32 %v1116, 0.0
  %v2780 = vmax.f32 %v1118, 0.0
  %v2781 = vmax.f32 %v1309, 0.0
  %v2782 = vmax.f32 %v1311, 0.0
  %v2783 = vmax.f32 %v1502, 0.0
  %v2784 = vmax.f32 %v1504, 0.0
  %v2785 = vmax.f32 %v1695, 0.0
  %v2786 = vmax.f32 %v1697, 0.0
  %v2787 = vmax.f32 %v1888, 0.0
  %v2788 = vmax.f32 %v1890, 0.0
  %v2789 = vmax.f32 %v2081, 0.0
  %v2790 = vmax.f32 %v2083, 0.0
  %v2791 = vmax.f32 %v2274, 0.0
  %v2792 = vmax.f32 %v2276, 0.0
  %v2793 = vmax.f32 %v2467, 0.0
  %v2794 = vmax.f32 %v2469, 0.0
  %v2795 = vmax.f32 %v1120, 0.0
  %v2796 = vmax.f32 %v1122, 0.0
  %v2797 = vmax.f32 %v1313, 0.0
  %v2798 = vmax.f32 %v1315, 0.0
  %v2799 = vmax.f32 %v1506, 0.0
  %v2800 = vmax.f32 %v1508, 0.0
  %v2801 = vmax.f32 %v1699, 0.0
  %v2802 = vmax.f32 %v1701, 0.0
  %v2803 = vmax.f32 %v1892, 0.0
  %v2804 = vmax.f32 %v1894, 0.0
  %v2805 = vmax.f32 %v2085, 0.0
  %v2806 = vmax.f32 %v2087, 0.0
  %v2807 = vmax.f32 %v2278, 0.0
  %v2808 = vmax.f32 %v2280, 0.0
  %v2809 = vmax.f32 %v2471, 0.0
  %v2810 = vmax.f32 %v2473, 0.0
  %v2811 = vmax.f32 %v1126, 0.0
  %v2812 = vmax.f32 %v1128, 0.0
  %v2813 = vmax.f32 %v1319, 0.0
  %v2814 = vmax.f32 %v1321, 0.0
  %v2815 = vmax.f32 %v1512, 0.0
  %v2816 = vmax.f32 %v1514, 0.0
  %v2817 = vmax.f32 %v1705, 0.0
  %v2818 = vmax.f32 %v1707, 0.0
  %v2819 = vmax.f32 %v1898, 0.0
  %v2820 = vmax.f32 %v1900, 0.0
  %v2821 = vmax.f32 %v2091, 0.0
  %v2822 = vmax.f32 %v2093, 0.0
  %v2823 = vmax.f32 %v2284, 0.0
  %v2824 = vmax.f32 %v2286, 0.0
  %v2825 = vmax.f32 %v2477, 0.0
  %v2826 = vmax.f32 %v2479, 0.0
  %v2827 = vmax.f32 %v1130, 0.0
  %v2828 = vmax.f32 %v1132, 0.0
  %v2829 = vmax.f32 %v1323, 0.0
  %v2830 = vmax.f32 %v1325, 0.0
  %v2831 = vmax.f32 %v1516, 0.0
  %v2832 = vmax.f32 %v1518, 0.0
  %v2833 = vmax.f32 %v1709, 0.0
  %v2834 = vmax.f32 %v1711, 0.0
  %v2835 = vmax.f32 %v1902, 0.0
  %v2836 = vmax.f32 %v1904, 0.0
  %v2837 = vmax.f32 %v2095, 0.0
  %v2838 = vmax.f32 %v2097, 0.0
  %v2839 = vmax.f32 %v2288, 0.0
  %v2840 = vmax.f32 %v2290, 0.0
  %v2841 = vmax.f32 %v2481, 0.0
  %v2842 = vmax.f32 %v2483, 0.0
  %v2843 = vmax.f32 %v1136, 0.0
  %v2844 = vmax.f32 %v1138, 0.0
  %v2845 = vmax.f32 %v1329, 0.0
  %v2846 = vmax.f32 %v1331, 0.0
  %v2847 = vmax.f32 %v1522, 0.0
  %v2848 = vmax.f32 %v1524, 0.0
  %v2849 = vmax.f32 %v1715, 0.0
  %v2850 = vmax.f32 %v1717, 0.0
  %v2851 = vmax.f32 %v1908, 0.0
  %v2852 = vmax.f32 %v1910, 0.0
  %v2853 = vmax.f32 %v2101, 0.0
  %v2854 = vmax.f32 %v2103, 0.0
  %v2855 = vmax.f32 %v2294, 0.0
  %v2856 = vmax.f32 %v2296, 0.0
  %v2857 = vmax.f32 %v2487, 0.0
  %v2858 = vmax.f32 %v2489, 0.0
  %v2859 = vmax.f32 %v1140, 0.0
  %v2860 = vmax.f32 %v1142, 0.0
  %v2861 = vmax.f32 %v1333, 0.0
  %v2862 = vmax.f32 %v1335, 0.0
  %v2863 = vmax.f32 %v1526, 0.0
  %v2864 = vmax.f32 %v1528, 0.0
  %v2865 = vmax.f32 %v1719, 0.0
  %v2866 = vmax.f32 %v1721, 0.0
  %v2867 = vmax.f32 %v1912, 0.0
  %v2868 = vmax.f32 %v1914, 0.0
  %v2869 = vmax.f32 %v2105, 0.0
  %v2870 = vmax.f32 %v2107, 0.0
  %v2871 = vmax.f32 %v2298, 0.0
  %v2872 = vmax.f32 %v2300, 0.0
  %v2873 = vmax.f32 %v2491, 0.0
  %v2874 = vmax.f32 %v2493, 0.0
  %v2875 = vmax.f32 %v1146, 0.0
  %v2876 = vmax.f32 %v1148, 0.0
  %v2877 = vmax.f32 %v1339, 0.0
  %v2878 = vmax.f32 %v1341, 0.0
  %v2879 = vmax.f32 %v1532, 0.0
  %v2880 = vmax.f32 %v1534, 0.0
  %v2881 = vmax.f32 %v1725, 0.0
  %v2882 = vmax.f32 %v1727, 0.0
  %v2883 = vmax.f32 %v1918, 0.0
  %v2884 = vmax.f32 %v1920, 0.0
  %v2885 = vmax.f32 %v2111, 0.0
  %v2886 = vmax.f32 %v2113, 0.0
  %v2887 = vmax.f32 %v2304, 0.0
  %v2888 = vmax.f32 %v2306, 0.0
  %v2889 = vmax.f32 %v2497, 0.0
  %v2890 = vmax.f32 %v2499, 0.0
  %v2891 = vmax.f32 %v1150, 0.0
  %v2892 = vmax.f32 %v1152, 0.0
  %v2893 = vmax.f32 %v1343, 0.0
  %v2894 = vmax.f32 %v1345, 0.0
  %v2895 = vmax.f32 %v1536, 0.0
  %v2896 = vmax.f32 %v1538, 0.0
  %v2897 = vmax.f32 %v1729, 0.0
  %v2898 = vmax.f32 %v1731, 0.0
  %v2899 = vmax.f32 %v1922, 0.0
  %v2900 = vmax.f32 %v1924, 0.0
  %v2901 = vmax.f32 %v2115, 0.0
  %v2902 = vmax.f32 %v2117, 0.0
  %v2903 = vmax.f32 %v2308, 0.0
  %v2904 = vmax.f32 %v2310, 0.0
  %v2905 = vmax.f32 %v2501, 0.0
  %v2906 = vmax.f32 %v2503, 0.0
  %v2907 = vmax.f32 %v1156, 0.0
  %v2908 = vmax.f32 %v1158, 0.0
  %v2909 = vmax.f32 %v1349, 0.0
  %v2910 = vmax.f32 %v1351, 0.0
  %v2911 = vmax.f32 %v1542, 0.0
  %v2912 = vmax.f32 %v1544, 0.0
  %v2913 = vmax.f32 %v1735, 0.0
  %v2914 = vmax.f32 %v1737, 0.0
  %v2915 = vmax.f32 %v1928, 0.0
  %v2916 = vmax.f32 %v1930, 0.0
  %v2917 = vmax.f32 %v2121, 0.0
  %v2918 = vmax.f32 %v2123, 0.0
  %v2919 = vmax.f32 %v2314, 0.0
  %v2920 = vmax.f32 %v2316, 0.0
  %v2921 = vmax.f32 %v2507, 0.0
  %v2922 = vmax.f32 %v2509, 0.0
  %v2923 = vmax.f32 %v1160, 0.0
  %v2924 = vmax.f32 %v1162, 0.0
  %v2925 = vmax.f32 %v1353, 0.0
  %v2926 = vmax.f32 %v1355, 0.0
  %v2927 = vmax.f32 %v1546, 0.0
  %v2928 = vmax.f32 %v1548, 0.0
  %v2929 = vmax.f32 %v1739, 0.0
  %v2930 = vmax.f32 %v1741, 0.0
  %v2931 = vmax.f32 %v1932, 0.0
  %v2932 = vmax.f32 %v1934, 0.0
  %v2933 = vmax.f32 %v2125, 0.0
  %v2934 = vmax.f32 %v2127, 0.0
  %v2935 = vmax.f32 %v2318, 0.0
  %v2936 = vmax.f32 %v2320, 0.0
  %v2937 = vmax.f32 %v2511, 0.0
  %v2938 = vmax.f32 %v2513, 0.0
  %v2939 = vmax.f32 %v1166, 0.0
  %v2940 = vmax.f32 %v1168, 0.0
  %v2941 = vmax.f32 %v1359, 0.0
  %v2942 = vmax.f32 %v1361, 0.0
  %v2943 = vmax.f32 %v1552, 0.0
  %v2944 = vmax.f32 %v1554, 0.0
  %v2945 = vmax.f32 %v1745, 0.0
  %v2946 = vmax.f32 %v1747, 0.0
  %v2947 = vmax.f32 %v1938, 0.0
  %v2948 = vmax.f32 %v1940, 0.0
  %v2949 = vmax.f32 %v2131, 0.0
  %v2950 = vmax.f32 %v2133, 0.0
  %v2951 = vmax.f32 %v2324, 0.0
  %v2952 = vmax.f32 %v2326, 0.0
  %v2953 = vmax.f32 %v2517, 0.0
  %v2954 = vmax.f32 %v2519, 0.0
  %v2955 = vmax.f32 %v1170, 0.0
  %v2956 = vmax.f32 %v1172, 0.0
  %v2957 = vmax.f32 %v1363, 0.0
  %v2958 = vmax.f32 %v1365, 0.0
  %v2959 = vmax.f32 %v1556, 0.0
  %v2960 = vmax.f32 %v1558, 0.0
  %v2961 = vmax.f32 %v1749, 0.0
  %v2962 = vmax.f32 %v1751, 0.0
  %v2963 = vmax.f32 %v1942, 0.0
  %v2964 = vmax.f32 %v1944, 0.0
  %v2965 = vmax.f32 %v2135, 0.0
  %v2966 = vmax.f32 %v2137, 0.0
  %v2967 = vmax.f32 %v2328, 0.0
  %v2968 = vmax.f32 %v2330, 0.0
  %v2969 = vmax.f32 %v2521, 0.0
  %v2970 = vmax.f32 %v2523, 0.0
  %v2971 = vmax.f32 %v1176, 0.0
  %v2972 = vmax.f32 %v1178, 0.0
  %v2973 = vmax.f32 %v1369, 0.0
  %v2974 = vmax.f32 %v1371, 0.0
  %v2975 = vmax.f32 %v1562, 0.0
  %v2976 = vmax.f32 %v1564, 0.0
  %v2977 = vmax.f32 %v1755, 0.0
  %v2978 = vmax.f32 %v1757, 0.0
  %v2979 = vmax.f32 %v1948, 0.0
  %v2980 = vmax.f32 %v1950, 0.0
  %v2981 = vmax.f32 %v2141, 0.0
  %v2982 = vmax.f32 %v2143, 0.0
  %v2983 = vmax.f32 %v2334, 0.0
  %v2984 = vmax.f32 %v2336, 0.0
  %v2985 = vmax.f32 %v2527, 0.0
  %v2986 = vmax.f32 %v2529, 0.0
  %v2987 = vmax.f32 %v1180, 0.0
  %v2988 = vmax.f32 %v1182, 0.0
  %v2989 = vmax.f32 %v1373, 0.0
  %v2990 = vmax.f32 %v1375, 0.0
  %v2991 = vmax.f32 %v1566, 0.0
  %v2992 = vmax.f32 %v1568, 0.0
  %v2993 = vmax.f32 %v1759, 0.0
  %v2994 = vmax.f32 %v1761, 0.0
  %v2995 = vmax.f32 %v1952, 0.0
  %v2996 = vmax.f32 %v1954, 0.0
  %v2997 = vmax.f32 %v2145, 0.0
  %v2998 = vmax.f32 %v2147, 0.0
  %v2999 = vmax.f32 %v2338, 0.0
  %v3000 = vmax.f32 %v2340, 0.0
  %v3001 = vmax.f32 %v2531, 0.0
  %v3002 = vmax.f32 %v2533, 0.0
  %v3003 = vmax.f32 %v1186, 0.0
  %v3004 = vmax.f32 %v1188, 0.0
  %v3005 = vmax.f32 %v1379, 0.0
  %v3006 = vmax.f32 %v1381, 0.0
  %v3007 = vmax.f32 %v1572, 0.0
  %v3008 = vmax.f32 %v1574, 0.0
  %v3009 = vmax.f32 %v1765, 0.0
  %v3010 = vmax.f32 %v1767, 0.0
  %v3011 = vmax.f32 %v1958, 0.0
  %v3012 = vmax.f32 %v1960, 0.0
  %v3013 = vmax.f32 %v2151, 0.0
  %v3014 = vmax.f32 %v2153, 0.0
  %v3015 = vmax.f32 %v2344, 0.0
  %v3016 = vmax.f32 %v2346, 0.0
  %v3017 = vmax.f32 %v2537, 0.0
  %v3018 = vmax.f32 %v2539, 0.0
  %v3019 = vmax.f32 %v1190, 0.0
  %v3020 = vmax.f32 %v1192, 0.0
  %v3021 = vmax.f32 %v1383, 0.0
  %v3022 = vmax.f32 %v1385, 0.0
  %v3023 = vmax.f32 %v1576, 0.0
  %v3024 = vmax.f32 %v1578, 0.0
  %v3025 = vmax.f32 %v1769, 0.0
  %v3026 = vmax.f32 %v1771, 0.0
  %v3027 = vmax.f32 %v1962, 0.0
  %v3028 = vmax.f32 %v1964, 0.0
  %v3029 = vmax.f32 %v2155, 0.0
  %v3030 = vmax.f32 %v2157, 0.0
  %v3031 = vmax.f32 %v2348, 0.0
  %v3032 = vmax.f32 %v2350, 0.0
  %v3033 = vmax.f32 %v2541, 0.0
  %v3034 = vmax.f32 %v2543, 0.0
  %v3035 = vmax.f32 %v1196, 0.0
  %v3036 = vmax.f32 %v1198, 0.0
  %v3037 = vmax.f32 %v1389, 0.0
  %v3038 = vmax.f32 %v1391, 0.0
  %v3039 = vmax.f32 %v1582, 0.0
  %v3040 = vmax.f32 %v1584, 0.0
  %v3041 = vmax.f32 %v1775, 0.0
  %v3042 = vmax.f32 %v1777, 0.0
  %v3043 = vmax.f32 %v1968, 0.0
  %v3044 = vmax.f32 %v1970, 0.0
  %v3045 = vmax.f32 %v2161, 0.0
  %v3046 = vmax.f32 %v2163, 0.0
  %v3047 = vmax.f32 %v2354, 0.0
  %v3048 = vmax.f32 %v2356, 0.0
  %v3049 = vmax.f32 %v2547, 0.0
  %v3050 = vmax.f32 %v2549, 0.0
  %v3051 = vmax.f32 %v1200, 0.0
  %v3052 = vmax.f32 %v1202, 0.0
  %v3053 = vmax.f32 %v1393, 0.0
  %v3054 = vmax.f32 %v1395, 0.0
  %v3055 = vmax.f32 %v1586, 0.0
  %v3056 = vmax.f32 %v1588, 0.0
  %v3057 = vmax.f32 %v1779, 0.0
  %v3058 = vmax.f32 %v1781, 0.0
  %v3059 = vmax.f32 %v1972, 0.0
  %v3060 = vmax.f32 %v1974, 0.0
  %v3061 = vmax.f32 %v2165, 0.0
  %v3062 = vmax.f32 %v2167, 0.0
  %v3063 = vmax.f32 %v2358, 0.0
  %v3064 = vmax.f32 %v2360, 0.0
  %v3065 = vmax.f32 %v2551, 0.0
  %v3066 = vmax.f32 %v2553, 0.0
  %v3067 = vpack.c.bf16 %v2571, %v2555
  %v3068 = vpack.c.bf16 %v2572, %v2556
  %v3069 = vpack.c.bf16 %v2573, %v2557
  %v3070 = vpack.c.bf16 %v2574, %v2558
  %v3071 = vpack.c.bf16 %v2575, %v2559
  %v3072 = vpack.c.bf16 %v2576, %v2560
  %v3073 = vpack.c.bf16 %v2577, %v2561
  %v3074 = vpack.c.bf16 %v2578, %v2562
  %v3075 = vpack.c.bf16 %v2579, %v2563
  %v3076 = vpack.c.bf16 %v2580, %v2564
  %v3077 = vpack.c.bf16 %v2581, %v2565
  %v3078 = vpack.c.bf16 %v2582, %v2566
  %v3079 = vpack.c.bf16 %v2583, %v2567
  %v3080 = vpack.c.bf16 %v2584, %v2568
  %v3081 = vpack.c.bf16 %v2585, %v2569
  %v3082 = vpack.c.bf16 %v2586, %v2570
  %v3083 = vpack.c.bf16 %v2603, %v2587
  %v3084 = vpack.c.bf16 %v2604, %v2588
  %v3085 = vpack.c.bf16 %v2605, %v2589
  %v3086 = vpack.c.bf16 %v2606, %v2590
  %v3087 = vpack.c.bf16 %v2607, %v2591
  %v3088 = vpack.c.bf16 %v2608, %v2592
  %v3089 = vpack.c.bf16 %v2609, %v2593
  %v3090 = vpack.c.bf16 %v2610, %v2594
  %v3091 = vpack.c.bf16 %v2611, %v2595
  %v3092 = vpack.c.bf16 %v2612, %v2596
  %v3093 = vpack.c.bf16 %v2613, %v2597
  %v3094 = vpack.c.bf16 %v2614, %v2598
  %v3095 = vpack.c.bf16 %v2615, %v2599
  %v3096 = vpack.c.bf16 %v2616, %v2600
  %v3097 = vpack.c.bf16 %v2617, %v2601
  %v3098 = vpack.c.bf16 %v2618, %v2602
  %v3099 = vpack.c.bf16 %v2635, %v2619
  %v3100 = vpack.c.bf16 %v2636, %v2620
  %v3101 = vpack.c.bf16 %v2637, %v2621
  %v3102 = vpack.c.bf16 %v2638, %v2622
  %v3103 = vpack.c.bf16 %v2639, %v2623
  %v3104 = vpack.c.bf16 %v2640, %v2624
  %v3105 = vpack.c.bf16 %v2641, %v2625
  %v3106 = vpack.c.bf16 %v2642, %v2626
  %v3107 = vpack.c.bf16 %v2643, %v2627
  %v3108 = vpack.c.bf16 %v2644, %v2628
  %v3109 = vpack.c.bf16 %v2645, %v2629
  %v3110 = vpack.c.bf16 %v2646, %v2630
  %v3111 = vpack.c.bf16 %v2647, %v2631
  %v3112 = vpack.c.bf16 %v2648, %v2632
  %v3113 = vpack.c.bf16 %v2649, %v2633
  %v3114 = vpack.c.bf16 %v2650, %v2634
  %v3115 = vpack.c.bf16 %v2667, %v2651
  %v3116 = vpack.c.bf16 %v2668, %v2652
  %v3117 = vpack.c.bf16 %v2669, %v2653
  %v3118 = vpack.c.bf16 %v2670, %v2654
  %v3119 = vpack.c.bf16 %v2671, %v2655
  %v3120 = vpack.c.bf16 %v2672, %v2656
  %v3121 = vpack.c.bf16 %v2673, %v2657
  %v3122 = vpack.c.bf16 %v2674, %v2658
  %v3123 = vpack.c.bf16 %v2675, %v2659
  %v3124 = vpack.c.bf16 %v2676, %v2660
  %v3125 = vpack.c.bf16 %v2677, %v2661
  %v3126 = vpack.c.bf16 %v2678, %v2662
  %v3127 = vpack.c.bf16 %v2679, %v2663
  %v3128 = vpack.c.bf16 %v2680, %v2664
  %v3129 = vpack.c.bf16 %v2681, %v2665
  %v3130 = vpack.c.bf16 %v2682, %v2666
  %v3131 = vpack.c.bf16 %v2699, %v2683
  %v3132 = vpack.c.bf16 %v2700, %v2684
  %v3133 = vpack.c.bf16 %v2701, %v2685
  %v3134 = vpack.c.bf16 %v2702, %v2686
  %v3135 = vpack.c.bf16 %v2703, %v2687
  %v3136 = vpack.c.bf16 %v2704, %v2688
  %v3137 = vpack.c.bf16 %v2705, %v2689
  %v3138 = vpack.c.bf16 %v2706, %v2690
  %v3139 = vpack.c.bf16 %v2707, %v2691
  %v3140 = vpack.c.bf16 %v2708, %v2692
  %v3141 = vpack.c.bf16 %v2709, %v2693
  %v3142 = vpack.c.bf16 %v2710, %v2694
  %v3143 = vpack.c.bf16 %v2711, %v2695
  %v3144 = vpack.c.bf16 %v2712, %v2696
  %v3145 = vpack.c.bf16 %v2713, %v2697
  %v3146 = vpack.c.bf16 %v2714, %v2698
  %v3147 = vpack.c.bf16 %v2731, %v2715
  %v3148 = vpack.c.bf16 %v2732, %v2716
  %v3149 = vpack.c.bf16 %v2733, %v2717
  %v3150 = vpack.c.bf16 %v2734, %v2718
  %v3151 = vpack.c.bf16 %v2735, %v2719
  %v3152 = vpack.c.bf16 %v2736, %v2720
  %v3153 = vpack.c.bf16 %v2737, %v2721
  %v3154 = vpack.c.bf16 %v2738, %v2722
  %v3155 = vpack.c.bf16 %v2739, %v2723
  %v3156 = vpack.c.bf16 %v2740, %v2724
  %v3157 = vpack.c.bf16 %v2741, %v2725
  %v3158 = vpack.c.bf16 %v2742, %v2726
  %v3159 = vpack.c.bf16 %v2743, %v2727
  %v3160 = vpack.c.bf16 %v2744, %v2728
  %v3161 = vpack.c.bf16 %v2745, %v2729
  %v3162 = vpack.c.bf16 %v2746, %v2730
  %v3163 = vpack.c.bf16 %v2763, %v2747
  %v3164 = vpack.c.bf16 %v2764, %v2748
  %v3165 = vpack.c.bf16 %v2765, %v2749
  %v3166 = vpack.c.bf16 %v2766, %v2750
  %v3167 = vpack.c.bf16 %v2767, %v2751
  %v3168 = vpack.c.bf16 %v2768, %v2752
  %v3169 = vpack.c.bf16 %v2769, %v2753
  %v3170 = vpack.c.bf16 %v2770, %v2754
  %v3171 = vpack.c.bf16 %v2771, %v2755
  %v3172 = vpack.c.bf16 %v2772, %v2756
  %v3173 = vpack.c.bf16 %v2773, %v2757
  %v3174 = vpack.c.bf16 %v2774, %v2758
  %v3175 = vpack.c.bf16 %v2775, %v2759
  %v3176 = vpack.c.bf16 %v2776, %v2760
  %v3177 = vpack.c.bf16 %v2777, %v2761
  %v3178 = vpack.c.bf16 %v2778, %v2762
  %v3179 = vpack.c.bf16 %v2795, %v2779
  %v3180 = vpack.c.bf16 %v2796, %v2780
  %v3181 = vpack.c.bf16 %v2797, %v2781
  %v3182 = vpack.c.bf16 %v2798, %v2782
  %v3183 = vpack.c.bf16 %v2799, %v2783
  %v3184 = vpack.c.bf16 %v2800, %v2784
  %v3185 = vpack.c.bf16 %v2801, %v2785
  %v3186 = vpack.c.bf16 %v2802, %v2786
  %v3187 = vpack.c.bf16 %v2803, %v2787
  %v3188 = vpack.c.bf16 %v2804, %v2788
  %v3189 = vpack.c.bf16 %v2805, %v2789
  %v3190 = vpack.c.bf16 %v2806, %v2790
  %v3191 = vpack.c.bf16 %v2807, %v2791
  %v3192 = vpack.c.bf16 %v2808, %v2792
  %v3193 = vpack.c.bf16 %v2809, %v2793
  %v3194 = vpack.c.bf16 %v2810, %v2794
  %v3195 = vpack.c.bf16 %v2827, %v2811
  %v3196 = vpack.c.bf16 %v2828, %v2812
  %v3197 = vpack.c.bf16 %v2829, %v2813
  %v3198 = vpack.c.bf16 %v2830, %v2814
  %v3199 = vpack.c.bf16 %v2831, %v2815
  %v3200 = vpack.c.bf16 %v2832, %v2816
  %v3201 = vpack.c.bf16 %v2833, %v2817
  %v3202 = vpack.c.bf16 %v2834, %v2818
  %v3203 = vpack.c.bf16 %v2835, %v2819
  %v3204 = vpack.c.bf16 %v2836, %v2820
  %v3205 = vpack.c.bf16 %v2837, %v2821
  %v3206 = vpack.c.bf16 %v2838, %v2822
  %v3207 = vpack.c.bf16 %v2839, %v2823
  %v3208 = vpack.c.bf16 %v2840, %v2824
  %v3209 = vpack.c.bf16 %v2841, %v2825
  %v3210 = vpack.c.bf16 %v2842, %v2826
  %v3211 = vpack.c.bf16 %v2859, %v2843
  %v3212 = vpack.c.bf16 %v2860, %v2844
  %v3213 = vpack.c.bf16 %v2861, %v2845
  %v3214 = vpack.c.bf16 %v2862, %v2846
  %v3215 = vpack.c.bf16 %v2863, %v2847
  %v3216 = vpack.c.bf16 %v2864, %v2848
  %v3217 = vpack.c.bf16 %v2865, %v2849
  %v3218 = vpack.c.bf16 %v2866, %v2850
  %v3219 = vpack.c.bf16 %v2867, %v2851
  %v3220 = vpack.c.bf16 %v2868, %v2852
  %v3221 = vpack.c.bf16 %v2869, %v2853
  %v3222 = vpack.c.bf16 %v2870, %v2854
  %v3223 = vpack.c.bf16 %v2871, %v2855
  %v3224 = vpack.c.bf16 %v2872, %v2856
  %v3225 = vpack.c.bf16 %v2873, %v2857
  %v3226 = vpack.c.bf16 %v2874, %v2858
  %v3227 = vpack.c.bf16 %v2891, %v2875
  %v3228 = vpack.c.bf16 %v2892, %v2876
  %v3229 = vpack.c.bf16 %v2893, %v2877
  %v3230 = vpack.c.bf16 %v2894, %v2878
  %v3231 = vpack.c.bf16 %v2895, %v2879
  %v3232 = vpack.c.bf16 %v2896, %v2880
  %v3233 = vpack.c.bf16 %v2897, %v2881
  %v3234 = vpack.c.bf16 %v2898, %v2882
  %v3235 = vpack.c.bf16 %v2899, %v2883
  %v3236 = vpack.c.bf16 %v2900, %v2884
  %v3237 = vpack.c.bf16 %v2901, %v2885
  %v3238 = vpack.c.bf16 %v2902, %v2886
  %v3239 = vpack.c.bf16 %v2903, %v2887
  %v3240 = vpack.c.bf16 %v2904, %v2888
  %v3241 = vpack.c.bf16 %v2905, %v2889
  %v3242 = vpack.c.bf16 %v2906, %v2890
  %v3243 = vpack.c.bf16 %v2923, %v2907
  %v3244 = vpack.c.bf16 %v2924, %v2908
  %v3245 = vpack.c.bf16 %v2925, %v2909
  %v3246 = vpack.c.bf16 %v2926, %v2910
  %v3247 = vpack.c.bf16 %v2927, %v2911
  %v3248 = vpack.c.bf16 %v2928, %v2912
  %v3249 = vpack.c.bf16 %v2929, %v2913
  %v3250 = vpack.c.bf16 %v2930, %v2914
  %v3251 = vpack.c.bf16 %v2931, %v2915
  %v3252 = vpack.c.bf16 %v2932, %v2916
  %v3253 = vpack.c.bf16 %v2933, %v2917
  %v3254 = vpack.c.bf16 %v2934, %v2918
  %v3255 = vpack.c.bf16 %v2935, %v2919
  %v3256 = vpack.c.bf16 %v2936, %v2920
  %v3257 = vpack.c.bf16 %v2937, %v2921
  %v3258 = vpack.c.bf16 %v2938, %v2922
  %v3259 = vpack.c.bf16 %v2955, %v2939
  %v3260 = vpack.c.bf16 %v2956, %v2940
  %v3261 = vpack.c.bf16 %v2957, %v2941
  %v3262 = vpack.c.bf16 %v2958, %v2942
  %v3263 = vpack.c.bf16 %v2959, %v2943
  %v3264 = vpack.c.bf16 %v2960, %v2944
  %v3265 = vpack.c.bf16 %v2961, %v2945
  %v3266 = vpack.c.bf16 %v2962, %v2946
  %v3267 = vpack.c.bf16 %v2963, %v2947
  %v3268 = vpack.c.bf16 %v2964, %v2948
  %v3269 = vpack.c.bf16 %v2965, %v2949
  %v3270 = vpack.c.bf16 %v2966, %v2950
  %v3271 = vpack.c.bf16 %v2967, %v2951
  %v3272 = vpack.c.bf16 %v2968, %v2952
  %v3273 = vpack.c.bf16 %v2969, %v2953
  %v3274 = vpack.c.bf16 %v2970, %v2954
  %v3275 = vpack.c.bf16 %v2987, %v2971
  %v3276 = vpack.c.bf16 %v2988, %v2972
  %v3277 = vpack.c.bf16 %v2989, %v2973
  %v3278 = vpack.c.bf16 %v2990, %v2974
  %v3279 = vpack.c.bf16 %v2991, %v2975
  %v3280 = vpack.c.bf16 %v2992, %v2976
  %v3281 = vpack.c.bf16 %v2993, %v2977
  %v3282 = vpack.c.bf16 %v2994, %v2978
  %v3283 = vpack.c.bf16 %v2995, %v2979
  %v3284 = vpack.c.bf16 %v2996, %v2980
  %v3285 = vpack.c.bf16 %v2997, %v2981
  %v3286 = vpack.c.bf16 %v2998, %v2982
  %v3287 = vpack.c.bf16 %v2999, %v2983
  %v3288 = vpack.c.bf16 %v3000, %v2984
  %v3289 = vpack.c.bf16 %v3001, %v2985
  %v3290 = vpack.c.bf16 %v3002, %v2986
  %v3291 = vpack.c.bf16 %v3019, %v3003
  %v3292 = vpack.c.bf16 %v3020, %v3004
  %v3293 = vpack.c.bf16 %v3021, %v3005
  %v3294 = vpack.c.bf16 %v3022, %v3006
  %v3295 = vpack.c.bf16 %v3023, %v3007
  %v3296 = vpack.c.bf16 %v3024, %v3008
  %v3297 = vpack.c.bf16 %v3025, %v3009
  %v3298 = vpack.c.bf16 %v3026, %v3010
  %v3299 = vpack.c.bf16 %v3027, %v3011
  %v3300 = vpack.c.bf16 %v3028, %v3012
  %v3301 = vpack.c.bf16 %v3029, %v3013
  %v3302 = vpack.c.bf16 %v3030, %v3014
  %v3303 = vpack.c.bf16 %v3031, %v3015
  %v3304 = vpack.c.bf16 %v3032, %v3016
  %v3305 = vpack.c.bf16 %v3033, %v3017
  %v3306 = vpack.c.bf16 %v3034, %v3018
  %v3307 = vpack.c.bf16 %v3051, %v3035
  %v3308 = vpack.c.bf16 %v3052, %v3036
  %v3309 = vpack.c.bf16 %v3053, %v3037
  %v3310 = vpack.c.bf16 %v3054, %v3038
  %v3311 = vpack.c.bf16 %v3055, %v3039
  %v3312 = vpack.c.bf16 %v3056, %v3040
  %v3313 = vpack.c.bf16 %v3057, %v3041
  %v3314 = vpack.c.bf16 %v3058, %v3042
  %v3315 = vpack.c.bf16 %v3059, %v3043
  %v3316 = vpack.c.bf16 %v3060, %v3044
  %v3317 = vpack.c.bf16 %v3061, %v3045
  %v3318 = vpack.c.bf16 %v3062, %v3046
  %v3319 = vpack.c.bf16 %v3063, %v3047
  %v3320 = vpack.c.bf16 %v3064, %v3048
  %v3321 = vpack.c.bf16 %v3065, %v3049
  %v3322 = vpack.c.bf16 %v3066, %v3050
  %v3323 = vunpack.c.l.bf16 %v94
  %v3324 = vunpack.c.l.bf16 %v95
  %v3325 = vunpack.c.l.bf16 %v96
  %v3326 = vunpack.c.l.bf16 %v97
  %v3327 = vunpack.c.l.bf16 %v98
  %v3328 = vunpack.c.l.bf16 %v99
  %v3329 = vunpack.c.l.bf16 %v100
  %v3330 = vunpack.c.l.bf16 %v101
  %v3331 = vunpack.c.l.bf16 %v102
  %v3332 = vunpack.c.l.bf16 %v103
  %v3333 = vunpack.c.l.bf16 %v104
  %v3334 = vunpack.c.l.bf16 %v105
  %v3335 = vunpack.c.l.bf16 %v106
  %v3336 = vunpack.c.l.bf16 %v107
  %v3337 = vunpack.c.l.bf16 %v108
  %v3338 = vunpack.c.l.bf16 %v109
  %v3339 = vunpack.c.l.bf16 %v110
  %v3340 = vunpack.c.l.bf16 %v111
  %v3341 = vunpack.c.l.bf16 %v112
  %v3342 = vunpack.c.l.bf16 %v113
  %v3343 = vunpack.c.l.bf16 %v114
  %v3344 = vunpack.c.l.bf16 %v115
  %v3345 = vunpack.c.l.bf16 %v116
  %v3346 = vunpack.c.l.bf16 %v117
  %v3347 = vunpack.c.l.bf16 %v118
  %v3348 = vunpack.c.l.bf16 %v119
  %v3349 = vunpack.c.l.bf16 %v120
  %v3350 = vunpack.c.l.bf16 %v121
  %v3351 = vunpack.c.l.bf16 %v122
  %v3352 = vunpack.c.l.bf16 %v123
  %v3353 = vunpack.c.l.bf16 %v124
  %v3354 = vunpack.c.l.bf16 %v125
  %v3355 = vld [vmem:[%s14] sm:$0x1]
  %v3357 = vlaneseq
  %v3358 = vshrl.u32 %v3357, 7
  %v3359 = vsub.s32 0, %v3358
  %v3360 = vrot.slane %v3355, %v3359
  %v3362 = vmul.f32 %v3323, %v3360
  %v3363 = vmul.f32 %v3324, %v3360
  %v3364 = vmul.f32 %v3325, %v3360
  %v3365 = vmul.f32 %v3326, %v3360
  %v3366 = vmul.f32 %v3327, %v3360
  %v3367 = vmul.f32 %v3328, %v3360
  %v3368 = vmul.f32 %v3329, %v3360
  %v3369 = vmul.f32 %v3330, %v3360
  %v3370 = vmul.f32 %v3331, %v3360
  %v3371 = vmul.f32 %v3332, %v3360
  %v3372 = vmul.f32 %v3333, %v3360
  %v3373 = vmul.f32 %v3334, %v3360
  %v3374 = vmul.f32 %v3335, %v3360
  %v3375 = vmul.f32 %v3336, %v3360
  %v3376 = vmul.f32 %v3337, %v3360
  %v3377 = vmul.f32 %v3338, %v3360
  %v3378 = vmul.f32 %v3339, %v3360
  %v3379 = vmul.f32 %v3340, %v3360
  %v3380 = vmul.f32 %v3341, %v3360
  %v3381 = vmul.f32 %v3342, %v3360
  %v3382 = vmul.f32 %v3343, %v3360
  %v3383 = vmul.f32 %v3344, %v3360
  %v3384 = vmul.f32 %v3345, %v3360
  %v3385 = vmul.f32 %v3346, %v3360
  %v3386 = vmul.f32 %v3347, %v3360
  %v3387 = vmul.f32 %v3348, %v3360
  %v3388 = vmul.f32 %v3349, %v3360
  %v3389 = vmul.f32 %v3350, %v3360
  %v3390 = vmul.f32 %v3351, %v3360
  %v3391 = vmul.f32 %v3352, %v3360
  %v3392 = vmul.f32 %v3353, %v3360
  %v3393 = vmul.f32 %v3354, %v3360
  %3394 = vadd.xlane.f32.xlu0 %v3362
  %v3395 = vpop.xlane.xlu0 %3394
  %3396 = vadd.xlane.f32.xlu0 %v3363
  %v3397 = vpop.xlane.xlu0 %3396
  %3398 = vadd.xlane.f32.xlu0 %v3364
  %v3399 = vpop.xlane.xlu0 %3398
  %3400 = vadd.xlane.f32.xlu0 %v3365
  %v3401 = vpop.xlane.xlu0 %3400
  %3402 = vadd.xlane.f32.xlu0 %v3366
  %v3403 = vpop.xlane.xlu0 %3402
  %3404 = vadd.xlane.f32.xlu0 %v3367
  %v3405 = vpop.xlane.xlu0 %3404
  %3406 = vadd.xlane.f32.xlu0 %v3368
  %v3407 = vpop.xlane.xlu0 %3406
  %3408 = vadd.xlane.f32.xlu0 %v3369
  %v3409 = vpop.xlane.xlu0 %3408
  %3410 = vadd.xlane.f32.xlu0 %v3370
  %v3411 = vpop.xlane.xlu0 %3410
  %3412 = vadd.xlane.f32.xlu0 %v3371
  %v3413 = vpop.xlane.xlu0 %3412
  %3414 = vadd.xlane.f32.xlu0 %v3372
  %v3415 = vpop.xlane.xlu0 %3414
  %3416 = vadd.xlane.f32.xlu0 %v3373
  %v3417 = vpop.xlane.xlu0 %3416
  %3418 = vadd.xlane.f32.xlu0 %v3374
  %v3419 = vpop.xlane.xlu0 %3418
  %3420 = vadd.xlane.f32.xlu0 %v3375
  %v3421 = vpop.xlane.xlu0 %3420
  %3422 = vadd.xlane.f32.xlu0 %v3376
  %v3423 = vpop.xlane.xlu0 %3422
  %3424 = vadd.xlane.f32.xlu0 %v3377
  %v3425 = vpop.xlane.xlu0 %3424
  %3426 = vadd.xlane.f32.xlu0 %v3378
  %v3427 = vpop.xlane.xlu0 %3426
  %3428 = vadd.xlane.f32.xlu0 %v3379
  %v3429 = vpop.xlane.xlu0 %3428
  %3430 = vadd.xlane.f32.xlu0 %v3380
  %v3431 = vpop.xlane.xlu0 %3430
  %3432 = vadd.xlane.f32.xlu0 %v3381
  %v3433 = vpop.xlane.xlu0 %3432
  %3434 = vadd.xlane.f32.xlu0 %v3382
  %v3435 = vpop.xlane.xlu0 %3434
  %3436 = vadd.xlane.f32.xlu0 %v3383
  %v3437 = vpop.xlane.xlu0 %3436
  %3438 = vadd.xlane.f32.xlu0 %v3384
  %v3439 = vpop.xlane.xlu0 %3438
  %3440 = vadd.xlane.f32.xlu0 %v3385
  %v3441 = vpop.xlane.xlu0 %3440
  %3442 = vadd.xlane.f32.xlu0 %v3386
  %v3443 = vpop.xlane.xlu0 %3442
  %3444 = vadd.xlane.f32.xlu0 %v3387
  %v3445 = vpop.xlane.xlu0 %3444
  %3446 = vadd.xlane.f32.xlu0 %v3388
  %v3447 = vpop.xlane.xlu0 %3446
  %3448 = vadd.xlane.f32.xlu0 %v3389
  %v3449 = vpop.xlane.xlu0 %3448
  %3450 = vadd.xlane.f32.xlu0 %v3390
  %v3451 = vpop.xlane.xlu0 %3450
  %3452 = vadd.xlane.f32.xlu0 %v3391
  %v3453 = vpop.xlane.xlu0 %3452
  %3454 = vadd.xlane.f32.xlu0 %v3392
  %v3455 = vpop.xlane.xlu0 %3454
  %3456 = vadd.xlane.f32.xlu0 %v3393
  %v3457 = vpop.xlane.xlu0 %3456
  %v3458 = vld [vmem:[%s4] sm:$0xf]
  %v3459 = vld [vmem:[%s4 + $0x4] sm:$0xf]
  %v3460 = vld [vmem:[%s4 + $0x8] sm:$0xf]
  %v3461 = vld [vmem:[%s4 + $0xc] sm:$0xf]
  %v3462 = vld [vmem:[%s4 + $0x10] sm:$0xf]
  %v3463 = vld [vmem:[%s4 + $0x14] sm:$0xf]
  %v3464 = vld [vmem:[%s4 + $0x18] sm:$0xf]
  %v3465 = vld [vmem:[%s4 + $0x1c] sm:$0xf]
  %v3466 = vld [vmem:[%s4 + $0x20] sm:$0xf]
  %v3467 = vld [vmem:[%s4 + $0x24] sm:$0xf]
  %v3468 = vld [vmem:[%s4 + $0x28] sm:$0xf]
  %v3469 = vld [vmem:[%s4 + $0x2c] sm:$0xf]
  %v3470 = vld [vmem:[%s4 + $0x30] sm:$0xf]
  %v3471 = vld [vmem:[%s4 + $0x34] sm:$0xf]
  %v3472 = vld [vmem:[%s4 + $0x38] sm:$0xf]
  %v3473 = vld [vmem:[%s4 + $0x3c] sm:$0xf]
  %v3474 = vld [vmem:[%s4 + $0x40] sm:$0xf]
  %v3475 = vld [vmem:[%s4 + $0x44] sm:$0xf]
  %v3476 = vld [vmem:[%s4 + $0x48] sm:$0xf]
  %v3477 = vld [vmem:[%s4 + $0x4c] sm:$0xf]
  %v3478 = vld [vmem:[%s4 + $0x50] sm:$0xf]
  %v3479 = vld [vmem:[%s4 + $0x54] sm:$0xf]
  %v3480 = vld [vmem:[%s4 + $0x58] sm:$0xf]
  %v3481 = vld [vmem:[%s4 + $0x5c] sm:$0xf]
  %v3482 = vld [vmem:[%s4 + $0x60] sm:$0xf]
  %v3483 = vld [vmem:[%s4 + $0x64] sm:$0xf]
  %v3484 = vld [vmem:[%s4 + $0x68] sm:$0xf]
  %v3485 = vld [vmem:[%s4 + $0x6c] sm:$0xf]
  %v3486 = vld [vmem:[%s4 + $0x70] sm:$0xf]
  %v3487 = vld [vmem:[%s4 + $0x74] sm:$0xf]
  %v3488 = vld [vmem:[%s4 + $0x78] sm:$0xf]
  %v3489 = vld [vmem:[%s4 + $0x7c] sm:$0xf]
  %v3490 = vld [vmem:[%s4 + $0x80] sm:$0xf]
  %v3491 = vld [vmem:[%s4 + $0x84] sm:$0xf]
  %v3492 = vld [vmem:[%s4 + $0x88] sm:$0xf]
  %v3493 = vld [vmem:[%s4 + $0x8c] sm:$0xf]
  %v3494 = vld [vmem:[%s4 + $0x90] sm:$0xf]
  %v3495 = vld [vmem:[%s4 + $0x94] sm:$0xf]
  %v3496 = vld [vmem:[%s4 + $0x98] sm:$0xf]
  %v3497 = vld [vmem:[%s4 + $0x9c] sm:$0xf]
  %v3498 = vld [vmem:[%s4 + $0xa0] sm:$0xf]
  %v3499 = vld [vmem:[%s4 + $0xa4] sm:$0xf]
  %v3500 = vld [vmem:[%s4 + $0xa8] sm:$0xf]
  %v3501 = vld [vmem:[%s4 + $0xac] sm:$0xf]
  %v3502 = vld [vmem:[%s4 + $0xb0] sm:$0xf]
  %v3503 = vld [vmem:[%s4 + $0xb4] sm:$0xf]
  %v3504 = vld [vmem:[%s4 + $0xb8] sm:$0xf]
  %v3505 = vld [vmem:[%s4 + $0xbc] sm:$0xf]
  %v3506 = vld [vmem:[%s4 + $0xc0] sm:$0xf]
  %v3507 = vld [vmem:[%s4 + $0xc4] sm:$0xf]
  %v3508 = vld [vmem:[%s4 + $0xc8] sm:$0xf]
  %v3509 = vld [vmem:[%s4 + $0xcc] sm:$0xf]
  %v3510 = vld [vmem:[%s4 + $0xd0] sm:$0xf]
  %v3511 = vld [vmem:[%s4 + $0xd4] sm:$0xf]
  %v3512 = vld [vmem:[%s4 + $0xd8] sm:$0xf]
  %v3513 = vld [vmem:[%s4 + $0xdc] sm:$0xf]
  %v3514 = vld [vmem:[%s4 + $0xe0] sm:$0xf]
  %v3515 = vld [vmem:[%s4 + $0xe4] sm:$0xf]
  %v3516 = vld [vmem:[%s4 + $0xe8] sm:$0xf]
  %v3517 = vld [vmem:[%s4 + $0xec] sm:$0xf]
  %v3518 = vld [vmem:[%s4 + $0xf0] sm:$0xf]
  %v3519 = vld [vmem:[%s4 + $0xf4] sm:$0xf]
  %v3520 = vld [vmem:[%s4 + $0xf8] sm:$0xf]
  %v3521 = vld [vmem:[%s4 + $0xfc] sm:$0xf]
  %v3522 = vld [vmem:[%s4 + $0x100] sm:$0xf]
  %v3523 = vld [vmem:[%s4 + $0x104] sm:$0xf]
  %v3524 = vld [vmem:[%s4 + $0x108] sm:$0xf]
  %v3525 = vld [vmem:[%s4 + $0x10c] sm:$0xf]
  %v3526 = vld [vmem:[%s4 + $0x110] sm:$0xf]
  %v3527 = vld [vmem:[%s4 + $0x114] sm:$0xf]
  %v3528 = vld [vmem:[%s4 + $0x118] sm:$0xf]
  %v3529 = vld [vmem:[%s4 + $0x11c] sm:$0xf]
  %v3530 = vld [vmem:[%s4 + $0x120] sm:$0xf]
  %v3531 = vld [vmem:[%s4 + $0x124] sm:$0xf]
  %v3532 = vld [vmem:[%s4 + $0x128] sm:$0xf]
  %v3533 = vld [vmem:[%s4 + $0x12c] sm:$0xf]
  %v3534 = vld [vmem:[%s4 + $0x130] sm:$0xf]
  %v3535 = vld [vmem:[%s4 + $0x134] sm:$0xf]
  %v3536 = vld [vmem:[%s4 + $0x138] sm:$0xf]
  %v3537 = vld [vmem:[%s4 + $0x13c] sm:$0xf]
  %v3538 = vld [vmem:[%s4 + $0x140] sm:$0xf]
  %v3539 = vld [vmem:[%s4 + $0x144] sm:$0xf]
  %v3540 = vld [vmem:[%s4 + $0x148] sm:$0xf]
  %v3541 = vld [vmem:[%s4 + $0x14c] sm:$0xf]
  %v3542 = vld [vmem:[%s4 + $0x150] sm:$0xf]
  %v3543 = vld [vmem:[%s4 + $0x154] sm:$0xf]
  %v3544 = vld [vmem:[%s4 + $0x158] sm:$0xf]
  %v3545 = vld [vmem:[%s4 + $0x15c] sm:$0xf]
  %v3546 = vld [vmem:[%s4 + $0x160] sm:$0xf]
  %v3547 = vld [vmem:[%s4 + $0x164] sm:$0xf]
  %v3548 = vld [vmem:[%s4 + $0x168] sm:$0xf]
  %v3549 = vld [vmem:[%s4 + $0x16c] sm:$0xf]
  %v3550 = vld [vmem:[%s4 + $0x170] sm:$0xf]
  %v3551 = vld [vmem:[%s4 + $0x174] sm:$0xf]
  %v3552 = vld [vmem:[%s4 + $0x178] sm:$0xf]
  %v3553 = vld [vmem:[%s4 + $0x17c] sm:$0xf]
  %v3554 = vld [vmem:[%s4 + $0x180] sm:$0xf]
  %v3555 = vld [vmem:[%s4 + $0x184] sm:$0xf]
  %v3556 = vld [vmem:[%s4 + $0x188] sm:$0xf]
  %v3557 = vld [vmem:[%s4 + $0x18c] sm:$0xf]
  %v3558 = vld [vmem:[%s4 + $0x190] sm:$0xf]
  %v3559 = vld [vmem:[%s4 + $0x194] sm:$0xf]
  %v3560 = vld [vmem:[%s4 + $0x198] sm:$0xf]
  %v3561 = vld [vmem:[%s4 + $0x19c] sm:$0xf]
  %v3562 = vld [vmem:[%s4 + $0x1a0] sm:$0xf]
  %v3563 = vld [vmem:[%s4 + $0x1a4] sm:$0xf]
  %v3564 = vld [vmem:[%s4 + $0x1a8] sm:$0xf]
  %v3565 = vld [vmem:[%s4 + $0x1ac] sm:$0xf]
  %v3566 = vld [vmem:[%s4 + $0x1b0] sm:$0xf]
  %v3567 = vld [vmem:[%s4 + $0x1b4] sm:$0xf]
  %v3568 = vld [vmem:[%s4 + $0x1b8] sm:$0xf]
  %v3569 = vld [vmem:[%s4 + $0x1bc] sm:$0xf]
  %v3570 = vld [vmem:[%s4 + $0x1c0] sm:$0xf]
  %v3571 = vld [vmem:[%s4 + $0x1c4] sm:$0xf]
  %v3572 = vld [vmem:[%s4 + $0x1c8] sm:$0xf]
  %v3573 = vld [vmem:[%s4 + $0x1cc] sm:$0xf]
  %v3574 = vld [vmem:[%s4 + $0x1d0] sm:$0xf]
  %v3575 = vld [vmem:[%s4 + $0x1d4] sm:$0xf]
  %v3576 = vld [vmem:[%s4 + $0x1d8] sm:$0xf]
  %v3577 = vld [vmem:[%s4 + $0x1dc] sm:$0xf]
  %v3578 = vld [vmem:[%s4 + $0x1e0] sm:$0xf]
  %v3579 = vld [vmem:[%s4 + $0x1e4] sm:$0xf]
  %v3580 = vld [vmem:[%s4 + $0x1e8] sm:$0xf]
  %v3581 = vld [vmem:[%s4 + $0x1ec] sm:$0xf]
  %v3582 = vld [vmem:[%s4 + $0x1f0] sm:$0xf]
  %v3583 = vld [vmem:[%s4 + $0x1f4] sm:$0xf]
  %v3584 = vld [vmem:[%s4 + $0x1f8] sm:$0xf]
  %v3585 = vld [vmem:[%s4 + $0x1fc] sm:$0xf]
  %v3586 = vld [vmem:[%s4 + $0x200] sm:$0xf]
  %v3587 = vld [vmem:[%s4 + $0x204] sm:$0xf]
  %v3588 = vld [vmem:[%s4 + $0x208] sm:$0xf]
  %v3589 = vld [vmem:[%s4 + $0x20c] sm:$0xf]
  %v3590 = vld [vmem:[%s4 + $0x210] sm:$0xf]
  %v3591 = vld [vmem:[%s4 + $0x214] sm:$0xf]
  %v3592 = vld [vmem:[%s4 + $0x218] sm:$0xf]
  %v3593 = vld [vmem:[%s4 + $0x21c] sm:$0xf]
  %v3594 = vld [vmem:[%s4 + $0x220] sm:$0xf]
  %v3595 = vld [vmem:[%s4 + $0x224] sm:$0xf]
  %v3596 = vld [vmem:[%s4 + $0x228] sm:$0xf]
  %v3597 = vld [vmem:[%s4 + $0x22c] sm:$0xf]
  %v3598 = vld [vmem:[%s4 + $0x230] sm:$0xf]
  %v3599 = vld [vmem:[%s4 + $0x234] sm:$0xf]
  %v3600 = vld [vmem:[%s4 + $0x238] sm:$0xf]
  %v3601 = vld [vmem:[%s4 + $0x23c] sm:$0xf]
  %v3602 = vld [vmem:[%s4 + $0x240] sm:$0xf]
  %v3603 = vld [vmem:[%s4 + $0x244] sm:$0xf]
  %v3604 = vld [vmem:[%s4 + $0x248] sm:$0xf]
  %v3605 = vld [vmem:[%s4 + $0x24c] sm:$0xf]
  %v3606 = vld [vmem:[%s4 + $0x250] sm:$0xf]
  %v3607 = vld [vmem:[%s4 + $0x254] sm:$0xf]
  %v3608 = vld [vmem:[%s4 + $0x258] sm:$0xf]
  %v3609 = vld [vmem:[%s4 + $0x25c] sm:$0xf]
  %v3610 = vld [vmem:[%s4 + $0x260] sm:$0xf]
  %v3611 = vld [vmem:[%s4 + $0x264] sm:$0xf]
  %v3612 = vld [vmem:[%s4 + $0x268] sm:$0xf]
  %v3613 = vld [vmem:[%s4 + $0x26c] sm:$0xf]
  %v3614 = vld [vmem:[%s4 + $0x270] sm:$0xf]
  %v3615 = vld [vmem:[%s4 + $0x274] sm:$0xf]
  %v3616 = vld [vmem:[%s4 + $0x278] sm:$0xf]
  %v3617 = vld [vmem:[%s4 + $0x27c] sm:$0xf]
  %v3618 = vld [vmem:[%s4 + $0x280] sm:$0xf]
  %v3619 = vld [vmem:[%s4 + $0x284] sm:$0xf]
  %v3620 = vld [vmem:[%s4 + $0x288] sm:$0xf]
  %v3621 = vld [vmem:[%s4 + $0x28c] sm:$0xf]
  %v3622 = vld [vmem:[%s4 + $0x290] sm:$0xf]
  %v3623 = vld [vmem:[%s4 + $0x294] sm:$0xf]
  %v3624 = vld [vmem:[%s4 + $0x298] sm:$0xf]
  %v3625 = vld [vmem:[%s4 + $0x29c] sm:$0xf]
  %v3626 = vld [vmem:[%s4 + $0x2a0] sm:$0xf]
  %v3627 = vld [vmem:[%s4 + $0x2a4] sm:$0xf]
  %v3628 = vld [vmem:[%s4 + $0x2a8] sm:$0xf]
  %v3629 = vld [vmem:[%s4 + $0x2ac] sm:$0xf]
  %v3630 = vld [vmem:[%s4 + $0x2b0] sm:$0xf]
  %v3631 = vld [vmem:[%s4 + $0x2b4] sm:$0xf]
  %v3632 = vld [vmem:[%s4 + $0x2b8] sm:$0xf]
  %v3633 = vld [vmem:[%s4 + $0x2bc] sm:$0xf]
  %v3634 = vld [vmem:[%s4 + $0x2c0] sm:$0xf]
  %v3635 = vld [vmem:[%s4 + $0x2c4] sm:$0xf]
  %v3636 = vld [vmem:[%s4 + $0x2c8] sm:$0xf]
  %v3637 = vld [vmem:[%s4 + $0x2cc] sm:$0xf]
  %v3638 = vld [vmem:[%s4 + $0x2d0] sm:$0xf]
  %v3639 = vld [vmem:[%s4 + $0x2d4] sm:$0xf]
  %v3640 = vld [vmem:[%s4 + $0x2d8] sm:$0xf]
  %v3641 = vld [vmem:[%s4 + $0x2dc] sm:$0xf]
  %v3642 = vld [vmem:[%s4 + $0x2e0] sm:$0xf]
  %v3643 = vld [vmem:[%s4 + $0x2e4] sm:$0xf]
  %v3644 = vld [vmem:[%s4 + $0x2e8] sm:$0xf]
  %v3645 = vld [vmem:[%s4 + $0x2ec] sm:$0xf]
  %v3646 = vld [vmem:[%s4 + $0x2f0] sm:$0xf]
  %v3647 = vld [vmem:[%s4 + $0x2f4] sm:$0xf]
  %v3648 = vld [vmem:[%s4 + $0x2f8] sm:$0xf]
  %v3649 = vld [vmem:[%s4 + $0x2fc] sm:$0xf]
  %v3650 = vld [vmem:[%s4 + $0x300] sm:$0xf]
  %v3651 = vld [vmem:[%s4 + $0x304] sm:$0xf]
  %v3652 = vld [vmem:[%s4 + $0x308] sm:$0xf]
  %v3653 = vld [vmem:[%s4 + $0x30c] sm:$0xf]
  %v3654 = vld [vmem:[%s4 + $0x310] sm:$0xf]
  %v3655 = vld [vmem:[%s4 + $0x314] sm:$0xf]
  %v3656 = vld [vmem:[%s4 + $0x318] sm:$0xf]
  %v3657 = vld [vmem:[%s4 + $0x31c] sm:$0xf]
  %v3658 = vld [vmem:[%s4 + $0x320] sm:$0xf]
  %v3659 = vld [vmem:[%s4 + $0x324] sm:$0xf]
  %v3660 = vld [vmem:[%s4 + $0x328] sm:$0xf]
  %v3661 = vld [vmem:[%s4 + $0x32c] sm:$0xf]
  %v3662 = vld [vmem:[%s4 + $0x330] sm:$0xf]
  %v3663 = vld [vmem:[%s4 + $0x334] sm:$0xf]
  %v3664 = vld [vmem:[%s4 + $0x338] sm:$0xf]
  %v3665 = vld [vmem:[%s4 + $0x33c] sm:$0xf]
  %v3666 = vld [vmem:[%s4 + $0x340] sm:$0xf]
  %v3667 = vld [vmem:[%s4 + $0x344] sm:$0xf]
  %v3668 = vld [vmem:[%s4 + $0x348] sm:$0xf]
  %v3669 = vld [vmem:[%s4 + $0x34c] sm:$0xf]
  %v3670 = vld [vmem:[%s4 + $0x350] sm:$0xf]
  %v3671 = vld [vmem:[%s4 + $0x354] sm:$0xf]
  %v3672 = vld [vmem:[%s4 + $0x358] sm:$0xf]
  %v3673 = vld [vmem:[%s4 + $0x35c] sm:$0xf]
  %v3674 = vld [vmem:[%s4 + $0x360] sm:$0xf]
  %v3675 = vld [vmem:[%s4 + $0x364] sm:$0xf]
  %v3676 = vld [vmem:[%s4 + $0x368] sm:$0xf]
  %v3677 = vld [vmem:[%s4 + $0x36c] sm:$0xf]
  %v3678 = vld [vmem:[%s4 + $0x370] sm:$0xf]
  %v3679 = vld [vmem:[%s4 + $0x374] sm:$0xf]
  %v3680 = vld [vmem:[%s4 + $0x378] sm:$0xf]
  %v3681 = vld [vmem:[%s4 + $0x37c] sm:$0xf]
  %v3682 = vld [vmem:[%s4 + $0x380] sm:$0xf]
  %v3683 = vld [vmem:[%s4 + $0x384] sm:$0xf]
  %v3684 = vld [vmem:[%s4 + $0x388] sm:$0xf]
  %v3685 = vld [vmem:[%s4 + $0x38c] sm:$0xf]
  %v3686 = vld [vmem:[%s4 + $0x390] sm:$0xf]
  %v3687 = vld [vmem:[%s4 + $0x394] sm:$0xf]
  %v3688 = vld [vmem:[%s4 + $0x398] sm:$0xf]
  %v3689 = vld [vmem:[%s4 + $0x39c] sm:$0xf]
  %v3690 = vld [vmem:[%s4 + $0x3a0] sm:$0xf]
  %v3691 = vld [vmem:[%s4 + $0x3a4] sm:$0xf]
  %v3692 = vld [vmem:[%s4 + $0x3a8] sm:$0xf]
  %v3693 = vld [vmem:[%s4 + $0x3ac] sm:$0xf]
  %v3694 = vld [vmem:[%s4 + $0x3b0] sm:$0xf]
  %v3695 = vld [vmem:[%s4 + $0x3b4] sm:$0xf]
  %v3696 = vld [vmem:[%s4 + $0x3b8] sm:$0xf]
  %v3697 = vld [vmem:[%s4 + $0x3bc] sm:$0xf]
  %v3698 = vld [vmem:[%s4 + $0x3c0] sm:$0xf]
  %v3699 = vld [vmem:[%s4 + $0x3c4] sm:$0xf]
  %v3700 = vld [vmem:[%s4 + $0x3c8] sm:$0xf]
  %v3701 = vld [vmem:[%s4 + $0x3cc] sm:$0xf]
  %v3702 = vld [vmem:[%s4 + $0x3d0] sm:$0xf]
  %v3703 = vld [vmem:[%s4 + $0x3d4] sm:$0xf]
  %v3704 = vld [vmem:[%s4 + $0x3d8] sm:$0xf]
  %v3705 = vld [vmem:[%s4 + $0x3dc] sm:$0xf]
  %v3706 = vld [vmem:[%s4 + $0x3e0] sm:$0xf]
  %v3707 = vld [vmem:[%s4 + $0x3e4] sm:$0xf]
  %v3708 = vld [vmem:[%s4 + $0x3e8] sm:$0xf]
  %v3709 = vld [vmem:[%s4 + $0x3ec] sm:$0xf]
  %v3710 = vld [vmem:[%s4 + $0x3f0] sm:$0xf]
  %v3711 = vld [vmem:[%s4 + $0x3f4] sm:$0xf]
  %v3712 = vld [vmem:[%s4 + $0x3f8] sm:$0xf]
  %v3713 = vld [vmem:[%s4 + $0x3fc] sm:$0xf]
  %v3714 = vld [vmem:[%s5] sm:$0xf]
  %v3715 = vld [vmem:[%s5 + $0x4] sm:$0xf]
  %v3716 = vld [vmem:[%s5 + $0x8] sm:$0xf]
  %v3717 = vld [vmem:[%s5 + $0xc] sm:$0xf]
  %v3718 = vld [vmem:[%s5 + $0x10] sm:$0xf]
  %v3719 = vld [vmem:[%s5 + $0x14] sm:$0xf]
  %v3720 = vld [vmem:[%s5 + $0x18] sm:$0xf]
  %v3721 = vld [vmem:[%s5 + $0x1c] sm:$0xf]
  %v3722 = vld [vmem:[%s5 + $0x20] sm:$0xf]
  %v3723 = vld [vmem:[%s5 + $0x24] sm:$0xf]
  %v3724 = vld [vmem:[%s5 + $0x28] sm:$0xf]
  %v3725 = vld [vmem:[%s5 + $0x2c] sm:$0xf]
  %v3726 = vld [vmem:[%s5 + $0x30] sm:$0xf]
  %v3727 = vld [vmem:[%s5 + $0x34] sm:$0xf]
  %v3728 = vld [vmem:[%s5 + $0x38] sm:$0xf]
  %v3729 = vld [vmem:[%s5 + $0x3c] sm:$0xf]
  %v3762 = vunpack.c.l.b16 %v94
  %v3763 = vunpack.c.l.b16 %v95
  %v3764 = vunpack.c.l.b16 %v96
  %v3765 = vunpack.c.l.b16 %v97
  %v3766 = vunpack.c.l.b16 %v98
  %v3767 = vunpack.c.l.b16 %v99
  %v3768 = vunpack.c.l.b16 %v100
  %v3769 = vunpack.c.l.b16 %v101
  %v3770 = vunpack.c.l.b16 %v102
  %v3771 = vunpack.c.l.b16 %v103
  %v3772 = vunpack.c.l.b16 %v104
  %v3773 = vunpack.c.l.b16 %v105
  %v3774 = vunpack.c.l.b16 %v106
  %v3775 = vunpack.c.l.b16 %v107
  %v3776 = vunpack.c.l.b16 %v108
  %v3777 = vunpack.c.l.b16 %v109
  %v3778 = vunpack.c.l.b16 %v110
  %v3779 = vunpack.c.l.b16 %v111
  %v3780 = vunpack.c.l.b16 %v112
  %v3781 = vunpack.c.l.b16 %v113
  %v3782 = vunpack.c.l.b16 %v114
  %v3783 = vunpack.c.l.b16 %v115
  %v3784 = vunpack.c.l.b16 %v116
  %v3785 = vunpack.c.l.b16 %v117
  %v3786 = vunpack.c.l.b16 %v118
  %v3787 = vunpack.c.l.b16 %v119
  %v3788 = vunpack.c.l.b16 %v120
  %v3789 = vunpack.c.l.b16 %v121
  %v3790 = vunpack.c.l.b16 %v122
  %v3791 = vunpack.c.l.b16 %v123
  %v3792 = vunpack.c.l.b16 %v124
  %v3793 = vunpack.c.l.b16 %v125
  %v3794 = vpack.c.b16 %v3763, %v3762
  %v3795 = vpack.c.b16 %v3765, %v3764
  %v3796 = vpack.c.b16 %v3767, %v3766
  %v3797 = vpack.c.b16 %v3769, %v3768
  %v3798 = vpack.c.b16 %v3771, %v3770
  %v3799 = vpack.c.b16 %v3773, %v3772
  %v3800 = vpack.c.b16 %v3775, %v3774
  %v3801 = vpack.c.b16 %v3777, %v3776
  %v3802 = vpack.c.b16 %v3779, %v3778
  %v3803 = vpack.c.b16 %v3781, %v3780
  %v3804 = vpack.c.b16 %v3783, %v3782
  %v3805 = vpack.c.b16 %v3785, %v3784
  %v3806 = vpack.c.b16 %v3787, %v3786
  %v3807 = vpack.c.b16 %v3789, %v3788
  %v3808 = vpack.c.b16 %v3791, %v3790
  %v3809 = vpack.c.b16 %v3793, %v3792
  %v3842 = vunpack.c.l.b16 %v3714
  %v3843 = vunpack.c.l.b16 %v3715
  %v3844 = vunpack.c.l.b16 %v3716
  %v3845 = vunpack.c.l.b16 %v3717
  %v3846 = vunpack.c.l.b16 %v3718
  %v3847 = vunpack.c.l.b16 %v3719
  %v3848 = vunpack.c.l.b16 %v3720
  %v3849 = vunpack.c.l.b16 %v3721
  %v3850 = vunpack.c.l.b16 %v3722
  %v3851 = vunpack.c.l.b16 %v3723
  %v3852 = vunpack.c.l.b16 %v3724
  %v3853 = vunpack.c.l.b16 %v3725
  %v3854 = vunpack.c.l.b16 %v3726
  %v3855 = vunpack.c.l.b16 %v3727
  %v3856 = vunpack.c.l.b16 %v3728
  %v3857 = vunpack.c.l.b16 %v3729
  %v3858 = vpack.c.b16 %v3843, %v3842
  %v3859 = vpack.c.b16 %v3845, %v3844
  %v3860 = vpack.c.b16 %v3847, %v3846
  %v3861 = vpack.c.b16 %v3849, %v3848
  %v3862 = vpack.c.b16 %v3851, %v3850
  %v3863 = vpack.c.b16 %v3853, %v3852
  %v3864 = vpack.c.b16 %v3855, %v3854
  %v3865 = vpack.c.b16 %v3857, %v3856
  %3874 = vmatprep.subr.bf16.mxu0 0
  %3875 = vmatpush1.bf16.msra.mxu0 %v3858
  %3876 = vmatprep.subr.bf16.mxu0 0
  %3877 = vmatpush1.bf16.msra.mxu0 %v3859
  %3878 = vmatprep.subr.bf16.mxu0 0
  %3879 = vmatpush1.bf16.msra.mxu0 %v3860
  %3880 = vmatprep.subr.bf16.mxu0 0
  %3881 = vmatpush1.bf16.msra.mxu0 %v3861
  %3882 = vmatprep.subr.bf16.mxu0 0
  %3883 = vmatpush1.bf16.msra.mxu0 %v3862
  %3884 = vmatprep.subr.bf16.mxu0 0
  %3885 = vmatpush1.bf16.msra.mxu0 %v3863
  %3886 = vmatprep.subr.bf16.mxu0 0
  %3887 = vmatpush1.bf16.msra.mxu0 %v3864
  %3888 = vmatprep.subr.bf16.mxu0 0
  %3889 = vmatpush1.bf16.msra.mxu0 %v3865
  %3890 = vmatprep.subr.bf16.mxu0 0
  %3891 = vmatpush1.bf16.msra.mxu0 0
  %3892 = vmatprep.subr.bf16.mxu0 0
  %3893 = vmatpush1.bf16.msra.mxu0 0
  %3894 = vmatprep.subr.bf16.mxu0 0
  %3895 = vmatpush1.bf16.msra.mxu0 0
  %3896 = vmatprep.subr.bf16.mxu0 0
  %3897 = vmatpush1.bf16.msra.mxu0 0
  %3898 = vmatprep.subr.bf16.mxu0 0
  %3899 = vmatpush1.bf16.msra.mxu0 0
  %3900 = vmatprep.subr.bf16.mxu0 0
  %3901 = vmatpush1.bf16.msra.mxu0 0
  %3902 = vmatprep.subr.bf16.mxu0 0
  %3903 = vmatpush1.bf16.msra.mxu0 0
  %3904 = vmatprep.subr.bf16.mxu0 0
  %3905 = vmatpush1.bf16.msra.mxu0 0
  %3906 = vmatprep.mubr.bf16.mxu0 0
  %3907 = vmatmul.mubr.bf16.gmra.mrb[0].mxu0 %v3794
  %v3908 = vpop.f32.mrb[0].mxu0
  %v3909 = vadd.f32 0.0, %v3908
  %v3910 = vpop.f32.mrb[0].mxu0
  %v3911 = vpop.f32.mrb[0].mxu0
  %v3912 = vadd.f32 0.0, %v3911
  %v3913 = vpop.f32.mrb[0].mxu0
  %3914 = vmatprep.mubr.bf16.mxu0 0
  %3915 = vmatmul.mubr.bf16.gmra.mrb[0].mxu0 %v3795
  %v3916 = vpop.f32.mrb[0].mxu0
  %v3917 = vadd.f32 0.0, %v3916
  %v3918 = vpop.f32.mrb[0].mxu0
  %v3919 = vpop.f32.mrb[0].mxu0
  %v3920 = vadd.f32 0.0, %v3919
  %v3921 = vpop.f32.mrb[0].mxu0
  %3922 = vmatprep.mubr.bf16.mxu0 0
  %3923 = vmatmul.mubr.bf16.gmra.mrb[0].mxu0 %v3796
  %v3924 = vpop.f32.mrb[0].mxu0
  %v3925 = vadd.f32 0.0, %v3924
  %v3926 = vpop.f32.mrb[0].mxu0
  %v3927 = vpop.f32.mrb[0].mxu0
  %v3928 = vadd.f32 0.0, %v3927
  %v3929 = vpop.f32.mrb[0].mxu0
  %3930 = vmatprep.mubr.bf16.mxu0 0
  %3931 = vmatmul.mubr.bf16.gmra.mrb[0].mxu0 %v3797
  %v3932 = vpop.f32.mrb[0].mxu0
  %v3933 = vadd.f32 0.0, %v3932
  %v3934 = vpop.f32.mrb[0].mxu0
  %v3935 = vpop.f32.mrb[0].mxu0
  %v3936 = vadd.f32 0.0, %v3935
  %v3937 = vpop.f32.mrb[0].mxu0
  %3938 = vmatprep.mubr.bf16.mxu0 0
  %3939 = vmatmul.mubr.bf16.gmra.mrb[0].mxu0 %v3798
  %v3940 = vpop.f32.mrb[0].mxu0
  %v3941 = vadd.f32 0.0, %v3940
  %v3942 = vpop.f32.mrb[0].mxu0
  %v3943 = vpop.f32.mrb[0].mxu0
  %v3944 = vadd.f32 0.0, %v3943
  %v3945 = vpop.f32.mrb[0].mxu0
  %3946 = vmatprep.mubr.bf16.mxu0 0
  %3947 = vmatmul.mubr.bf16.gmra.mrb[0].mxu0 %v3799
  %v3948 = vpop.f32.mrb[0].mxu0
  %v3949 = vadd.f32 0.0, %v3948
  %v3950 = vpop.f32.mrb[0].mxu0
  %v3951 = vpop.f32.mrb[0].mxu0
  %v3952 = vadd.f32 0.0, %v3951
  %v3953 = vpop.f32.mrb[0].mxu0
  %3954 = vmatprep.mubr.bf16.mxu0 0
  %3955 = vmatmul.mubr.bf16.gmra.mrb[0].mxu0 %v3800
  %v3956 = vpop.f32.mrb[0].mxu0
  %v3957 = vadd.f32 0.0, %v3956
  %v3958 = vpop.f32.mrb[0].mxu0
  %v3959 = vpop.f32.mrb[0].mxu0
  %v3960 = vadd.f32 0.0, %v3959
  %v3961 = vpop.f32.mrb[0].mxu0
  %3962 = vmatprep.mubr.bf16.mxu0 0
  %3963 = vmatmul.mubr.bf16.gmra.mrb[0].mxu0 %v3801
  %v3964 = vpop.f32.mrb[0].mxu0
  %v3965 = vadd.f32 0.0, %v3964
  %v3966 = vpop.f32.mrb[0].mxu0
  %v3967 = vpop.f32.mrb[0].mxu0
  %v3968 = vadd.f32 0.0, %v3967
  %v3969 = vpop.f32.mrb[0].mxu0
  %3970 = vmatprep.mubr.bf16.mxu0 0
  %3971 = vmatmul.mubr.bf16.gmra.mrb[0].mxu0 %v3802
  %v3972 = vpop.f32.mrb[0].mxu0
  %v3973 = vadd.f32 0.0, %v3972
  %v3974 = vpop.f32.mrb[0].mxu0
  %v3975 = vpop.f32.mrb[0].mxu0
  %v3976 = vadd.f32 0.0, %v3975
  %v3977 = vpop.f32.mrb[0].mxu0
  %3978 = vmatprep.mubr.bf16.mxu0 0
  %3979 = vmatmul.mubr.bf16.gmra.mrb[0].mxu0 %v3803
  %v3980 = vpop.f32.mrb[0].mxu0
  %v3981 = vadd.f32 0.0, %v3980
  %v3982 = vpop.f32.mrb[0].mxu0
  %v3983 = vpop.f32.mrb[0].mxu0
  %v3984 = vadd.f32 0.0, %v3983
  %v3985 = vpop.f32.mrb[0].mxu0
  %3986 = vmatprep.mubr.bf16.mxu0 0
  %3987 = vmatmul.mubr.bf16.gmra.mrb[0].mxu0 %v3804
  %v3988 = vpop.f32.mrb[0].mxu0
  %v3989 = vadd.f32 0.0, %v3988
  %v3990 = vpop.f32.mrb[0].mxu0
  %v3991 = vpop.f32.mrb[0].mxu0
  %v3992 = vadd.f32 0.0, %v3991
  %v3993 = vpop.f32.mrb[0].mxu0
  %3994 = vmatprep.mubr.bf16.mxu0 0
  %3995 = vmatmul.mubr.bf16.gmra.mrb[0].mxu0 %v3805
  %v3996 = vpop.f32.mrb[0].mxu0
  %v3997 = vadd.f32 0.0, %v3996
  %v3998 = vpop.f32.mrb[0].mxu0
  %v3999 = vpop.f32.mrb[0].mxu0
  %v4000 = vadd.f32 0.0, %v3999
  %v4001 = vpop.f32.mrb[0].mxu0
  %4002 = vmatprep.mubr.bf16.mxu0 0
  %4003 = vmatmul.mubr.bf16.gmra.mrb[0].mxu0 %v3806
  %v4004 = vpop.f32.mrb[0].mxu0
  %v4005 = vadd.f32 0.0, %v4004
  %v4006 = vpop.f32.mrb[0].mxu0
  %v4007 = vpop.f32.mrb[0].mxu0
  %v4008 = vadd.f32 0.0, %v4007
  %v4009 = vpop.f32.mrb[0].mxu0
  %4010 = vmatprep.mubr.bf16.mxu0 0
  %4011 = vmatmul.mubr.bf16.gmra.mrb[0].mxu0 %v3807
  %v4012 = vpop.f32.mrb[0].mxu0
  %v4013 = vadd.f32 0.0, %v4012
  %v4014 = vpop.f32.mrb[0].mxu0
  %v4015 = vpop.f32.mrb[0].mxu0
  %v4016 = vadd.f32 0.0, %v4015
  %v4017 = vpop.f32.mrb[0].mxu0
  %4018 = vmatprep.mubr.bf16.mxu0 0
  %4019 = vmatmul.mubr.bf16.gmra.mrb[0].mxu0 %v3808
  %v4020 = vpop.f32.mrb[0].mxu0
  %v4021 = vadd.f32 0.0, %v4020
  %v4022 = vpop.f32.mrb[0].mxu0
  %v4023 = vpop.f32.mrb[0].mxu0
  %v4024 = vadd.f32 0.0, %v4023
  %v4025 = vpop.f32.mrb[0].mxu0
  %4026 = vmatprep.mubr.bf16.mxu0 0
  %4027 = vmatmul.mubr.bf16.gmra.mrb[0].mxu0 %v3809
  %v4028 = vpop.f32.mrb[0].mxu0
  %v4029 = vadd.f32 0.0, %v4028
  %v4030 = vpop.f32.mrb[0].mxu0
  %v4031 = vpop.f32.mrb[0].mxu0
  %v4032 = vadd.f32 0.0, %v4031
  %v4033 = vpop.f32.mrb[0].mxu0
  %4034 = vdwg.mxu0
  %v4291 = vunpack.c.l.b16 %v3458
  %v4292 = vunpack.c.l.b16 %v3459
  %v4293 = vunpack.c.l.b16 %v3460
  %v4294 = vunpack.c.l.b16 %v3461
  %v4295 = vunpack.c.l.b16 %v3462
  %v4296 = vunpack.c.l.b16 %v3463
  %v4297 = vunpack.c.l.b16 %v3464
  %v4298 = vunpack.c.l.b16 %v3465
  %v4299 = vunpack.c.l.b16 %v3466
  %v4300 = vunpack.c.l.b16 %v3467
  %v4301 = vunpack.c.l.b16 %v3468
  %v4302 = vunpack.c.l.b16 %v3469
  %v4303 = vunpack.c.l.b16 %v3470
  %v4304 = vunpack.c.l.b16 %v3471
  %v4305 = vunpack.c.l.b16 %v3472
  %v4306 = vunpack.c.l.b16 %v3473
  %v4307 = vunpack.c.l.b16 %v3474
  %v4308 = vunpack.c.l.b16 %v3475
  %v4309 = vunpack.c.l.b16 %v3476
  %v4310 = vunpack.c.l.b16 %v3477
  %v4311 = vunpack.c.l.b16 %v3478
  %v4312 = vunpack.c.l.b16 %v3479
  %v4313 = vunpack.c.l.b16 %v3480
  %v4314 = vunpack.c.l.b16 %v3481
  %v4315 = vunpack.c.l.b16 %v3482
  %v4316 = vunpack.c.l.b16 %v3483
  %v4317 = vunpack.c.l.b16 %v3484
  %v4318 = vunpack.c.l.b16 %v3485
  %v4319 = vunpack.c.l.b16 %v3486
  %v4320 = vunpack.c.l.b16 %v3487
  %v4321 = vunpack.c.l.b16 %v3488
  %v4322 = vunpack.c.l.b16 %v3489
  %v4323 = vunpack.c.l.b16 %v3490
  %v4324 = vunpack.c.l.b16 %v3491
  %v4325 = vunpack.c.l.b16 %v3492
  %v4326 = vunpack.c.l.b16 %v3493
  %v4327 = vunpack.c.l.b16 %v3494
  %v4328 = vunpack.c.l.b16 %v3495
  %v4329 = vunpack.c.l.b16 %v3496
  %v4330 = vunpack.c.l.b16 %v3497
  %v4331 = vunpack.c.l.b16 %v3498
  %v4332 = vunpack.c.l.b16 %v3499
  %v4333 = vunpack.c.l.b16 %v3500
  %v4334 = vunpack.c.l.b16 %v3501
  %v4335 = vunpack.c.l.b16 %v3502
  %v4336 = vunpack.c.l.b16 %v3503
  %v4337 = vunpack.c.l.b16 %v3504
  %v4338 = vunpack.c.l.b16 %v3505
  %v4339 = vunpack.c.l.b16 %v3506
  %v4340 = vunpack.c.l.b16 %v3507
  %v4341 = vunpack.c.l.b16 %v3508
  %v4342 = vunpack.c.l.b16 %v3509
  %v4343 = vunpack.c.l.b16 %v3510
  %v4344 = vunpack.c.l.b16 %v3511
  %v4345 = vunpack.c.l.b16 %v3512
  %v4346 = vunpack.c.l.b16 %v3513
  %v4347 = vunpack.c.l.b16 %v3514
  %v4348 = vunpack.c.l.b16 %v3515
  %v4349 = vunpack.c.l.b16 %v3516
  %v4350 = vunpack.c.l.b16 %v3517
  %v4351 = vunpack.c.l.b16 %v3518
  %v4352 = vunpack.c.l.b16 %v3519
  %v4353 = vunpack.c.l.b16 %v3520
  %v4354 = vunpack.c.l.b16 %v3521
  %v4355 = vunpack.c.l.b16 %v3522
  %v4356 = vunpack.c.l.b16 %v3523
  %v4357 = vunpack.c.l.b16 %v3524
  %v4358 = vunpack.c.l.b16 %v3525
  %v4359 = vunpack.c.l.b16 %v3526
  %v4360 = vunpack.c.l.b16 %v3527
  %v4361 = vunpack.c.l.b16 %v3528
  %v4362 = vunpack.c.l.b16 %v3529
  %v4363 = vunpack.c.l.b16 %v3530
  %v4364 = vunpack.c.l.b16 %v3531
  %v4365 = vunpack.c.l.b16 %v3532
  %v4366 = vunpack.c.l.b16 %v3533
  %v4367 = vunpack.c.l.b16 %v3534
  %v4368 = vunpack.c.l.b16 %v3535
  %v4369 = vunpack.c.l.b16 %v3536
  %v4370 = vunpack.c.l.b16 %v3537
  %v4371 = vunpack.c.l.b16 %v3538
  %v4372 = vunpack.c.l.b16 %v3539
  %v4373 = vunpack.c.l.b16 %v3540
  %v4374 = vunpack.c.l.b16 %v3541
  %v4375 = vunpack.c.l.b16 %v3542
  %v4376 = vunpack.c.l.b16 %v3543
  %v4377 = vunpack.c.l.b16 %v3544
  %v4378 = vunpack.c.l.b16 %v3545
  %v4379 = vunpack.c.l.b16 %v3546
  %v4380 = vunpack.c.l.b16 %v3547
  %v4381 = vunpack.c.l.b16 %v3548
  %v4382 = vunpack.c.l.b16 %v3549
  %v4383 = vunpack.c.l.b16 %v3550
  %v4384 = vunpack.c.l.b16 %v3551
  %v4385 = vunpack.c.l.b16 %v3552
  %v4386 = vunpack.c.l.b16 %v3553
  %v4387 = vunpack.c.l.b16 %v3554
  %v4388 = vunpack.c.l.b16 %v3555
  %v4389 = vunpack.c.l.b16 %v3556
  %v4390 = vunpack.c.l.b16 %v3557
  %v4391 = vunpack.c.l.b16 %v3558
  %v4392 = vunpack.c.l.b16 %v3559
  %v4393 = vunpack.c.l.b16 %v3560
  %v4394 = vunpack.c.l.b16 %v3561
  %v4395 = vunpack.c.l.b16 %v3562
  %v4396 = vunpack.c.l.b16 %v3563
  %v4397 = vunpack.c.l.b16 %v3564
  %v4398 = vunpack.c.l.b16 %v3565
  %v4399 = vunpack.c.l.b16 %v3566
  %v4400 = vunpack.c.l.b16 %v3567
  %v4401 = vunpack.c.l.b16 %v3568
  %v4402 = vunpack.c.l.b16 %v3569
  %v4403 = vunpack.c.l.b16 %v3570
  %v4404 = vunpack.c.l.b16 %v3571
  %v4405 = vunpack.c.l.b16 %v3572
  %v4406 = vunpack.c.l.b16 %v3573
  %v4407 = vunpack.c.l.b16 %v3574
  %v4408 = vunpack.c.l.b16 %v3575
  %v4409 = vunpack.c.l.b16 %v3576
  %v4410 = vunpack.c.l.b16 %v3577
  %v4411 = vunpack.c.l.b16 %v3578
  %v4412 = vunpack.c.l.b16 %v3579
  %v4413 = vunpack.c.l.b16 %v3580
  %v4414 = vunpack.c.l.b16 %v3581
  %v4415 = vunpack.c.l.b16 %v3582
  %v4416 = vunpack.c.l.b16 %v3583
  %v4417 = vunpack.c.l.b16 %v3584
  %v4418 = vunpack.c.l.b16 %v3585
  %v4419 = vunpack.c.l.b16 %v3586
  %v4420 = vunpack.c.l.b16 %v3587
  %v4421 = vunpack.c.l.b16 %v3588
  %v4422 = vunpack.c.l.b16 %v3589
  %v4423 = vunpack.c.l.b16 %v3590
  %v4424 = vunpack.c.l.b16 %v3591
  %v4425 = vunpack.c.l.b16 %v3592
  %v4426 = vunpack.c.l.b16 %v3593
  %v4427 = vunpack.c.l.b16 %v3594
  %v4428 = vunpack.c.l.b16 %v3595
  %v4429 = vunpack.c.l.b16 %v3596
  %v4430 = vunpack.c.l.b16 %v3597
  %v4431 = vunpack.c.l.b16 %v3598
  %v4432 = vunpack.c.l.b16 %v3599
  %v4433 = vunpack.c.l.b16 %v3600
  %v4434 = vunpack.c.l.b16 %v3601
  %v4435 = vunpack.c.l.b16 %v3602
  %v4436 = vunpack.c.l.b16 %v3603
  %v4437 = vunpack.c.l.b16 %v3604
  %v4438 = vunpack.c.l.b16 %v3605
  %v4439 = vunpack.c.l.b16 %v3606
  %v4440 = vunpack.c.l.b16 %v3607
  %v4441 = vunpack.c.l.b16 %v3608
  %v4442 = vunpack.c.l.b16 %v3609
  %v4443 = vunpack.c.l.b16 %v3610
  %v4444 = vunpack.c.l.b16 %v3611
  %v4445 = vunpack.c.l.b16 %v3612
  %v4446 = vunpack.c.l.b16 %v3613
  %v4447 = vunpack.c.l.b16 %v3614
  %v4448 = vunpack.c.l.b16 %v3615
  %v4449 = vunpack.c.l.b16 %v3616
  %v4450 = vunpack.c.l.b16 %v3617
  %v4451 = vunpack.c.l.b16 %v3618
  %v4452 = vunpack.c.l.b16 %v3619
  %v4453 = vunpack.c.l.b16 %v3620
  %v4454 = vunpack.c.l.b16 %v3621
  %v4455 = vunpack.c.l.b16 %v3622
  %v4456 = vunpack.c.l.b16 %v3623
  %v4457 = vunpack.c.l.b16 %v3624
  %v4458 = vunpack.c.l.b16 %v3625
  %v4459 = vunpack.c.l.b16 %v3626
  %v4460 = vunpack.c.l.b16 %v3627
  %v4461 = vunpack.c.l.b16 %v3628
  %v4462 = vunpack.c.l.b16 %v3629
  %v4463 = vunpack.c.l.b16 %v3630
  %v4464 = vunpack.c.l.b16 %v3631
  %v4465 = vunpack.c.l.b16 %v3632
  %v4466 = vunpack.c.l.b16 %v3633
  %v4467 = vunpack.c.l.b16 %v3634
  %v4468 = vunpack.c.l.b16 %v3635
  %v4469 = vunpack.c.l.b16 %v3636
  %v4470 = vunpack.c.l.b16 %v3637
  %v4471 = vunpack.c.l.b16 %v3638
  %v4472 = vunpack.c.l.b16 %v3639
  %v4473 = vunpack.c.l.b16 %v3640
  %v4474 = vunpack.c.l.b16 %v3641
  %v4475 = vunpack.c.l.b16 %v3642
  %v4476 = vunpack.c.l.b16 %v3643
  %v4477 = vunpack.c.l.b16 %v3644
  %v4478 = vunpack.c.l.b16 %v3645
  %v4479 = vunpack.c.l.b16 %v3646
  %v4480 = vunpack.c.l.b16 %v3647
  %v4481 = vunpack.c.l.b16 %v3648
  %v4482 = vunpack.c.l.b16 %v3649
  %v4483 = vunpack.c.l.b16 %v3650
  %v4484 = vunpack.c.l.b16 %v3651
  %v4485 = vunpack.c.l.b16 %v3652
  %v4486 = vunpack.c.l.b16 %v3653
  %v4487 = vunpack.c.l.b16 %v3654
  %v4488 = vunpack.c.l.b16 %v3655
  %v4489 = vunpack.c.l.b16 %v3656
  %v4490 = vunpack.c.l.b16 %v3657
  %v4491 = vunpack.c.l.b16 %v3658
  %v4492 = vunpack.c.l.b16 %v3659
  %v4493 = vunpack.c.l.b16 %v3660
  %v4494 = vunpack.c.l.b16 %v3661
  %v4495 = vunpack.c.l.b16 %v3662
  %v4496 = vunpack.c.l.b16 %v3663
  %v4497 = vunpack.c.l.b16 %v3664
  %v4498 = vunpack.c.l.b16 %v3665
  %v4499 = vunpack.c.l.b16 %v3666
  %v4500 = vunpack.c.l.b16 %v3667
  %v4501 = vunpack.c.l.b16 %v3668
  %v4502 = vunpack.c.l.b16 %v3669
  %v4503 = vunpack.c.l.b16 %v3670
  %v4504 = vunpack.c.l.b16 %v3671
  %v4505 = vunpack.c.l.b16 %v3672
  %v4506 = vunpack.c.l.b16 %v3673
  %v4507 = vunpack.c.l.b16 %v3674
  %v4508 = vunpack.c.l.b16 %v3675
  %v4509 = vunpack.c.l.b16 %v3676
  %v4510 = vunpack.c.l.b16 %v3677
  %v4511 = vunpack.c.l.b16 %v3678
  %v4512 = vunpack.c.l.b16 %v3679
  %v4513 = vunpack.c.l.b16 %v3680
  %v4514 = vunpack.c.l.b16 %v3681
  %v4515 = vunpack.c.l.b16 %v3682
  %v4516 = vunpack.c.l.b16 %v3683
  %v4517 = vunpack.c.l.b16 %v3684
  %v4518 = vunpack.c.l.b16 %v3685
  %v4519 = vunpack.c.l.b16 %v3686
  %v4520 = vunpack.c.l.b16 %v3687
  %v4521 = vunpack.c.l.b16 %v3688
  %v4522 = vunpack.c.l.b16 %v3689
  %v4523 = vunpack.c.l.b16 %v3690
  %v4524 = vunpack.c.l.b16 %v3691
  %v4525 = vunpack.c.l.b16 %v3692
  %v4526 = vunpack.c.l.b16 %v3693
  %v4527 = vunpack.c.l.b16 %v3694
  %v4528 = vunpack.c.l.b16 %v3695
  %v4529 = vunpack.c.l.b16 %v3696
  %v4530 = vunpack.c.l.b16 %v3697
  %v4531 = vunpack.c.l.b16 %v3698
  %v4532 = vunpack.c.l.b16 %v3699
  %v4533 = vunpack.c.l.b16 %v3700
  %v4534 = vunpack.c.l.b16 %v3701
  %v4535 = vunpack.c.l.b16 %v3702
  %v4536 = vunpack.c.l.b16 %v3703
  %v4537 = vunpack.c.l.b16 %v3704
  %v4538 = vunpack.c.l.b16 %v3705
  %v4539 = vunpack.c.l.b16 %v3706
  %v4540 = vunpack.c.l.b16 %v3707
  %v4541 = vunpack.c.l.b16 %v3708
  %v4542 = vunpack.c.l.b16 %v3709
  %v4543 = vunpack.c.l.b16 %v3710
  %v4544 = vunpack.c.l.b16 %v3711
  %v4545 = vunpack.c.l.b16 %v3712
  %v4546 = vunpack.c.l.b16 %v3713
  %v4547 = vpack.c.b16 %v4292, %v4291
  %v4548 = vpack.c.b16 %v4294, %v4293
  %v4549 = vpack.c.b16 %v4296, %v4295
  %v4550 = vpack.c.b16 %v4298, %v4297
  %v4551 = vpack.c.b16 %v4300, %v4299
  %v4552 = vpack.c.b16 %v4302, %v4301
  %v4553 = vpack.c.b16 %v4304, %v4303
  %v4554 = vpack.c.b16 %v4306, %v4305
  %v4555 = vpack.c.b16 %v4308, %v4307
  %v4556 = vpack.c.b16 %v4310, %v4309
  %v4557 = vpack.c.b16 %v4312, %v4311
  %v4558 = vpack.c.b16 %v4314, %v4313
  %v4559 = vpack.c.b16 %v4316, %v4315
  %v4560 = vpack.c.b16 %v4318, %v4317
  %v4561 = vpack.c.b16 %v4320, %v4319
  %v4562 = vpack.c.b16 %v4322, %v4321
  %v4563 = vpack.c.b16 %v4324, %v4323
  %v4564 = vpack.c.b16 %v4326, %v4325
  %v4565 = vpack.c.b16 %v4328, %v4327
  %v4566 = vpack.c.b16 %v4330, %v4329
  %v4567 = vpack.c.b16 %v4332, %v4331
  %v4568 = vpack.c.b16 %v4334, %v4333
  %v4569 = vpack.c.b16 %v4336, %v4335
  %v4570 = vpack.c.b16 %v4338, %v4337
  %v4571 = vpack.c.b16 %v4340, %v4339
  %v4572 = vpack.c.b16 %v4342, %v4341
  %v4573 = vpack.c.b16 %v4344, %v4343
  %v4574 = vpack.c.b16 %v4346, %v4345
  %v4575 = vpack.c.b16 %v4348, %v4347
  %v4576 = vpack.c.b16 %v4350, %v4349
  %v4577 = vpack.c.b16 %v4352, %v4351
  %v4578 = vpack.c.b16 %v4354, %v4353
  %v4579 = vpack.c.b16 %v4356, %v4355
  %v4580 = vpack.c.b16 %v4358, %v4357
  %v4581 = vpack.c.b16 %v4360, %v4359
  %v4582 = vpack.c.b16 %v4362, %v4361
  %v4583 = vpack.c.b16 %v4364, %v4363
  %v4584 = vpack.c.b16 %v4366, %v4365
  %v4585 = vpack.c.b16 %v4368, %v4367
  %v4586 = vpack.c.b16 %v4370, %v4369
  %v4587 = vpack.c.b16 %v4372, %v4371
  %v4588 = vpack.c.b16 %v4374, %v4373
  %v4589 = vpack.c.b16 %v4376, %v4375
  %v4590 = vpack.c.b16 %v4378, %v4377
  %v4591 = vpack.c.b16 %v4380, %v4379
  %v4592 = vpack.c.b16 %v4382, %v4381
  %v4593 = vpack.c.b16 %v4384, %v4383
  %v4594 = vpack.c.b16 %v4386, %v4385
  %v4595 = vpack.c.b16 %v4388, %v4387
  %v4596 = vpack.c.b16 %v4390, %v4389
  %v4597 = vpack.c.b16 %v4392, %v4391
  %v4598 = vpack.c.b16 %v4394, %v4393
  %v4599 = vpack.c.b16 %v4396, %v4395
  %v4600 = vpack.c.b16 %v4398, %v4397
  %v4601 = vpack.c.b16 %v4400, %v4399
  %v4602 = vpack.c.b16 %v4402, %v4401
  %v4603 = vpack.c.b16 %v4404, %v4403
  %v4604 = vpack.c.b16 %v4406, %v4405
  %v4605 = vpack.c.b16 %v4408, %v4407
  %v4606 = vpack.c.b16 %v4410, %v4409
  %v4607 = vpack.c.b16 %v4412, %v4411
  %v4608 = vpack.c.b16 %v4414, %v4413
  %v4609 = vpack.c.b16 %v4416, %v4415
  %v4610 = vpack.c.b16 %v4418, %v4417
  %v4611 = vpack.c.b16 %v4420, %v4419
  %v4612 = vpack.c.b16 %v4422, %v4421
  %v4613 = vpack.c.b16 %v4424, %v4423
  %v4614 = vpack.c.b16 %v4426, %v4425
  %v4615 = vpack.c.b16 %v4428, %v4427
  %v4616 = vpack.c.b16 %v4430, %v4429
  %v4617 = vpack.c.b16 %v4432, %v4431
  %v4618 = vpack.c.b16 %v4434, %v4433
  %v4619 = vpack.c.b16 %v4436, %v4435
  %v4620 = vpack.c.b16 %v4438, %v4437
  %v4621 = vpack.c.b16 %v4440, %v4439
  %v4622 = vpack.c.b16 %v4442, %v4441
  %v4623 = vpack.c.b16 %v4444, %v4443
  %v4624 = vpack.c.b16 %v4446, %v4445
  %v4625 = vpack.c.b16 %v4448, %v4447
  %v4626 = vpack.c.b16 %v4450, %v4449
  %v4627 = vpack.c.b16 %v4452, %v4451
  %v4628 = vpack.c.b16 %v4454, %v4453
  %v4629 = vpack.c.b16 %v4456, %v4455
  %v4630 = vpack.c.b16 %v4458, %v4457
  %v4631 = vpack.c.b16 %v4460, %v4459
  %v4632 = vpack.c.b16 %v4462, %v4461
  %v4633 = vpack.c.b16 %v4464, %v4463
  %v4634 = vpack.c.b16 %v4466, %v4465
  %v4635 = vpack.c.b16 %v4468, %v4467
  %v4636 = vpack.c.b16 %v4470, %v4469
  %v4637 = vpack.c.b16 %v4472, %v4471
  %v4638 = vpack.c.b16 %v4474, %v4473
  %v4639 = vpack.c.b16 %v4476, %v4475
  %v4640 = vpack.c.b16 %v4478, %v4477
  %v4641 = vpack.c.b16 %v4480, %v4479
  %v4642 = vpack.c.b16 %v4482, %v4481
  %v4643 = vpack.c.b16 %v4484, %v4483
  %v4644 = vpack.c.b16 %v4486, %v4485
  %v4645 = vpack.c.b16 %v4488, %v4487
  %v4646 = vpack.c.b16 %v4490, %v4489
  %v4647 = vpack.c.b16 %v4492, %v4491
  %v4648 = vpack.c.b16 %v4494, %v4493
  %v4649 = vpack.c.b16 %v4496, %v4495
  %v4650 = vpack.c.b16 %v4498, %v4497
  %v4651 = vpack.c.b16 %v4500, %v4499
  %v4652 = vpack.c.b16 %v4502, %v4501
  %v4653 = vpack.c.b16 %v4504, %v4503
  %v4654 = vpack.c.b16 %v4506, %v4505
  %v4655 = vpack.c.b16 %v4508, %v4507
  %v4656 = vpack.c.b16 %v4510, %v4509
  %v4657 = vpack.c.b16 %v4512, %v4511
  %v4658 = vpack.c.b16 %v4514, %v4513
  %v4659 = vpack.c.b16 %v4516, %v4515
  %v4660 = vpack.c.b16 %v4518, %v4517
  %v4661 = vpack.c.b16 %v4520, %v4519
  %v4662 = vpack.c.b16 %v4522, %v4521
  %v4663 = vpack.c.b16 %v4524, %v4523
  %v4664 = vpack.c.b16 %v4526, %v4525
  %v4665 = vpack.c.b16 %v4528, %v4527
  %v4666 = vpack.c.b16 %v4530, %v4529
  %v4667 = vpack.c.b16 %v4532, %v4531
  %v4668 = vpack.c.b16 %v4534, %v4533
  %v4669 = vpack.c.b16 %v4536, %v4535
  %v4670 = vpack.c.b16 %v4538, %v4537
  %v4671 = vpack.c.b16 %v4540, %v4539
  %v4672 = vpack.c.b16 %v4542, %v4541
  %v4673 = vpack.c.b16 %v4544, %v4543
  %v4674 = vpack.c.b16 %v4546, %v4545
  %4803 = vmatprep.subr.bf16.mxu0 0
  %4804 = vmatpush1.bf16.msra.mxu0 %v4547
  %4805 = vmatprep.subr.bf16.mxu0 0
  %4806 = vmatpush1.bf16.msra.mxu0 %v4548
  %4807 = vmatprep.subr.bf16.mxu0 0
  %4808 = vmatpush1.bf16.msra.mxu0 %v4549
  %4809 = vmatprep.subr.bf16.mxu0 0
  %4810 = vmatpush1.bf16.msra.mxu0 %v4550
  %4811 = vmatprep.subr.bf16.mxu0 0
  %4812 = vmatpush1.bf16.msra.mxu0 %v4551
  %4813 = vmatprep.subr.bf16.mxu0 0
  %4814 = vmatpush1.bf16.msra.mxu0 %v4552
  %4815 = vmatprep.subr.bf16.mxu0 0
  %4816 = vmatpush1.bf16.msra.mxu0 %v4553
  %4817 = vmatprep.subr.bf16.mxu0 0
  %4818 = vmatpush1.bf16.msra.mxu0 %v4554
  %4819 = vmatprep.subr.bf16.mxu0 0
  %4820 = vmatpush1.bf16.msra.mxu0 %v4555
  %4821 = vmatprep.subr.bf16.mxu0 0
  %4822 = vmatpush1.bf16.msra.mxu0 %v4556
  %4823 = vmatprep.subr.bf16.mxu0 0
  %4824 = vmatpush1.bf16.msra.mxu0 %v4557
  %4825 = vmatprep.subr.bf16.mxu0 0
  %4826 = vmatpush1.bf16.msra.mxu0 %v4558
  %4827 = vmatprep.subr.bf16.mxu0 0
  %4828 = vmatpush1.bf16.msra.mxu0 %v4559
  %4829 = vmatprep.subr.bf16.mxu0 0
  %4830 = vmatpush1.bf16.msra.mxu0 %v4560
  %4831 = vmatprep.subr.bf16.mxu0 0
  %4832 = vmatpush1.bf16.msra.mxu0 %v4561
  %4833 = vmatprep.subr.bf16.mxu0 0
  %4834 = vmatpush1.bf16.msra.mxu0 %v4562
  %4835 = vmatprep.mubr.bf16.mxu0 %v3068
  %4836 = vmatmul.mubr.bf16.gmra.mrb[0].mxu0 %v3067
  %v4837 = vpop.f32.mrb[0].mxu0
  %v4838 = vadd.f32 %v3909, %v4837
  %v4839 = vpop.f32.mrb[0].mxu0
  %v4840 = vpop.f32.mrb[0].mxu0
  %v4841 = vadd.f32 %v3912, %v4840
  %v4842 = vpop.f32.mrb[0].mxu0
  %4843 = vmatprep.mubr.bf16.mxu0 %v3084
  %4844 = vmatmul.mubr.bf16.gmra.mrb[0].mxu0 %v3083
  %v4845 = vpop.f32.mrb[0].mxu0
  %v4846 = vadd.f32 %v3917, %v4845
  %v4847 = vpop.f32.mrb[0].mxu0
  %v4848 = vpop.f32.mrb[0].mxu0
  %v4849 = vadd.f32 %v3920, %v4848
  %v4850 = vpop.f32.mrb[0].mxu0
  %4851 = vmatprep.mubr.bf16.mxu0 %v3100
  %4852 = vmatmul.mubr.bf16.gmra.mrb[0].mxu0 %v3099
  %v4853 = vpop.f32.mrb[0].mxu0
  %v4854 = vadd.f32 %v3925, %v4853
  %v4855 = vpop.f32.mrb[0].mxu0
  %v4856 = vpop.f32.mrb[0].mxu0
  %v4857 = vadd.f32 %v3928, %v4856
  %v4858 = vpop.f32.mrb[0].mxu0
  %4859 = vmatprep.mubr.bf16.mxu0 %v3116
  %4860 = vmatmul.mubr.bf16.gmra.mrb[0].mxu0 %v3115
  %v4861 = vpop.f32.mrb[0].mxu0
  %v4862 = vadd.f32 %v3933, %v4861
  %v4863 = vpop.f32.mrb[0].mxu0
  %v4864 = vpop.f32.mrb[0].mxu0
  %v4865 = vadd.f32 %v3936, %v4864
  %v4866 = vpop.f32.mrb[0].mxu0
  %4867 = vmatprep.mubr.bf16.mxu0 %v3132
  %4868 = vmatmul.mubr.bf16.gmra.mrb[0].mxu0 %v3131
  %v4869 = vpop.f32.mrb[0].mxu0
  %v4870 = vadd.f32 %v3941, %v4869
  %v4871 = vpop.f32.mrb[0].mxu0
  %v4872 = vpop.f32.mrb[0].mxu0
  %v4873 = vadd.f32 %v3944, %v4872
  %v4874 = vpop.f32.mrb[0].mxu0
  %4875 = vmatprep.mubr.bf16.mxu0 %v3148
  %4876 = vmatmul.mubr.bf16.gmra.mrb[0].mxu0 %v3147
  %v4877 = vpop.f32.mrb[0].mxu0
  %v4878 = vadd.f32 %v3949, %v4877
  %v4879 = vpop.f32.mrb[0].mxu0
  %v4880 = vpop.f32.mrb[0].mxu0
  %v4881 = vadd.f32 %v3952, %v4880
  %v4882 = vpop.f32.mrb[0].mxu0
  %4883 = vmatprep.mubr.bf16.mxu0 %v3164
  %4884 = vmatmul.mubr.bf16.gmra.mrb[0].mxu0 %v3163
  %v4885 = vpop.f32.mrb[0].mxu0
  %v4886 = vadd.f32 %v3957, %v4885
  %v4887 = vpop.f32.mrb[0].mxu0
  %v4888 = vpop.f32.mrb[0].mxu0
  %v4889 = vadd.f32 %v3960, %v4888
  %v4890 = vpop.f32.mrb[0].mxu0
  %4891 = vmatprep.mubr.bf16.mxu0 %v3180
  %4892 = vmatmul.mubr.bf16.gmra.mrb[0].mxu0 %v3179
  %v4893 = vpop.f32.mrb[0].mxu0
  %v4894 = vadd.f32 %v3965, %v4893
  %v4895 = vpop.f32.mrb[0].mxu0
  %v4896 = vpop.f32.mrb[0].mxu0
  %v4897 = vadd.f32 %v3968, %v4896
  %v4898 = vpop.f32.mrb[0].mxu0
  %4899 = vmatprep.mubr.bf16.mxu0 %v3196
  %4900 = vmatmul.mubr.bf16.gmra.mrb[0].mxu0 %v3195
  %v4901 = vpop.f32.mrb[0].mxu0
  %v4902 = vadd.f32 %v3973, %v4901
  %v4903 = vpop.f32.mrb[0].mxu0
  %v4904 = vpop.f32.mrb[0].mxu0
  %v4905 = vadd.f32 %v3976, %v4904
  %v4906 = vpop.f32.mrb[0].mxu0
  %4907 = vmatprep.mubr.bf16.mxu0 %v3212
  %4908 = vmatmul.mubr.bf16.gmra.mrb[0].mxu0 %v3211
  %v4909 = vpop.f32.mrb[0].mxu0
  %v4910 = vadd.f32 %v3981, %v4909
  %v4911 = vpop.f32.mrb[0].mxu0
  %v4912 = vpop.f32.mrb[0].mxu0
  %v4913 = vadd.f32 %v3984, %v4912
  %v4914 = vpop.f32.mrb[0].mxu0
  %4915 = vmatprep.mubr.bf16.mxu0 %v3228
  %4916 = vmatmul.mubr.bf16.gmra.mrb[0].mxu0 %v3227
  %v4917 = vpop.f32.mrb[0].mxu0
  %v4918 = vadd.f32 %v3989, %v4917
  %v4919 = vpop.f32.mrb[0].mxu0
  %v4920 = vpop.f32.mrb[0].mxu0
  %v4921 = vadd.f32 %v3992, %v4920
  %v4922 = vpop.f32.mrb[0].mxu0
  %4923 = vmatprep.mubr.bf16.mxu0 %v3244
  %4924 = vmatmul.mubr.bf16.gmra.mrb[0].mxu0 %v3243
  %v4925 = vpop.f32.mrb[0].mxu0
  %v4926 = vadd.f32 %v3997, %v4925
  %v4927 = vpop.f32.mrb[0].mxu0
  %v4928 = vpop.f32.mrb[0].mxu0
  %v4929 = vadd.f32 %v4000, %v4928
  %v4930 = vpop.f32.mrb[0].mxu0
  %4931 = vmatprep.mubr.bf16.mxu0 %v3260
  %4932 = vmatmul.mubr.bf16.gmra.mrb[0].mxu0 %v3259
  %v4933 = vpop.f32.mrb[0].mxu0
  %v4934 = vadd.f32 %v4005, %v4933
  %v4935 = vpop.f32.mrb[0].mxu0
  %v4936 = vpop.f32.mrb[0].mxu0
  %v4937 = vadd.f32 %v4008, %v4936
  %v4938 = vpop.f32.mrb[0].mxu0
  %4939 = vmatprep.mubr.bf16.mxu0 %v3276
  %4940 = vmatmul.mubr.bf16.gmra.mrb[0].mxu0 %v3275
  %v4941 = vpop.f32.mrb[0].mxu0
  %v4942 = vadd.f32 %v4013, %v4941
  %v4943 = vpop.f32.mrb[0].mxu0
  %v4944 = vpop.f32.mrb[0].mxu0
  %v4945 = vadd.f32 %v4016, %v4944
  %v4946 = vpop.f32.mrb[0].mxu0
  %4947 = vmatprep.mubr.bf16.mxu0 %v3292
  %4948 = vmatmul.mubr.bf16.gmra.mrb[0].mxu0 %v3291
  %v4949 = vpop.f32.mrb[0].mxu0
  %v4950 = vadd.f32 %v4021, %v4949
  %v4951 = vpop.f32.mrb[0].mxu0
  %v4952 = vpop.f32.mrb[0].mxu0
  %v4953 = vadd.f32 %v4024, %v4952
  %v4954 = vpop.f32.mrb[0].mxu0
  %4955 = vmatprep.mubr.bf16.mxu0 %v3308
  %4956 = vmatmul.mubr.bf16.gmra.mrb[0].mxu0 %v3307
  %v4957 = vpop.f32.mrb[0].mxu0
  %v4958 = vadd.f32 %v4029, %v4957
  %v4959 = vpop.f32.mrb[0].mxu0
  %v4960 = vpop.f32.mrb[0].mxu0
  %v4961 = vadd.f32 %v4032, %v4960
  %v4962 = vpop.f32.mrb[0].mxu0
  %4963 = vdwg.mxu0
  %4964 = vmatprep.subr.bf16.mxu0 0
  %4965 = vmatpush1.bf16.msra.mxu0 %v4563
  %4966 = vmatprep.subr.bf16.mxu0 0
  %4967 = vmatpush1.bf16.msra.mxu0 %v4564
  %4968 = vmatprep.subr.bf16.mxu0 0
  %4969 = vmatpush1.bf16.msra.mxu0 %v4565
  %4970 = vmatprep.subr.bf16.mxu0 0
  %4971 = vmatpush1.bf16.msra.mxu0 %v4566
  %4972 = vmatprep.subr.bf16.mxu0 0
  %4973 = vmatpush1.bf16.msra.mxu0 %v4567
  %4974 = vmatprep.subr.bf16.mxu0 0
  %4975 = vmatpush1.bf16.msra.mxu0 %v4568
  %4976 = vmatprep.subr.bf16.mxu0 0
  %4977 = vmatpush1.bf16.msra.mxu0 %v4569
  %4978 = vmatprep.subr.bf16.mxu0 0
  %4979 = vmatpush1.bf16.msra.mxu0 %v4570
  %4980 = vmatprep.subr.bf16.mxu0 0
  %4981 = vmatpush1.bf16.msra.mxu0 %v4571
  %4982 = vmatprep.subr.bf16.mxu0 0
  %4983 = vmatpush1.bf16.msra.mxu0 %v4572
  %4984 = vmatprep.subr.bf16.mxu0 0
  %4985 = vmatpush1.bf16.msra.mxu0 %v4573
  %4986 = vmatprep.subr.bf16.mxu0 0
  %4987 = vmatpush1.bf16.msra.mxu0 %v4574
  %4988 = vmatprep.subr.bf16.mxu0 0
  %4989 = vmatpush1.bf16.msra.mxu0 %v4575
  %4990 = vmatprep.subr.bf16.mxu0 0
  %4991 = vmatpush1.bf16.msra.mxu0 %v4576
  %4992 = vmatprep.subr.bf16.mxu0 0
  %4993 = vmatpush1.bf16.msra.mxu0 %v4577
  %4994 = vmatprep.subr.bf16.mxu0 0
  %4995 = vmatpush1.bf16.msra.mxu0 %v4578
  %4996 = vmatprep.mubr.bf16.mxu0 %v3070
  %4997 = vmatmul.mubr.bf16.gmra.mrb[0].mxu0 %v3069
  %v4998 = vpop.f32.mrb[0].mxu0
  %v4999 = vadd.f32 %v4838, %v4998
  %v5000 = vpop.f32.mrb[0].mxu0
  %v5001 = vpop.f32.mrb[0].mxu0
  %v5002 = vadd.f32 %v4841, %v5001
  %v5003 = vpop.f32.mrb[0].mxu0
  %5004 = vmatprep.mubr.bf16.mxu0 %v3086
  %5005 = vmatmul.mubr.bf16.gmra.mrb[0].mxu0 %v3085
  %v5006 = vpop.f32.mrb[0].mxu0
  %v5007 = vadd.f32 %v4846, %v5006
  %v5008 = vpop.f32.mrb[0].mxu0
  %v5009 = vpop.f32.mrb[0].mxu0
  %v5010 = vadd.f32 %v4849, %v5009
  %v5011 = vpop.f32.mrb[0].mxu0
  %5012 = vmatprep.mubr.bf16.mxu0 %v3102
  %5013 = vmatmul.mubr.bf16.gmra.mrb[0].mxu0 %v3101
  %v5014 = vpop.f32.mrb[0].mxu0
  %v5015 = vadd.f32 %v4854, %v5014
  %v5016 = vpop.f32.mrb[0].mxu0
  %v5017 = vpop.f32.mrb[0].mxu0
  %v5018 = vadd.f32 %v4857, %v5017
  %v5019 = vpop.f32.mrb[0].mxu0
  %5020 = vmatprep.mubr.bf16.mxu0 %v3118
  %5021 = vmatmul.mubr.bf16.gmra.mrb[0].mxu0 %v3117
  %v5022 = vpop.f32.mrb[0].mxu0
  %v5023 = vadd.f32 %v4862, %v5022
  %v5024 = vpop.f32.mrb[0].mxu0
  %v5025 = vpop.f32.mrb[0].mxu0
  %v5026 = vadd.f32 %v4865, %v5025
  %v5027 = vpop.f32.mrb[0].mxu0
  %5028 = vmatprep.mubr.bf16.mxu0 %v3134
  %5029 = vmatmul.mubr.bf16.gmra.mrb[0].mxu0 %v3133
  %v5030 = vpop.f32.mrb[0].mxu0
  %v5031 = vadd.f32 %v4870, %v5030
  %v5032 = vpop.f32.mrb[0].mxu0
  %v5033 = vpop.f32.mrb[0].mxu0
  %v5034 = vadd.f32 %v4873, %v5033
  %v5035 = vpop.f32.mrb[0].mxu0
  %5036 = vmatprep.mubr.bf16.mxu0 %v3150
  %5037 = vmatmul.mubr.bf16.gmra.mrb[0].mxu0 %v3149
  %v5038 = vpop.f32.mrb[0].mxu0
  %v5039 = vadd.f32 %v4878, %v5038
  %v5040 = vpop.f32.mrb[0].mxu0
  %v5041 = vpop.f32.mrb[0].mxu0
  %v5042 = vadd.f32 %v4881, %v5041
  %v5043 = vpop.f32.mrb[0].mxu0
  %5044 = vmatprep.mubr.bf16.mxu0 %v3166
  %5045 = vmatmul.mubr.bf16.gmra.mrb[0].mxu0 %v3165
  %v5046 = vpop.f32.mrb[0].mxu0
  %v5047 = vadd.f32 %v4886, %v5046
  %v5048 = vpop.f32.mrb[0].mxu0
  %v5049 = vpop.f32.mrb[0].mxu0
  %v5050 = vadd.f32 %v4889, %v5049
  %v5051 = vpop.f32.mrb[0].mxu0
  %5052 = vmatprep.mubr.bf16.mxu0 %v3182
  %5053 = vmatmul.mubr.bf16.gmra.mrb[0].mxu0 %v3181
  %v5054 = vpop.f32.mrb[0].mxu0
  %v5055 = vadd.f32 %v4894, %v5054
  %v5056 = vpop.f32.mrb[0].mxu0
  %v5057 = vpop.f32.mrb[0].mxu0
  %v5058 = vadd.f32 %v4897, %v5057
  %v5059 = vpop.f32.mrb[0].mxu0
  %5060 = vmatprep.mubr.bf16.mxu0 %v3198
  %5061 = vmatmul.mubr.bf16.gmra.mrb[0].mxu0 %v3197
  %v5062 = vpop.f32.mrb[0].mxu0
  %v5063 = vadd.f32 %v4902, %v5062
  %v5064 = vpop.f32.mrb[0].mxu0
  %v5065 = vpop.f32.mrb[0].mxu0
  %v5066 = vadd.f32 %v4905, %v5065
  %v5067 = vpop.f32.mrb[0].mxu0
  %5068 = vmatprep.mubr.bf16.mxu0 %v3214
  %5069 = vmatmul.mubr.bf16.gmra.mrb[0].mxu0 %v3213
  %v5070 = vpop.f32.mrb[0].mxu0
  %v5071 = vadd.f32 %v4910, %v5070
  %v5072 = vpop.f32.mrb[0].mxu0
  %v5073 = vpop.f32.mrb[0].mxu0
  %v5074 = vadd.f32 %v4913, %v5073
  %v5075 = vpop.f32.mrb[0].mxu0
  %5076 = vmatprep.mubr.bf16.mxu0 %v3230
  %5077 = vmatmul.mubr.bf16.gmra.mrb[0].mxu0 %v3229
  %v5078 = vpop.f32.mrb[0].mxu0
  %v5079 = vadd.f32 %v4918, %v5078
  %v5080 = vpop.f32.mrb[0].mxu0
  %v5081 = vpop.f32.mrb[0].mxu0
  %v5082 = vadd.f32 %v4921, %v5081
  %v5083 = vpop.f32.mrb[0].mxu0
  %5084 = vmatprep.mubr.bf16.mxu0 %v3246
  %5085 = vmatmul.mubr.bf16.gmra.mrb[0].mxu0 %v3245
  %v5086 = vpop.f32.mrb[0].mxu0
  %v5087 = vadd.f32 %v4926, %v5086
  %v5088 = vpop.f32.mrb[0].mxu0
  %v5089 = vpop.f32.mrb[0].mxu0
  %v5090 = vadd.f32 %v4929, %v5089
  %v5091 = vpop.f32.mrb[0].mxu0
  %5092 = vmatprep.mubr.bf16.mxu0 %v3262
  %5093 = vmatmul.mubr.bf16.gmra.mrb[0].mxu0 %v3261
  %v5094 = vpop.f32.mrb[0].mxu0
  %v5095 = vadd.f32 %v4934, %v5094
  %v5096 = vpop.f32.mrb[0].mxu0
  %v5097 = vpop.f32.mrb[0].mxu0
  %v5098 = vadd.f32 %v4937, %v5097
  %v5099 = vpop.f32.mrb[0].mxu0
  %5100 = vmatprep.mubr.bf16.mxu0 %v3278
  %5101 = vmatmul.mubr.bf16.gmra.mrb[0].mxu0 %v3277
  %v5102 = vpop.f32.mrb[0].mxu0
  %v5103 = vadd.f32 %v4942, %v5102
  %v5104 = vpop.f32.mrb[0].mxu0
  %v5105 = vpop.f32.mrb[0].mxu0
  %v5106 = vadd.f32 %v4945, %v5105
  %v5107 = vpop.f32.mrb[0].mxu0
  %5108 = vmatprep.mubr.bf16.mxu0 %v3294
  %5109 = vmatmul.mubr.bf16.gmra.mrb[0].mxu0 %v3293
  %v5110 = vpop.f32.mrb[0].mxu0
  %v5111 = vadd.f32 %v4950, %v5110
  %v5112 = vpop.f32.mrb[0].mxu0
  %v5113 = vpop.f32.mrb[0].mxu0
  %v5114 = vadd.f32 %v4953, %v5113
  %v5115 = vpop.f32.mrb[0].mxu0
  %5116 = vmatprep.mubr.bf16.mxu0 %v3310
  %5117 = vmatmul.mubr.bf16.gmra.mrb[0].mxu0 %v3309
  %v5118 = vpop.f32.mrb[0].mxu0
  %v5119 = vadd.f32 %v4958, %v5118
  %v5120 = vpop.f32.mrb[0].mxu0
  %v5121 = vpop.f32.mrb[0].mxu0
  %v5122 = vadd.f32 %v4961, %v5121
  %v5123 = vpop.f32.mrb[0].mxu0
  %5124 = vdwg.mxu0
  %5125 = vmatprep.subr.bf16.mxu0 0
  %5126 = vmatpush1.bf16.msra.mxu0 %v4579
  %5127 = vmatprep.subr.bf16.mxu0 0
  %5128 = vmatpush1.bf16.msra.mxu0 %v4580
  %5129 = vmatprep.subr.bf16.mxu0 0
  %5130 = vmatpush1.bf16.msra.mxu0 %v4581
  %5131 = vmatprep.subr.bf16.mxu0 0
  %5132 = vmatpush1.bf16.msra.mxu0 %v4582
  %5133 = vmatprep.subr.bf16.mxu0 0
  %5134 = vmatpush1.bf16.msra.mxu0 %v4583
  %5135 = vmatprep.subr.bf16.mxu0 0
  %5136 = vmatpush1.bf16.msra.mxu0 %v4584
  %5137 = vmatprep.subr.bf16.mxu0 0
  %5138 = vmatpush1.bf16.msra.mxu0 %v4585
  %5139 = vmatprep.subr.bf16.mxu0 0
  %5140 = vmatpush1.bf16.msra.mxu0 %v4586
  %5141 = vmatprep.subr.bf16.mxu0 0
  %5142 = vmatpush1.bf16.msra.mxu0 %v4587
  %5143 = vmatprep.subr.bf16.mxu0 0
  %5144 = vmatpush1.bf16.msra.mxu0 %v4588
  %5145 = vmatprep.subr.bf16.mxu0 0
  %5146 = vmatpush1.bf16.msra.mxu0 %v4589
  %5147 = vmatprep.subr.bf16.mxu0 0
  %5148 = vmatpush1.bf16.msra.mxu0 %v4590
  %5149 = vmatprep.subr.bf16.mxu0 0
  %5150 = vmatpush1.bf16.msra.mxu0 %v4591
  %5151 = vmatprep.subr.bf16.mxu0 0
  %5152 = vmatpush1.bf16.msra.mxu0 %v4592
  %5153 = vmatprep.subr.bf16.mxu0 0
  %5154 = vmatpush1.bf16.msra.mxu0 %v4593
  %5155 = vmatprep.subr.bf16.mxu0 0
  %5156 = vmatpush1.bf16.msra.mxu0 %v4594
  %5157 = vmatprep.mubr.bf16.mxu0 %v3072
  %5158 = vmatmul.mubr.bf16.gmra.mrb[0].mxu0 %v3071
  %v5159 = vpop.f32.mrb[0].mxu0
  %v5160 = vadd.f32 %v4999, %v5159
  %v5161 = vpop.f32.mrb[0].mxu0
  %v5162 = vpop.f32.mrb[0].mxu0
  %v5163 = vadd.f32 %v5002, %v5162
  %v5164 = vpop.f32.mrb[0].mxu0
  %5165 = vmatprep.mubr.bf16.mxu0 %v3088
  %5166 = vmatmul.mubr.bf16.gmra.mrb[0].mxu0 %v3087
  %v5167 = vpop.f32.mrb[0].mxu0
  %v5168 = vadd.f32 %v5007, %v5167
  %v5169 = vpop.f32.mrb[0].mxu0
  %v5170 = vpop.f32.mrb[0].mxu0
  %v5171 = vadd.f32 %v5010, %v5170
  %v5172 = vpop.f32.mrb[0].mxu0
  %5173 = vmatprep.mubr.bf16.mxu0 %v3104
  %5174 = vmatmul.mubr.bf16.gmra.mrb[0].mxu0 %v3103
  %v5175 = vpop.f32.mrb[0].mxu0
  %v5176 = vadd.f32 %v5015, %v5175
  %v5177 = vpop.f32.mrb[0].mxu0
  %v5178 = vpop.f32.mrb[0].mxu0
  %v5179 = vadd.f32 %v5018, %v5178
  %v5180 = vpop.f32.mrb[0].mxu0
  %5181 = vmatprep.mubr.bf16.mxu0 %v3120
  %5182 = vmatmul.mubr.bf16.gmra.mrb[0].mxu0 %v3119
  %v5183 = vpop.f32.mrb[0].mxu0
  %v5184 = vadd.f32 %v5023, %v5183
  %v5185 = vpop.f32.mrb[0].mxu0
  %v5186 = vpop.f32.mrb[0].mxu0
  %v5187 = vadd.f32 %v5026, %v5186
  %v5188 = vpop.f32.mrb[0].mxu0
  %5189 = vmatprep.mubr.bf16.mxu0 %v3136
  %5190 = vmatmul.mubr.bf16.gmra.mrb[0].mxu0 %v3135
  %v5191 = vpop.f32.mrb[0].mxu0
  %v5192 = vadd.f32 %v5031, %v5191
  %v5193 = vpop.f32.mrb[0].mxu0
  %v5194 = vpop.f32.mrb[0].mxu0
  %v5195 = vadd.f32 %v5034, %v5194
  %v5196 = vpop.f32.mrb[0].mxu0
  %5197 = vmatprep.mubr.bf16.mxu0 %v3152
  %5198 = vmatmul.mubr.bf16.gmra.mrb[0].mxu0 %v3151
  %v5199 = vpop.f32.mrb[0].mxu0
  %v5200 = vadd.f32 %v5039, %v5199
  %v5201 = vpop.f32.mrb[0].mxu0
  %v5202 = vpop.f32.mrb[0].mxu0
  %v5203 = vadd.f32 %v5042, %v5202
  %v5204 = vpop.f32.mrb[0].mxu0
  %5205 = vmatprep.mubr.bf16.mxu0 %v3168
  %5206 = vmatmul.mubr.bf16.gmra.mrb[0].mxu0 %v3167
  %v5207 = vpop.f32.mrb[0].mxu0
  %v5208 = vadd.f32 %v5047, %v5207
  %v5209 = vpop.f32.mrb[0].mxu0
  %v5210 = vpop.f32.mrb[0].mxu0
  %v5211 = vadd.f32 %v5050, %v5210
  %v5212 = vpop.f32.mrb[0].mxu0
  %5213 = vmatprep.mubr.bf16.mxu0 %v3184
  %5214 = vmatmul.mubr.bf16.gmra.mrb[0].mxu0 %v3183
  %v5215 = vpop.f32.mrb[0].mxu0
  %v5216 = vadd.f32 %v5055, %v5215
  %v5217 = vpop.f32.mrb[0].mxu0
  %v5218 = vpop.f32.mrb[0].mxu0
  %v5219 = vadd.f32 %v5058, %v5218
  %v5220 = vpop.f32.mrb[0].mxu0
  %5221 = vmatprep.mubr.bf16.mxu0 %v3200
  %5222 = vmatmul.mubr.bf16.gmra.mrb[0].mxu0 %v3199
  %v5223 = vpop.f32.mrb[0].mxu0
  %v5224 = vadd.f32 %v5063, %v5223
  %v5225 = vpop.f32.mrb[0].mxu0
  %v5226 = vpop.f32.mrb[0].mxu0
  %v5227 = vadd.f32 %v5066, %v5226
  %v5228 = vpop.f32.mrb[0].mxu0
  %5229 = vmatprep.mubr.bf16.mxu0 %v3216
  %5230 = vmatmul.mubr.bf16.gmra.mrb[0].mxu0 %v3215
  %v5231 = vpop.f32.mrb[0].mxu0
  %v5232 = vadd.f32 %v5071, %v5231
  %v5233 = vpop.f32.mrb[0].mxu0
  %v5234 = vpop.f32.mrb[0].mxu0
  %v5235 = vadd.f32 %v5074, %v5234
  %v5236 = vpop.f32.mrb[0].mxu0
  %5237 = vmatprep.mubr.bf16.mxu0 %v3232
  %5238 = vmatmul.mubr.bf16.gmra.mrb[0].mxu0 %v3231
  %v5239 = vpop.f32.mrb[0].mxu0
  %v5240 = vadd.f32 %v5079, %v5239
  %v5241 = vpop.f32.mrb[0].mxu0
  %v5242 = vpop.f32.mrb[0].mxu0
  %v5243 = vadd.f32 %v5082, %v5242
  %v5244 = vpop.f32.mrb[0].mxu0
  %5245 = vmatprep.mubr.bf16.mxu0 %v3248
  %5246 = vmatmul.mubr.bf16.gmra.mrb[0].mxu0 %v3247
  %v5247 = vpop.f32.mrb[0].mxu0
  %v5248 = vadd.f32 %v5087, %v5247
  %v5249 = vpop.f32.mrb[0].mxu0
  %v5250 = vpop.f32.mrb[0].mxu0
  %v5251 = vadd.f32 %v5090, %v5250
  %v5252 = vpop.f32.mrb[0].mxu0
  %5253 = vmatprep.mubr.bf16.mxu0 %v3264
  %5254 = vmatmul.mubr.bf16.gmra.mrb[0].mxu0 %v3263
  %v5255 = vpop.f32.mrb[0].mxu0
  %v5256 = vadd.f32 %v5095, %v5255
  %v5257 = vpop.f32.mrb[0].mxu0
  %v5258 = vpop.f32.mrb[0].mxu0
  %v5259 = vadd.f32 %v5098, %v5258
  %v5260 = vpop.f32.mrb[0].mxu0
  %5261 = vmatprep.mubr.bf16.mxu0 %v3280
  %5262 = vmatmul.mubr.bf16.gmra.mrb[0].mxu0 %v3279
  %v5263 = vpop.f32.mrb[0].mxu0
  %v5264 = vadd.f32 %v5103, %v5263
  %v5265 = vpop.f32.mrb[0].mxu0
  %v5266 = vpop.f32.mrb[0].mxu0
  %v5267 = vadd.f32 %v5106, %v5266
  %v5268 = vpop.f32.mrb[0].mxu0
  %5269 = vmatprep.mubr.bf16.mxu0 %v3296
  %5270 = vmatmul.mubr.bf16.gmra.mrb[0].mxu0 %v3295
  %v5271 = vpop.f32.mrb[0].mxu0
  %v5272 = vadd.f32 %v5111, %v5271
  %v5273 = vpop.f32.mrb[0].mxu0
  %v5274 = vpop.f32.mrb[0].mxu0
  %v5275 = vadd.f32 %v5114, %v5274
  %v5276 = vpop.f32.mrb[0].mxu0
  %5277 = vmatprep.mubr.bf16.mxu0 %v3312
  %5278 = vmatmul.mubr.bf16.gmra.mrb[0].mxu0 %v3311
  %v5279 = vpop.f32.mrb[0].mxu0
  %v5280 = vadd.f32 %v5119, %v5279
  %v5281 = vpop.f32.mrb[0].mxu0
  %v5282 = vpop.f32.mrb[0].mxu0
  %v5283 = vadd.f32 %v5122, %v5282
  %v5284 = vpop.f32.mrb[0].mxu0
  %5285 = vdwg.mxu0
  %5286 = vmatprep.subr.bf16.mxu0 0
  %5287 = vmatpush1.bf16.msra.mxu0 %v4595
  %5288 = vmatprep.subr.bf16.mxu0 0
  %5289 = vmatpush1.bf16.msra.mxu0 %v4596
  %5290 = vmatprep.subr.bf16.mxu0 0
  %5291 = vmatpush1.bf16.msra.mxu0 %v4597
  %5292 = vmatprep.subr.bf16.mxu0 0
  %5293 = vmatpush1.bf16.msra.mxu0 %v4598
  %5294 = vmatprep.subr.bf16.mxu0 0
  %5295 = vmatpush1.bf16.msra.mxu0 %v4599
  %5296 = vmatprep.subr.bf16.mxu0 0
  %5297 = vmatpush1.bf16.msra.mxu0 %v4600
  %5298 = vmatprep.subr.bf16.mxu0 0
  %5299 = vmatpush1.bf16.msra.mxu0 %v4601
  %5300 = vmatprep.subr.bf16.mxu0 0
  %5301 = vmatpush1.bf16.msra.mxu0 %v4602
  %5302 = vmatprep.subr.bf16.mxu0 0
  %5303 = vmatpush1.bf16.msra.mxu0 %v4603
  %5304 = vmatprep.subr.bf16.mxu0 0
  %5305 = vmatpush1.bf16.msra.mxu0 %v4604
  %5306 = vmatprep.subr.bf16.mxu0 0
  %5307 = vmatpush1.bf16.msra.mxu0 %v4605
  %5308 = vmatprep.subr.bf16.mxu0 0
  %5309 = vmatpush1.bf16.msra.mxu0 %v4606
  %5310 = vmatprep.subr.bf16.mxu0 0
  %5311 = vmatpush1.bf16.msra.mxu0 %v4607
  %5312 = vmatprep.subr.bf16.mxu0 0
  %5313 = vmatpush1.bf16.msra.mxu0 %v4608
  %5314 = vmatprep.subr.bf16.mxu0 0
  %5315 = vmatpush1.bf16.msra.mxu0 %v4609
  %5316 = vmatprep.subr.bf16.mxu0 0
  %5317 = vmatpush1.bf16.msra.mxu0 %v4610
  %5318 = vmatprep.mubr.bf16.mxu0 %v3074
  %5319 = vmatmul.mubr.bf16.gmra.mrb[0].mxu0 %v3073
  %v5320 = vpop.f32.mrb[0].mxu0
  %v5321 = vadd.f32 %v5160, %v5320
  %v5322 = vpop.f32.mrb[0].mxu0
  %v5323 = vpop.f32.mrb[0].mxu0
  %v5324 = vadd.f32 %v5163, %v5323
  %v5325 = vpop.f32.mrb[0].mxu0
  %5326 = vmatprep.mubr.bf16.mxu0 %v3090
  %5327 = vmatmul.mubr.bf16.gmra.mrb[0].mxu0 %v3089
  %v5328 = vpop.f32.mrb[0].mxu0
  %v5329 = vadd.f32 %v5168, %v5328
  %v5330 = vpop.f32.mrb[0].mxu0
  %v5331 = vpop.f32.mrb[0].mxu0
  %v5332 = vadd.f32 %v5171, %v5331
  %v5333 = vpop.f32.mrb[0].mxu0
  %5334 = vmatprep.mubr.bf16.mxu0 %v3106
  %5335 = vmatmul.mubr.bf16.gmra.mrb[0].mxu0 %v3105
  %v5336 = vpop.f32.mrb[0].mxu0
  %v5337 = vadd.f32 %v5176, %v5336
  %v5338 = vpop.f32.mrb[0].mxu0
  %v5339 = vpop.f32.mrb[0].mxu0
  %v5340 = vadd.f32 %v5179, %v5339
  %v5341 = vpop.f32.mrb[0].mxu0
  %5342 = vmatprep.mubr.bf16.mxu0 %v3122
  %5343 = vmatmul.mubr.bf16.gmra.mrb[0].mxu0 %v3121
  %v5344 = vpop.f32.mrb[0].mxu0
  %v5345 = vadd.f32 %v5184, %v5344
  %v5346 = vpop.f32.mrb[0].mxu0
  %v5347 = vpop.f32.mrb[0].mxu0
  %v5348 = vadd.f32 %v5187, %v5347
  %v5349 = vpop.f32.mrb[0].mxu0
  %5350 = vmatprep.mubr.bf16.mxu0 %v3138
  %5351 = vmatmul.mubr.bf16.gmra.mrb[0].mxu0 %v3137
  %v5352 = vpop.f32.mrb[0].mxu0
  %v5353 = vadd.f32 %v5192, %v5352
  %v5354 = vpop.f32.mrb[0].mxu0
  %v5355 = vpop.f32.mrb[0].mxu0
  %v5356 = vadd.f32 %v5195, %v5355
  %v5357 = vpop.f32.mrb[0].mxu0
  %5358 = vmatprep.mubr.bf16.mxu0 %v3154
  %5359 = vmatmul.mubr.bf16.gmra.mrb[0].mxu0 %v3153
  %v5360 = vpop.f32.mrb[0].mxu0
  %v5361 = vadd.f32 %v5200, %v5360
  %v5362 = vpop.f32.mrb[0].mxu0
  %v5363 = vpop.f32.mrb[0].mxu0
  %v5364 = vadd.f32 %v5203, %v5363
  %v5365 = vpop.f32.mrb[0].mxu0
  %5366 = vmatprep.mubr.bf16.mxu0 %v3170
  %5367 = vmatmul.mubr.bf16.gmra.mrb[0].mxu0 %v3169
  %v5368 = vpop.f32.mrb[0].mxu0
  %v5369 = vadd.f32 %v5208, %v5368
  %v5370 = vpop.f32.mrb[0].mxu0
  %v5371 = vpop.f32.mrb[0].mxu0
  %v5372 = vadd.f32 %v5211, %v5371
  %v5373 = vpop.f32.mrb[0].mxu0
  %5374 = vmatprep.mubr.bf16.mxu0 %v3186
  %5375 = vmatmul.mubr.bf16.gmra.mrb[0].mxu0 %v3185
  %v5376 = vpop.f32.mrb[0].mxu0
  %v5377 = vadd.f32 %v5216, %v5376
  %v5378 = vpop.f32.mrb[0].mxu0
  %v5379 = vpop.f32.mrb[0].mxu0
  %v5380 = vadd.f32 %v5219, %v5379
  %v5381 = vpop.f32.mrb[0].mxu0
  %5382 = vmatprep.mubr.bf16.mxu0 %v3202
  %5383 = vmatmul.mubr.bf16.gmra.mrb[0].mxu0 %v3201
  %v5384 = vpop.f32.mrb[0].mxu0
  %v5385 = vadd.f32 %v5224, %v5384
  %v5386 = vpop.f32.mrb[0].mxu0
  %v5387 = vpop.f32.mrb[0].mxu0
  %v5388 = vadd.f32 %v5227, %v5387
  %v5389 = vpop.f32.mrb[0].mxu0
  %5390 = vmatprep.mubr.bf16.mxu0 %v3218
  %5391 = vmatmul.mubr.bf16.gmra.mrb[0].mxu0 %v3217
  %v5392 = vpop.f32.mrb[0].mxu0
  %v5393 = vadd.f32 %v5232, %v5392
  %v5394 = vpop.f32.mrb[0].mxu0
  %v5395 = vpop.f32.mrb[0].mxu0
  %v5396 = vadd.f32 %v5235, %v5395
  %v5397 = vpop.f32.mrb[0].mxu0
  %5398 = vmatprep.mubr.bf16.mxu0 %v3234
  %5399 = vmatmul.mubr.bf16.gmra.mrb[0].mxu0 %v3233
  %v5400 = vpop.f32.mrb[0].mxu0
  %v5401 = vadd.f32 %v5240, %v5400
  %v5402 = vpop.f32.mrb[0].mxu0
  %v5403 = vpop.f32.mrb[0].mxu0
  %v5404 = vadd.f32 %v5243, %v5403
  %v5405 = vpop.f32.mrb[0].mxu0
  %5406 = vmatprep.mubr.bf16.mxu0 %v3250
  %5407 = vmatmul.mubr.bf16.gmra.mrb[0].mxu0 %v3249
  %v5408 = vpop.f32.mrb[0].mxu0
  %v5409 = vadd.f32 %v5248, %v5408
  %v5410 = vpop.f32.mrb[0].mxu0
  %v5411 = vpop.f32.mrb[0].mxu0
  %v5412 = vadd.f32 %v5251, %v5411
  %v5413 = vpop.f32.mrb[0].mxu0
  %5414 = vmatprep.mubr.bf16.mxu0 %v3266
  %5415 = vmatmul.mubr.bf16.gmra.mrb[0].mxu0 %v3265
  %v5416 = vpop.f32.mrb[0].mxu0
  %v5417 = vadd.f32 %v5256, %v5416
  %v5418 = vpop.f32.mrb[0].mxu0
  %v5419 = vpop.f32.mrb[0].mxu0
  %v5420 = vadd.f32 %v5259, %v5419
  %v5421 = vpop.f32.mrb[0].mxu0
  %5422 = vmatprep.mubr.bf16.mxu0 %v3282
  %5423 = vmatmul.mubr.bf16.gmra.mrb[0].mxu0 %v3281
  %v5424 = vpop.f32.mrb[0].mxu0
  %v5425 = vadd.f32 %v5264, %v5424
  %v5426 = vpop.f32.mrb[0].mxu0
  %v5427 = vpop.f32.mrb[0].mxu0
  %v5428 = vadd.f32 %v5267, %v5427
  %v5429 = vpop.f32.mrb[0].mxu0
  %5430 = vmatprep.mubr.bf16.mxu0 %v3298
  %5431 = vmatmul.mubr.bf16.gmra.mrb[0].mxu0 %v3297
  %v5432 = vpop.f32.mrb[0].mxu0
  %v5433 = vadd.f32 %v5272, %v5432
  %v5434 = vpop.f32.mrb[0].mxu0
  %v5435 = vpop.f32.mrb[0].mxu0
  %v5436 = vadd.f32 %v5275, %v5435
  %v5437 = vpop.f32.mrb[0].mxu0
  %5438 = vmatprep.mubr.bf16.mxu0 %v3314
  %5439 = vmatmul.mubr.bf16.gmra.mrb[0].mxu0 %v3313
  %v5440 = vpop.f32.mrb[0].mxu0
  %v5441 = vadd.f32 %v5280, %v5440
  %v5442 = vpop.f32.mrb[0].mxu0
  %v5443 = vpop.f32.mrb[0].mxu0
  %v5444 = vadd.f32 %v5283, %v5443
  %v5445 = vpop.f32.mrb[0].mxu0
  %5446 = vdwg.mxu0
  %5447 = vmatprep.subr.bf16.mxu0 0
  %5448 = vmatpush1.bf16.msra.mxu0 %v4611
  %5449 = vmatprep.subr.bf16.mxu0 0
  %5450 = vmatpush1.bf16.msra.mxu0 %v4612
  %5451 = vmatprep.subr.bf16.mxu0 0
  %5452 = vmatpush1.bf16.msra.mxu0 %v4613
  %5453 = vmatprep.subr.bf16.mxu0 0
  %5454 = vmatpush1.bf16.msra.mxu0 %v4614
  %5455 = vmatprep.subr.bf16.mxu0 0
  %5456 = vmatpush1.bf16.msra.mxu0 %v4615
  %5457 = vmatprep.subr.bf16.mxu0 0
  %5458 = vmatpush1.bf16.msra.mxu0 %v4616
  %5459 = vmatprep.subr.bf16.mxu0 0
  %5460 = vmatpush1.bf16.msra.mxu0 %v4617
  %5461 = vmatprep.subr.bf16.mxu0 0
  %5462 = vmatpush1.bf16.msra.mxu0 %v4618
  %5463 = vmatprep.subr.bf16.mxu0 0
  %5464 = vmatpush1.bf16.msra.mxu0 %v4619
  %5465 = vmatprep.subr.bf16.mxu0 0
  %5466 = vmatpush1.bf16.msra.mxu0 %v4620
  %5467 = vmatprep.subr.bf16.mxu0 0
  %5468 = vmatpush1.bf16.msra.mxu0 %v4621
  %5469 = vmatprep.subr.bf16.mxu0 0
  %5470 = vmatpush1.bf16.msra.mxu0 %v4622
  %5471 = vmatprep.subr.bf16.mxu0 0
  %5472 = vmatpush1.bf16.msra.mxu0 %v4623
  %5473 = vmatprep.subr.bf16.mxu0 0
  %5474 = vmatpush1.bf16.msra.mxu0 %v4624
  %5475 = vmatprep.subr.bf16.mxu0 0
  %5476 = vmatpush1.bf16.msra.mxu0 %v4625
  %5477 = vmatprep.subr.bf16.mxu0 0
  %5478 = vmatpush1.bf16.msra.mxu0 %v4626
  %5479 = vmatprep.mubr.bf16.mxu0 %v3076
  %5480 = vmatmul.mubr.bf16.gmra.mrb[0].mxu0 %v3075
  %v5481 = vpop.f32.mrb[0].mxu0
  %v5482 = vadd.f32 %v5321, %v5481
  %v5483 = vpop.f32.mrb[0].mxu0
  %v5484 = vpop.f32.mrb[0].mxu0
  %v5485 = vadd.f32 %v5324, %v5484
  %v5486 = vpop.f32.mrb[0].mxu0
  %5487 = vmatprep.mubr.bf16.mxu0 %v3092
  %5488 = vmatmul.mubr.bf16.gmra.mrb[0].mxu0 %v3091
  %v5489 = vpop.f32.mrb[0].mxu0
  %v5490 = vadd.f32 %v5329, %v5489
  %v5491 = vpop.f32.mrb[0].mxu0
  %v5492 = vpop.f32.mrb[0].mxu0
  %v5493 = vadd.f32 %v5332, %v5492
  %v5494 = vpop.f32.mrb[0].mxu0
  %5495 = vmatprep.mubr.bf16.mxu0 %v3108
  %5496 = vmatmul.mubr.bf16.gmra.mrb[0].mxu0 %v3107
  %v5497 = vpop.f32.mrb[0].mxu0
  %v5498 = vadd.f32 %v5337, %v5497
  %v5499 = vpop.f32.mrb[0].mxu0
  %v5500 = vpop.f32.mrb[0].mxu0
  %v5501 = vadd.f32 %v5340, %v5500
  %v5502 = vpop.f32.mrb[0].mxu0
  %5503 = vmatprep.mubr.bf16.mxu0 %v3124
  %5504 = vmatmul.mubr.bf16.gmra.mrb[0].mxu0 %v3123
  %v5505 = vpop.f32.mrb[0].mxu0
  %v5506 = vadd.f32 %v5345, %v5505
  %v5507 = vpop.f32.mrb[0].mxu0
  %v5508 = vpop.f32.mrb[0].mxu0
  %v5509 = vadd.f32 %v5348, %v5508
  %v5510 = vpop.f32.mrb[0].mxu0
  %5511 = vmatprep.mubr.bf16.mxu0 %v3140
  %5512 = vmatmul.mubr.bf16.gmra.mrb[0].mxu0 %v3139
  %v5513 = vpop.f32.mrb[0].mxu0
  %v5514 = vadd.f32 %v5353, %v5513
  %v5515 = vpop.f32.mrb[0].mxu0
  %v5516 = vpop.f32.mrb[0].mxu0
  %v5517 = vadd.f32 %v5356, %v5516
  %v5518 = vpop.f32.mrb[0].mxu0
  %5519 = vmatprep.mubr.bf16.mxu0 %v3156
  %5520 = vmatmul.mubr.bf16.gmra.mrb[0].mxu0 %v3155
  %v5521 = vpop.f32.mrb[0].mxu0
  %v5522 = vadd.f32 %v5361, %v5521
  %v5523 = vpop.f32.mrb[0].mxu0
  %v5524 = vpop.f32.mrb[0].mxu0
  %v5525 = vadd.f32 %v5364, %v5524
  %v5526 = vpop.f32.mrb[0].mxu0
  %5527 = vmatprep.mubr.bf16.mxu0 %v3172
  %5528 = vmatmul.mubr.bf16.gmra.mrb[0].mxu0 %v3171
  %v5529 = vpop.f32.mrb[0].mxu0
  %v5530 = vadd.f32 %v5369, %v5529
  %v5531 = vpop.f32.mrb[0].mxu0
  %v5532 = vpop.f32.mrb[0].mxu0
  %v5533 = vadd.f32 %v5372, %v5532
  %v5534 = vpop.f32.mrb[0].mxu0
  %5535 = vmatprep.mubr.bf16.mxu0 %v3188
  %5536 = vmatmul.mubr.bf16.gmra.mrb[0].mxu0 %v3187
  %v5537 = vpop.f32.mrb[0].mxu0
  %v5538 = vadd.f32 %v5377, %v5537
  %v5539 = vpop.f32.mrb[0].mxu0
  %v5540 = vpop.f32.mrb[0].mxu0
  %v5541 = vadd.f32 %v5380, %v5540
  %v5542 = vpop.f32.mrb[0].mxu0
  %5543 = vmatprep.mubr.bf16.mxu0 %v3204
  %5544 = vmatmul.mubr.bf16.gmra.mrb[0].mxu0 %v3203
  %v5545 = vpop.f32.mrb[0].mxu0
  %v5546 = vadd.f32 %v5385, %v5545
  %v5547 = vpop.f32.mrb[0].mxu0
  %v5548 = vpop.f32.mrb[0].mxu0
  %v5549 = vadd.f32 %v5388, %v5548
  %v5550 = vpop.f32.mrb[0].mxu0
  %5551 = vmatprep.mubr.bf16.mxu0 %v3220
  %5552 = vmatmul.mubr.bf16.gmra.mrb[0].mxu0 %v3219
  %v5553 = vpop.f32.mrb[0].mxu0
  %v5554 = vadd.f32 %v5393, %v5553
  %v5555 = vpop.f32.mrb[0].mxu0
  %v5556 = vpop.f32.mrb[0].mxu0
  %v5557 = vadd.f32 %v5396, %v5556
  %v5558 = vpop.f32.mrb[0].mxu0
  %5559 = vmatprep.mubr.bf16.mxu0 %v3236
  %5560 = vmatmul.mubr.bf16.gmra.mrb[0].mxu0 %v3235
  %v5561 = vpop.f32.mrb[0].mxu0
  %v5562 = vadd.f32 %v5401, %v5561
  %v5563 = vpop.f32.mrb[0].mxu0
  %v5564 = vpop.f32.mrb[0].mxu0
  %v5565 = vadd.f32 %v5404, %v5564
  %v5566 = vpop.f32.mrb[0].mxu0
  %5567 = vmatprep.mubr.bf16.mxu0 %v3252
  %5568 = vmatmul.mubr.bf16.gmra.mrb[0].mxu0 %v3251
  %v5569 = vpop.f32.mrb[0].mxu0
  %v5570 = vadd.f32 %v5409, %v5569
  %v5571 = vpop.f32.mrb[0].mxu0
  %v5572 = vpop.f32.mrb[0].mxu0
  %v5573 = vadd.f32 %v5412, %v5572
  %v5574 = vpop.f32.mrb[0].mxu0
  %5575 = vmatprep.mubr.bf16.mxu0 %v3268
  %5576 = vmatmul.mubr.bf16.gmra.mrb[0].mxu0 %v3267
  %v5577 = vpop.f32.mrb[0].mxu0
  %v5578 = vadd.f32 %v5417, %v5577
  %v5579 = vpop.f32.mrb[0].mxu0
  %v5580 = vpop.f32.mrb[0].mxu0
  %v5581 = vadd.f32 %v5420, %v5580
  %v5582 = vpop.f32.mrb[0].mxu0
  %5583 = vmatprep.mubr.bf16.mxu0 %v3284
  %5584 = vmatmul.mubr.bf16.gmra.mrb[0].mxu0 %v3283
  %v5585 = vpop.f32.mrb[0].mxu0
  %v5586 = vadd.f32 %v5425, %v5585
  %v5587 = vpop.f32.mrb[0].mxu0
  %v5588 = vpop.f32.mrb[0].mxu0
  %v5589 = vadd.f32 %v5428, %v5588
  %v5590 = vpop.f32.mrb[0].mxu0
  %5591 = vmatprep.mubr.bf16.mxu0 %v3300
  %5592 = vmatmul.mubr.bf16.gmra.mrb[0].mxu0 %v3299
  %v5593 = vpop.f32.mrb[0].mxu0
  %v5594 = vadd.f32 %v5433, %v5593
  %v5595 = vpop.f32.mrb[0].mxu0
  %v5596 = vpop.f32.mrb[0].mxu0
  %v5597 = vadd.f32 %v5436, %v5596
  %v5598 = vpop.f32.mrb[0].mxu0
  %5599 = vmatprep.mubr.bf16.mxu0 %v3316
  %5600 = vmatmul.mubr.bf16.gmra.mrb[0].mxu0 %v3315
  %v5601 = vpop.f32.mrb[0].mxu0
  %v5602 = vadd.f32 %v5441, %v5601
  %v5603 = vpop.f32.mrb[0].mxu0
  %v5604 = vpop.f32.mrb[0].mxu0
  %v5605 = vadd.f32 %v5444, %v5604
  %v5606 = vpop.f32.mrb[0].mxu0
  %5607 = vdwg.mxu0
  %5608 = vmatprep.subr.bf16.mxu0 0
  %5609 = vmatpush1.bf16.msra.mxu0 %v4627
  %5610 = vmatprep.subr.bf16.mxu0 0
  %5611 = vmatpush1.bf16.msra.mxu0 %v4628
  %5612 = vmatprep.subr.bf16.mxu0 0
  %5613 = vmatpush1.bf16.msra.mxu0 %v4629
  %5614 = vmatprep.subr.bf16.mxu0 0
  %5615 = vmatpush1.bf16.msra.mxu0 %v4630
  %5616 = vmatprep.subr.bf16.mxu0 0
  %5617 = vmatpush1.bf16.msra.mxu0 %v4631
  %5618 = vmatprep.subr.bf16.mxu0 0
  %5619 = vmatpush1.bf16.msra.mxu0 %v4632
  %5620 = vmatprep.subr.bf16.mxu0 0
  %5621 = vmatpush1.bf16.msra.mxu0 %v4633
  %5622 = vmatprep.subr.bf16.mxu0 0
  %5623 = vmatpush1.bf16.msra.mxu0 %v4634
  %5624 = vmatprep.subr.bf16.mxu0 0
  %5625 = vmatpush1.bf16.msra.mxu0 %v4635
  %5626 = vmatprep.subr.bf16.mxu0 0
  %5627 = vmatpush1.bf16.msra.mxu0 %v4636
  %5628 = vmatprep.subr.bf16.mxu0 0
  %5629 = vmatpush1.bf16.msra.mxu0 %v4637
  %5630 = vmatprep.subr.bf16.mxu0 0
  %5631 = vmatpush1.bf16.msra.mxu0 %v4638
  %5632 = vmatprep.subr.bf16.mxu0 0
  %5633 = vmatpush1.bf16.msra.mxu0 %v4639
  %5634 = vmatprep.subr.bf16.mxu0 0
  %5635 = vmatpush1.bf16.msra.mxu0 %v4640
  %5636 = vmatprep.subr.bf16.mxu0 0
  %5637 = vmatpush1.bf16.msra.mxu0 %v4641
  %5638 = vmatprep.subr.bf16.mxu0 0
  %5639 = vmatpush1.bf16.msra.mxu0 %v4642
  %5640 = vmatprep.mubr.bf16.mxu0 %v3078
  %5641 = vmatmul.mubr.bf16.gmra.mrb[0].mxu0 %v3077
  %v5642 = vpop.f32.mrb[0].mxu0
  %v5643 = vadd.f32 %v5482, %v5642
  %v5644 = vpop.f32.mrb[0].mxu0
  %v5645 = vpop.f32.mrb[0].mxu0
  %v5646 = vadd.f32 %v5485, %v5645
  %v5647 = vpop.f32.mrb[0].mxu0
  %5648 = vmatprep.mubr.bf16.mxu0 %v3094
  %5649 = vmatmul.mubr.bf16.gmra.mrb[0].mxu0 %v3093
  %v5650 = vpop.f32.mrb[0].mxu0
  %v5651 = vadd.f32 %v5490, %v5650
  %v5652 = vpop.f32.mrb[0].mxu0
  %v5653 = vpop.f32.mrb[0].mxu0
  %v5654 = vadd.f32 %v5493, %v5653
  %v5655 = vpop.f32.mrb[0].mxu0
  %5656 = vmatprep.mubr.bf16.mxu0 %v3110
  %5657 = vmatmul.mubr.bf16.gmra.mrb[0].mxu0 %v3109
  %v5658 = vpop.f32.mrb[0].mxu0
  %v5659 = vadd.f32 %v5498, %v5658
  %v5660 = vpop.f32.mrb[0].mxu0
  %v5661 = vpop.f32.mrb[0].mxu0
  %v5662 = vadd.f32 %v5501, %v5661
  %v5663 = vpop.f32.mrb[0].mxu0
  %5664 = vmatprep.mubr.bf16.mxu0 %v3126
  %5665 = vmatmul.mubr.bf16.gmra.mrb[0].mxu0 %v3125
  %v5666 = vpop.f32.mrb[0].mxu0
  %v5667 = vadd.f32 %v5506, %v5666
  %v5668 = vpop.f32.mrb[0].mxu0
  %v5669 = vpop.f32.mrb[0].mxu0
  %v5670 = vadd.f32 %v5509, %v5669
  %v5671 = vpop.f32.mrb[0].mxu0
  %5672 = vmatprep.mubr.bf16.mxu0 %v3142
  %5673 = vmatmul.mubr.bf16.gmra.mrb[0].mxu0 %v3141
  %v5674 = vpop.f32.mrb[0].mxu0
  %v5675 = vadd.f32 %v5514, %v5674
  %v5676 = vpop.f32.mrb[0].mxu0
  %v5677 = vpop.f32.mrb[0].mxu0
  %v5678 = vadd.f32 %v5517, %v5677
  %v5679 = vpop.f32.mrb[0].mxu0
  %5680 = vmatprep.mubr.bf16.mxu0 %v3158
  %5681 = vmatmul.mubr.bf16.gmra.mrb[0].mxu0 %v3157
  %v5682 = vpop.f32.mrb[0].mxu0
  %v5683 = vadd.f32 %v5522, %v5682
  %v5684 = vpop.f32.mrb[0].mxu0
  %v5685 = vpop.f32.mrb[0].mxu0
  %v5686 = vadd.f32 %v5525, %v5685
  %v5687 = vpop.f32.mrb[0].mxu0
  %5688 = vmatprep.mubr.bf16.mxu0 %v3174
  %5689 = vmatmul.mubr.bf16.gmra.mrb[0].mxu0 %v3173
  %v5690 = vpop.f32.mrb[0].mxu0
  %v5691 = vadd.f32 %v5530, %v5690
  %v5692 = vpop.f32.mrb[0].mxu0
  %v5693 = vpop.f32.mrb[0].mxu0
  %v5694 = vadd.f32 %v5533, %v5693
  %v5695 = vpop.f32.mrb[0].mxu0
  %5696 = vmatprep.mubr.bf16.mxu0 %v3190
  %5697 = vmatmul.mubr.bf16.gmra.mrb[0].mxu0 %v3189
  %v5698 = vpop.f32.mrb[0].mxu0
  %v5699 = vadd.f32 %v5538, %v5698
  %v5700 = vpop.f32.mrb[0].mxu0
  %v5701 = vpop.f32.mrb[0].mxu0
  %v5702 = vadd.f32 %v5541, %v5701
  %v5703 = vpop.f32.mrb[0].mxu0
  %5704 = vmatprep.mubr.bf16.mxu0 %v3206
  %5705 = vmatmul.mubr.bf16.gmra.mrb[0].mxu0 %v3205
  %v5706 = vpop.f32.mrb[0].mxu0
  %v5707 = vadd.f32 %v5546, %v5706
  %v5708 = vpop.f32.mrb[0].mxu0
  %v5709 = vpop.f32.mrb[0].mxu0
  %v5710 = vadd.f32 %v5549, %v5709
  %v5711 = vpop.f32.mrb[0].mxu0
  %5712 = vmatprep.mubr.bf16.mxu0 %v3222
  %5713 = vmatmul.mubr.bf16.gmra.mrb[0].mxu0 %v3221
  %v5714 = vpop.f32.mrb[0].mxu0
  %v5715 = vadd.f32 %v5554, %v5714
  %v5716 = vpop.f32.mrb[0].mxu0
  %v5717 = vpop.f32.mrb[0].mxu0
  %v5718 = vadd.f32 %v5557, %v5717
  %v5719 = vpop.f32.mrb[0].mxu0
  %5720 = vmatprep.mubr.bf16.mxu0 %v3238
  %5721 = vmatmul.mubr.bf16.gmra.mrb[0].mxu0 %v3237
  %v5722 = vpop.f32.mrb[0].mxu0
  %v5723 = vadd.f32 %v5562, %v5722
  %v5724 = vpop.f32.mrb[0].mxu0
  %v5725 = vpop.f32.mrb[0].mxu0
  %v5726 = vadd.f32 %v5565, %v5725
  %v5727 = vpop.f32.mrb[0].mxu0
  %5728 = vmatprep.mubr.bf16.mxu0 %v3254
  %5729 = vmatmul.mubr.bf16.gmra.mrb[0].mxu0 %v3253
  %v5730 = vpop.f32.mrb[0].mxu0
  %v5731 = vadd.f32 %v5570, %v5730
  %v5732 = vpop.f32.mrb[0].mxu0
  %v5733 = vpop.f32.mrb[0].mxu0
  %v5734 = vadd.f32 %v5573, %v5733
  %v5735 = vpop.f32.mrb[0].mxu0
  %5736 = vmatprep.mubr.bf16.mxu0 %v3270
  %5737 = vmatmul.mubr.bf16.gmra.mrb[0].mxu0 %v3269
  %v5738 = vpop.f32.mrb[0].mxu0
  %v5739 = vadd.f32 %v5578, %v5738
  %v5740 = vpop.f32.mrb[0].mxu0
  %v5741 = vpop.f32.mrb[0].mxu0
  %v5742 = vadd.f32 %v5581, %v5741
  %v5743 = vpop.f32.mrb[0].mxu0
  %5744 = vmatprep.mubr.bf16.mxu0 %v3286
  %5745 = vmatmul.mubr.bf16.gmra.mrb[0].mxu0 %v3285
  %v5746 = vpop.f32.mrb[0].mxu0
  %v5747 = vadd.f32 %v5586, %v5746
  %v5748 = vpop.f32.mrb[0].mxu0
  %v5749 = vpop.f32.mrb[0].mxu0
  %v5750 = vadd.f32 %v5589, %v5749
  %v5751 = vpop.f32.mrb[0].mxu0
  %5752 = vmatprep.mubr.bf16.mxu0 %v3302
  %5753 = vmatmul.mubr.bf16.gmra.mrb[0].mxu0 %v3301
  %v5754 = vpop.f32.mrb[0].mxu0
  %v5755 = vadd.f32 %v5594, %v5754
  %v5756 = vpop.f32.mrb[0].mxu0
  %v5757 = vpop.f32.mrb[0].mxu0
  %v5758 = vadd.f32 %v5597, %v5757
  %v5759 = vpop.f32.mrb[0].mxu0
  %5760 = vmatprep.mubr.bf16.mxu0 %v3318
  %5761 = vmatmul.mubr.bf16.gmra.mrb[0].mxu0 %v3317
  %v5762 = vpop.f32.mrb[0].mxu0
  %v5763 = vadd.f32 %v5602, %v5762
  %v5764 = vpop.f32.mrb[0].mxu0
  %v5765 = vpop.f32.mrb[0].mxu0
  %v5766 = vadd.f32 %v5605, %v5765
  %v5767 = vpop.f32.mrb[0].mxu0
  %5768 = vdwg.mxu0
  %5769 = vmatprep.subr.bf16.mxu0 0
  %5770 = vmatpush1.bf16.msra.mxu0 %v4643
  %5771 = vmatprep.subr.bf16.mxu0 0
  %5772 = vmatpush1.bf16.msra.mxu0 %v4644
  %5773 = vmatprep.subr.bf16.mxu0 0
  %5774 = vmatpush1.bf16.msra.mxu0 %v4645
  %5775 = vmatprep.subr.bf16.mxu0 0
  %5776 = vmatpush1.bf16.msra.mxu0 %v4646
  %5777 = vmatprep.subr.bf16.mxu0 0
  %5778 = vmatpush1.bf16.msra.mxu0 %v4647
  %5779 = vmatprep.subr.bf16.mxu0 0
  %5780 = vmatpush1.bf16.msra.mxu0 %v4648
  %5781 = vmatprep.subr.bf16.mxu0 0
  %5782 = vmatpush1.bf16.msra.mxu0 %v4649
  %5783 = vmatprep.subr.bf16.mxu0 0
  %5784 = vmatpush1.bf16.msra.mxu0 %v4650
  %5785 = vmatprep.subr.bf16.mxu0 0
  %5786 = vmatpush1.bf16.msra.mxu0 %v4651
  %5787 = vmatprep.subr.bf16.mxu0 0
  %5788 = vmatpush1.bf16.msra.mxu0 %v4652
  %5789 = vmatprep.subr.bf16.mxu0 0
  %5790 = vmatpush1.bf16.msra.mxu0 %v4653
  %5791 = vmatprep.subr.bf16.mxu0 0
  %5792 = vmatpush1.bf16.msra.mxu0 %v4654
  %5793 = vmatprep.subr.bf16.mxu0 0
  %5794 = vmatpush1.bf16.msra.mxu0 %v4655
  %5795 = vmatprep.subr.bf16.mxu0 0
  %5796 = vmatpush1.bf16.msra.mxu0 %v4656
  %5797 = vmatprep.subr.bf16.mxu0 0
  %5798 = vmatpush1.bf16.msra.mxu0 %v4657
  %5799 = vmatprep.subr.bf16.mxu0 0
  %5800 = vmatpush1.bf16.msra.mxu0 %v4658
  %5801 = vmatprep.mubr.bf16.mxu0 %v3080
  %5802 = vmatmul.mubr.bf16.gmra.mrb[0].mxu0 %v3079
  %v5803 = vpop.f32.mrb[0].mxu0
  %v5804 = vadd.f32 %v5643, %v5803
  %v5805 = vpop.f32.mrb[0].mxu0
  %v5806 = vpop.f32.mrb[0].mxu0
  %v5807 = vadd.f32 %v5646, %v5806
  %v5808 = vpop.f32.mrb[0].mxu0
  %5809 = vmatprep.mubr.bf16.mxu0 %v3096
  %5810 = vmatmul.mubr.bf16.gmra.mrb[0].mxu0 %v3095
  %v5811 = vpop.f32.mrb[0].mxu0
  %v5812 = vadd.f32 %v5651, %v5811
  %v5813 = vpop.f32.mrb[0].mxu0
  %v5814 = vpop.f32.mrb[0].mxu0
  %v5815 = vadd.f32 %v5654, %v5814
  %v5816 = vpop.f32.mrb[0].mxu0
  %5817 = vmatprep.mubr.bf16.mxu0 %v3112
  %5818 = vmatmul.mubr.bf16.gmra.mrb[0].mxu0 %v3111
  %v5819 = vpop.f32.mrb[0].mxu0
  %v5820 = vadd.f32 %v5659, %v5819
  %v5821 = vpop.f32.mrb[0].mxu0
  %v5822 = vpop.f32.mrb[0].mxu0
  %v5823 = vadd.f32 %v5662, %v5822
  %v5824 = vpop.f32.mrb[0].mxu0
  %5825 = vmatprep.mubr.bf16.mxu0 %v3128
  %5826 = vmatmul.mubr.bf16.gmra.mrb[0].mxu0 %v3127
  %v5827 = vpop.f32.mrb[0].mxu0
  %v5828 = vadd.f32 %v5667, %v5827
  %v5829 = vpop.f32.mrb[0].mxu0
  %v5830 = vpop.f32.mrb[0].mxu0
  %v5831 = vadd.f32 %v5670, %v5830
  %v5832 = vpop.f32.mrb[0].mxu0
  %5833 = vmatprep.mubr.bf16.mxu0 %v3144
  %5834 = vmatmul.mubr.bf16.gmra.mrb[0].mxu0 %v3143
  %v5835 = vpop.f32.mrb[0].mxu0
  %v5836 = vadd.f32 %v5675, %v5835
  %v5837 = vpop.f32.mrb[0].mxu0
  %v5838 = vpop.f32.mrb[0].mxu0
  %v5839 = vadd.f32 %v5678, %v5838
  %v5840 = vpop.f32.mrb[0].mxu0
  %5841 = vmatprep.mubr.bf16.mxu0 %v3160
  %5842 = vmatmul.mubr.bf16.gmra.mrb[0].mxu0 %v3159
  %v5843 = vpop.f32.mrb[0].mxu0
  %v5844 = vadd.f32 %v5683, %v5843
  %v5845 = vpop.f32.mrb[0].mxu0
  %v5846 = vpop.f32.mrb[0].mxu0
  %v5847 = vadd.f32 %v5686, %v5846
  %v5848 = vpop.f32.mrb[0].mxu0
  %5849 = vmatprep.mubr.bf16.mxu0 %v3176
  %5850 = vmatmul.mubr.bf16.gmra.mrb[0].mxu0 %v3175
  %v5851 = vpop.f32.mrb[0].mxu0
  %v5852 = vadd.f32 %v5691, %v5851
  %v5853 = vpop.f32.mrb[0].mxu0
  %v5854 = vpop.f32.mrb[0].mxu0
  %v5855 = vadd.f32 %v5694, %v5854
  %v5856 = vpop.f32.mrb[0].mxu0
  %5857 = vmatprep.mubr.bf16.mxu0 %v3192
  %5858 = vmatmul.mubr.bf16.gmra.mrb[0].mxu0 %v3191
  %v5859 = vpop.f32.mrb[0].mxu0
  %v5860 = vadd.f32 %v5699, %v5859
  %v5861 = vpop.f32.mrb[0].mxu0
  %v5862 = vpop.f32.mrb[0].mxu0
  %v5863 = vadd.f32 %v5702, %v5862
  %v5864 = vpop.f32.mrb[0].mxu0
  %5865 = vmatprep.mubr.bf16.mxu0 %v3208
  %5866 = vmatmul.mubr.bf16.gmra.mrb[0].mxu0 %v3207
  %v5867 = vpop.f32.mrb[0].mxu0
  %v5868 = vadd.f32 %v5707, %v5867
  %v5869 = vpop.f32.mrb[0].mxu0
  %v5870 = vpop.f32.mrb[0].mxu0
  %v5871 = vadd.f32 %v5710, %v5870
  %v5872 = vpop.f32.mrb[0].mxu0
  %5873 = vmatprep.mubr.bf16.mxu0 %v3224
  %5874 = vmatmul.mubr.bf16.gmra.mrb[0].mxu0 %v3223
  %v5875 = vpop.f32.mrb[0].mxu0
  %v5876 = vadd.f32 %v5715, %v5875
  %v5877 = vpop.f32.mrb[0].mxu0
  %v5878 = vpop.f32.mrb[0].mxu0
  %v5879 = vadd.f32 %v5718, %v5878
  %v5880 = vpop.f32.mrb[0].mxu0
  %5881 = vmatprep.mubr.bf16.mxu0 %v3240
  %5882 = vmatmul.mubr.bf16.gmra.mrb[0].mxu0 %v3239
  %v5883 = vpop.f32.mrb[0].mxu0
  %v5884 = vadd.f32 %v5723, %v5883
  %v5885 = vpop.f32.mrb[0].mxu0
  %v5886 = vpop.f32.mrb[0].mxu0
  %v5887 = vadd.f32 %v5726, %v5886
  %v5888 = vpop.f32.mrb[0].mxu0
  %5889 = vmatprep.mubr.bf16.mxu0 %v3256
  %5890 = vmatmul.mubr.bf16.gmra.mrb[0].mxu0 %v3255
  %v5891 = vpop.f32.mrb[0].mxu0
  %v5892 = vadd.f32 %v5731, %v5891
  %v5893 = vpop.f32.mrb[0].mxu0
  %v5894 = vpop.f32.mrb[0].mxu0
  %v5895 = vadd.f32 %v5734, %v5894
  %v5896 = vpop.f32.mrb[0].mxu0
  %5897 = vmatprep.mubr.bf16.mxu0 %v3272
  %5898 = vmatmul.mubr.bf16.gmra.mrb[0].mxu0 %v3271
  %v5899 = vpop.f32.mrb[0].mxu0
  %v5900 = vadd.f32 %v5739, %v5899
  %v5901 = vpop.f32.mrb[0].mxu0
  %v5902 = vpop.f32.mrb[0].mxu0
  %v5903 = vadd.f32 %v5742, %v5902
  %v5904 = vpop.f32.mrb[0].mxu0
  %5905 = vmatprep.mubr.bf16.mxu0 %v3288
  %5906 = vmatmul.mubr.bf16.gmra.mrb[0].mxu0 %v3287
  %v5907 = vpop.f32.mrb[0].mxu0
  %v5908 = vadd.f32 %v5747, %v5907
  %v5909 = vpop.f32.mrb[0].mxu0
  %v5910 = vpop.f32.mrb[0].mxu0
  %v5911 = vadd.f32 %v5750, %v5910
  %v5912 = vpop.f32.mrb[0].mxu0
  %5913 = vmatprep.mubr.bf16.mxu0 %v3304
  %5914 = vmatmul.mubr.bf16.gmra.mrb[0].mxu0 %v3303
  %v5915 = vpop.f32.mrb[0].mxu0
  %v5916 = vadd.f32 %v5755, %v5915
  %v5917 = vpop.f32.mrb[0].mxu0
  %v5918 = vpop.f32.mrb[0].mxu0
  %v5919 = vadd.f32 %v5758, %v5918
  %v5920 = vpop.f32.mrb[0].mxu0
  %5921 = vmatprep.mubr.bf16.mxu0 %v3320
  %5922 = vmatmul.mubr.bf16.gmra.mrb[0].mxu0 %v3319
  %v5923 = vpop.f32.mrb[0].mxu0
  %v5924 = vadd.f32 %v5763, %v5923
  %v5925 = vpop.f32.mrb[0].mxu0
  %v5926 = vpop.f32.mrb[0].mxu0
  %v5927 = vadd.f32 %v5766, %v5926
  %v5928 = vpop.f32.mrb[0].mxu0
  %5929 = vdwg.mxu0
  %5930 = vmatprep.subr.bf16.mxu0 0
  %5931 = vmatpush1.bf16.msra.mxu0 %v4659
  %5932 = vmatprep.subr.bf16.mxu0 0
  %5933 = vmatpush1.bf16.msra.mxu0 %v4660
  %5934 = vmatprep.subr.bf16.mxu0 0
  %5935 = vmatpush1.bf16.msra.mxu0 %v4661
  %5936 = vmatprep.subr.bf16.mxu0 0
  %5937 = vmatpush1.bf16.msra.mxu0 %v4662
  %5938 = vmatprep.subr.bf16.mxu0 0
  %5939 = vmatpush1.bf16.msra.mxu0 %v4663
  %5940 = vmatprep.subr.bf16.mxu0 0
  %5941 = vmatpush1.bf16.msra.mxu0 %v4664
  %5942 = vmatprep.subr.bf16.mxu0 0
  %5943 = vmatpush1.bf16.msra.mxu0 %v4665
  %5944 = vmatprep.subr.bf16.mxu0 0
  %5945 = vmatpush1.bf16.msra.mxu0 %v4666
  %5946 = vmatprep.subr.bf16.mxu0 0
  %5947 = vmatpush1.bf16.msra.mxu0 %v4667
  %5948 = vmatprep.subr.bf16.mxu0 0
  %5949 = vmatpush1.bf16.msra.mxu0 %v4668
  %5950 = vmatprep.subr.bf16.mxu0 0
  %5951 = vmatpush1.bf16.msra.mxu0 %v4669
  %5952 = vmatprep.subr.bf16.mxu0 0
  %5953 = vmatpush1.bf16.msra.mxu0 %v4670
  %5954 = vmatprep.subr.bf16.mxu0 0
  %5955 = vmatpush1.bf16.msra.mxu0 %v4671
  %5956 = vmatprep.subr.bf16.mxu0 0
  %5957 = vmatpush1.bf16.msra.mxu0 %v4672
  %5958 = vmatprep.subr.bf16.mxu0 0
  %5959 = vmatpush1.bf16.msra.mxu0 %v4673
  %5960 = vmatprep.subr.bf16.mxu0 0
  %5961 = vmatpush1.bf16.msra.mxu0 %v4674
  %5962 = vmatprep.mubr.bf16.mxu0 %v3082
  %5963 = vmatmul.mubr.bf16.gmra.mrb[0].mxu0 %v3081
  %v5964 = vpop.f32.mrb[0].mxu0
  %v5965 = vadd.f32 %v5804, %v5964
  %v5966 = vpop.f32.mrb[0].mxu0
  %v5967 = vpop.f32.mrb[0].mxu0
  %v5968 = vadd.f32 %v5807, %v5967
  %v5969 = vpop.f32.mrb[0].mxu0
  %5970 = vmatprep.mubr.bf16.mxu0 %v3098
  %5971 = vmatmul.mubr.bf16.gmra.mrb[0].mxu0 %v3097
  %v5972 = vpop.f32.mrb[0].mxu0
  %v5973 = vadd.f32 %v5812, %v5972
  %v5974 = vpop.f32.mrb[0].mxu0
  %v5975 = vpop.f32.mrb[0].mxu0
  %v5976 = vadd.f32 %v5815, %v5975
  %v5977 = vpop.f32.mrb[0].mxu0
  %5978 = vmatprep.mubr.bf16.mxu0 %v3114
  %5979 = vmatmul.mubr.bf16.gmra.mrb[0].mxu0 %v3113
  %v5980 = vpop.f32.mrb[0].mxu0
  %v5981 = vadd.f32 %v5820, %v5980
  %v5982 = vpop.f32.mrb[0].mxu0
  %v5983 = vpop.f32.mrb[0].mxu0
  %v5984 = vadd.f32 %v5823, %v5983
  %v5985 = vpop.f32.mrb[0].mxu0
  %5986 = vmatprep.mubr.bf16.mxu0 %v3130
  %5987 = vmatmul.mubr.bf16.gmra.mrb[0].mxu0 %v3129
  %v5988 = vpop.f32.mrb[0].mxu0
  %v5989 = vadd.f32 %v5828, %v5988
  %v5990 = vpop.f32.mrb[0].mxu0
  %v5991 = vpop.f32.mrb[0].mxu0
  %v5992 = vadd.f32 %v5831, %v5991
  %v5993 = vpop.f32.mrb[0].mxu0
  %5994 = vmatprep.mubr.bf16.mxu0 %v3146
  %5995 = vmatmul.mubr.bf16.gmra.mrb[0].mxu0 %v3145
  %v5996 = vpop.f32.mrb[0].mxu0
  %v5997 = vadd.f32 %v5836, %v5996
  %v5998 = vpop.f32.mrb[0].mxu0
  %v5999 = vpop.f32.mrb[0].mxu0
  %v6000 = vadd.f32 %v5839, %v5999
  %v6001 = vpop.f32.mrb[0].mxu0
  %6002 = vmatprep.mubr.bf16.mxu0 %v3162
  %6003 = vmatmul.mubr.bf16.gmra.mrb[0].mxu0 %v3161
  %v6004 = vpop.f32.mrb[0].mxu0
  %v6005 = vadd.f32 %v5844, %v6004
  %v6006 = vpop.f32.mrb[0].mxu0
  %v6007 = vpop.f32.mrb[0].mxu0
  %v6008 = vadd.f32 %v5847, %v6007
  %v6009 = vpop.f32.mrb[0].mxu0
  %6010 = vmatprep.mubr.bf16.mxu0 %v3178
  %6011 = vmatmul.mubr.bf16.gmra.mrb[0].mxu0 %v3177
  %v6012 = vpop.f32.mrb[0].mxu0
  %v6013 = vadd.f32 %v5852, %v6012
  %v6014 = vpop.f32.mrb[0].mxu0
  %v6015 = vpop.f32.mrb[0].mxu0
  %v6016 = vadd.f32 %v5855, %v6015
  %v6017 = vpop.f32.mrb[0].mxu0
  %6018 = vmatprep.mubr.bf16.mxu0 %v3194
  %6019 = vmatmul.mubr.bf16.gmra.mrb[0].mxu0 %v3193
  %v6020 = vpop.f32.mrb[0].mxu0
  %v6021 = vadd.f32 %v5860, %v6020
  %v6022 = vpop.f32.mrb[0].mxu0
  %v6023 = vpop.f32.mrb[0].mxu0
  %v6024 = vadd.f32 %v5863, %v6023
  %v6025 = vpop.f32.mrb[0].mxu0
  %6026 = vmatprep.mubr.bf16.mxu0 %v3210
  %6027 = vmatmul.mubr.bf16.gmra.mrb[0].mxu0 %v3209
  %v6028 = vpop.f32.mrb[0].mxu0
  %v6029 = vadd.f32 %v5868, %v6028
  %v6030 = vpop.f32.mrb[0].mxu0
  %v6031 = vpop.f32.mrb[0].mxu0
  %v6032 = vadd.f32 %v5871, %v6031
  %v6033 = vpop.f32.mrb[0].mxu0
  %6034 = vmatprep.mubr.bf16.mxu0 %v3226
  %6035 = vmatmul.mubr.bf16.gmra.mrb[0].mxu0 %v3225
  %v6036 = vpop.f32.mrb[0].mxu0
  %v6037 = vadd.f32 %v5876, %v6036
  %v6038 = vpop.f32.mrb[0].mxu0
  %v6039 = vpop.f32.mrb[0].mxu0
  %v6040 = vadd.f32 %v5879, %v6039
  %v6041 = vpop.f32.mrb[0].mxu0
  %6042 = vmatprep.mubr.bf16.mxu0 %v3242
  %6043 = vmatmul.mubr.bf16.gmra.mrb[0].mxu0 %v3241
  %v6044 = vpop.f32.mrb[0].mxu0
  %v6045 = vadd.f32 %v5884, %v6044
  %v6046 = vpop.f32.mrb[0].mxu0
  %v6047 = vpop.f32.mrb[0].mxu0
  %v6048 = vadd.f32 %v5887, %v6047
  %v6049 = vpop.f32.mrb[0].mxu0
  %6050 = vmatprep.mubr.bf16.mxu0 %v3258
  %6051 = vmatmul.mubr.bf16.gmra.mrb[0].mxu0 %v3257
  %v6052 = vpop.f32.mrb[0].mxu0
  %v6053 = vadd.f32 %v5892, %v6052
  %v6054 = vpop.f32.mrb[0].mxu0
  %v6055 = vpop.f32.mrb[0].mxu0
  %v6056 = vadd.f32 %v5895, %v6055
  %v6057 = vpop.f32.mrb[0].mxu0
  %6058 = vmatprep.mubr.bf16.mxu0 %v3274
  %6059 = vmatmul.mubr.bf16.gmra.mrb[0].mxu0 %v3273
  %v6060 = vpop.f32.mrb[0].mxu0
  %v6061 = vadd.f32 %v5900, %v6060
  %v6062 = vpop.f32.mrb[0].mxu0
  %v6063 = vpop.f32.mrb[0].mxu0
  %v6064 = vadd.f32 %v5903, %v6063
  %v6065 = vpop.f32.mrb[0].mxu0
  %6066 = vmatprep.mubr.bf16.mxu0 %v3290
  %6067 = vmatmul.mubr.bf16.gmra.mrb[0].mxu0 %v3289
  %v6068 = vpop.f32.mrb[0].mxu0
  %v6069 = vadd.f32 %v5908, %v6068
  %v6070 = vpop.f32.mrb[0].mxu0
  %v6071 = vpop.f32.mrb[0].mxu0
  %v6072 = vadd.f32 %v5911, %v6071
  %v6073 = vpop.f32.mrb[0].mxu0
  %6074 = vmatprep.mubr.bf16.mxu0 %v3306
  %6075 = vmatmul.mubr.bf16.gmra.mrb[0].mxu0 %v3305
  %v6076 = vpop.f32.mrb[0].mxu0
  %v6077 = vadd.f32 %v5916, %v6076
  %v6078 = vpop.f32.mrb[0].mxu0
  %v6079 = vpop.f32.mrb[0].mxu0
  %v6080 = vadd.f32 %v5919, %v6079
  %v6081 = vpop.f32.mrb[0].mxu0
  %6082 = vmatprep.mubr.bf16.mxu0 %v3322
  %6083 = vmatmul.mubr.bf16.gmra.mrb[0].mxu0 %v3321
  %v6084 = vpop.f32.mrb[0].mxu0
  %v6085 = vadd.f32 %v5924, %v6084
  %v6086 = vpop.f32.mrb[0].mxu0
  %v6087 = vpop.f32.mrb[0].mxu0
  %v6088 = vadd.f32 %v5927, %v6087
  %v6089 = vpop.f32.mrb[0].mxu0
  %6090 = vdwg.mxu0
  %v6091 = vld [vmem:[%s6] sm:$0x1]
  %v6093 = vlaneseq
  %v6094 = vshrl.u32 %v6093, 7
  %v6095 = vsub.s32 0, %v6094
  %v6096 = vrot.slane %v6091, %v6095
  %v6098 = vadd.f32 %v5965, %v6096
  %v6099 = vadd.f32 %v5968, %v6096
  %v6100 = vadd.f32 %v5973, %v6096
  %v6101 = vadd.f32 %v5976, %v6096
  %v6102 = vadd.f32 %v5981, %v6096
  %v6103 = vadd.f32 %v5984, %v6096
  %v6104 = vadd.f32 %v5989, %v6096
  %v6105 = vadd.f32 %v5992, %v6096
  %v6106 = vadd.f32 %v5997, %v6096
  %v6107 = vadd.f32 %v6000, %v6096
  %v6108 = vadd.f32 %v6005, %v6096
  %v6109 = vadd.f32 %v6008, %v6096
  %v6110 = vadd.f32 %v6013, %v6096
  %v6111 = vadd.f32 %v6016, %v6096
  %v6112 = vadd.f32 %v6021, %v6096
  %v6113 = vadd.f32 %v6024, %v6096
  %v6114 = vadd.f32 %v6029, %v6096
  %v6115 = vadd.f32 %v6032, %v6096
  %v6116 = vadd.f32 %v6037, %v6096
  %v6117 = vadd.f32 %v6040, %v6096
  %v6118 = vadd.f32 %v6045, %v6096
  %v6119 = vadd.f32 %v6048, %v6096
  %v6120 = vadd.f32 %v6053, %v6096
  %v6121 = vadd.f32 %v6056, %v6096
  %v6122 = vadd.f32 %v6061, %v6096
  %v6123 = vadd.f32 %v6064, %v6096
  %v6124 = vadd.f32 %v6069, %v6096
  %v6125 = vadd.f32 %v6072, %v6096
  %v6126 = vadd.f32 %v6077, %v6096
  %v6127 = vadd.f32 %v6080, %v6096
  %v6128 = vadd.f32 %v6085, %v6096
  %v6129 = vadd.f32 %v6088, %v6096
  %v6130 = vmax.f32 %v6098, 0.0
  %v6131 = vmax.f32 %v6099, 0.0
  %v6132 = vmax.f32 %v6100, 0.0
  %v6133 = vmax.f32 %v6101, 0.0
  %v6134 = vmax.f32 %v6102, 0.0
  %v6135 = vmax.f32 %v6103, 0.0
  %v6136 = vmax.f32 %v6104, 0.0
  %v6137 = vmax.f32 %v6105, 0.0
  %v6138 = vmax.f32 %v6106, 0.0
  %v6139 = vmax.f32 %v6107, 0.0
  %v6140 = vmax.f32 %v6108, 0.0
  %v6141 = vmax.f32 %v6109, 0.0
  %v6142 = vmax.f32 %v6110, 0.0
  %v6143 = vmax.f32 %v6111, 0.0
  %v6144 = vmax.f32 %v6112, 0.0
  %v6145 = vmax.f32 %v6113, 0.0
  %v6146 = vmax.f32 %v6114, 0.0
  %v6147 = vmax.f32 %v6115, 0.0
  %v6148 = vmax.f32 %v6116, 0.0
  %v6149 = vmax.f32 %v6117, 0.0
  %v6150 = vmax.f32 %v6118, 0.0
  %v6151 = vmax.f32 %v6119, 0.0
  %v6152 = vmax.f32 %v6120, 0.0
  %v6153 = vmax.f32 %v6121, 0.0
  %v6154 = vmax.f32 %v6122, 0.0
  %v6155 = vmax.f32 %v6123, 0.0
  %v6156 = vmax.f32 %v6124, 0.0
  %v6157 = vmax.f32 %v6125, 0.0
  %v6158 = vmax.f32 %v6126, 0.0
  %v6159 = vmax.f32 %v6127, 0.0
  %v6160 = vmax.f32 %v6128, 0.0
  %v6161 = vmax.f32 %v6129, 0.0
  %v6162 = vpack.c.bf16 %v6131, %v6130
  %v6163 = vpack.c.bf16 %v6133, %v6132
  %v6164 = vpack.c.bf16 %v6135, %v6134
  %v6165 = vpack.c.bf16 %v6137, %v6136
  %v6166 = vpack.c.bf16 %v6139, %v6138
  %v6167 = vpack.c.bf16 %v6141, %v6140
  %v6168 = vpack.c.bf16 %v6143, %v6142
  %v6169 = vpack.c.bf16 %v6145, %v6144
  %v6170 = vpack.c.bf16 %v6147, %v6146
  %v6171 = vpack.c.bf16 %v6149, %v6148
  %v6172 = vpack.c.bf16 %v6151, %v6150
  %v6173 = vpack.c.bf16 %v6153, %v6152
  %v6174 = vpack.c.bf16 %v6155, %v6154
  %v6175 = vpack.c.bf16 %v6157, %v6156
  %v6176 = vpack.c.bf16 %v6159, %v6158
  %v6177 = vpack.c.bf16 %v6161, %v6160
  %v6178 = vld [vmem:[%s10] sm:$0xf]
  %v6179 = vld [vmem:[%s10 + $0x4] sm:$0xf]
  %v6180 = vld [vmem:[%s10 + $0x8] sm:$0xf]
  %v6181 = vld [vmem:[%s10 + $0xc] sm:$0xf]
  %v6182 = vld [vmem:[%s10 + $0x10] sm:$0xf]
  %v6183 = vld [vmem:[%s10 + $0x14] sm:$0xf]
  %v6184 = vld [vmem:[%s10 + $0x18] sm:$0xf]
  %v6185 = vld [vmem:[%s10 + $0x1c] sm:$0xf]
  %v6186 = vld [vmem:[%s11] sm:$0x1]
  %v6188 = vlaneseq
  %v6189 = vshrl.u32 %v6188, 7
  %v6190 = vsub.s32 0, %v6189
  %v6191 = vrot.slane %v6186, %v6190
  %v6201 = vunpack.c.l.b16 %v6178
  %v6202 = vunpack.c.l.b16 %v6179
  %v6203 = vunpack.c.l.b16 %v6180
  %v6204 = vunpack.c.l.b16 %v6181
  %v6205 = vunpack.c.l.b16 %v6182
  %v6206 = vunpack.c.l.b16 %v6183
  %v6207 = vunpack.c.l.b16 %v6184
  %v6208 = vunpack.c.l.b16 %v6185
  %v6209 = vpack.c.b16 %v6202, %v6201
  %v6210 = vpack.c.b16 %v6204, %v6203
  %v6211 = vpack.c.b16 %v6206, %v6205
  %v6212 = vpack.c.b16 %v6208, %v6207
  %vm6217 = vcmask 523264
  %v6219 = vsel %vm6217, %v6162, 0
  %v6222 = vsel %vm6217, %v6163, 0
  %v6225 = vsel %vm6217, %v6164, 0
  %v6228 = vsel %vm6217, %v6165, 0
  %v6231 = vsel %vm6217, %v6166, 0
  %v6234 = vsel %vm6217, %v6167, 0
  %v6237 = vsel %vm6217, %v6168, 0
  %v6240 = vsel %vm6217, %v6169, 0
  %v6243 = vsel %vm6217, %v6170, 0
  %v6246 = vsel %vm6217, %v6171, 0
  %v6249 = vsel %vm6217, %v6172, 0
  %v6252 = vsel %vm6217, %v6173, 0
  %v6255 = vsel %vm6217, %v6174, 0
  %v6258 = vsel %vm6217, %v6175, 0
  %v6261 = vsel %vm6217, %v6176, 0
  %v6264 = vsel %vm6217, %v6177, 0
  %6266 = vmatprep.subr.bf16.mxu0 0
  %6267 = vmatpush1.bf16.msra.mxu0 %v6209
  %6268 = vmatprep.subr.bf16.mxu0 0
  %6269 = vmatpush1.bf16.msra.mxu0 %v6210
  %6270 = vmatprep.subr.bf16.mxu0 0
  %6271 = vmatpush1.bf16.msra.mxu0 %v6211
  %6272 = vmatprep.subr.bf16.mxu0 0
  %6273 = vmatpush1.bf16.msra.mxu0 %v6212
  %6274 = vmatprep.subr.bf16.mxu0 0
  %6275 = vmatpush1.bf16.msra.mxu0 0
  %6276 = vmatprep.subr.bf16.mxu0 0
  %6277 = vmatpush1.bf16.msra.mxu0 0
  %6278 = vmatprep.subr.bf16.mxu0 0
  %6279 = vmatpush1.bf16.msra.mxu0 0
  %6280 = vmatprep.subr.bf16.mxu0 0
  %6281 = vmatpush1.bf16.msra.mxu0 0
  %6282 = vmatprep.subr.bf16.mxu0 0
  %6283 = vmatpush1.bf16.msra.mxu0 0
  %6284 = vmatprep.subr.bf16.mxu0 0
  %6285 = vmatpush1.bf16.msra.mxu0 0
  %6286 = vmatprep.subr.bf16.mxu0 0
  %6287 = vmatpush1.bf16.msra.mxu0 0
  %6288 = vmatprep.subr.bf16.mxu0 0
  %6289 = vmatpush1.bf16.msra.mxu0 0
  %6290 = vmatprep.subr.bf16.mxu0 0
  %6291 = vmatpush1.bf16.msra.mxu0 0
  %6292 = vmatprep.subr.bf16.mxu0 0
  %6293 = vmatpush1.bf16.msra.mxu0 0
  %6294 = vmatprep.subr.bf16.mxu0 0
  %6295 = vmatpush1.bf16.msra.mxu0 0
  %6296 = vmatprep.subr.bf16.mxu0 0
  %6297 = vmatpush1.bf16.msra.mxu0 0
  %6298 = vmatprep.mubr.bf16.mxu0 0
  %6299 = vmatmul.mubr.bf16.gmra.mrb[0].mxu0 %v6219
  %v6300 = vpop.f32.mrb[0].mxu0
  %v6301 = vadd.f32 %v6191, %v6300
  %v6302 = vpop.f32.mrb[0].mxu0
  %v6303 = vpop.f32.mrb[0].mxu0
  %v6304 = vadd.f32 %v6191, %v6303
  %v6305 = vpop.f32.mrb[0].mxu0
  %6306 = vmatprep.mubr.bf16.mxu0 0
  %6307 = vmatmul.mubr.bf16.gmra.mrb[0].mxu0 %v6222
  %v6308 = vpop.f32.mrb[0].mxu0
  %v6309 = vadd.f32 %v6191, %v6308
  %v6310 = vpop.f32.mrb[0].mxu0
  %v6311 = vpop.f32.mrb[0].mxu0
  %v6312 = vadd.f32 %v6191, %v6311
  %v6313 = vpop.f32.mrb[0].mxu0
  %6314 = vmatprep.mubr.bf16.mxu0 0
  %6315 = vmatmul.mubr.bf16.gmra.mrb[0].mxu0 %v6225
  %v6316 = vpop.f32.mrb[0].mxu0
  %v6317 = vadd.f32 %v6191, %v6316
  %v6318 = vpop.f32.mrb[0].mxu0
  %v6319 = vpop.f32.mrb[0].mxu0
  %v6320 = vadd.f32 %v6191, %v6319
  %v6321 = vpop.f32.mrb[0].mxu0
  %6322 = vmatprep.mubr.bf16.mxu0 0
  %6323 = vmatmul.mubr.bf16.gmra.mrb[0].mxu0 %v6228
  %v6324 = vpop.f32.mrb[0].mxu0
  %v6325 = vadd.f32 %v6191, %v6324
  %v6326 = vpop.f32.mrb[0].mxu0
  %v6327 = vpop.f32.mrb[0].mxu0
  %v6328 = vadd.f32 %v6191, %v6327
  %v6329 = vpop.f32.mrb[0].mxu0
  %6330 = vmatprep.mubr.bf16.mxu0 0
  %6331 = vmatmul.mubr.bf16.gmra.mrb[0].mxu0 %v6231
  %v6332 = vpop.f32.mrb[0].mxu0
  %v6333 = vadd.f32 %v6191, %v6332
  %v6334 = vpop.f32.mrb[0].mxu0
  %v6335 = vpop.f32.mrb[0].mxu0
  %v6336 = vadd.f32 %v6191, %v6335
  %v6337 = vpop.f32.mrb[0].mxu0
  %6338 = vmatprep.mubr.bf16.mxu0 0
  %6339 = vmatmul.mubr.bf16.gmra.mrb[0].mxu0 %v6234
  %v6340 = vpop.f32.mrb[0].mxu0
  %v6341 = vadd.f32 %v6191, %v6340
  %v6342 = vpop.f32.mrb[0].mxu0
  %v6343 = vpop.f32.mrb[0].mxu0
  %v6344 = vadd.f32 %v6191, %v6343
  %v6345 = vpop.f32.mrb[0].mxu0
  %6346 = vmatprep.mubr.bf16.mxu0 0
  %6347 = vmatmul.mubr.bf16.gmra.mrb[0].mxu0 %v6237
  %v6348 = vpop.f32.mrb[0].mxu0
  %v6349 = vadd.f32 %v6191, %v6348
  %v6350 = vpop.f32.mrb[0].mxu0
  %v6351 = vpop.f32.mrb[0].mxu0
  %v6352 = vadd.f32 %v6191, %v6351
  %v6353 = vpop.f32.mrb[0].mxu0
  %6354 = vmatprep.mubr.bf16.mxu0 0
  %6355 = vmatmul.mubr.bf16.gmra.mrb[0].mxu0 %v6240
  %v6356 = vpop.f32.mrb[0].mxu0
  %v6357 = vadd.f32 %v6191, %v6356
  %v6358 = vpop.f32.mrb[0].mxu0
  %v6359 = vpop.f32.mrb[0].mxu0
  %v6360 = vadd.f32 %v6191, %v6359
  %v6361 = vpop.f32.mrb[0].mxu0
  %6362 = vmatprep.mubr.bf16.mxu0 0
  %6363 = vmatmul.mubr.bf16.gmra.mrb[0].mxu0 %v6243
  %v6364 = vpop.f32.mrb[0].mxu0
  %v6365 = vadd.f32 %v6191, %v6364
  %v6366 = vpop.f32.mrb[0].mxu0
  %v6367 = vpop.f32.mrb[0].mxu0
  %v6368 = vadd.f32 %v6191, %v6367
  %v6369 = vpop.f32.mrb[0].mxu0
  %6370 = vmatprep.mubr.bf16.mxu0 0
  %6371 = vmatmul.mubr.bf16.gmra.mrb[0].mxu0 %v6246
  %v6372 = vpop.f32.mrb[0].mxu0
  %v6373 = vadd.f32 %v6191, %v6372
  %v6374 = vpop.f32.mrb[0].mxu0
  %v6375 = vpop.f32.mrb[0].mxu0
  %v6376 = vadd.f32 %v6191, %v6375
  %v6377 = vpop.f32.mrb[0].mxu0
  %6378 = vmatprep.mubr.bf16.mxu0 0
  %6379 = vmatmul.mubr.bf16.gmra.mrb[0].mxu0 %v6249
  %v6380 = vpop.f32.mrb[0].mxu0
  %v6381 = vadd.f32 %v6191, %v6380
  %v6382 = vpop.f32.mrb[0].mxu0
  %v6383 = vpop.f32.mrb[0].mxu0
  %v6384 = vadd.f32 %v6191, %v6383
  %v6385 = vpop.f32.mrb[0].mxu0
  %6386 = vmatprep.mubr.bf16.mxu0 0
  %6387 = vmatmul.mubr.bf16.gmra.mrb[0].mxu0 %v6252
  %v6388 = vpop.f32.mrb[0].mxu0
  %v6389 = vadd.f32 %v6191, %v6388
  %v6390 = vpop.f32.mrb[0].mxu0
  %v6391 = vpop.f32.mrb[0].mxu0
  %v6392 = vadd.f32 %v6191, %v6391
  %v6393 = vpop.f32.mrb[0].mxu0
  %6394 = vmatprep.mubr.bf16.mxu0 0
  %6395 = vmatmul.mubr.bf16.gmra.mrb[0].mxu0 %v6255
  %v6396 = vpop.f32.mrb[0].mxu0
  %v6397 = vadd.f32 %v6191, %v6396
  %v6398 = vpop.f32.mrb[0].mxu0
  %v6399 = vpop.f32.mrb[0].mxu0
  %v6400 = vadd.f32 %v6191, %v6399
  %v6401 = vpop.f32.mrb[0].mxu0
  %6402 = vmatprep.mubr.bf16.mxu0 0
  %6403 = vmatmul.mubr.bf16.gmra.mrb[0].mxu0 %v6258
  %v6404 = vpop.f32.mrb[0].mxu0
  %v6405 = vadd.f32 %v6191, %v6404
  %v6406 = vpop.f32.mrb[0].mxu0
  %v6407 = vpop.f32.mrb[0].mxu0
  %v6408 = vadd.f32 %v6191, %v6407
  %v6409 = vpop.f32.mrb[0].mxu0
  %6410 = vmatprep.mubr.bf16.mxu0 0
  %6411 = vmatmul.mubr.bf16.gmra.mrb[0].mxu0 %v6261
  %v6412 = vpop.f32.mrb[0].mxu0
  %v6413 = vadd.f32 %v6191, %v6412
  %v6414 = vpop.f32.mrb[0].mxu0
  %v6415 = vpop.f32.mrb[0].mxu0
  %v6416 = vadd.f32 %v6191, %v6415
  %v6417 = vpop.f32.mrb[0].mxu0
  %6418 = vmatprep.mubr.bf16.mxu0 0
  %6419 = vmatmul.mubr.bf16.gmra.mrb[0].mxu0 %v6264
  %v6420 = vpop.f32.mrb[0].mxu0
  %v6421 = vadd.f32 %v6191, %v6420
  %v6422 = vpop.f32.mrb[0].mxu0
  %v6423 = vpop.f32.mrb[0].mxu0
  %v6424 = vadd.f32 %v6191, %v6423
  %v6425 = vpop.f32.mrb[0].mxu0
  %6426 = vdwg.mxu0
  %v6427 = vmax.f32 %v6301, 0.0
  %v6428 = vmax.f32 %v6304, 0.0
  %v6429 = vmax.f32 %v6309, 0.0
  %v6430 = vmax.f32 %v6312, 0.0
  %v6431 = vmax.f32 %v6317, 0.0
  %v6432 = vmax.f32 %v6320, 0.0
  %v6433 = vmax.f32 %v6325, 0.0
  %v6434 = vmax.f32 %v6328, 0.0
  %v6435 = vmax.f32 %v6333, 0.0
  %v6436 = vmax.f32 %v6336, 0.0
  %v6437 = vmax.f32 %v6341, 0.0
  %v6438 = vmax.f32 %v6344, 0.0
  %v6439 = vmax.f32 %v6349, 0.0
  %v6440 = vmax.f32 %v6352, 0.0
  %v6441 = vmax.f32 %v6357, 0.0
  %v6442 = vmax.f32 %v6360, 0.0
  %v6443 = vmax.f32 %v6365, 0.0
  %v6444 = vmax.f32 %v6368, 0.0
  %v6445 = vmax.f32 %v6373, 0.0
  %v6446 = vmax.f32 %v6376, 0.0
  %v6447 = vmax.f32 %v6381, 0.0
  %v6448 = vmax.f32 %v6384, 0.0
  %v6449 = vmax.f32 %v6389, 0.0
  %v6450 = vmax.f32 %v6392, 0.0
  %v6451 = vmax.f32 %v6397, 0.0
  %v6452 = vmax.f32 %v6400, 0.0
  %v6453 = vmax.f32 %v6405, 0.0
  %v6454 = vmax.f32 %v6408, 0.0
  %v6455 = vmax.f32 %v6413, 0.0
  %v6456 = vmax.f32 %v6416, 0.0
  %v6457 = vmax.f32 %v6421, 0.0
  %v6458 = vmax.f32 %v6424, 0.0
  %v6459 = vld [vmem:[%s15] sm:$0x1]
  %v6461 = vlaneseq
  %v6462 = vshrl.u32 %v6461, 7
  %v6463 = vsub.s32 0, %v6462
  %v6464 = vrot.slane %v6459, %v6463
  %v6466 = vmul.f32 %v6427, %v6464
  %v6467 = vmul.f32 %v6428, %v6464
  %v6468 = vmul.f32 %v6429, %v6464
  %v6469 = vmul.f32 %v6430, %v6464
  %v6470 = vmul.f32 %v6431, %v6464
  %v6471 = vmul.f32 %v6432, %v6464
  %v6472 = vmul.f32 %v6433, %v6464
  %v6473 = vmul.f32 %v6434, %v6464
  %v6474 = vmul.f32 %v6435, %v6464
  %v6475 = vmul.f32 %v6436, %v6464
  %v6476 = vmul.f32 %v6437, %v6464
  %v6477 = vmul.f32 %v6438, %v6464
  %v6478 = vmul.f32 %v6439, %v6464
  %v6479 = vmul.f32 %v6440, %v6464
  %v6480 = vmul.f32 %v6441, %v6464
  %v6481 = vmul.f32 %v6442, %v6464
  %v6482 = vmul.f32 %v6443, %v6464
  %v6483 = vmul.f32 %v6444, %v6464
  %v6484 = vmul.f32 %v6445, %v6464
  %v6485 = vmul.f32 %v6446, %v6464
  %v6486 = vmul.f32 %v6447, %v6464
  %v6487 = vmul.f32 %v6448, %v6464
  %v6488 = vmul.f32 %v6449, %v6464
  %v6489 = vmul.f32 %v6450, %v6464
  %v6490 = vmul.f32 %v6451, %v6464
  %v6491 = vmul.f32 %v6452, %v6464
  %v6492 = vmul.f32 %v6453, %v6464
  %v6493 = vmul.f32 %v6454, %v6464
  %v6494 = vmul.f32 %v6455, %v6464
  %v6495 = vmul.f32 %v6456, %v6464
  %v6496 = vmul.f32 %v6457, %v6464
  %v6497 = vmul.f32 %v6458, %v6464
  %v6498 = vsel %vm6217, %v6466, 0.0
  %6499 = vadd.xlane.f32.xlu0 %v6498
  %v6500 = vpop.xlane.xlu0 %6499
  %v6501 = vsel %vm6217, %v6467, 0.0
  %6502 = vadd.xlane.f32.xlu0 %v6501
  %v6503 = vpop.xlane.xlu0 %6502
  %v6504 = vsel %vm6217, %v6468, 0.0
  %6505 = vadd.xlane.f32.xlu0 %v6504
  %v6506 = vpop.xlane.xlu0 %6505
  %v6507 = vsel %vm6217, %v6469, 0.0
  %6508 = vadd.xlane.f32.xlu0 %v6507
  %v6509 = vpop.xlane.xlu0 %6508
  %v6510 = vsel %vm6217, %v6470, 0.0
  %6511 = vadd.xlane.f32.xlu0 %v6510
  %v6512 = vpop.xlane.xlu0 %6511
  %v6513 = vsel %vm6217, %v6471, 0.0
  %6514 = vadd.xlane.f32.xlu0 %v6513
  %v6515 = vpop.xlane.xlu0 %6514
  %v6516 = vsel %vm6217, %v6472, 0.0
  %6517 = vadd.xlane.f32.xlu0 %v6516
  %v6518 = vpop.xlane.xlu0 %6517
  %v6519 = vsel %vm6217, %v6473, 0.0
  %6520 = vadd.xlane.f32.xlu0 %v6519
  %v6521 = vpop.xlane.xlu0 %6520
  %v6522 = vsel %vm6217, %v6474, 0.0
  %6523 = vadd.xlane.f32.xlu0 %v6522
  %v6524 = vpop.xlane.xlu0 %6523
  %v6525 = vsel %vm6217, %v6475, 0.0
  %6526 = vadd.xlane.f32.xlu0 %v6525
  %v6527 = vpop.xlane.xlu0 %6526
  %v6528 = vsel %vm6217, %v6476, 0.0
  %6529 = vadd.xlane.f32.xlu0 %v6528
  %v6530 = vpop.xlane.xlu0 %6529
  %v6531 = vsel %vm6217, %v6477, 0.0
  %6532 = vadd.xlane.f32.xlu0 %v6531
  %v6533 = vpop.xlane.xlu0 %6532
  %v6534 = vsel %vm6217, %v6478, 0.0
  %6535 = vadd.xlane.f32.xlu0 %v6534
  %v6536 = vpop.xlane.xlu0 %6535
  %v6537 = vsel %vm6217, %v6479, 0.0
  %6538 = vadd.xlane.f32.xlu0 %v6537
  %v6539 = vpop.xlane.xlu0 %6538
  %v6540 = vsel %vm6217, %v6480, 0.0
  %6541 = vadd.xlane.f32.xlu0 %v6540
  %v6542 = vpop.xlane.xlu0 %6541
  %v6543 = vsel %vm6217, %v6481, 0.0
  %6544 = vadd.xlane.f32.xlu0 %v6543
  %v6545 = vpop.xlane.xlu0 %6544
  %v6546 = vsel %vm6217, %v6482, 0.0
  %6547 = vadd.xlane.f32.xlu0 %v6546
  %v6548 = vpop.xlane.xlu0 %6547
  %v6549 = vsel %vm6217, %v6483, 0.0
  %6550 = vadd.xlane.f32.xlu0 %v6549
  %v6551 = vpop.xlane.xlu0 %6550
  %v6552 = vsel %vm6217, %v6484, 0.0
  %6553 = vadd.xlane.f32.xlu0 %v6552
  %v6554 = vpop.xlane.xlu0 %6553
  %v6555 = vsel %vm6217, %v6485, 0.0
  %6556 = vadd.xlane.f32.xlu0 %v6555
  %v6557 = vpop.xlane.xlu0 %6556
  %v6558 = vsel %vm6217, %v6486, 0.0
  %6559 = vadd.xlane.f32.xlu0 %v6558
  %v6560 = vpop.xlane.xlu0 %6559
  %v6561 = vsel %vm6217, %v6487, 0.0
  %6562 = vadd.xlane.f32.xlu0 %v6561
  %v6563 = vpop.xlane.xlu0 %6562
  %v6564 = vsel %vm6217, %v6488, 0.0
  %6565 = vadd.xlane.f32.xlu0 %v6564
  %v6566 = vpop.xlane.xlu0 %6565
  %v6567 = vsel %vm6217, %v6489, 0.0
  %6568 = vadd.xlane.f32.xlu0 %v6567
  %v6569 = vpop.xlane.xlu0 %6568
  %v6570 = vsel %vm6217, %v6490, 0.0
  %6571 = vadd.xlane.f32.xlu0 %v6570
  %v6572 = vpop.xlane.xlu0 %6571
  %v6573 = vsel %vm6217, %v6491, 0.0
  %6574 = vadd.xlane.f32.xlu0 %v6573
  %v6575 = vpop.xlane.xlu0 %6574
  %v6576 = vsel %vm6217, %v6492, 0.0
  %6577 = vadd.xlane.f32.xlu0 %v6576
  %v6578 = vpop.xlane.xlu0 %6577
  %v6579 = vsel %vm6217, %v6493, 0.0
  %6580 = vadd.xlane.f32.xlu0 %v6579
  %v6581 = vpop.xlane.xlu0 %6580
  %v6582 = vsel %vm6217, %v6494, 0.0
  %6583 = vadd.xlane.f32.xlu0 %v6582
  %v6584 = vpop.xlane.xlu0 %6583
  %v6585 = vsel %vm6217, %v6495, 0.0
  %6586 = vadd.xlane.f32.xlu0 %v6585
  %v6587 = vpop.xlane.xlu0 %6586
  %v6588 = vsel %vm6217, %v6496, 0.0
  %6589 = vadd.xlane.f32.xlu0 %v6588
  %v6590 = vpop.xlane.xlu0 %6589
  %v6591 = vsel %vm6217, %v6497, 0.0
  %6592 = vadd.xlane.f32.xlu0 %v6591
  %v6593 = vpop.xlane.xlu0 %6592
  %v6594 = vld [vmem:[%s7] sm:$0xf]
  %v6595 = vld [vmem:[%s7 + $0x4] sm:$0xf]
  %v6596 = vld [vmem:[%s7 + $0x8] sm:$0xf]
  %v6597 = vld [vmem:[%s7 + $0xc] sm:$0xf]
  %v6598 = vld [vmem:[%s7 + $0x10] sm:$0xf]
  %v6599 = vld [vmem:[%s7 + $0x14] sm:$0xf]
  %v6600 = vld [vmem:[%s7 + $0x18] sm:$0xf]
  %v6601 = vld [vmem:[%s7 + $0x1c] sm:$0xf]
  %v6602 = vld [vmem:[%s7 + $0x20] sm:$0xf]
  %v6603 = vld [vmem:[%s7 + $0x24] sm:$0xf]
  %v6604 = vld [vmem:[%s7 + $0x28] sm:$0xf]
  %v6605 = vld [vmem:[%s7 + $0x2c] sm:$0xf]
  %v6606 = vld [vmem:[%s7 + $0x30] sm:$0xf]
  %v6607 = vld [vmem:[%s7 + $0x34] sm:$0xf]
  %v6608 = vld [vmem:[%s7 + $0x38] sm:$0xf]
  %v6609 = vld [vmem:[%s7 + $0x3c] sm:$0xf]
  %v6610 = vld [vmem:[%s7 + $0x40] sm:$0xf]
  %v6611 = vld [vmem:[%s7 + $0x44] sm:$0xf]
  %v6612 = vld [vmem:[%s7 + $0x48] sm:$0xf]
  %v6613 = vld [vmem:[%s7 + $0x4c] sm:$0xf]
  %v6614 = vld [vmem:[%s7 + $0x50] sm:$0xf]
  %v6615 = vld [vmem:[%s7 + $0x54] sm:$0xf]
  %v6616 = vld [vmem:[%s7 + $0x58] sm:$0xf]
  %v6617 = vld [vmem:[%s7 + $0x5c] sm:$0xf]
  %v6618 = vld [vmem:[%s7 + $0x60] sm:$0xf]
  %v6619 = vld [vmem:[%s7 + $0x64] sm:$0xf]
  %v6620 = vld [vmem:[%s7 + $0x68] sm:$0xf]
  %v6621 = vld [vmem:[%s7 + $0x6c] sm:$0xf]
  %v6622 = vld [vmem:[%s7 + $0x70] sm:$0xf]
  %v6623 = vld [vmem:[%s7 + $0x74] sm:$0xf]
  %v6624 = vld [vmem:[%s7 + $0x78] sm:$0xf]
  %v6625 = vld [vmem:[%s7 + $0x7c] sm:$0xf]
  %v6626 = vld [vmem:[%s7 + $0x80] sm:$0xf]
  %v6627 = vld [vmem:[%s7 + $0x84] sm:$0xf]
  %v6628 = vld [vmem:[%s7 + $0x88] sm:$0xf]
  %v6629 = vld [vmem:[%s7 + $0x8c] sm:$0xf]
  %v6630 = vld [vmem:[%s7 + $0x90] sm:$0xf]
  %v6631 = vld [vmem:[%s7 + $0x94] sm:$0xf]
  %v6632 = vld [vmem:[%s7 + $0x98] sm:$0xf]
  %v6633 = vld [vmem:[%s7 + $0x9c] sm:$0xf]
  %v6634 = vld [vmem:[%s7 + $0xa0] sm:$0xf]
  %v6635 = vld [vmem:[%s7 + $0xa4] sm:$0xf]
  %v6636 = vld [vmem:[%s7 + $0xa8] sm:$0xf]
  %v6637 = vld [vmem:[%s7 + $0xac] sm:$0xf]
  %v6638 = vld [vmem:[%s7 + $0xb0] sm:$0xf]
  %v6639 = vld [vmem:[%s7 + $0xb4] sm:$0xf]
  %v6640 = vld [vmem:[%s7 + $0xb8] sm:$0xf]
  %v6641 = vld [vmem:[%s7 + $0xbc] sm:$0xf]
  %v6642 = vld [vmem:[%s7 + $0xc0] sm:$0xf]
  %v6643 = vld [vmem:[%s7 + $0xc4] sm:$0xf]
  %v6644 = vld [vmem:[%s7 + $0xc8] sm:$0xf]
  %v6645 = vld [vmem:[%s7 + $0xcc] sm:$0xf]
  %v6646 = vld [vmem:[%s7 + $0xd0] sm:$0xf]
  %v6647 = vld [vmem:[%s7 + $0xd4] sm:$0xf]
  %v6648 = vld [vmem:[%s7 + $0xd8] sm:$0xf]
  %v6649 = vld [vmem:[%s7 + $0xdc] sm:$0xf]
  %v6650 = vld [vmem:[%s7 + $0xe0] sm:$0xf]
  %v6651 = vld [vmem:[%s7 + $0xe4] sm:$0xf]
  %v6652 = vld [vmem:[%s7 + $0xe8] sm:$0xf]
  %v6653 = vld [vmem:[%s7 + $0xec] sm:$0xf]
  %v6654 = vld [vmem:[%s7 + $0xf0] sm:$0xf]
  %v6655 = vld [vmem:[%s7 + $0xf4] sm:$0xf]
  %v6656 = vld [vmem:[%s7 + $0xf8] sm:$0xf]
  %v6657 = vld [vmem:[%s7 + $0xfc] sm:$0xf]
  %v6658 = vld [vmem:[%s8] sm:$0xf]
  %v6659 = vld [vmem:[%s8 + $0x4] sm:$0xf]
  %v6660 = vld [vmem:[%s8 + $0x8] sm:$0xf]
  %v6661 = vld [vmem:[%s8 + $0xc] sm:$0xf]
  %v6662 = vld [vmem:[%s8 + $0x10] sm:$0xf]
  %v6663 = vld [vmem:[%s8 + $0x14] sm:$0xf]
  %v6664 = vld [vmem:[%s8 + $0x18] sm:$0xf]
  %v6665 = vld [vmem:[%s8 + $0x1c] sm:$0xf]
  %v6666 = vld [vmem:[%s8 + $0x20] sm:$0xf]
  %v6667 = vld [vmem:[%s8 + $0x24] sm:$0xf]
  %v6668 = vld [vmem:[%s8 + $0x28] sm:$0xf]
  %v6669 = vld [vmem:[%s8 + $0x2c] sm:$0xf]
  %v6670 = vld [vmem:[%s8 + $0x30] sm:$0xf]
  %v6671 = vld [vmem:[%s8 + $0x34] sm:$0xf]
  %v6672 = vld [vmem:[%s8 + $0x38] sm:$0xf]
  %v6673 = vld [vmem:[%s8 + $0x3c] sm:$0xf]
  %v6690 = vunpack.c.l.b16 %v6658
  %v6691 = vunpack.c.l.b16 %v6659
  %v6692 = vunpack.c.l.b16 %v6660
  %v6693 = vunpack.c.l.b16 %v6661
  %v6694 = vunpack.c.l.b16 %v6662
  %v6695 = vunpack.c.l.b16 %v6663
  %v6696 = vunpack.c.l.b16 %v6664
  %v6697 = vunpack.c.l.b16 %v6665
  %v6698 = vunpack.c.l.b16 %v6666
  %v6699 = vunpack.c.l.b16 %v6667
  %v6700 = vunpack.c.l.b16 %v6668
  %v6701 = vunpack.c.l.b16 %v6669
  %v6702 = vunpack.c.l.b16 %v6670
  %v6703 = vunpack.c.l.b16 %v6671
  %v6704 = vunpack.c.l.b16 %v6672
  %v6705 = vunpack.c.l.b16 %v6673
  %v6706 = vpack.c.b16 %v6691, %v6690
  %v6707 = vpack.c.b16 %v6693, %v6692
  %v6708 = vpack.c.b16 %v6695, %v6694
  %v6709 = vpack.c.b16 %v6697, %v6696
  %v6710 = vpack.c.b16 %v6699, %v6698
  %v6711 = vpack.c.b16 %v6701, %v6700
  %v6712 = vpack.c.b16 %v6703, %v6702
  %v6713 = vpack.c.b16 %v6705, %v6704
  %6722 = vmatprep.subr.bf16.mxu0 0
  %6723 = vmatpush1.bf16.msra.mxu0 %v6706
  %6724 = vmatprep.subr.bf16.mxu0 0
  %6725 = vmatpush1.bf16.msra.mxu0 %v6707
  %6726 = vmatprep.subr.bf16.mxu0 0
  %6727 = vmatpush1.bf16.msra.mxu0 %v6708
  %6728 = vmatprep.subr.bf16.mxu0 0
  %6729 = vmatpush1.bf16.msra.mxu0 %v6709
  %6730 = vmatprep.subr.bf16.mxu0 0
  %6731 = vmatpush1.bf16.msra.mxu0 %v6710
  %6732 = vmatprep.subr.bf16.mxu0 0
  %6733 = vmatpush1.bf16.msra.mxu0 %v6711
  %6734 = vmatprep.subr.bf16.mxu0 0
  %6735 = vmatpush1.bf16.msra.mxu0 %v6712
  %6736 = vmatprep.subr.bf16.mxu0 0
  %6737 = vmatpush1.bf16.msra.mxu0 %v6713
  %6738 = vmatprep.subr.bf16.mxu0 0
  %6739 = vmatpush1.bf16.msra.mxu0 0
  %6740 = vmatprep.subr.bf16.mxu0 0
  %6741 = vmatpush1.bf16.msra.mxu0 0
  %6742 = vmatprep.subr.bf16.mxu0 0
  %6743 = vmatpush1.bf16.msra.mxu0 0
  %6744 = vmatprep.subr.bf16.mxu0 0
  %6745 = vmatpush1.bf16.msra.mxu0 0
  %6746 = vmatprep.subr.bf16.mxu0 0
  %6747 = vmatpush1.bf16.msra.mxu0 0
  %6748 = vmatprep.subr.bf16.mxu0 0
  %6749 = vmatpush1.bf16.msra.mxu0 0
  %6750 = vmatprep.subr.bf16.mxu0 0
  %6751 = vmatpush1.bf16.msra.mxu0 0
  %6752 = vmatprep.subr.bf16.mxu0 0
  %6753 = vmatpush1.bf16.msra.mxu0 0
  %6754 = vmatprep.mubr.bf16.mxu0 0
  %6755 = vmatmul.mubr.bf16.gmra.mrb[0].mxu0 %v3794
  %v6756 = vpop.f32.mrb[0].mxu0
  %v6757 = vadd.f32 0.0, %v6756
  %v6758 = vpop.f32.mrb[0].mxu0
  %v6759 = vpop.f32.mrb[0].mxu0
  %v6760 = vadd.f32 0.0, %v6759
  %v6761 = vpop.f32.mrb[0].mxu0
  %6762 = vmatprep.mubr.bf16.mxu0 0
  %6763 = vmatmul.mubr.bf16.gmra.mrb[0].mxu0 %v3795
  %v6764 = vpop.f32.mrb[0].mxu0
  %v6765 = vadd.f32 0.0, %v6764
  %v6766 = vpop.f32.mrb[0].mxu0
  %v6767 = vpop.f32.mrb[0].mxu0
  %v6768 = vadd.f32 0.0, %v6767
  %v6769 = vpop.f32.mrb[0].mxu0
  %6770 = vmatprep.mubr.bf16.mxu0 0
  %6771 = vmatmul.mubr.bf16.gmra.mrb[0].mxu0 %v3796
  %v6772 = vpop.f32.mrb[0].mxu0
  %v6773 = vadd.f32 0.0, %v6772
  %v6774 = vpop.f32.mrb[0].mxu0
  %v6775 = vpop.f32.mrb[0].mxu0
  %v6776 = vadd.f32 0.0, %v6775
  %v6777 = vpop.f32.mrb[0].mxu0
  %6778 = vmatprep.mubr.bf16.mxu0 0
  %6779 = vmatmul.mubr.bf16.gmra.mrb[0].mxu0 %v3797
  %v6780 = vpop.f32.mrb[0].mxu0
  %v6781 = vadd.f32 0.0, %v6780
  %v6782 = vpop.f32.mrb[0].mxu0
  %v6783 = vpop.f32.mrb[0].mxu0
  %v6784 = vadd.f32 0.0, %v6783
  %v6785 = vpop.f32.mrb[0].mxu0
  %6786 = vmatprep.mubr.bf16.mxu0 0
  %6787 = vmatmul.mubr.bf16.gmra.mrb[0].mxu0 %v3798
  %v6788 = vpop.f32.mrb[0].mxu0
  %v6789 = vadd.f32 0.0, %v6788
  %v6790 = vpop.f32.mrb[0].mxu0
  %v6791 = vpop.f32.mrb[0].mxu0
  %v6792 = vadd.f32 0.0, %v6791
  %v6793 = vpop.f32.mrb[0].mxu0
  %6794 = vmatprep.mubr.bf16.mxu0 0
  %6795 = vmatmul.mubr.bf16.gmra.mrb[0].mxu0 %v3799
  %v6796 = vpop.f32.mrb[0].mxu0
  %v6797 = vadd.f32 0.0, %v6796
  %v6798 = vpop.f32.mrb[0].mxu0
  %v6799 = vpop.f32.mrb[0].mxu0
  %v6800 = vadd.f32 0.0, %v6799
  %v6801 = vpop.f32.mrb[0].mxu0
  %6802 = vmatprep.mubr.bf16.mxu0 0
  %6803 = vmatmul.mubr.bf16.gmra.mrb[0].mxu0 %v3800
  %v6804 = vpop.f32.mrb[0].mxu0
  %v6805 = vadd.f32 0.0, %v6804
  %v6806 = vpop.f32.mrb[0].mxu0
  %v6807 = vpop.f32.mrb[0].mxu0
  %v6808 = vadd.f32 0.0, %v6807
  %v6809 = vpop.f32.mrb[0].mxu0
  %6810 = vmatprep.mubr.bf16.mxu0 0
  %6811 = vmatmul.mubr.bf16.gmra.mrb[0].mxu0 %v3801
  %v6812 = vpop.f32.mrb[0].mxu0
  %v6813 = vadd.f32 0.0, %v6812
  %v6814 = vpop.f32.mrb[0].mxu0
  %v6815 = vpop.f32.mrb[0].mxu0
  %v6816 = vadd.f32 0.0, %v6815
  %v6817 = vpop.f32.mrb[0].mxu0
  %6818 = vmatprep.mubr.bf16.mxu0 0
  %6819 = vmatmul.mubr.bf16.gmra.mrb[0].mxu0 %v3802
  %v6820 = vpop.f32.mrb[0].mxu0
  %v6821 = vadd.f32 0.0, %v6820
  %v6822 = vpop.f32.mrb[0].mxu0
  %v6823 = vpop.f32.mrb[0].mxu0
  %v6824 = vadd.f32 0.0, %v6823
  %v6825 = vpop.f32.mrb[0].mxu0
  %6826 = vmatprep.mubr.bf16.mxu0 0
  %6827 = vmatmul.mubr.bf16.gmra.mrb[0].mxu0 %v3803
  %v6828 = vpop.f32.mrb[0].mxu0
  %v6829 = vadd.f32 0.0, %v6828
  %v6830 = vpop.f32.mrb[0].mxu0
  %v6831 = vpop.f32.mrb[0].mxu0
  %v6832 = vadd.f32 0.0, %v6831
  %v6833 = vpop.f32.mrb[0].mxu0
  %6834 = vmatprep.mubr.bf16.mxu0 0
  %6835 = vmatmul.mubr.bf16.gmra.mrb[0].mxu0 %v3804
  %v6836 = vpop.f32.mrb[0].mxu0
  %v6837 = vadd.f32 0.0, %v6836
  %v6838 = vpop.f32.mrb[0].mxu0
  %v6839 = vpop.f32.mrb[0].mxu0
  %v6840 = vadd.f32 0.0, %v6839
  %v6841 = vpop.f32.mrb[0].mxu0
  %6842 = vmatprep.mubr.bf16.mxu0 0
  %6843 = vmatmul.mubr.bf16.gmra.mrb[0].mxu0 %v3805
  %v6844 = vpop.f32.mrb[0].mxu0
  %v6845 = vadd.f32 0.0, %v6844
  %v6846 = vpop.f32.mrb[0].mxu0
  %v6847 = vpop.f32.mrb[0].mxu0
  %v6848 = vadd.f32 0.0, %v6847
  %v6849 = vpop.f32.mrb[0].mxu0
  %6850 = vmatprep.mubr.bf16.mxu0 0
  %6851 = vmatmul.mubr.bf16.gmra.mrb[0].mxu0 %v3806
  %v6852 = vpop.f32.mrb[0].mxu0
  %v6853 = vadd.f32 0.0, %v6852
  %v6854 = vpop.f32.mrb[0].mxu0
  %v6855 = vpop.f32.mrb[0].mxu0
  %v6856 = vadd.f32 0.0, %v6855
  %v6857 = vpop.f32.mrb[0].mxu0
  %6858 = vmatprep.mubr.bf16.mxu0 0
  %6859 = vmatmul.mubr.bf16.gmra.mrb[0].mxu0 %v3807
  %v6860 = vpop.f32.mrb[0].mxu0
  %v6861 = vadd.f32 0.0, %v6860
  %v6862 = vpop.f32.mrb[0].mxu0
  %v6863 = vpop.f32.mrb[0].mxu0
  %v6864 = vadd.f32 0.0, %v6863
  %v6865 = vpop.f32.mrb[0].mxu0
  %6866 = vmatprep.mubr.bf16.mxu0 0
  %6867 = vmatmul.mubr.bf16.gmra.mrb[0].mxu0 %v3808
  %v6868 = vpop.f32.mrb[0].mxu0
  %v6869 = vadd.f32 0.0, %v6868
  %v6870 = vpop.f32.mrb[0].mxu0
  %v6871 = vpop.f32.mrb[0].mxu0
  %v6872 = vadd.f32 0.0, %v6871
  %v6873 = vpop.f32.mrb[0].mxu0
  %6874 = vmatprep.mubr.bf16.mxu0 0
  %6875 = vmatmul.mubr.bf16.gmra.mrb[0].mxu0 %v3809
  %v6876 = vpop.f32.mrb[0].mxu0
  %v6877 = vadd.f32 0.0, %v6876
  %v6878 = vpop.f32.mrb[0].mxu0
  %v6879 = vpop.f32.mrb[0].mxu0
  %v6880 = vadd.f32 0.0, %v6879
  %v6881 = vpop.f32.mrb[0].mxu0
  %6882 = vdwg.mxu0
  %v6947 = vunpack.c.l.b16 %v6594
  %v6948 = vunpack.c.l.b16 %v6595
  %v6949 = vunpack.c.l.b16 %v6596
  %v6950 = vunpack.c.l.b16 %v6597
  %v6951 = vunpack.c.l.b16 %v6598
  %v6952 = vunpack.c.l.b16 %v6599
  %v6953 = vunpack.c.l.b16 %v6600
  %v6954 = vunpack.c.l.b16 %v6601
  %v6955 = vunpack.c.l.b16 %v6602
  %v6956 = vunpack.c.l.b16 %v6603
  %v6957 = vunpack.c.l.b16 %v6604
  %v6958 = vunpack.c.l.b16 %v6605
  %v6959 = vunpack.c.l.b16 %v6606
  %v6960 = vunpack.c.l.b16 %v6607
  %v6961 = vunpack.c.l.b16 %v6608
  %v6962 = vunpack.c.l.b16 %v6609
  %v6963 = vunpack.c.l.b16 %v6610
  %v6964 = vunpack.c.l.b16 %v6611
  %v6965 = vunpack.c.l.b16 %v6612
  %v6966 = vunpack.c.l.b16 %v6613
  %v6967 = vunpack.c.l.b16 %v6614
  %v6968 = vunpack.c.l.b16 %v6615
  %v6969 = vunpack.c.l.b16 %v6616
  %v6970 = vunpack.c.l.b16 %v6617
  %v6971 = vunpack.c.l.b16 %v6618
  %v6972 = vunpack.c.l.b16 %v6619
  %v6973 = vunpack.c.l.b16 %v6620
  %v6974 = vunpack.c.l.b16 %v6621
  %v6975 = vunpack.c.l.b16 %v6622
  %v6976 = vunpack.c.l.b16 %v6623
  %v6977 = vunpack.c.l.b16 %v6624
  %v6978 = vunpack.c.l.b16 %v6625
  %v6979 = vunpack.c.l.b16 %v6626
  %v6980 = vunpack.c.l.b16 %v6627
  %v6981 = vunpack.c.l.b16 %v6628
  %v6982 = vunpack.c.l.b16 %v6629
  %v6983 = vunpack.c.l.b16 %v6630
  %v6984 = vunpack.c.l.b16 %v6631
  %v6985 = vunpack.c.l.b16 %v6632
  %v6986 = vunpack.c.l.b16 %v6633
  %v6987 = vunpack.c.l.b16 %v6634
  %v6988 = vunpack.c.l.b16 %v6635
  %v6989 = vunpack.c.l.b16 %v6636
  %v6990 = vunpack.c.l.b16 %v6637
  %v6991 = vunpack.c.l.b16 %v6638
  %v6992 = vunpack.c.l.b16 %v6639
  %v6993 = vunpack.c.l.b16 %v6640
  %v6994 = vunpack.c.l.b16 %v6641
  %v6995 = vunpack.c.l.b16 %v6642
  %v6996 = vunpack.c.l.b16 %v6643
  %v6997 = vunpack.c.l.b16 %v6644
  %v6998 = vunpack.c.l.b16 %v6645
  %v6999 = vunpack.c.l.b16 %v6646
  %v7000 = vunpack.c.l.b16 %v6647
  %v7001 = vunpack.c.l.b16 %v6648
  %v7002 = vunpack.c.l.b16 %v6649
  %v7003 = vunpack.c.l.b16 %v6650
  %v7004 = vunpack.c.l.b16 %v6651
  %v7005 = vunpack.c.l.b16 %v6652
  %v7006 = vunpack.c.l.b16 %v6653
  %v7007 = vunpack.c.l.b16 %v6654
  %v7008 = vunpack.c.l.b16 %v6655
  %v7009 = vunpack.c.l.b16 %v6656
  %v7010 = vunpack.c.l.b16 %v6657
  %v7011 = vpack.c.b16 %v6948, %v6947
  %v7012 = vpack.c.b16 %v6950, %v6949
  %v7013 = vpack.c.b16 %v6952, %v6951
  %v7014 = vpack.c.b16 %v6954, %v6953
  %v7015 = vpack.c.b16 %v6956, %v6955
  %v7016 = vpack.c.b16 %v6958, %v6957
  %v7017 = vpack.c.b16 %v6960, %v6959
  %v7018 = vpack.c.b16 %v6962, %v6961
  %v7019 = vpack.c.b16 %v6964, %v6963
  %v7020 = vpack.c.b16 %v6966, %v6965
  %v7021 = vpack.c.b16 %v6968, %v6967
  %v7022 = vpack.c.b16 %v6970, %v6969
  %v7023 = vpack.c.b16 %v6972, %v6971
  %v7024 = vpack.c.b16 %v6974, %v6973
  %v7025 = vpack.c.b16 %v6976, %v6975
  %v7026 = vpack.c.b16 %v6978, %v6977
  %v7027 = vpack.c.b16 %v6980, %v6979
  %v7028 = vpack.c.b16 %v6982, %v6981
  %v7029 = vpack.c.b16 %v6984, %v6983
  %v7030 = vpack.c.b16 %v6986, %v6985
  %v7031 = vpack.c.b16 %v6988, %v6987
  %v7032 = vpack.c.b16 %v6990, %v6989
  %v7033 = vpack.c.b16 %v6992, %v6991
  %v7034 = vpack.c.b16 %v6994, %v6993
  %v7035 = vpack.c.b16 %v6996, %v6995
  %v7036 = vpack.c.b16 %v6998, %v6997
  %v7037 = vpack.c.b16 %v7000, %v6999
  %v7038 = vpack.c.b16 %v7002, %v7001
  %v7039 = vpack.c.b16 %v7004, %v7003
  %v7040 = vpack.c.b16 %v7006, %v7005
  %v7041 = vpack.c.b16 %v7008, %v7007
  %v7042 = vpack.c.b16 %v7010, %v7009
  %7075 = vmatprep.subr.bf16.mxu0 0
  %7076 = vmatpush1.bf16.msra.mxu0 %v7011
  %7077 = vmatprep.subr.bf16.mxu0 0
  %7078 = vmatpush1.bf16.msra.mxu0 %v7012
  %7079 = vmatprep.subr.bf16.mxu0 0
  %7080 = vmatpush1.bf16.msra.mxu0 %v7013
  %7081 = vmatprep.subr.bf16.mxu0 0
  %7082 = vmatpush1.bf16.msra.mxu0 %v7014
  %7083 = vmatprep.subr.bf16.mxu0 0
  %7084 = vmatpush1.bf16.msra.mxu0 %v7015
  %7085 = vmatprep.subr.bf16.mxu0 0
  %7086 = vmatpush1.bf16.msra.mxu0 %v7016
  %7087 = vmatprep.subr.bf16.mxu0 0
  %7088 = vmatpush1.bf16.msra.mxu0 %v7017
  %7089 = vmatprep.subr.bf16.mxu0 0
  %7090 = vmatpush1.bf16.msra.mxu0 %v7018
  %7091 = vmatprep.subr.bf16.mxu0 0
  %7092 = vmatpush1.bf16.msra.mxu0 %v7019
  %7093 = vmatprep.subr.bf16.mxu0 0
  %7094 = vmatpush1.bf16.msra.mxu0 %v7020
  %7095 = vmatprep.subr.bf16.mxu0 0
  %7096 = vmatpush1.bf16.msra.mxu0 %v7021
  %7097 = vmatprep.subr.bf16.mxu0 0
  %7098 = vmatpush1.bf16.msra.mxu0 %v7022
  %7099 = vmatprep.subr.bf16.mxu0 0
  %7100 = vmatpush1.bf16.msra.mxu0 %v7023
  %7101 = vmatprep.subr.bf16.mxu0 0
  %7102 = vmatpush1.bf16.msra.mxu0 %v7024
  %7103 = vmatprep.subr.bf16.mxu0 0
  %7104 = vmatpush1.bf16.msra.mxu0 %v7025
  %7105 = vmatprep.subr.bf16.mxu0 0
  %7106 = vmatpush1.bf16.msra.mxu0 %v7026
  %7107 = vmatprep.mubr.bf16.mxu0 %v3076
  %7108 = vmatmul.mubr.bf16.gmra.mrb[0].mxu0 %v3075
  %v7109 = vpop.f32.mrb[0].mxu0
  %v7110 = vadd.f32 %v6757, %v7109
  %v7111 = vpop.f32.mrb[0].mxu0
  %v7112 = vpop.f32.mrb[0].mxu0
  %v7113 = vadd.f32 %v6760, %v7112
  %v7114 = vpop.f32.mrb[0].mxu0
  %7115 = vmatprep.mubr.bf16.mxu0 %v3092
  %7116 = vmatmul.mubr.bf16.gmra.mrb[0].mxu0 %v3091
  %v7117 = vpop.f32.mrb[0].mxu0
  %v7118 = vadd.f32 %v6765, %v7117
  %v7119 = vpop.f32.mrb[0].mxu0
  %v7120 = vpop.f32.mrb[0].mxu0
  %v7121 = vadd.f32 %v6768, %v7120
  %v7122 = vpop.f32.mrb[0].mxu0
  %7123 = vmatprep.mubr.bf16.mxu0 %v3108
  %7124 = vmatmul.mubr.bf16.gmra.mrb[0].mxu0 %v3107
  %v7125 = vpop.f32.mrb[0].mxu0
  %v7126 = vadd.f32 %v6773, %v7125
  %v7127 = vpop.f32.mrb[0].mxu0
  %v7128 = vpop.f32.mrb[0].mxu0
  %v7129 = vadd.f32 %v6776, %v7128
  %v7130 = vpop.f32.mrb[0].mxu0
  %7131 = vmatprep.mubr.bf16.mxu0 %v3124
  %7132 = vmatmul.mubr.bf16.gmra.mrb[0].mxu0 %v3123
  %v7133 = vpop.f32.mrb[0].mxu0
  %v7134 = vadd.f32 %v6781, %v7133
  %v7135 = vpop.f32.mrb[0].mxu0
  %v7136 = vpop.f32.mrb[0].mxu0
  %v7137 = vadd.f32 %v6784, %v7136
  %v7138 = vpop.f32.mrb[0].mxu0
  %7139 = vmatprep.mubr.bf16.mxu0 %v3140
  %7140 = vmatmul.mubr.bf16.gmra.mrb[0].mxu0 %v3139
  %v7141 = vpop.f32.mrb[0].mxu0
  %v7142 = vadd.f32 %v6789, %v7141
  %v7143 = vpop.f32.mrb[0].mxu0
  %v7144 = vpop.f32.mrb[0].mxu0
  %v7145 = vadd.f32 %v6792, %v7144
  %v7146 = vpop.f32.mrb[0].mxu0
  %7147 = vmatprep.mubr.bf16.mxu0 %v3156
  %7148 = vmatmul.mubr.bf16.gmra.mrb[0].mxu0 %v3155
  %v7149 = vpop.f32.mrb[0].mxu0
  %v7150 = vadd.f32 %v6797, %v7149
  %v7151 = vpop.f32.mrb[0].mxu0
  %v7152 = vpop.f32.mrb[0].mxu0
  %v7153 = vadd.f32 %v6800, %v7152
  %v7154 = vpop.f32.mrb[0].mxu0
  %7155 = vmatprep.mubr.bf16.mxu0 %v3172
  %7156 = vmatmul.mubr.bf16.gmra.mrb[0].mxu0 %v3171
  %v7157 = vpop.f32.mrb[0].mxu0
  %v7158 = vadd.f32 %v6805, %v7157
  %v7159 = vpop.f32.mrb[0].mxu0
  %v7160 = vpop.f32.mrb[0].mxu0
  %v7161 = vadd.f32 %v6808, %v7160
  %v7162 = vpop.f32.mrb[0].mxu0
  %7163 = vmatprep.mubr.bf16.mxu0 %v3188
  %7164 = vmatmul.mubr.bf16.gmra.mrb[0].mxu0 %v3187
  %v7165 = vpop.f32.mrb[0].mxu0
  %v7166 = vadd.f32 %v6813, %v7165
  %v7167 = vpop.f32.mrb[0].mxu0
  %v7168 = vpop.f32.mrb[0].mxu0
  %v7169 = vadd.f32 %v6816, %v7168
  %v7170 = vpop.f32.mrb[0].mxu0
  %7171 = vmatprep.mubr.bf16.mxu0 %v3204
  %7172 = vmatmul.mubr.bf16.gmra.mrb[0].mxu0 %v3203
  %v7173 = vpop.f32.mrb[0].mxu0
  %v7174 = vadd.f32 %v6821, %v7173
  %v7175 = vpop.f32.mrb[0].mxu0
  %v7176 = vpop.f32.mrb[0].mxu0
  %v7177 = vadd.f32 %v6824, %v7176
  %v7178 = vpop.f32.mrb[0].mxu0
  %7179 = vmatprep.mubr.bf16.mxu0 %v3220
  %7180 = vmatmul.mubr.bf16.gmra.mrb[0].mxu0 %v3219
  %v7181 = vpop.f32.mrb[0].mxu0
  %v7182 = vadd.f32 %v6829, %v7181
  %v7183 = vpop.f32.mrb[0].mxu0
  %v7184 = vpop.f32.mrb[0].mxu0
  %v7185 = vadd.f32 %v6832, %v7184
  %v7186 = vpop.f32.mrb[0].mxu0
  %7187 = vmatprep.mubr.bf16.mxu0 %v3236
  %7188 = vmatmul.mubr.bf16.gmra.mrb[0].mxu0 %v3235
  %v7189 = vpop.f32.mrb[0].mxu0
  %v7190 = vadd.f32 %v6837, %v7189
  %v7191 = vpop.f32.mrb[0].mxu0
  %v7192 = vpop.f32.mrb[0].mxu0
  %v7193 = vadd.f32 %v6840, %v7192
  %v7194 = vpop.f32.mrb[0].mxu0
  %7195 = vmatprep.mubr.bf16.mxu0 %v3252
  %7196 = vmatmul.mubr.bf16.gmra.mrb[0].mxu0 %v3251
  %v7197 = vpop.f32.mrb[0].mxu0
  %v7198 = vadd.f32 %v6845, %v7197
  %v7199 = vpop.f32.mrb[0].mxu0
  %v7200 = vpop.f32.mrb[0].mxu0
  %v7201 = vadd.f32 %v6848, %v7200
  %v7202 = vpop.f32.mrb[0].mxu0
  %7203 = vmatprep.mubr.bf16.mxu0 %v3268
  %7204 = vmatmul.mubr.bf16.gmra.mrb[0].mxu0 %v3267
  %v7205 = vpop.f32.mrb[0].mxu0
  %v7206 = vadd.f32 %v6853, %v7205
  %v7207 = vpop.f32.mrb[0].mxu0
  %v7208 = vpop.f32.mrb[0].mxu0
  %v7209 = vadd.f32 %v6856, %v7208
  %v7210 = vpop.f32.mrb[0].mxu0
  %7211 = vmatprep.mubr.bf16.mxu0 %v3284
  %7212 = vmatmul.mubr.bf16.gmra.mrb[0].mxu0 %v3283
  %v7213 = vpop.f32.mrb[0].mxu0
  %v7214 = vadd.f32 %v6861, %v7213
  %v7215 = vpop.f32.mrb[0].mxu0
  %v7216 = vpop.f32.mrb[0].mxu0
  %v7217 = vadd.f32 %v6864, %v7216
  %v7218 = vpop.f32.mrb[0].mxu0
  %7219 = vmatprep.mubr.bf16.mxu0 %v3300
  %7220 = vmatmul.mubr.bf16.gmra.mrb[0].mxu0 %v3299
  %v7221 = vpop.f32.mrb[0].mxu0
  %v7222 = vadd.f32 %v6869, %v7221
  %v7223 = vpop.f32.mrb[0].mxu0
  %v7224 = vpop.f32.mrb[0].mxu0
  %v7225 = vadd.f32 %v6872, %v7224
  %v7226 = vpop.f32.mrb[0].mxu0
  %7227 = vmatprep.mubr.bf16.mxu0 %v3316
  %7228 = vmatmul.mubr.bf16.gmra.mrb[0].mxu0 %v3315
  %v7229 = vpop.f32.mrb[0].mxu0
  %v7230 = vadd.f32 %v6877, %v7229
  %v7231 = vpop.f32.mrb[0].mxu0
  %v7232 = vpop.f32.mrb[0].mxu0
  %v7233 = vadd.f32 %v6880, %v7232
  %v7234 = vpop.f32.mrb[0].mxu0
  %7235 = vdwg.mxu0
  %7236 = vmatprep.subr.bf16.mxu0 0
  %7237 = vmatpush1.bf16.msra.mxu0 %v7027
  %7238 = vmatprep.subr.bf16.mxu0 0
  %7239 = vmatpush1.bf16.msra.mxu0 %v7028
  %7240 = vmatprep.subr.bf16.mxu0 0
  %7241 = vmatpush1.bf16.msra.mxu0 %v7029
  %7242 = vmatprep.subr.bf16.mxu0 0
  %7243 = vmatpush1.bf16.msra.mxu0 %v7030
  %7244 = vmatprep.subr.bf16.mxu0 0
  %7245 = vmatpush1.bf16.msra.mxu0 %v7031
  %7246 = vmatprep.subr.bf16.mxu0 0
  %7247 = vmatpush1.bf16.msra.mxu0 %v7032
  %7248 = vmatprep.subr.bf16.mxu0 0
  %7249 = vmatpush1.bf16.msra.mxu0 %v7033
  %7250 = vmatprep.subr.bf16.mxu0 0
  %7251 = vmatpush1.bf16.msra.mxu0 %v7034
  %7252 = vmatprep.subr.bf16.mxu0 0
  %7253 = vmatpush1.bf16.msra.mxu0 %v7035
  %7254 = vmatprep.subr.bf16.mxu0 0
  %7255 = vmatpush1.bf16.msra.mxu0 %v7036
  %7256 = vmatprep.subr.bf16.mxu0 0
  %7257 = vmatpush1.bf16.msra.mxu0 %v7037
  %7258 = vmatprep.subr.bf16.mxu0 0
  %7259 = vmatpush1.bf16.msra.mxu0 %v7038
  %7260 = vmatprep.subr.bf16.mxu0 0
  %7261 = vmatpush1.bf16.msra.mxu0 %v7039
  %7262 = vmatprep.subr.bf16.mxu0 0
  %7263 = vmatpush1.bf16.msra.mxu0 %v7040
  %7264 = vmatprep.subr.bf16.mxu0 0
  %7265 = vmatpush1.bf16.msra.mxu0 %v7041
  %7266 = vmatprep.subr.bf16.mxu0 0
  %7267 = vmatpush1.bf16.msra.mxu0 %v7042
  %7268 = vmatprep.mubr.bf16.mxu0 %v3078
  %7269 = vmatmul.mubr.bf16.gmra.mrb[0].mxu0 %v3077
  %v7270 = vpop.f32.mrb[0].mxu0
  %v7271 = vadd.f32 %v7110, %v7270
  %v7272 = vpop.f32.mrb[0].mxu0
  %v7273 = vpop.f32.mrb[0].mxu0
  %v7274 = vadd.f32 %v7113, %v7273
  %v7275 = vpop.f32.mrb[0].mxu0
  %7276 = vmatprep.mubr.bf16.mxu0 %v3094
  %7277 = vmatmul.mubr.bf16.gmra.mrb[0].mxu0 %v3093
  %v7278 = vpop.f32.mrb[0].mxu0
  %v7279 = vadd.f32 %v7118, %v7278
  %v7280 = vpop.f32.mrb[0].mxu0
  %v7281 = vpop.f32.mrb[0].mxu0
  %v7282 = vadd.f32 %v7121, %v7281
  %v7283 = vpop.f32.mrb[0].mxu0
  %7284 = vmatprep.mubr.bf16.mxu0 %v3110
  %7285 = vmatmul.mubr.bf16.gmra.mrb[0].mxu0 %v3109
  %v7286 = vpop.f32.mrb[0].mxu0
  %v7287 = vadd.f32 %v7126, %v7286
  %v7288 = vpop.f32.mrb[0].mxu0
  %v7289 = vpop.f32.mrb[0].mxu0
  %v7290 = vadd.f32 %v7129, %v7289
  %v7291 = vpop.f32.mrb[0].mxu0
  %7292 = vmatprep.mubr.bf16.mxu0 %v3126
  %7293 = vmatmul.mubr.bf16.gmra.mrb[0].mxu0 %v3125
  %v7294 = vpop.f32.mrb[0].mxu0
  %v7295 = vadd.f32 %v7134, %v7294
  %v7296 = vpop.f32.mrb[0].mxu0
  %v7297 = vpop.f32.mrb[0].mxu0
  %v7298 = vadd.f32 %v7137, %v7297
  %v7299 = vpop.f32.mrb[0].mxu0
  %7300 = vmatprep.mubr.bf16.mxu0 %v3142
  %7301 = vmatmul.mubr.bf16.gmra.mrb[0].mxu0 %v3141
  %v7302 = vpop.f32.mrb[0].mxu0
  %v7303 = vadd.f32 %v7142, %v7302
  %v7304 = vpop.f32.mrb[0].mxu0
  %v7305 = vpop.f32.mrb[0].mxu0
  %v7306 = vadd.f32 %v7145, %v7305
  %v7307 = vpop.f32.mrb[0].mxu0
  %7308 = vmatprep.mubr.bf16.mxu0 %v3158
  %7309 = vmatmul.mubr.bf16.gmra.mrb[0].mxu0 %v3157
  %v7310 = vpop.f32.mrb[0].mxu0
  %v7311 = vadd.f32 %v7150, %v7310
  %v7312 = vpop.f32.mrb[0].mxu0
  %v7313 = vpop.f32.mrb[0].mxu0
  %v7314 = vadd.f32 %v7153, %v7313
  %v7315 = vpop.f32.mrb[0].mxu0
  %7316 = vmatprep.mubr.bf16.mxu0 %v3174
  %7317 = vmatmul.mubr.bf16.gmra.mrb[0].mxu0 %v3173
  %v7318 = vpop.f32.mrb[0].mxu0
  %v7319 = vadd.f32 %v7158, %v7318
  %v7320 = vpop.f32.mrb[0].mxu0
  %v7321 = vpop.f32.mrb[0].mxu0
  %v7322 = vadd.f32 %v7161, %v7321
  %v7323 = vpop.f32.mrb[0].mxu0
  %7324 = vmatprep.mubr.bf16.mxu0 %v3190
  %7325 = vmatmul.mubr.bf16.gmra.mrb[0].mxu0 %v3189
  %v7326 = vpop.f32.mrb[0].mxu0
  %v7327 = vadd.f32 %v7166, %v7326
  %v7328 = vpop.f32.mrb[0].mxu0
  %v7329 = vpop.f32.mrb[0].mxu0
  %v7330 = vadd.f32 %v7169, %v7329
  %v7331 = vpop.f32.mrb[0].mxu0
  %7332 = vmatprep.mubr.bf16.mxu0 %v3206
  %7333 = vmatmul.mubr.bf16.gmra.mrb[0].mxu0 %v3205
  %v7334 = vpop.f32.mrb[0].mxu0
  %v7335 = vadd.f32 %v7174, %v7334
  %v7336 = vpop.f32.mrb[0].mxu0
  %v7337 = vpop.f32.mrb[0].mxu0
  %v7338 = vadd.f32 %v7177, %v7337
  %v7339 = vpop.f32.mrb[0].mxu0
  %7340 = vmatprep.mubr.bf16.mxu0 %v3222
  %7341 = vmatmul.mubr.bf16.gmra.mrb[0].mxu0 %v3221
  %v7342 = vpop.f32.mrb[0].mxu0
  %v7343 = vadd.f32 %v7182, %v7342
  %v7344 = vpop.f32.mrb[0].mxu0
  %v7345 = vpop.f32.mrb[0].mxu0
  %v7346 = vadd.f32 %v7185, %v7345
  %v7347 = vpop.f32.mrb[0].mxu0
  %7348 = vmatprep.mubr.bf16.mxu0 %v3238
  %7349 = vmatmul.mubr.bf16.gmra.mrb[0].mxu0 %v3237
  %v7350 = vpop.f32.mrb[0].mxu0
  %v7351 = vadd.f32 %v7190, %v7350
  %v7352 = vpop.f32.mrb[0].mxu0
  %v7353 = vpop.f32.mrb[0].mxu0
  %v7354 = vadd.f32 %v7193, %v7353
  %v7355 = vpop.f32.mrb[0].mxu0
  %7356 = vmatprep.mubr.bf16.mxu0 %v3254
  %7357 = vmatmul.mubr.bf16.gmra.mrb[0].mxu0 %v3253
  %v7358 = vpop.f32.mrb[0].mxu0
  %v7359 = vadd.f32 %v7198, %v7358
  %v7360 = vpop.f32.mrb[0].mxu0
  %v7361 = vpop.f32.mrb[0].mxu0
  %v7362 = vadd.f32 %v7201, %v7361
  %v7363 = vpop.f32.mrb[0].mxu0
  %7364 = vmatprep.mubr.bf16.mxu0 %v3270
  %7365 = vmatmul.mubr.bf16.gmra.mrb[0].mxu0 %v3269
  %v7366 = vpop.f32.mrb[0].mxu0
  %v7367 = vadd.f32 %v7206, %v7366
  %v7368 = vpop.f32.mrb[0].mxu0
  %v7369 = vpop.f32.mrb[0].mxu0
  %v7370 = vadd.f32 %v7209, %v7369
  %v7371 = vpop.f32.mrb[0].mxu0
  %7372 = vmatprep.mubr.bf16.mxu0 %v3286
  %7373 = vmatmul.mubr.bf16.gmra.mrb[0].mxu0 %v3285
  %v7374 = vpop.f32.mrb[0].mxu0
  %v7375 = vadd.f32 %v7214, %v7374
  %v7376 = vpop.f32.mrb[0].mxu0
  %v7377 = vpop.f32.mrb[0].mxu0
  %v7378 = vadd.f32 %v7217, %v7377
  %v7379 = vpop.f32.mrb[0].mxu0
  %7380 = vmatprep.mubr.bf16.mxu0 %v3302
  %7381 = vmatmul.mubr.bf16.gmra.mrb[0].mxu0 %v3301
  %v7382 = vpop.f32.mrb[0].mxu0
  %v7383 = vadd.f32 %v7222, %v7382
  %v7384 = vpop.f32.mrb[0].mxu0
  %v7385 = vpop.f32.mrb[0].mxu0
  %v7386 = vadd.f32 %v7225, %v7385
  %v7387 = vpop.f32.mrb[0].mxu0
  %7388 = vmatprep.mubr.bf16.mxu0 %v3318
  %7389 = vmatmul.mubr.bf16.gmra.mrb[0].mxu0 %v3317
  %v7390 = vpop.f32.mrb[0].mxu0
  %v7391 = vadd.f32 %v7230, %v7390
  %v7392 = vpop.f32.mrb[0].mxu0
  %v7393 = vpop.f32.mrb[0].mxu0
  %v7394 = vadd.f32 %v7233, %v7393
  %v7395 = vpop.f32.mrb[0].mxu0
  %7396 = vdwg.mxu0
  %v7397 = vld [vmem:[%s9] sm:$0x1]
  %v7399 = vlaneseq
  %v7400 = vshrl.u32 %v7399, 7
  %v7401 = vsub.s32 0, %v7400
  %v7402 = vrot.slane %v7397, %v7401
  %v7404 = vadd.f32 %v7271, %v7402
  %v7405 = vadd.f32 %v7274, %v7402
  %v7406 = vadd.f32 %v7279, %v7402
  %v7407 = vadd.f32 %v7282, %v7402
  %v7408 = vadd.f32 %v7287, %v7402
  %v7409 = vadd.f32 %v7290, %v7402
  %v7410 = vadd.f32 %v7295, %v7402
  %v7411 = vadd.f32 %v7298, %v7402
  %v7412 = vadd.f32 %v7303, %v7402
  %v7413 = vadd.f32 %v7306, %v7402
  %v7414 = vadd.f32 %v7311, %v7402
  %v7415 = vadd.f32 %v7314, %v7402
  %v7416 = vadd.f32 %v7319, %v7402
  %v7417 = vadd.f32 %v7322, %v7402
  %v7418 = vadd.f32 %v7327, %v7402
  %v7419 = vadd.f32 %v7330, %v7402
  %v7420 = vadd.f32 %v7335, %v7402
  %v7421 = vadd.f32 %v7338, %v7402
  %v7422 = vadd.f32 %v7343, %v7402
  %v7423 = vadd.f32 %v7346, %v7402
  %v7424 = vadd.f32 %v7351, %v7402
  %v7425 = vadd.f32 %v7354, %v7402
  %v7426 = vadd.f32 %v7359, %v7402
  %v7427 = vadd.f32 %v7362, %v7402
  %v7428 = vadd.f32 %v7367, %v7402
  %v7429 = vadd.f32 %v7370, %v7402
  %v7430 = vadd.f32 %v7375, %v7402
  %v7431 = vadd.f32 %v7378, %v7402
  %v7432 = vadd.f32 %v7383, %v7402
  %v7433 = vadd.f32 %v7386, %v7402
  %v7434 = vadd.f32 %v7391, %v7402
  %v7435 = vadd.f32 %v7394, %v7402
  %v7436 = vmax.f32 %v7404, 0.0
  %v7437 = vmax.f32 %v7405, 0.0
  %v7438 = vmax.f32 %v7406, 0.0
  %v7439 = vmax.f32 %v7407, 0.0
  %v7440 = vmax.f32 %v7408, 0.0
  %v7441 = vmax.f32 %v7409, 0.0
  %v7442 = vmax.f32 %v7410, 0.0
  %v7443 = vmax.f32 %v7411, 0.0
  %v7444 = vmax.f32 %v7412, 0.0
  %v7445 = vmax.f32 %v7413, 0.0
  %v7446 = vmax.f32 %v7414, 0.0
  %v7447 = vmax.f32 %v7415, 0.0
  %v7448 = vmax.f32 %v7416, 0.0
  %v7449 = vmax.f32 %v7417, 0.0
  %v7450 = vmax.f32 %v7418, 0.0
  %v7451 = vmax.f32 %v7419, 0.0
  %v7452 = vmax.f32 %v7420, 0.0
  %v7453 = vmax.f32 %v7421, 0.0
  %v7454 = vmax.f32 %v7422, 0.0
  %v7455 = vmax.f32 %v7423, 0.0
  %v7456 = vmax.f32 %v7424, 0.0
  %v7457 = vmax.f32 %v7425, 0.0
  %v7458 = vmax.f32 %v7426, 0.0
  %v7459 = vmax.f32 %v7427, 0.0
  %v7460 = vmax.f32 %v7428, 0.0
  %v7461 = vmax.f32 %v7429, 0.0
  %v7462 = vmax.f32 %v7430, 0.0
  %v7463 = vmax.f32 %v7431, 0.0
  %v7464 = vmax.f32 %v7432, 0.0
  %v7465 = vmax.f32 %v7433, 0.0
  %v7466 = vmax.f32 %v7434, 0.0
  %v7467 = vmax.f32 %v7435, 0.0
  %v7468 = vpack.c.bf16 %v7437, %v7436
  %v7469 = vpack.c.bf16 %v7439, %v7438
  %v7470 = vpack.c.bf16 %v7441, %v7440
  %v7471 = vpack.c.bf16 %v7443, %v7442
  %v7472 = vpack.c.bf16 %v7445, %v7444
  %v7473 = vpack.c.bf16 %v7447, %v7446
  %v7474 = vpack.c.bf16 %v7449, %v7448
  %v7475 = vpack.c.bf16 %v7451, %v7450
  %v7476 = vpack.c.bf16 %v7453, %v7452
  %v7477 = vpack.c.bf16 %v7455, %v7454
  %v7478 = vpack.c.bf16 %v7457, %v7456
  %v7479 = vpack.c.bf16 %v7459, %v7458
  %v7480 = vpack.c.bf16 %v7461, %v7460
  %v7481 = vpack.c.bf16 %v7463, %v7462
  %v7482 = vpack.c.bf16 %v7465, %v7464
  %v7483 = vpack.c.bf16 %v7467, %v7466
  %v7484 = vld [vmem:[%s12] sm:$0xf]
  %v7485 = vld [vmem:[%s12 + $0x4] sm:$0xf]
  %v7486 = vld [vmem:[%s12 + $0x8] sm:$0xf]
  %v7487 = vld [vmem:[%s12 + $0xc] sm:$0xf]
  %v7488 = vld [vmem:[%s12 + $0x10] sm:$0xf]
  %v7489 = vld [vmem:[%s12 + $0x14] sm:$0xf]
  %v7490 = vld [vmem:[%s12 + $0x18] sm:$0xf]
  %v7491 = vld [vmem:[%s12 + $0x1c] sm:$0xf]
  %v7492 = vld [vmem:[%s13] sm:$0x1]
  %v7494 = vlaneseq
  %v7495 = vshrl.u32 %v7494, 7
  %v7496 = vsub.s32 0, %v7495
  %v7497 = vrot.slane %v7492, %v7496
  %v7507 = vunpack.c.l.b16 %v7484
  %v7508 = vunpack.c.l.b16 %v7485
  %v7509 = vunpack.c.l.b16 %v7486
  %v7510 = vunpack.c.l.b16 %v7487
  %v7511 = vunpack.c.l.b16 %v7488
  %v7512 = vunpack.c.l.b16 %v7489
  %v7513 = vunpack.c.l.b16 %v7490
  %v7514 = vunpack.c.l.b16 %v7491
  %v7515 = vpack.c.b16 %v7508, %v7507
  %v7516 = vpack.c.b16 %v7510, %v7509
  %v7517 = vpack.c.b16 %v7512, %v7511
  %v7518 = vpack.c.b16 %v7514, %v7513
  %v7524 = vsel %vm6217, %v7468, 0
  %v7527 = vsel %vm6217, %v7469, 0
  %v7530 = vsel %vm6217, %v7470, 0
  %v7533 = vsel %vm6217, %v7471, 0
  %v7536 = vsel %vm6217, %v7472, 0
  %v7539 = vsel %vm6217, %v7473, 0
  %v7542 = vsel %vm6217, %v7474, 0
  %v7545 = vsel %vm6217, %v7475, 0
  %v7548 = vsel %vm6217, %v7476, 0
  %v7551 = vsel %vm6217, %v7477, 0
  %v7554 = vsel %vm6217, %v7478, 0
  %v7557 = vsel %vm6217, %v7479, 0
  %v7560 = vsel %vm6217, %v7480, 0
  %v7563 = vsel %vm6217, %v7481, 0
  %v7566 = vsel %vm6217, %v7482, 0
  %v7569 = vsel %vm6217, %v7483, 0
  %7571 = vmatprep.subr.bf16.mxu0 0
  %7572 = vmatpush1.bf16.msra.mxu0 %v7515
  %7573 = vmatprep.subr.bf16.mxu0 0
  %7574 = vmatpush1.bf16.msra.mxu0 %v7516
  %7575 = vmatprep.subr.bf16.mxu0 0
  %7576 = vmatpush1.bf16.msra.mxu0 %v7517
  %7577 = vmatprep.subr.bf16.mxu0 0
  %7578 = vmatpush1.bf16.msra.mxu0 %v7518
  %7579 = vmatprep.subr.bf16.mxu0 0
  %7580 = vmatpush1.bf16.msra.mxu0 0
  %7581 = vmatprep.subr.bf16.mxu0 0
  %7582 = vmatpush1.bf16.msra.mxu0 0
  %7583 = vmatprep.subr.bf16.mxu0 0
  %7584 = vmatpush1.bf16.msra.mxu0 0
  %7585 = vmatprep.subr.bf16.mxu0 0
  %7586 = vmatpush1.bf16.msra.mxu0 0
  %7587 = vmatprep.subr.bf16.mxu0 0
  %7588 = vmatpush1.bf16.msra.mxu0 0
  %7589 = vmatprep.subr.bf16.mxu0 0
  %7590 = vmatpush1.bf16.msra.mxu0 0
  %7591 = vmatprep.subr.bf16.mxu0 0
  %7592 = vmatpush1.bf16.msra.mxu0 0
  %7593 = vmatprep.subr.bf16.mxu0 0
  %7594 = vmatpush1.bf16.msra.mxu0 0
  %7595 = vmatprep.subr.bf16.mxu0 0
  %7596 = vmatpush1.bf16.msra.mxu0 0
  %7597 = vmatprep.subr.bf16.mxu0 0
  %7598 = vmatpush1.bf16.msra.mxu0 0
  %7599 = vmatprep.subr.bf16.mxu0 0
  %7600 = vmatpush1.bf16.msra.mxu0 0
  %7601 = vmatprep.subr.bf16.mxu0 0
  %7602 = vmatpush1.bf16.msra.mxu0 0
  %7603 = vmatprep.mubr.bf16.mxu0 0
  %7604 = vmatmul.mubr.bf16.gmra.mrb[0].mxu0 %v7524
  %v7605 = vpop.f32.mrb[0].mxu0
  %v7606 = vadd.f32 %v7497, %v7605
  %v7607 = vpop.f32.mrb[0].mxu0
  %v7608 = vpop.f32.mrb[0].mxu0
  %v7609 = vadd.f32 %v7497, %v7608
  %v7610 = vpop.f32.mrb[0].mxu0
  %7611 = vmatprep.mubr.bf16.mxu0 0
  %7612 = vmatmul.mubr.bf16.gmra.mrb[0].mxu0 %v7527
  %v7613 = vpop.f32.mrb[0].mxu0
  %v7614 = vadd.f32 %v7497, %v7613
  %v7615 = vpop.f32.mrb[0].mxu0
  %v7616 = vpop.f32.mrb[0].mxu0
  %v7617 = vadd.f32 %v7497, %v7616
  %v7618 = vpop.f32.mrb[0].mxu0
  %7619 = vmatprep.mubr.bf16.mxu0 0
  %7620 = vmatmul.mubr.bf16.gmra.mrb[0].mxu0 %v7530
  %v7621 = vpop.f32.mrb[0].mxu0
  %v7622 = vadd.f32 %v7497, %v7621
  %v7623 = vpop.f32.mrb[0].mxu0
  %v7624 = vpop.f32.mrb[0].mxu0
  %v7625 = vadd.f32 %v7497, %v7624
  %v7626 = vpop.f32.mrb[0].mxu0
  %7627 = vmatprep.mubr.bf16.mxu0 0
  %7628 = vmatmul.mubr.bf16.gmra.mrb[0].mxu0 %v7533
  %v7629 = vpop.f32.mrb[0].mxu0
  %v7630 = vadd.f32 %v7497, %v7629
  %v7631 = vpop.f32.mrb[0].mxu0
  %v7632 = vpop.f32.mrb[0].mxu0
  %v7633 = vadd.f32 %v7497, %v7632
  %v7634 = vpop.f32.mrb[0].mxu0
  %7635 = vmatprep.mubr.bf16.mxu0 0
  %7636 = vmatmul.mubr.bf16.gmra.mrb[0].mxu0 %v7536
  %v7637 = vpop.f32.mrb[0].mxu0
  %v7638 = vadd.f32 %v7497, %v7637
  %v7639 = vpop.f32.mrb[0].mxu0
  %v7640 = vpop.f32.mrb[0].mxu0
  %v7641 = vadd.f32 %v7497, %v7640
  %v7642 = vpop.f32.mrb[0].mxu0
  %7643 = vmatprep.mubr.bf16.mxu0 0
  %7644 = vmatmul.mubr.bf16.gmra.mrb[0].mxu0 %v7539
  %v7645 = vpop.f32.mrb[0].mxu0
  %v7646 = vadd.f32 %v7497, %v7645
  %v7647 = vpop.f32.mrb[0].mxu0
  %v7648 = vpop.f32.mrb[0].mxu0
  %v7649 = vadd.f32 %v7497, %v7648
  %v7650 = vpop.f32.mrb[0].mxu0
  %7651 = vmatprep.mubr.bf16.mxu0 0
  %7652 = vmatmul.mubr.bf16.gmra.mrb[0].mxu0 %v7542
  %v7653 = vpop.f32.mrb[0].mxu0
  %v7654 = vadd.f32 %v7497, %v7653
  %v7655 = vpop.f32.mrb[0].mxu0
  %v7656 = vpop.f32.mrb[0].mxu0
  %v7657 = vadd.f32 %v7497, %v7656
  %v7658 = vpop.f32.mrb[0].mxu0
  %7659 = vmatprep.mubr.bf16.mxu0 0
  %7660 = vmatmul.mubr.bf16.gmra.mrb[0].mxu0 %v7545
  %v7661 = vpop.f32.mrb[0].mxu0
  %v7662 = vadd.f32 %v7497, %v7661
  %v7663 = vpop.f32.mrb[0].mxu0
  %v7664 = vpop.f32.mrb[0].mxu0
  %v7665 = vadd.f32 %v7497, %v7664
  %v7666 = vpop.f32.mrb[0].mxu0
  %7667 = vmatprep.mubr.bf16.mxu0 0
  %7668 = vmatmul.mubr.bf16.gmra.mrb[0].mxu0 %v7548
  %v7669 = vpop.f32.mrb[0].mxu0
  %v7670 = vadd.f32 %v7497, %v7669
  %v7671 = vpop.f32.mrb[0].mxu0
  %v7672 = vpop.f32.mrb[0].mxu0
  %v7673 = vadd.f32 %v7497, %v7672
  %v7674 = vpop.f32.mrb[0].mxu0
  %7675 = vmatprep.mubr.bf16.mxu0 0
  %7676 = vmatmul.mubr.bf16.gmra.mrb[0].mxu0 %v7551
  %v7677 = vpop.f32.mrb[0].mxu0
  %v7678 = vadd.f32 %v7497, %v7677
  %v7679 = vpop.f32.mrb[0].mxu0
  %v7680 = vpop.f32.mrb[0].mxu0
  %v7681 = vadd.f32 %v7497, %v7680
  %v7682 = vpop.f32.mrb[0].mxu0
  %7683 = vmatprep.mubr.bf16.mxu0 0
  %7684 = vmatmul.mubr.bf16.gmra.mrb[0].mxu0 %v7554
  %v7685 = vpop.f32.mrb[0].mxu0
  %v7686 = vadd.f32 %v7497, %v7685
  %v7687 = vpop.f32.mrb[0].mxu0
  %v7688 = vpop.f32.mrb[0].mxu0
  %v7689 = vadd.f32 %v7497, %v7688
  %v7690 = vpop.f32.mrb[0].mxu0
  %7691 = vmatprep.mubr.bf16.mxu0 0
  %7692 = vmatmul.mubr.bf16.gmra.mrb[0].mxu0 %v7557
  %v7693 = vpop.f32.mrb[0].mxu0
  %v7694 = vadd.f32 %v7497, %v7693
  %v7695 = vpop.f32.mrb[0].mxu0
  %v7696 = vpop.f32.mrb[0].mxu0
  %v7697 = vadd.f32 %v7497, %v7696
  %v7698 = vpop.f32.mrb[0].mxu0
  %7699 = vmatprep.mubr.bf16.mxu0 0
  %7700 = vmatmul.mubr.bf16.gmra.mrb[0].mxu0 %v7560
  %v7701 = vpop.f32.mrb[0].mxu0
  %v7702 = vadd.f32 %v7497, %v7701
  %v7703 = vpop.f32.mrb[0].mxu0
  %v7704 = vpop.f32.mrb[0].mxu0
  %v7705 = vadd.f32 %v7497, %v7704
  %v7706 = vpop.f32.mrb[0].mxu0
  %7707 = vmatprep.mubr.bf16.mxu0 0
  %7708 = vmatmul.mubr.bf16.gmra.mrb[0].mxu0 %v7563
  %v7709 = vpop.f32.mrb[0].mxu0
  %v7710 = vadd.f32 %v7497, %v7709
  %v7711 = vpop.f32.mrb[0].mxu0
  %v7712 = vpop.f32.mrb[0].mxu0
  %v7713 = vadd.f32 %v7497, %v7712
  %v7714 = vpop.f32.mrb[0].mxu0
  %7715 = vmatprep.mubr.bf16.mxu0 0
  %7716 = vmatmul.mubr.bf16.gmra.mrb[0].mxu0 %v7566
  %v7717 = vpop.f32.mrb[0].mxu0
  %v7718 = vadd.f32 %v7497, %v7717
  %v7719 = vpop.f32.mrb[0].mxu0
  %v7720 = vpop.f32.mrb[0].mxu0
  %v7721 = vadd.f32 %v7497, %v7720
  %v7722 = vpop.f32.mrb[0].mxu0
  %7723 = vmatprep.mubr.bf16.mxu0 0
  %7724 = vmatmul.mubr.bf16.gmra.mrb[0].mxu0 %v7569
  %v7725 = vpop.f32.mrb[0].mxu0
  %v7726 = vadd.f32 %v7497, %v7725
  %v7727 = vpop.f32.mrb[0].mxu0
  %v7728 = vpop.f32.mrb[0].mxu0
  %v7729 = vadd.f32 %v7497, %v7728
  %v7730 = vpop.f32.mrb[0].mxu0
  %7731 = vdwg.mxu0
  %v7732 = vmax.f32 %v7606, 0.0
  %v7733 = vmax.f32 %v7609, 0.0
  %v7734 = vmax.f32 %v7614, 0.0
  %v7735 = vmax.f32 %v7617, 0.0
  %v7736 = vmax.f32 %v7622, 0.0
  %v7737 = vmax.f32 %v7625, 0.0
  %v7738 = vmax.f32 %v7630, 0.0
  %v7739 = vmax.f32 %v7633, 0.0
  %v7740 = vmax.f32 %v7638, 0.0
  %v7741 = vmax.f32 %v7641, 0.0
  %v7742 = vmax.f32 %v7646, 0.0
  %v7743 = vmax.f32 %v7649, 0.0
  %v7744 = vmax.f32 %v7654, 0.0
  %v7745 = vmax.f32 %v7657, 0.0
  %v7746 = vmax.f32 %v7662, 0.0
  %v7747 = vmax.f32 %v7665, 0.0
  %v7748 = vmax.f32 %v7670, 0.0
  %v7749 = vmax.f32 %v7673, 0.0
  %v7750 = vmax.f32 %v7678, 0.0
  %v7751 = vmax.f32 %v7681, 0.0
  %v7752 = vmax.f32 %v7686, 0.0
  %v7753 = vmax.f32 %v7689, 0.0
  %v7754 = vmax.f32 %v7694, 0.0
  %v7755 = vmax.f32 %v7697, 0.0
  %v7756 = vmax.f32 %v7702, 0.0
  %v7757 = vmax.f32 %v7705, 0.0
  %v7758 = vmax.f32 %v7710, 0.0
  %v7759 = vmax.f32 %v7713, 0.0
  %v7760 = vmax.f32 %v7718, 0.0
  %v7761 = vmax.f32 %v7721, 0.0
  %v7762 = vmax.f32 %v7726, 0.0
  %v7763 = vmax.f32 %v7729, 0.0
  %v7764 = vld [vmem:[%s16] sm:$0x1]
  %v7766 = vlaneseq
  %v7767 = vshrl.u32 %v7766, 7
  %v7768 = vsub.s32 0, %v7767
  %v7769 = vrot.slane %v7764, %v7768
  %v7771 = vmul.f32 %v7732, %v7769
  %v7772 = vmul.f32 %v7733, %v7769
  %v7773 = vmul.f32 %v7734, %v7769
  %v7774 = vmul.f32 %v7735, %v7769
  %v7775 = vmul.f32 %v7736, %v7769
  %v7776 = vmul.f32 %v7737, %v7769
  %v7777 = vmul.f32 %v7738, %v7769
  %v7778 = vmul.f32 %v7739, %v7769
  %v7779 = vmul.f32 %v7740, %v7769
  %v7780 = vmul.f32 %v7741, %v7769
  %v7781 = vmul.f32 %v7742, %v7769
  %v7782 = vmul.f32 %v7743, %v7769
  %v7783 = vmul.f32 %v7744, %v7769
  %v7784 = vmul.f32 %v7745, %v7769
  %v7785 = vmul.f32 %v7746, %v7769
  %v7786 = vmul.f32 %v7747, %v7769
  %v7787 = vmul.f32 %v7748, %v7769
  %v7788 = vmul.f32 %v7749, %v7769
  %v7789 = vmul.f32 %v7750, %v7769
  %v7790 = vmul.f32 %v7751, %v7769
  %v7791 = vmul.f32 %v7752, %v7769
  %v7792 = vmul.f32 %v7753, %v7769
  %v7793 = vmul.f32 %v7754, %v7769
  %v7794 = vmul.f32 %v7755, %v7769
  %v7795 = vmul.f32 %v7756, %v7769
  %v7796 = vmul.f32 %v7757, %v7769
  %v7797 = vmul.f32 %v7758, %v7769
  %v7798 = vmul.f32 %v7759, %v7769
  %v7799 = vmul.f32 %v7760, %v7769
  %v7800 = vmul.f32 %v7761, %v7769
  %v7801 = vmul.f32 %v7762, %v7769
  %v7802 = vmul.f32 %v7763, %v7769
  %v7803 = vsel %vm6217, %v7771, 0.0
  %7804 = vadd.xlane.f32.xlu0 %v7803
  %v7805 = vpop.xlane.xlu0 %7804
  %v7806 = vsel %vm6217, %v7772, 0.0
  %7807 = vadd.xlane.f32.xlu0 %v7806
  %v7808 = vpop.xlane.xlu0 %7807
  %v7809 = vsel %vm6217, %v7773, 0.0
  %7810 = vadd.xlane.f32.xlu0 %v7809
  %v7811 = vpop.xlane.xlu0 %7810
  %v7812 = vsel %vm6217, %v7774, 0.0
  %7813 = vadd.xlane.f32.xlu0 %v7812
  %v7814 = vpop.xlane.xlu0 %7813
  %v7815 = vsel %vm6217, %v7775, 0.0
  %7816 = vadd.xlane.f32.xlu0 %v7815
  %v7817 = vpop.xlane.xlu0 %7816
  %v7818 = vsel %vm6217, %v7776, 0.0
  %7819 = vadd.xlane.f32.xlu0 %v7818
  %v7820 = vpop.xlane.xlu0 %7819
  %v7821 = vsel %vm6217, %v7777, 0.0
  %7822 = vadd.xlane.f32.xlu0 %v7821
  %v7823 = vpop.xlane.xlu0 %7822
  %v7824 = vsel %vm6217, %v7778, 0.0
  %7825 = vadd.xlane.f32.xlu0 %v7824
  %v7826 = vpop.xlane.xlu0 %7825
  %v7827 = vsel %vm6217, %v7779, 0.0
  %7828 = vadd.xlane.f32.xlu0 %v7827
  %v7829 = vpop.xlane.xlu0 %7828
  %v7830 = vsel %vm6217, %v7780, 0.0
  %7831 = vadd.xlane.f32.xlu0 %v7830
  %v7832 = vpop.xlane.xlu0 %7831
  %v7833 = vsel %vm6217, %v7781, 0.0
  %7834 = vadd.xlane.f32.xlu0 %v7833
  %v7835 = vpop.xlane.xlu0 %7834
  %v7836 = vsel %vm6217, %v7782, 0.0
  %7837 = vadd.xlane.f32.xlu0 %v7836
  %v7838 = vpop.xlane.xlu0 %7837
  %v7839 = vsel %vm6217, %v7783, 0.0
  %7840 = vadd.xlane.f32.xlu0 %v7839
  %v7841 = vpop.xlane.xlu0 %7840
  %v7842 = vsel %vm6217, %v7784, 0.0
  %7843 = vadd.xlane.f32.xlu0 %v7842
  %v7844 = vpop.xlane.xlu0 %7843
  %v7845 = vsel %vm6217, %v7785, 0.0
  %7846 = vadd.xlane.f32.xlu0 %v7845
  %v7847 = vpop.xlane.xlu0 %7846
  %v7848 = vsel %vm6217, %v7786, 0.0
  %7849 = vadd.xlane.f32.xlu0 %v7848
  %v7850 = vpop.xlane.xlu0 %7849
  %v7851 = vsel %vm6217, %v7787, 0.0
  %7852 = vadd.xlane.f32.xlu0 %v7851
  %v7853 = vpop.xlane.xlu0 %7852
  %v7854 = vsel %vm6217, %v7788, 0.0
  %7855 = vadd.xlane.f32.xlu0 %v7854
  %v7856 = vpop.xlane.xlu0 %7855
  %v7857 = vsel %vm6217, %v7789, 0.0
  %7858 = vadd.xlane.f32.xlu0 %v7857
  %v7859 = vpop.xlane.xlu0 %7858
  %v7860 = vsel %vm6217, %v7790, 0.0
  %7861 = vadd.xlane.f32.xlu0 %v7860
  %v7862 = vpop.xlane.xlu0 %7861
  %v7863 = vsel %vm6217, %v7791, 0.0
  %7864 = vadd.xlane.f32.xlu0 %v7863
  %v7865 = vpop.xlane.xlu0 %7864
  %v7866 = vsel %vm6217, %v7792, 0.0
  %7867 = vadd.xlane.f32.xlu0 %v7866
  %v7868 = vpop.xlane.xlu0 %7867
  %v7869 = vsel %vm6217, %v7793, 0.0
  %7870 = vadd.xlane.f32.xlu0 %v7869
  %v7871 = vpop.xlane.xlu0 %7870
  %v7872 = vsel %vm6217, %v7794, 0.0
  %7873 = vadd.xlane.f32.xlu0 %v7872
  %v7874 = vpop.xlane.xlu0 %7873
  %v7875 = vsel %vm6217, %v7795, 0.0
  %7876 = vadd.xlane.f32.xlu0 %v7875
  %v7877 = vpop.xlane.xlu0 %7876
  %v7878 = vsel %vm6217, %v7796, 0.0
  %7879 = vadd.xlane.f32.xlu0 %v7878
  %v7880 = vpop.xlane.xlu0 %7879
  %v7881 = vsel %vm6217, %v7797, 0.0
  %7882 = vadd.xlane.f32.xlu0 %v7881
  %v7883 = vpop.xlane.xlu0 %7882
  %v7884 = vsel %vm6217, %v7798, 0.0
  %7885 = vadd.xlane.f32.xlu0 %v7884
  %v7886 = vpop.xlane.xlu0 %7885
  %v7887 = vsel %vm6217, %v7799, 0.0
  %7888 = vadd.xlane.f32.xlu0 %v7887
  %v7889 = vpop.xlane.xlu0 %7888
  %v7890 = vsel %vm6217, %v7800, 0.0
  %7891 = vadd.xlane.f32.xlu0 %v7890
  %v7892 = vpop.xlane.xlu0 %7891
  %v7893 = vsel %vm6217, %v7801, 0.0
  %7894 = vadd.xlane.f32.xlu0 %v7893
  %v7895 = vpop.xlane.xlu0 %7894
  %v7896 = vsel %vm6217, %v7802, 0.0
  %7897 = vadd.xlane.f32.xlu0 %v7896
  %v7898 = vpop.xlane.xlu0 %7897
  %v7899 = vadd.f32 %v3395, %v6500
  %v7900 = vadd.f32 %v3397, %v6503
  %v7901 = vadd.f32 %v3399, %v6506
  %v7902 = vadd.f32 %v3401, %v6509
  %v7903 = vadd.f32 %v3403, %v6512
  %v7904 = vadd.f32 %v3405, %v6515
  %v7905 = vadd.f32 %v3407, %v6518
  %v7906 = vadd.f32 %v3409, %v6521
  %v7907 = vadd.f32 %v3411, %v6524
  %v7908 = vadd.f32 %v3413, %v6527
  %v7909 = vadd.f32 %v3415, %v6530
  %v7910 = vadd.f32 %v3417, %v6533
  %v7911 = vadd.f32 %v3419, %v6536
  %v7912 = vadd.f32 %v3421, %v6539
  %v7913 = vadd.f32 %v3423, %v6542
  %v7914 = vadd.f32 %v3425, %v6545
  %v7915 = vadd.f32 %v3427, %v6548
  %v7916 = vadd.f32 %v3429, %v6551
  %v7917 = vadd.f32 %v3431, %v6554
  %v7918 = vadd.f32 %v3433, %v6557
  %v7919 = vadd.f32 %v3435, %v6560
  %v7920 = vadd.f32 %v3437, %v6563
  %v7921 = vadd.f32 %v3439, %v6566
  %v7922 = vadd.f32 %v3441, %v6569
  %v7923 = vadd.f32 %v3443, %v6572
  %v7924 = vadd.f32 %v3445, %v6575
  %v7925 = vadd.f32 %v3447, %v6578
  %v7926 = vadd.f32 %v3449, %v6581
  %v7927 = vadd.f32 %v3451, %v6584
  %v7928 = vadd.f32 %v3453, %v6587
  %v7929 = vadd.f32 %v3455, %v6590
  %v7930 = vadd.f32 %v3457, %v6593
  %v7931 = vadd.f32 %v7899, %v7805
  %v7932 = vadd.f32 %v7900, %v7808
  %v7933 = vadd.f32 %v7901, %v7811
  %v7934 = vadd.f32 %v7902, %v7814
  %v7935 = vadd.f32 %v7903, %v7817
  %v7936 = vadd.f32 %v7904, %v7820
  %v7937 = vadd.f32 %v7905, %v7823
  %v7938 = vadd.f32 %v7906, %v7826
  %v7939 = vadd.f32 %v7907, %v7829
  %v7940 = vadd.f32 %v7908, %v7832
  %v7941 = vadd.f32 %v7909, %v7835
  %v7942 = vadd.f32 %v7910, %v7838
  %v7943 = vadd.f32 %v7911, %v7841
  %v7944 = vadd.f32 %v7912, %v7844
  %v7945 = vadd.f32 %v7913, %v7847
  %v7946 = vadd.f32 %v7914, %v7850
  %v7947 = vadd.f32 %v7915, %v7853
  %v7948 = vadd.f32 %v7916, %v7856
  %v7949 = vadd.f32 %v7917, %v7859
  %v7950 = vadd.f32 %v7918, %v7862
  %v7951 = vadd.f32 %v7919, %v7865
  %v7952 = vadd.f32 %v7920, %v7868
  %v7953 = vadd.f32 %v7921, %v7871
  %v7954 = vadd.f32 %v7922, %v7874
  %v7955 = vadd.f32 %v7923, %v7877
  %v7956 = vadd.f32 %v7924, %v7880
  %v7957 = vadd.f32 %v7925, %v7883
  %v7958 = vadd.f32 %v7926, %v7886
  %v7959 = vadd.f32 %v7927, %v7889
  %v7960 = vadd.f32 %v7928, %v7892
  %v7961 = vadd.f32 %v7929, %v7895
  %v7962 = vadd.f32 %v7930, %v7898
  %v7963 = vld [vmem:[#allocation2] sm:$0x1]
  %v7965 = vlaneseq
  %v7966 = vshrl.u32 %v7965, 7
  %v7967 = vsub.s32 0, %v7966
  %v7968 = vrot.slane %v7963, %v7967
  %v7970 = vadd.f32 %v7931, %v7968
  %v7971 = vadd.f32 %v7932, %v7968
  %v7972 = vadd.f32 %v7933, %v7968
  %v7973 = vadd.f32 %v7934, %v7968
  %v7974 = vadd.f32 %v7935, %v7968
  %v7975 = vadd.f32 %v7936, %v7968
  %v7976 = vadd.f32 %v7937, %v7968
  %v7977 = vadd.f32 %v7938, %v7968
  %v7978 = vadd.f32 %v7939, %v7968
  %v7979 = vadd.f32 %v7940, %v7968
  %v7980 = vadd.f32 %v7941, %v7968
  %v7981 = vadd.f32 %v7942, %v7968
  %v7982 = vadd.f32 %v7943, %v7968
  %v7983 = vadd.f32 %v7944, %v7968
  %v7984 = vadd.f32 %v7945, %v7968
  %v7985 = vadd.f32 %v7946, %v7968
  %v7986 = vadd.f32 %v7947, %v7968
  %v7987 = vadd.f32 %v7948, %v7968
  %v7988 = vadd.f32 %v7949, %v7968
  %v7989 = vadd.f32 %v7950, %v7968
  %v7990 = vadd.f32 %v7951, %v7968
  %v7991 = vadd.f32 %v7952, %v7968
  %v7992 = vadd.f32 %v7953, %v7968
  %v7993 = vadd.f32 %v7954, %v7968
  %v7994 = vadd.f32 %v7955, %v7968
  %v7995 = vadd.f32 %v7956, %v7968
  %v7996 = vadd.f32 %v7957, %v7968
  %v7997 = vadd.f32 %v7958, %v7968
  %v7998 = vadd.f32 %v7959, %v7968
  %v7999 = vadd.f32 %v7960, %v7968
  %v8000 = vadd.f32 %v7961, %v7968
  %v8001 = vadd.f32 %v7962, %v7968
  %vm8002 = vcmask 7168
  %8003 = vst.msk [vmem:[%s18] sm:$0xff] %vm8002, %v7970
  %8004 = vst.msk [vmem:[%s18 + $0x8] sm:$0xff] %vm8002, %v7971
  %8005 = vst.msk [vmem:[%s18 + $0x10] sm:$0xff] %vm8002, %v7972
  %8006 = vst.msk [vmem:[%s18 + $0x18] sm:$0xff] %vm8002, %v7973
  %8007 = vst.msk [vmem:[%s18 + $0x20] sm:$0xff] %vm8002, %v7974
  %8008 = vst.msk [vmem:[%s18 + $0x28] sm:$0xff] %vm8002, %v7975
  %8009 = vst.msk [vmem:[%s18 + $0x30] sm:$0xff] %vm8002, %v7976
  %8010 = vst.msk [vmem:[%s18 + $0x38] sm:$0xff] %vm8002, %v7977
  %8011 = vst.msk [vmem:[%s18 + $0x40] sm:$0xff] %vm8002, %v7978
  %8012 = vst.msk [vmem:[%s18 + $0x48] sm:$0xff] %vm8002, %v7979
  %8013 = vst.msk [vmem:[%s18 + $0x50] sm:$0xff] %vm8002, %v7980
  %8014 = vst.msk [vmem:[%s18 + $0x58] sm:$0xff] %vm8002, %v7981
  %8015 = vst.msk [vmem:[%s18 + $0x60] sm:$0xff] %vm8002, %v7982
  %8016 = vst.msk [vmem:[%s18 + $0x68] sm:$0xff] %vm8002, %v7983
  %8017 = vst.msk [vmem:[%s18 + $0x70] sm:$0xff] %vm8002, %v7984
  %8018 = vst.msk [vmem:[%s18 + $0x78] sm:$0xff] %vm8002, %v7985
  %8019 = vst.msk [vmem:[%s18 + $0x80] sm:$0xff] %vm8002, %v7986
  %8020 = vst.msk [vmem:[%s18 + $0x88] sm:$0xff] %vm8002, %v7987
  %8021 = vst.msk [vmem:[%s18 + $0x90] sm:$0xff] %vm8002, %v7988
  %8022 = vst.msk [vmem:[%s18 + $0x98] sm:$0xff] %vm8002, %v7989
  %8023 = vst.msk [vmem:[%s18 + $0xa0] sm:$0xff] %vm8002, %v7990
  %8024 = vst.msk [vmem:[%s18 + $0xa8] sm:$0xff] %vm8002, %v7991
  %8025 = vst.msk [vmem:[%s18 + $0xb0] sm:$0xff] %vm8002, %v7992
  %8026 = vst.msk [vmem:[%s18 + $0xb8] sm:$0xff] %vm8002, %v7993
  %8027 = vst.msk [vmem:[%s18 + $0xc0] sm:$0xff] %vm8002, %v7994
  %8028 = vst.msk [vmem:[%s18 + $0xc8] sm:$0xff] %vm8002, %v7995
  %8029 = vst.msk [vmem:[%s18 + $0xd0] sm:$0xff] %vm8002, %v7996
  %8030 = vst.msk [vmem:[%s18 + $0xd8] sm:$0xff] %vm8002, %v7997
  %8031 = vst.msk [vmem:[%s18 + $0xe0] sm:$0xff] %vm8002, %v7998
  %8032 = vst.msk [vmem:[%s18 + $0xe8] sm:$0xff] %vm8002, %v7999
  %8033 = vst.msk [vmem:[%s18 + $0xf0] sm:$0xff] %vm8002, %v8000
  %8034 = vst.msk [vmem:[%s18 + $0xf8] sm:$0xff] %vm8002, %v8001
  // Predicated region
  $region74: #{tpu_custom_call.1} parent=0 // pred_check
    _
  $region75: #{tpu_custom_call.1} parent=0 // pred_check_branch
    %8036 = sbr.rel (0) target = $region77
  $region76: #{tpu_custom_call.1} parent=0 // pred_region
    _
  $region77: #{tpu_custom_call.1} parent=0 // pred_fallthru
    _
  // Predicated region
  $region78: #{tpu_custom_call.1} parent=0 // pred_check
    _
  $region79: #{tpu_custom_call.1} parent=0 // pred_check_branch
    %8038 = sbr.rel (0) target = $region81
  $region80: #{tpu_custom_call.1} parent=0 // pred_region
    _
  $region81: #{tpu_custom_call.1} parent=0 // pred_fallthru
    _

</llo_original>
